<compile_context>
chip_gen: v6e
topology: v6e:2x2x1
jax: 0.10.0
libtpu: 0.0.40
codegen_flags: <defaults>
</compile_context>

<pallas_src>
import jax
import jax.numpy as jnp
from jax import lax
from jax.experimental import pallas as pl
from jax.experimental.pallas import tpu as pltpu

EPS = 1e-5                              # nn.BatchNorm2d default eps
LANE = 128                              # TPU lane width; channels padded to this
_VMEM_LIMIT_BYTES = 32 * 1024 * 1024    # safe scoped-VMEM limit on v5e/v6e/v7x


def _cparams():
    return pltpu.CompilerParams(
        dimension_semantics=("parallel",),      # image axis -> both TCs on v7x
        vmem_limit_bytes=_VMEM_LIMIT_BYTES)


# ------------------------------ Pallas kernels ------------------------------

def _stem_conv_stats_kernel(p_ref, w_ref, b_ref, y_ref, st_ref):
    """Stem 5x5 conv (as a single matmul on pre-built 25-tap patches) + bias,
    plus per-image sum / sum-of-squares partials for bn1."""
    # p_ref : (1, HW, K) bf16   im2col patches (25 taps padded to 128 lanes)
    # w_ref : (K, C)     bf16   tap-major weights
    # b_ref : (1, C)     f32    conv bias
    # y_ref : (1, HW, C) bf16   pre-BN conv output
    # st_ref: (1, 2, C)  f32    row0 = sum, row1 = sum of squares
    acc = jnp.dot(p_ref[0], w_ref[...], preferred_element_type=jnp.float32)
    acc = acc + b_ref[...]
    y_ref[0] = acc.astype(y_ref.dtype)
    st_ref[0, 0:1, :] = jnp.sum(acc, axis=0, keepdims=True)
    st_ref[0, 1:2, :] = jnp.sum(acc * acc, axis=0, keepdims=True)


def _make_stem_bn_relu_maxpool_kernel(H, W):
    """bn1(scale/shift) + ReLU + MaxPool2d(3,1,1), emitting the halo-padded
    NHWC activation that block1's conv1 consumes directly."""
    def kernel(y_ref, sc_ref, sh_ref, o_ref, hp_ref):
        # y_ref : (1, HW, C)        bf16
        # sc/sh : (1, C)            f32
        # o_ref : (1, H+2, W+2, C)  f32  zero-bordered maxpool output
        # hp_ref: (H+2, W+2, C)     f32  VMEM scratch (zero-padded activation)
        C = y_ref.shape[2]
        h = jnp.maximum(y_ref[0] * sc_ref[...] + sh_ref[...], 0.0)     # f32
        hp_ref[...] = jnp.zeros_like(hp_ref)     # zero pad == -inf pad post-ReLU
        hp_ref[1:H + 1, 1:W + 1, :] = h.reshape(H, W, C)
        m = hp_ref[0:H, 0:W, :]
        for t in range(1, 9):
            kh, kw = divmod(t, 3)
            m = jnp.maximum(m, hp_ref[kh:kh + H, kw:kw + W, :])
        o_ref[...] = jnp.zeros_like(o_ref)       # halo for the next conv
        o_ref[0, 1:H + 1, 1:W + 1, :] = m
    return kernel


def _make_conv3x3_stats_kernel(H, W):
    """Block conv1: 3x3 stride-1 conv as 9 shifted VMEM sub-matmuls, plus
    per-image sum / sum-of-squares partials for bn1."""
    HW = H * W

    def kernel(xp_ref, w_ref, y_ref, st_ref):
        # xp_ref: (1, H+2, W+2, Cin) f32   halo-padded NHWC input
        # w_ref : (9, Cin, Cout)     bf16  tap-major weights (kh*3+kw)
        # y_ref : (1, HW, Cout)      bf16  pre-BN conv output
        # st_ref: (1, 2, Cout)       f32
        cin = xp_ref.shape[3]
        cout = w_ref.shape[2]
        acc = jnp.zeros((HW, cout), jnp.float32)
        for t in range(9):
            kh, kw = divmod(t, 3)
            xs = xp_ref[0, kh:kh + H, kw:kw + W, :].reshape(HW, cin)
            acc = acc + jnp.dot(xs.astype(jnp.bfloat16), w_ref[t],
                                preferred_element_type=jnp.float32)
        y_ref[0] = acc.astype(y_ref.dtype)
        st_ref[0, 0:1, :] = jnp.sum(acc, axis=0, keepdims=True)
        st_ref[0, 1:2, :] = jnp.sum(acc * acc, axis=0, keepdims=True)
    return kernel


def _make_bn_relu_conv3x3_stats_kernel(H, W):
    """bn1(scale/shift) + ReLU + conv2 (3x3) + conv2 stats, fused so the
    intermediate activation stays in a zero-padded VMEM scratch."""
    HW = H * W

    def kernel(y1_ref, sc_ref, sh_ref, w_ref, y2_ref, st_ref, hp_ref):
        C = y1_ref.shape[2]
        cout = w_ref.shape[2]
        h = jnp.maximum(y1_ref[0] * sc_ref[...] + sh_ref[...], 0.0)    # f32
        hp_ref[...] = jnp.zeros_like(hp_ref)
        hp_ref[1:H + 1, 1:W + 1, :] = h.reshape(H, W, C)
        acc = jnp.zeros((HW, cout), jnp.float32)
        for t in range(9):
            kh, kw = divmod(t, 3)
            xs = hp_ref[kh:kh + H, kw:kw + W, :].reshape(HW, C)
            acc = acc + jnp.dot(xs.astype(jnp.bfloat16), w_ref[t],
                                preferred_element_type=jnp.float32)
        y2_ref[0] = acc.astype(y2_ref.dtype)
        st_ref[0, 0:1, :] = jnp.sum(acc, axis=0, keepdims=True)
        st_ref[0, 1:2, :] = jnp.sum(acc * acc, axis=0, keepdims=True)
    return kernel


def _make_bn_shortcut_relu_pad_kernel(H, W):
    """bn2(scale/shift) + 1x1-conv shortcut (from the same halo-padded input
    already in VMEM) + add + ReLU, emitting the next block's halo-padded
    input directly (no jnp.pad between blocks)."""
    HW = H * W

    def kernel(y2_ref, sc_ref, sh_ref, xp_ref, wds_ref, o_ref):
        cin = xp_ref.shape[3]
        C = y2_ref.shape[2]
        y = y2_ref[0] * sc_ref[...] + sh_ref[...]                      # f32
        xid = xp_ref[0, 1:H + 1, 1:W + 1, :].reshape(HW, cin)          # interior = x
        ident = jnp.dot(xid.astype(jnp.bfloat16), wds_ref[...],
                        preferred_element_type=jnp.float32)
        out = jnp.maximum(y + ident, 0.0)
        o_ref[...] = jnp.zeros_like(o_ref)
        o_ref[0, 1:H + 1, 1:W + 1, :] = out.reshape(H, W, C)
    return kernel


def _make_bn_shortcut_relu_pool_fc_kernel(H, W):
    """Last block: bn2 + 1x1 shortcut + add + ReLU + adaptive avg-pool + fc,
    fully fused so the block-3 activation never hits HBM."""
    HW = H * W

    def kernel(y2_ref, sc_ref, sh_ref, xp_ref, wds_ref, wfc_ref, bfc_ref, o_ref):
        cin = xp_ref.shape[3]
        y = y2_ref[0] * sc_ref[...] + sh_ref[...]                      # f32
        xid = xp_ref[0, 1:H + 1, 1:W + 1, :].reshape(HW, cin)
        ident = jnp.dot(xid.astype(jnp.bfloat16), wds_ref[...],
                        preferred_element_type=jnp.float32)
        out = jnp.maximum(y + ident, 0.0)                              # (HW, C)
        pooled = jnp.mean(out, axis=0, keepdims=True)                  # (1, C)
        logits = jnp.dot(pooled, wfc_ref[...],
                         preferred_element_type=jnp.float32) + bfc_ref[...]
        o_ref[0] = logits
    return kernel


# ------------------------------ pallas_call wrappers ------------------------

def _stem_conv_pass(patches, w5, b5):
    N, HW, K = patches.shape
    C = w5.shape[1]
    return pl.pallas_call(
        _stem_conv_stats_kernel,
        out_shape=(jax.ShapeDtypeStruct((N, HW, C), jnp.bfloat16),
                   jax.ShapeDtypeStruct((N, 2, C), jnp.float32)),
        grid=(N,),
        in_specs=[pl.BlockSpec((1, HW, K), lambda n: (n, 0, 0)),
                  pl.BlockSpec((K, C), lambda n: (0, 0)),
                  pl.BlockSpec((1, C), lambda n: (0, 0))],
        out_specs=(pl.BlockSpec((1, HW, C), lambda n: (n, 0, 0)),
                   pl.BlockSpec((1, 2, C), lambda n: (n, 0, 0))),
        compiler_params=_cparams(),
    )(patches, w5, b5)


def _stem_pool_pass(y0, sc, sh, H, W):
    N, HW, C = y0.shape
    return pl.pallas_call(
        _make_stem_bn_relu_maxpool_kernel(H, W),
        out_shape=jax.ShapeDtypeStruct((N, H + 2, W + 2, C), jnp.float32),
        grid=(N,),
        in_specs=[pl.BlockSpec((1, HW, C), lambda n: (n, 0, 0)),
                  pl.BlockSpec((1, C), lambda n: (0, 0)),
                  pl.BlockSpec((1, C), lambda n: (0, 0))],
        out_specs=pl.BlockSpec((1, H + 2, W + 2, C), lambda n: (n, 0, 0, 0)),
        scratch_shapes=[pltpu.VMEM((H + 2, W + 2, C), jnp.float32)],
        compiler_params=_cparams(),
    )(y0, sc, sh)


def _conv1_pass(xp, w1, H, W):
    N, _, _, cin = xp.shape
    cout = w1.shape[2]
    HW = H * W
    return pl.pallas_call(
        _make_conv3x3_stats_kernel(H, W),
        out_shape=(jax.ShapeDtypeStruct((N, HW, cout), jnp.bfloat16),
                   jax.ShapeDtypeStruct((N, 2, cout), jnp.float32)),
        grid=(N,),
        in_specs=[pl.BlockSpec((1, H + 2, W + 2, cin), lambda n: (n, 0, 0, 0)),
                  pl.BlockSpec((9, cin, cout), lambda n: (0, 0, 0))],
        out_specs=(pl.BlockSpec((1, HW, cout), lambda n: (n, 0, 0)),
                   pl.BlockSpec((1, 2, cout), lambda n: (n, 0, 0))),
        compiler_params=_cparams(),
    )(xp, w1)


def _conv2_pass(y1, sc1, sh1, w2, H, W):
    N, HW, C = y1.shape
    cout = w2.shape[2]
    return pl.pallas_call(
        _make_bn_relu_conv3x3_stats_kernel(H, W),
        out_shape=(jax.ShapeDtypeStruct((N, HW, cout), jnp.bfloat16),
                   jax.ShapeDtypeStruct((N, 2, cout), jnp.float32)),
        grid=(N,),
        in_specs=[pl.BlockSpec((1, HW, C), lambda n: (n, 0, 0)),
                  pl.BlockSpec((1, C), lambda n: (0, 0)),
                  pl.BlockSpec((1, C), lambda n: (0, 0)),
                  pl.BlockSpec((9, C, cout), lambda n: (0, 0, 0))],
        out_specs=(pl.BlockSpec((1, HW, cout), lambda n: (n, 0, 0)),
                   pl.BlockSpec((1, 2, cout), lambda n: (n, 0, 0))),
        scratch_shapes=[pltpu.VMEM((H + 2, W + 2, C), jnp.float32)],
        compiler_params=_cparams(),
    )(y1, sc1, sh1, w2)


def _residual_pad_pass(y2, sc2, sh2, xp, wds, H, W):
    N, HW, C = y2.shape
    cin = xp.shape[3]
    return pl.pallas_call(
        _make_bn_shortcut_relu_pad_kernel(H, W),
        out_shape=jax.ShapeDtypeStruct((N, H + 2, W + 2, C), jnp.float32),
        grid=(N,),
        in_specs=[pl.BlockSpec((1, HW, C), lambda n: (n, 0, 0)),
                  pl.BlockSpec((1, C), lambda n: (0, 0)),
                  pl.BlockSpec((1, C), lambda n: (0, 0)),
                  pl.BlockSpec((1, H + 2, W + 2, cin), lambda n: (n, 0, 0, 0)),
                  pl.BlockSpec((cin, C), lambda n: (0, 0))],
        out_specs=pl.BlockSpec((1, H + 2, W + 2, C), lambda n: (n, 0, 0, 0)),
        compiler_params=_cparams(),
    )(y2, sc2, sh2, xp, wds)


def _head_pass(y2, sc2, sh2, xp, wds, wfc, bfc, H, W):
    N, HW, C = y2.shape
    cin = xp.shape[3]
    return pl.pallas_call(
        _make_bn_shortcut_relu_pool_fc_kernel(H, W),
        out_shape=jax.ShapeDtypeStruct((N, 1, C), jnp.float32),
        grid=(N,),
        in_specs=[pl.BlockSpec((1, HW, C), lambda n: (n, 0, 0)),
                  pl.BlockSpec((1, C), lambda n: (0, 0)),
                  pl.BlockSpec((1, C), lambda n: (0, 0)),
                  pl.BlockSpec((1, H + 2, W + 2, cin), lambda n: (n, 0, 0, 0)),
                  pl.BlockSpec((cin, C), lambda n: (0, 0)),
                  pl.BlockSpec((C, C), lambda n: (0, 0)),
                  pl.BlockSpec((1, C), lambda n: (0, 0))],
        out_specs=pl.BlockSpec((1, 1, C), lambda n: (n, 0, 0)),
        compiler_params=_cparams(),
    )(y2, sc2, sh2, xp, wds, wfc, bfc)


def _bn_fold(stats, gamma_p, beta_p, count):
    """Fold per-image sum / sumsq partials into per-channel scale / shift
    (training-mode BatchNorm: batch mean, biased variance, eps=1e-5)."""
    s = jnp.sum(stats[:, 0, :], axis=0)
    ss = jnp.sum(stats[:, 1, :], axis=0)
    mean = s / count
    var = jnp.maximum(ss / count - mean * mean, 0.0)
    inv = lax.rsqrt(var + EPS)
    scale = gamma_p * inv
    shift = beta_p - mean * scale
    return scale.reshape(1, -1), shift.reshape(1, -1)


# ------------------------------ module wrapper -------------------------------

def make_resnet(params):
    """Build a jitted forward(x_nchw) for the reference ResNet.

    x_nchw: (N, 1, H0, W0); the stem 5x5 conv (no padding) requires
    (H0-4) and (W0-4) to be multiples of 8.
    """
    C = LANE

    # ---- hoisted, lane-dense (padded-to-128), tap-major bf16 weights ----
    w5 = jnp.transpose(params["stem_w"], (2, 3, 1, 0)).reshape(25, 16)
    w5 = jnp.pad(w5, ((0, C - 25), (0, C - 16))).astype(jnp.bfloat16)
    b5 = jnp.pad(params["stem_b"].astype(jnp.float32), (0, C - 16)).reshape(1, C)
    g0 = jnp.pad(params["stem_g"].astype(jnp.float32), (0, C - 16))
    bt0 = jnp.pad(params["stem_bt"].astype(jnp.float32), (0, C - 16))

    def prep_block(p, inplanes, planes):
        w1 = jnp.transpose(p["w1"], (2, 3, 1, 0)).reshape(9, inplanes, planes)
        w1 = jnp.pad(w1, ((0, 0), (0, C - inplanes), (0, C - planes))
                     ).astype(jnp.bfloat16)
        w2 = jnp.transpose(p["w2"], (2, 3, 1, 0)).reshape(9, planes, planes)
        w2 = jnp.pad(w2, ((0, 0), (0, C - planes), (0, C - planes))
                     ).astype(jnp.bfloat16)
        wds = p["wds"].reshape(planes, inplanes).T
        wds = jnp.pad(wds, ((0, C - inplanes), (0, C - planes))).astype(jnp.bfloat16)
        return dict(
            w1=w1, w2=w2, wds=wds,
            g1=jnp.pad(p["g1"].astype(jnp.float32), (0, C - planes)),
            b1=jnp.pad(p["b1"].astype(jnp.float32), (0, C - planes)),
            g2=jnp.pad(p["g2"].astype(jnp.float32), (0, C - planes)),
            b2=jnp.pad(p["b2"].astype(jnp.float32), (0, C - planes)))

    blk1 = prep_block(params["block1"], 16, 32)
    blk2 = prep_block(params["block2"], 32, 64)
    blk3 = prep_block(params["block3"], 64, 128)

    wfc = jnp.pad(params["fc_w"].T, ((0, 0), (0, C - 62))).astype(jnp.float32)
    bfc = jnp.pad(params["fc_b"].astype(jnp.float32), (0, C - 62)).reshape(1, C)

    @jax.jit
    def forward(x_nchw):
        N, _, H0, W0 = x_nchw.shape
        H, W = H0 - 4, W0 - 4                    # stem 5x5 conv, no padding
        assert H > 0 and W > 0 and H % 8 == 0 and W % 8 == 0, (H, W)
        HW = H * W
        count = N * H * W

        # tiny single-channel im2col for the 5x5 stem conv (JAX glue, ~KBs)
        x0 = x_nchw[:, 0, :, :].astype(jnp.float32)
        patches = jnp.stack(
            [x0[:, kh:kh + H, kw:kw + W] for kh in range(5) for kw in range(5)],
            axis=-1).reshape(N, HW, 25)
        patches = jnp.pad(patches, ((0, 0), (0, 0), (0, C - 25))).astype(jnp.bfloat16)

        # ---- stem: conv5x5+bias -> bn1 -> relu -> maxpool(3,1,1) ----
        y0, st0 = _stem_conv_pass(patches, w5, b5)
        sc0, sh0 = _bn_fold(st0, g0, bt0, count)
        xp = _stem_pool_pass(y0, sc0, sh0, H, W)     # halo-padded block1 input

        # ---- BasicBlocks (stride 1, fresh 1x1-conv shortcut path) ----
        def run_block(xp, blk, last):
            y1, st1 = _conv1_pass(xp, blk["w1"], H, W)
            sc1, sh1 = _bn_fold(st1, blk["g1"], blk["b1"], count)
            y2, st2 = _conv2_pass(y1, sc1, sh1, blk["w2"], H, W)
            sc2, sh2 = _bn_fold(st2, blk["g2"], blk["b2"], count)
            if last:
                return _head_pass(y2, sc2, sh2, xp, blk["wds"], wfc, bfc, H, W)
            return _residual_pad_pass(y2, sc2, sh2, xp, blk["wds"], H, W)

        xp = run_block(xp, blk1, last=False)
        xp = run_block(xp, blk2, last=False)
        logits = run_block(xp, blk3, last=True)      # fused bn2+res+relu+pool+fc

        return logits[:, 0, :62]                     # drop padded fc channels

    return forward


# ------------------------------ plain-JAX reference --------------------------

def _reference(x, params):
    dn = ("NCHW", "OIHW", "NCHW")

    def bn(y, g, b):
        mean = jnp.mean(y, axis=(0, 2, 3), keepdims=True)
        var = jnp.mean((y - mean) ** 2, axis=(0, 2, 3), keepdims=True)
        return ((y - mean) * lax.rsqrt(var + EPS)
                * g.reshape(1, -1, 1, 1) + b.reshape(1, -1, 1, 1))

    def block(x, p):
        y = lax.conv_general_dilated(x, p["w1"], (1, 1), ((1, 1), (1, 1)),
                                     dimension_numbers=dn)
        y = jnp.maximum(bn(y, p["g1"], p["b1"]), 0.0)
        y = lax.conv_general_dilated(y, p["w2"], (1, 1), ((1, 1), (1, 1)),
                                     dimension_numbers=dn)
        y = bn(y, p["g2"], p["b2"])
        ident = lax.conv_general_dilated(x, p["wds"], (1, 1), ((0, 0), (0, 0)),
                                         dimension_numbers=dn)
        return jnp.maximum(y + ident, 0.0)

    y = lax.conv_general_dilated(x, params["stem_w"], (1, 1), ((0, 0), (0, 0)),
                                 dimension_numbers=dn)
    y = y + params["stem_b"].reshape(1, -1, 1, 1)
    y = jnp.maximum(bn(y, params["stem_g"], params["stem_bt"]), 0.0)
    y = lax.reduce_window(y, -jnp.inf, lax.max, (1, 1, 3, 3), (1, 1, 1, 1),
                          ((0, 0), (0, 0), (1, 1), (1, 1)))
    y = block(y, params["block1"])
    y = block(y, params["block2"])
    y = block(y, params["block3"])
    pooled = jnp.mean(y, axis=(2, 3))
    return pooled @ params["fc_w"].T + params["fc_b"]


# ------------------------------------ main -----------------------------------

if __name__ == "__main__":
    N, H0, W0 = 2, 20, 20                    # 20x20 input -> 16x16 after stem conv
    key = jax.random.PRNGKey(0)
    ks = jax.random.split(key, 8)
    x = jax.random.normal(ks[0], (N, 1, H0, W0), jnp.float32)

    def conv_w(k, cout, cin, kh, kw, s):
        return s * jax.random.normal(k, (cout, cin, kh, kw), jnp.float32)

    def block_params(k, inplanes, planes):
        k1, k2, k3 = jax.random.split(k, 3)
        return dict(
            w1=conv_w(k1, planes, inplanes, 3, 3, 0.1),
            g1=jnp.ones((planes,), jnp.float32),
            b1=jnp.zeros((planes,), jnp.float32),
            w2=conv_w(k2, planes, planes, 3, 3, 0.1),
            g2=jnp.ones((planes,), jnp.float32),
            b2=jnp.zeros((planes,), jnp.float32),
            # the reference builds a *fresh* random 1x1 shortcut conv inside
            # forward(); pinned deterministically here for reproducibility.
            wds=conv_w(k3, planes, inplanes, 1, 1, 0.2),
        )

    params = dict(
        stem_w=conv_w(ks[1], 16, 1, 5, 5, 0.2),
        stem_b=0.1 * jax.random.normal(ks[2], (16,), jnp.float32),
        stem_g=jnp.ones((16,), jnp.float32),
        stem_bt=jnp.zeros((16,), jnp.float32),
        block1=block_params(ks[3], 16, 32),
        block2=block_params(ks[4], 32, 64),
        block3=block_params(ks[5], 64, 128),
        fc_w=0.1 * jax.random.normal(ks[6], (62, 128), jnp.float32),
        fc_b=0.1 * jax.random.normal(ks[7], (62,), jnp.float32),
    )

    fwd = make_resnet(params)
    out = jax.block_until_ready(fwd(x))
    assert out.shape == (N, 62), out.shape

    ref = _reference(x, params)
    err = float(jnp.max(jnp.abs(out - ref)))
    # tolerance sized for bf16 MXU operands cascaded through 7 conv layers
    assert jnp.allclose(out, ref, atol=5e-2, rtol=5e-2), err

    print("KERNEL_OK")
</pallas_src>

<mosaic_0001>
module attributes {stable_mosaic.version = 11 : i64} {
  func.func @_stem_conv_stats_kernel(%arg0: i32, %arg1: memref<1x256x128xbf16, #tpu.memory_space<vmem>>, %arg2: memref<128x128xbf16, #tpu.memory_space<vmem>>, %arg3: memref<1x128xf32, #tpu.memory_space<vmem>>, %arg4: memref<1x256x128xbf16, #tpu.memory_space<vmem>>, %arg5: memref<1x2x128xf32, #tpu.memory_space<vmem>>) attributes {dimension_semantics = [#tpu.dimension_semantics<parallel>], iteration_bounds = array<i64: 2>, scalar_prefetch = 0 : i64, scratch_operands = 0 : i64, tpu.core_type = #tpu.core_type<tc>, window_params = [{transform_indices = @transform_0, window_bounds = array<i64: 1, 256, 128>}, {pipeline_mode = #tpu.pipeline_mode<synchronous>, transform_indices = @transform_1, window_bounds = array<i64: 128, 128>}, {pipeline_mode = #tpu.pipeline_mode<synchronous>, transform_indices = @transform_2, window_bounds = array<i64: 1, 128>}, {transform_indices = @transform_3, window_bounds = array<i64: 1, 256, 128>}, {transform_indices = @transform_4, window_bounds = array<i64: 1, 2, 128>}]} {
    %c0 = arith.constant 0 : index
    %c0_0 = arith.constant 0 : index
    %c0_1 = arith.constant 0 : index
    %0 = vector.load %arg1[%c0, %c0_0, %c0_1] : memref<1x256x128xbf16, #tpu.memory_space<vmem>>, vector<1x256x128xbf16>
    %1 = vector.shape_cast %0 : vector<1x256x128xbf16> to vector<256x128xbf16>
    %c0_2 = arith.constant 0 : index
    %c0_3 = arith.constant 0 : index
    %2 = vector.load %arg2[%c0_2, %c0_3] : memref<128x128xbf16, #tpu.memory_space<vmem>>, vector<128x128xbf16>
    %cst = arith.constant dense<0.000000e+00> : vector<256x128xf32>
    %3 = tpu.matmul %1, %2, %cst {dimension_numbers = #tpu.dot_dimension_numbers<[1], [0], [0], [1], [0, 0, 1, 1], [], []>} : vector<256x128xbf16>, vector<128x128xbf16>, vector<256x128xf32> -> vector<256x128xf32>
    %c0_4 = arith.constant 0 : index
    %c0_5 = arith.constant 0 : index
    %4 = vector.load %arg3[%c0_4, %c0_5] : memref<1x128xf32, #tpu.memory_space<vmem>>, vector<1x128xf32>
    %5 = vector.broadcast %4 : vector<1x128xf32> to vector<256x128xf32>
    %6 = arith.addf %3, %5 : vector<256x128xf32>
    %7 = arith.truncf %6 : vector<256x128xf32> to vector<256x128xbf16>
    %c0_6 = arith.constant 0 : index
    %c0_7 = arith.constant 0 : index
    %c0_8 = arith.constant 0 : index
    %8 = vector.load %arg4[%c0_6, %c0_7, %c0_8] : memref<1x256x128xbf16, #tpu.memory_space<vmem>>, vector<1x256x128xbf16>
    %9 = vector.shape_cast %8 : vector<1x256x128xbf16> to vector<256x128xbf16>
    %10 = vector.shape_cast %7 : vector<256x128xbf16> to vector<1x256x128xbf16>
    tpu.vector_store %arg4[%c0_6, %c0_7, %c0_8], %10 {strides = array<i32>} : memref<1x256x128xbf16, #tpu.memory_space<vmem>>, vector<1x256x128xbf16>,
    %cst_9 = arith.constant dense<0.000000e+00> : vector<128xf32>
    %11 = vector.multi_reduction <add>, %6, %cst_9 [0] : vector<256x128xf32> to vector<128xf32>
    %12 = vector.shape_cast %11 : vector<128xf32> to vector<1x128xf32>
    %c0_10 = arith.constant 0 : index
    %c0_11 = arith.constant 0 : index
    %c0_12 = arith.constant 0 : index
    %13 = vector.load %arg5[%c0_10, %c0_11, %c0_12] : memref<1x2x128xf32, #tpu.memory_space<vmem>>, vector<1x1x128xf32>
    %14 = vector.shape_cast %13 : vector<1x1x128xf32> to vector<1x128xf32>
    %15 = vector.shape_cast %12 : vector<1x128xf32> to vector<1x1x128xf32>
    tpu.vector_store %arg5[%c0_10, %c0_11, %c0_12], %15 {strides = array<i32>} : memref<1x2x128xf32, #tpu.memory_space<vmem>>, vector<1x1x128xf32>,
    %16 = arith.mulf %6, %6 : vector<256x128xf32>
    %cst_13 = arith.constant dense<0.000000e+00> : vector<128xf32>
    %17 = vector.multi_reduction <add>, %16, %cst_13 [0] : vector<256x128xf32> to vector<128xf32>
    %18 = vector.shape_cast %17 : vector<128xf32> to vector<1x128xf32>
    %c0_14 = arith.constant 0 : index
    %c1 = arith.constant 1 : index
    %c0_15 = arith.constant 0 : index
    %19 = vector.load %arg5[%c0_14, %c1, %c0_15] : memref<1x2x128xf32, #tpu.memory_space<vmem>>, vector<1x1x128xf32>
    %20 = vector.shape_cast %19 : vector<1x1x128xf32> to vector<1x128xf32>
    %21 = vector.shape_cast %18 : vector<1x128xf32> to vector<1x1x128xf32>
    tpu.vector_store %arg5[%c0_14, %c1, %c0_15], %21 {strides = array<i32>} : memref<1x2x128xf32, #tpu.memory_space<vmem>>, vector<1x1x128xf32>,
    return
  }
  func.func @transform_0(%arg0: i32) -> (i32, i32, i32) {
    %c0_i32 = arith.constant 0 : i32
    %c0_i32_0 = arith.constant 0 : i32
    %c0_i32_1 = arith.constant 0 : i32
    return %arg0, %c0_i32, %c0_i32_0 : i32, i32, i32
  }
  func.func @transform_1(%arg0: i32) -> (i32, i32) {
    %c0_i32 = arith.constant 0 : i32
    %c0_i32_0 = arith.constant 0 : i32
    %c0_i32_1 = arith.constant 0 : i32
    return %c0_i32, %c0_i32_0 : i32, i32
  }
  func.func @transform_2(%arg0: i32) -> (i32, i32) {
    %c0_i32 = arith.constant 0 : i32
    %c0_i32_0 = arith.constant 0 : i32
    %c0_i32_1 = arith.constant 0 : i32
    return %c0_i32, %c0_i32_0 : i32, i32
  }
  func.func @transform_3(%arg0: i32) -> (i32, i32, i32) {
    %c0_i32 = arith.constant 0 : i32
    %c0_i32_0 = arith.constant 0 : i32
    %c0_i32_1 = arith.constant 0 : i32
    return %arg0, %c0_i32, %c0_i32_0 : i32, i32, i32
  }
  func.func @transform_4(%arg0: i32) -> (i32, i32, i32) {
    %c0_i32 = arith.constant 0 : i32
    %c0_i32_0 = arith.constant 0 : i32
    %c0_i32_1 = arith.constant 0 : i32
    return %arg0, %c0_i32, %c0_i32_0 : i32, i32, i32
  }
}

module attributes {stable_mosaic.version = 11 : i64} {
  func.func @kernel(%arg0: i32, %arg1: memref<1x256x128xbf16, #tpu.memory_space<vmem>>, %arg2: memref<1x128xf32, #tpu.memory_space<vmem>>, %arg3: memref<1x128xf32, #tpu.memory_space<vmem>>, %arg4: memref<1x18x18x128xf32, #tpu.memory_space<vmem>>, %arg5: memref<18x18x128xf32, #tpu.memory_space<vmem>>) attributes {dimension_semantics = [#tpu.dimension_semantics<parallel>], iteration_bounds = array<i64: 2>, scalar_prefetch = 0 : i64, scratch_operands = 1 : i64, tpu.core_type = #tpu.core_type<tc>, window_params = [{transform_indices = @transform_0, window_bounds = array<i64: 1, 256, 128>}, {pipeline_mode = #tpu.pipeline_mode<synchronous>, transform_indices = @transform_1, window_bounds = array<i64: 1, 128>}, {pipeline_mode = #tpu.pipeline_mode<synchronous>, transform_indices = @transform_2, window_bounds = array<i64: 1, 128>}, {transform_indices = @transform_3, window_bounds = array<i64: 1, 18, 18, 128>}]} {
    %c0 = arith.constant 0 : index
    %c0_0 = arith.constant 0 : index
    %c0_1 = arith.constant 0 : index
    %0 = vector.load %arg1[%c0, %c0_0, %c0_1] : memref<1x256x128xbf16, #tpu.memory_space<vmem>>, vector<1x256x128xbf16>
    %1 = vector.shape_cast %0 : vector<1x256x128xbf16> to vector<256x128xbf16>
    %c0_2 = arith.constant 0 : index
    %c0_3 = arith.constant 0 : index
    %2 = vector.load %arg2[%c0_2, %c0_3] : memref<1x128xf32, #tpu.memory_space<vmem>>, vector<1x128xf32>
    %3 = arith.extf %1 : vector<256x128xbf16> to vector<256x128xf32>
    %4 = vector.broadcast %2 : vector<1x128xf32> to vector<256x128xf32>
    %5 = arith.mulf %3, %4 : vector<256x128xf32>
    %c0_4 = arith.constant 0 : index
    %c0_5 = arith.constant 0 : index
    %6 = vector.load %arg3[%c0_4, %c0_5] : memref<1x128xf32, #tpu.memory_space<vmem>>, vector<1x128xf32>
    %7 = vector.broadcast %6 : vector<1x128xf32> to vector<256x128xf32>
    %8 = arith.addf %5, %7 : vector<256x128xf32>
    %cst = arith.constant 0.000000e+00 : f32
    %9 = vector.broadcast %cst : f32 to vector<256x128xf32>
    %10 = arith.maximumf %8, %9 : vector<256x128xf32>
    %cst_6 = arith.constant 0.000000e+00 : f32
    %11 = vector.broadcast %cst_6 : f32 to vector<18x18x128xf32>
    %c0_7 = arith.constant 0 : index
    %c0_8 = arith.constant 0 : index
    %c0_9 = arith.constant 0 : index
    %12 = vector.load %arg5[%c0_7, %c0_8, %c0_9] : memref<18x18x128xf32, #tpu.memory_space<vmem>>, vector<18x18x128xf32>
    tpu.vector_store %arg5[%c0_7, %c0_8, %c0_9], %11 {strides = array<i32>} : memref<18x18x128xf32, #tpu.memory_space<vmem>>, vector<18x18x128xf32>,
    %13 = vector.shape_cast %10 : vector<256x128xf32> to vector<16x16x128xf32>
    %c1 = arith.constant 1 : index
    %c1_10 = arith.constant 1 : index
    %c0_11 = arith.constant 0 : index
    %14 = vector.load %arg5[%c1, %c1_10, %c0_11] : memref<18x18x128xf32, #tpu.memory_space<vmem>>, vector<16x16x128xf32>
    tpu.vector_store %arg5[%c1, %c1_10, %c0_11], %13 {strides = array<i32>} : memref<18x18x128xf32, #tpu.memory_space<vmem>>, vector<16x16x128xf32>,
    %c0_12 = arith.constant 0 : index
    %c0_13 = arith.constant 0 : index
    %c0_14 = arith.constant 0 : index
    %15 = vector.load %arg5[%c0_12, %c0_13, %c0_14] : memref<18x18x128xf32, #tpu.memory_space<vmem>>, vector<16x16x128xf32>
    %c0_15 = arith.constant 0 : index
    %c1_16 = arith.constant 1 : index
    %c0_17 = arith.constant 0 : index
    %16 = vector.load %arg5[%c0_15, %c1_16, %c0_17] : memref<18x18x128xf32, #tpu.memory_space<vmem>>, vector<16x16x128xf32>
    %17 = arith.maximumf %15, %16 : vector<16x16x128xf32>
    %c0_18 = arith.constant 0 : index
    %c2 = arith.constant 2 : index
    %c0_19 = arith.constant 0 : index
    %18 = vector.load %arg5[%c0_18, %c2, %c0_19] : memref<18x18x128xf32, #tpu.memory_space<vmem>>, vector<16x16x128xf32>
    %19 = arith.maximumf %17, %18 : vector<16x16x128xf32>
    %c1_20 = arith.constant 1 : index
    %c0_21 = arith.constant 0 : index
    %c0_22 = arith.constant 0 : index
    %20 = vector.load %arg5[%c1_20, %c0_21, %c0_22] : memref<18x18x128xf32, #tpu.memory_space<vmem>>, vector<16x16x128xf32>
    %21 = arith.maximumf %19, %20 : vector<16x16x128xf32>
    %c1_23 = arith.constant 1 : index
    %c1_24 = arith.constant 1 : index
    %c0_25 = arith.constant 0 : index
    %22 = vector.load %arg5[%c1_23, %c1_24, %c0_25] : memref<18x18x128xf32, #tpu.memory_space<vmem>>, vector<16x16x128xf32>
    %23 = arith.maximumf %21, %22 : vector<16x16x128xf32>
    %c1_26 = arith.constant 1 : index
    %c2_27 = arith.constant 2 : index
    %c0_28 = arith.constant 0 : index
    %24 = vector.load %arg5[%c1_26, %c2_27, %c0_28] : memref<18x18x128xf32, #tpu.memory_space<vmem>>, vector<16x16x128xf32>
    %25 = arith.maximumf %23, %24 : vector<16x16x128xf32>
    %c2_29 = arith.constant 2 : index
    %c0_30 = arith.constant 0 : index
    %c0_31 = arith.constant 0 : index
    %26 = vector.load %arg5[%c2_29, %c0_30, %c0_31] : memref<18x18x128xf32, #tpu.memory_space<vmem>>, vector<16x16x128xf32>
    %27 = arith.maximumf %25, %26 : vector<16x16x128xf32>
    %c2_32 = arith.constant 2 : index
    %c1_33 = arith.constant 1 : index
    %c0_34 = arith.constant 0 : index
    %28 = vector.load %arg5[%c2_32, %c1_33, %c0_34] : memref<18x18x128xf32, #tpu.memory_space<vmem>>, vector<16x16x128xf32>
    %29 = arith.maximumf %27, %28 : vector<16x16x128xf32>
    %c2_35 = arith.constant 2 : index
    %c2_36 = arith.constant 2 : index
    %c0_37 = arith.constant 0 : index
    %30 = vector.load %arg5[%c2_35, %c2_36, %c0_37] : memref<18x18x128xf32, #tpu.memory_space<vmem>>, vector<16x16x128xf32>
    %31 = arith.maximumf %29, %30 : vector<16x16x128xf32>
    %cst_38 = arith.constant 0.000000e+00 : f32
    %32 = vector.broadcast %cst_38 : f32 to vector<1x18x18x128xf32>
    %c0_39 = arith.constant 0 : index
    %c0_40 = arith.constant 0 : index
    %c0_41 = arith.constant 0 : index
    %c0_42 = arith.constant 0 : index
    %33 = vector.load %arg4[%c0_39, %c0_40, %c0_41, %c0_42] : memref<1x18x18x128xf32, #tpu.memory_space<vmem>>, vector<1x18x18x128xf32>
    tpu.vector_store %arg4[%c0_39, %c0_40, %c0_41, %c0_42], %32 {strides = array<i32>} : memref<1x18x18x128xf32, #tpu.memory_space<vmem>>, vector<1x18x18x128xf32>,
    %c0_43 = arith.constant 0 : index
    %c1_44 = arith.constant 1 : index
    %c1_45 = arith.constant 1 : index
    %c0_46 = arith.constant 0 : index
    %34 = vector.load %arg4[%c0_43, %c1_44, %c1_45, %c0_46] : memref<1x18x18x128xf32, #tpu.memory_space<vmem>>, vector<1x16x16x128xf32>
    %35 = vector.shape_cast %34 : vector<1x16x16x128xf32> to vector<16x16x128xf32>
    %36 = vector.shape_cast %31 : vector<16x16x128xf32> to vector<1x16x16x128xf32>
    tpu.vector_store %arg4[%c0_43, %c1_44, %c1_45, %c0_46], %36 {strides = array<i32>} : memref<1x18x18x128xf32, #tpu.memory_space<vmem>>, vector<1x16x16x128xf32>,
    return
  }
  func.func @transform_0(%arg0: i32) -> (i32, i32, i32) {
    %c0_i32 = arith.constant 0 : i32
    %c0_i32_0 = arith.constant 0 : i32
    %c0_i32_1 = arith.constant 0 : i32
    return %arg0, %c0_i32, %c0_i32_0 : i32, i32, i32
  }
  func.func @transform_1(%arg0: i32) -> (i32, i32) {
    %c0_i32 = arith.constant 0 : i32
    %c0_i32_0 = arith.constant 0 : i32
    %c0_i32_1 = arith.constant 0 : i32
    return %c0_i32, %c0_i32_0 : i32, i32
  }
  func.func @transform_2(%arg0: i32) -> (i32, i32) {
    %c0_i32 = arith.constant 0 : i32
    %c0_i32_0 = arith.constant 0 : i32
    %c0_i32_1 = arith.constant 0 : i32
    return %c0_i32, %c0_i32_0 : i32, i32
  }
  func.func @transform_3(%arg0: i32) -> (i32, i32, i32, i32) {
    %c0_i32 = arith.constant 0 : i32
    %c0_i32_0 = arith.constant 0 : i32
    %c0_i32_1 = arith.constant 0 : i32
    %c0_i32_2 = arith.constant 0 : i32
    return %arg0, %c0_i32, %c0_i32_0, %c0_i32_1 : i32, i32, i32, i32
  }
}

module attributes {stable_mosaic.version = 11 : i64} {
  func.func @kernel(%arg0: i32, %arg1: memref<1x18x18x128xf32, #tpu.memory_space<vmem>>, %arg2: memref<9x128x128xbf16, #tpu.memory_space<vmem>>, %arg3: memref<1x256x128xbf16, #tpu.memory_space<vmem>>, %arg4: memref<1x2x128xf32, #tpu.memory_space<vmem>>) attributes {dimension_semantics = [#tpu.dimension_semantics<parallel>], iteration_bounds = array<i64: 2>, scalar_prefetch = 0 : i64, scratch_operands = 0 : i64, tpu.core_type = #tpu.core_type<tc>, window_params = [{transform_indices = @transform_0, window_bounds = array<i64: 1, 18, 18, 128>}, {pipeline_mode = #tpu.pipeline_mode<synchronous>, transform_indices = @transform_1, window_bounds = array<i64: 9, 128, 128>}, {transform_indices = @transform_2, window_bounds = array<i64: 1, 256, 128>}, {transform_indices = @transform_3, window_bounds = array<i64: 1, 2, 128>}]} {
    %cst = arith.constant 0.000000e+00 : f32
    %0 = vector.broadcast %cst : f32 to vector<256x128xf32>
    %c0 = arith.constant 0 : index
    %c0_0 = arith.constant 0 : index
    %c0_1 = arith.constant 0 : index
    %c0_2 = arith.constant 0 : index
    %1 = vector.load %arg1[%c0, %c0_0, %c0_1, %c0_2] : memref<1x18x18x128xf32, #tpu.memory_space<vmem>>, vector<1x16x16x128xf32>
    %2 = vector.shape_cast %1 : vector<1x16x16x128xf32> to vector<16x16x128xf32>
    %3 = vector.shape_cast %2 : vector<16x16x128xf32> to vector<256x128xf32>
    %4 = arith.truncf %3 : vector<256x128xf32> to vector<256x128xbf16>
    %c0_3 = arith.constant 0 : index
    %c0_4 = arith.constant 0 : index
    %c0_5 = arith.constant 0 : index
    %5 = vector.load %arg2[%c0_3, %c0_4, %c0_5] : memref<9x128x128xbf16, #tpu.memory_space<vmem>>, vector<1x128x128xbf16>
    %6 = vector.shape_cast %5 : vector<1x128x128xbf16> to vector<128x128xbf16>
    %cst_6 = arith.constant dense<0.000000e+00> : vector<256x128xf32>
    %7 = tpu.matmul %4, %6, %cst_6 {dimension_numbers = #tpu.dot_dimension_numbers<[1], [0], [0], [1], [0, 0, 1, 1], [], []>} : vector<256x128xbf16>, vector<128x128xbf16>, vector<256x128xf32> -> vector<256x128xf32>
    %8 = arith.addf %0, %7 : vector<256x128xf32>
    %c0_7 = arith.constant 0 : index
    %c0_8 = arith.constant 0 : index
    %c1 = arith.constant 1 : index
    %c0_9 = arith.constant 0 : index
    %9 = vector.load %arg1[%c0_7, %c0_8, %c1, %c0_9] : memref<1x18x18x128xf32, #tpu.memory_space<vmem>>, vector<1x16x16x128xf32>
    %10 = vector.shape_cast %9 : vector<1x16x16x128xf32> to vector<16x16x128xf32>
    %11 = vector.shape_cast %10 : vector<16x16x128xf32> to vector<256x128xf32>
    %12 = arith.truncf %11 : vector<256x128xf32> to vector<256x128xbf16>
    %c1_10 = arith.constant 1 : index
    %c0_11 = arith.constant 0 : index
    %c0_12 = arith.constant 0 : index
    %13 = vector.load %arg2[%c1_10, %c0_11, %c0_12] : memref<9x128x128xbf16, #tpu.memory_space<vmem>>, vector<1x128x128xbf16>
    %14 = vector.shape_cast %13 : vector<1x128x128xbf16> to vector<128x128xbf16>
    %cst_13 = arith.constant dense<0.000000e+00> : vector<256x128xf32>
    %15 = tpu.matmul %12, %14, %cst_13 {dimension_numbers = #tpu.dot_dimension_numbers<[1], [0], [0], [1], [0, 0, 1, 1], [], []>} : vector<256x128xbf16>, vector<128x128xbf16>, vector<256x128xf32> -> vector<256x128xf32>
    %16 = arith.addf %8, %15 : vector<256x128xf32>
    %c0_14 = arith.constant 0 : index
    %c0_15 = arith.constant 0 : index
    %c2 = arith.constant 2 : index
    %c0_16 = arith.constant 0 : index
    %17 = vector.load %arg1[%c0_14, %c0_15, %c2, %c0_16] : memref<1x18x18x128xf32, #tpu.memory_space<vmem>>, vector<1x16x16x128xf32>
    %18 = vector.shape_cast %17 : vector<1x16x16x128xf32> to vector<16x16x128xf32>
    %19 = vector.shape_cast %18 : vector<16x16x128xf32> to vector<256x128xf32>
    %20 = arith.truncf %19 : vector<256x128xf32> to vector<256x128xbf16>
    %c2_17 = arith.constant 2 : index
    %c0_18 = arith.constant 0 : index
    %c0_19 = arith.constant 0 : index
    %21 = vector.load %arg2[%c2_17, %c0_18, %c0_19] : memref<9x128x128xbf16, #tpu.memory_space<vmem>>, vector<1x128x128xbf16>
    %22 = vector.shape_cast %21 : vector<1x128x128xbf16> to vector<128x128xbf16>
    %cst_20 = arith.constant dense<0.000000e+00> : vector<256x128xf32>
    %23 = tpu.matmul %20, %22, %cst_20 {dimension_numbers = #tpu.dot_dimension_numbers<[1], [0], [0], [1], [0, 0, 1, 1], [], []>} : vector<256x128xbf16>, vector<128x128xbf16>, vector<256x128xf32> -> vector<256x128xf32>
    %24 = arith.addf %16, %23 : vector<256x128xf32>
    %c0_21 = arith.constant 0 : index
    %c1_22 = arith.constant 1 : index
    %c0_23 = arith.constant 0 : index
    %c0_24 = arith.constant 0 : index
    %25 = vector.load %arg1[%c0_21, %c1_22, %c0_23, %c0_24] : memref<1x18x18x128xf32, #tpu.memory_space<vmem>>, vector<1x16x16x128xf32>
    %26 = vector.shape_cast %25 : vector<1x16x16x128xf32> to vector<16x16x128xf32>
    %27 = vector.shape_cast %26 : vector<16x16x128xf32> to vector<256x128xf32>
    %28 = arith.truncf %27 : vector<256x128xf32> to vector<256x128xbf16>
    %c3 = arith.constant 3 : index
    %c0_25 = arith.constant 0 : index
    %c0_26 = arith.constant 0 : index
    %29 = vector.load %arg2[%c3, %c0_25, %c0_26] : memref<9x128x128xbf16, #tpu.memory_space<vmem>>, vector<1x128x128xbf16>
    %30 = vector.shape_cast %29 : vector<1x128x128xbf16> to vector<128x128xbf16>
    %cst_27 = arith.constant dense<0.000000e+00> : vector<256x128xf32>
    %31 = tpu.matmul %28, %30, %cst_27 {dimension_numbers = #tpu.dot_dimension_numbers<[1], [0], [0], [1], [0, 0, 1, 1], [], []>} : vector<256x128xbf16>, vector<128x128xbf16>, vector<256x128xf32> -> vector<256x128xf32>
    %32 = arith.addf %24, %31 : vector<256x128xf32>
    %c0_28 = arith.constant 0 : index
    %c1_29 = arith.constant 1 : index
    %c1_30 = arith.constant 1 : index
    %c0_31 = arith.constant 0 : index
    %33 = vector.load %arg1[%c0_28, %c1_29, %c1_30, %c0_31] : memref<1x18x18x128xf32, #tpu.memory_space<vmem>>, vector<1x16x16x128xf32>
    %34 = vector.shape_cast %33 : vector<1x16x16x128xf32> to vector<16x16x128xf32>
    %35 = vector.shape_cast %34 : vector<16x16x128xf32> to vector<256x128xf32>
    %36 = arith.truncf %35 : vector<256x128xf32> to vector<256x128xbf16>
    %c4 = arith.constant 4 : index
    %c0_32 = arith.constant 0 : index
    %c0_33 = arith.constant 0 : index
    %37 = vector.load %arg2[%c4, %c0_32, %c0_33] : memref<9x128x128xbf16, #tpu.memory_space<vmem>>, vector<1x128x128xbf16>
    %38 = vector.shape_cast %37 : vector<1x128x128xbf16> to vector<128x128xbf16>
    %cst_34 = arith.constant dense<0.000000e+00> : vector<256x128xf32>
    %39 = tpu.matmul %36, %38, %cst_34 {dimension_numbers = #tpu.dot_dimension_numbers<[1], [0], [0], [1], [0, 0, 1, 1], [], []>} : vector<256x128xbf16>, vector<128x128xbf16>, vector<256x128xf32> -> vector<256x128xf32>
    %40 = arith.addf %32, %39 : vector<256x128xf32>
    %c0_35 = arith.constant 0 : index
    %c1_36 = arith.constant 1 : index
    %c2_37 = arith.constant 2 : index
    %c0_38 = arith.constant 0 : index
    %41 = vector.load %arg1[%c0_35, %c1_36, %c2_37, %c0_38] : memref<1x18x18x128xf32, #tpu.memory_space<vmem>>, vector<1x16x16x128xf32>
    %42 = vector.shape_cast %41 : vector<1x16x16x128xf32> to vector<16x16x128xf32>
    %43 = vector.shape_cast %42 : vector<16x16x128xf32> to vector<256x128xf32>
    %44 = arith.truncf %43 : vector<256x128xf32> to vector<256x128xbf16>
    %c5 = arith.constant 5 : index
    %c0_39 = arith.constant 0 : index
    %c0_40 = arith.constant 0 : index
    %45 = vector.load %arg2[%c5, %c0_39, %c0_40] : memref<9x128x128xbf16, #tpu.memory_space<vmem>>, vector<1x128x128xbf16>
    %46 = vector.shape_cast %45 : vector<1x128x128xbf16> to vector<128x128xbf16>
    %cst_41 = arith.constant dense<0.000000e+00> : vector<256x128xf32>
    %47 = tpu.matmul %44, %46, %cst_41 {dimension_numbers = #tpu.dot_dimension_numbers<[1], [0], [0], [1], [0, 0, 1, 1], [], []>} : vector<256x128xbf16>, vector<128x128xbf16>, vector<256x128xf32> -> vector<256x128xf32>
    %48 = arith.addf %40, %47 : vector<256x128xf32>
    %c0_42 = arith.constant 0 : index
    %c2_43 = arith.constant 2 : index
    %c0_44 = arith.constant 0 : index
    %c0_45 = arith.constant 0 : index
    %49 = vector.load %arg1[%c0_42, %c2_43, %c0_44, %c0_45] : memref<1x18x18x128xf32, #tpu.memory_space<vmem>>, vector<1x16x16x128xf32>
    %50 = vector.shape_cast %49 : vector<1x16x16x128xf32> to vector<16x16x128xf32>
    %51 = vector.shape_cast %50 : vector<16x16x128xf32> to vector<256x128xf32>
    %52 = arith.truncf %51 : vector<256x128xf32> to vector<256x128xbf16>
    %c6 = arith.constant 6 : index
    %c0_46 = arith.constant 0 : index
    %c0_47 = arith.constant 0 : index
    %53 = vector.load %arg2[%c6, %c0_46, %c0_47] : memref<9x128x128xbf16, #tpu.memory_space<vmem>>, vector<1x128x128xbf16>
    %54 = vector.shape_cast %53 : vector<1x128x128xbf16> to vector<128x128xbf16>
    %cst_48 = arith.constant dense<0.000000e+00> : vector<256x128xf32>
    %55 = tpu.matmul %52, %54, %cst_48 {dimension_numbers = #tpu.dot_dimension_numbers<[1], [0], [0], [1], [0, 0, 1, 1], [], []>} : vector<256x128xbf16>, vector<128x128xbf16>, vector<256x128xf32> -> vector<256x128xf32>
    %56 = arith.addf %48, %55 : vector<256x128xf32>
    %c0_49 = arith.constant 0 : index
    %c2_50 = arith.constant 2 : index
    %c1_51 = arith.constant 1 : index
    %c0_52 = arith.constant 0 : index
    %57 = vector.load %arg1[%c0_49, %c2_50, %c1_51, %c0_52] : memref<1x18x18x128xf32, #tpu.memory_space<vmem>>, vector<1x16x16x128xf32>
    %58 = vector.shape_cast %57 : vector<1x16x16x128xf32> to vector<16x16x128xf32>
    %59 = vector.shape_cast %58 : vector<16x16x128xf32> to vector<256x128xf32>
    %60 = arith.truncf %59 : vector<256x128xf32> to vector<256x128xbf16>
    %c7 = arith.constant 7 : index
    %c0_53 = arith.constant 0 : index
    %c0_54 = arith.constant 0 : index
    %61 = vector.load %arg2[%c7, %c0_53, %c0_54] : memref<9x128x128xbf16, #tpu.memory_space<vmem>>, vector<1x128x128xbf16>
    %62 = vector.shape_cast %61 : vector<1x128x128xbf16> to vector<128x128xbf16>
    %cst_55 = arith.constant dense<0.000000e+00> : vector<256x128xf32>
    %63 = tpu.matmul %60, %62, %cst_55 {dimension_numbers = #tpu.dot_dimension_numbers<[1], [0], [0], [1], [0, 0, 1, 1], [], []>} : vector<256x128xbf16>, vector<128x128xbf16>, vector<256x128xf32> -> vector<256x128xf32>
    %64 = arith.addf %56, %63 : vector<256x128xf32>
    %c0_56 = arith.constant 0 : index
    %c2_57 = arith.constant 2 : index
    %c2_58 = arith.constant 2 : index
    %c0_59 = arith.constant 0 : index
    %65 = vector.load %arg1[%c0_56, %c2_57, %c2_58, %c0_59] : memref<1x18x18x128xf32, #tpu.memory_space<vmem>>, vector<1x16x16x128xf32>
    %66 = vector.shape_cast %65 : vector<1x16x16x128xf32> to vector<16x16x128xf32>
    %67 = vector.shape_cast %66 : vector<16x16x128xf32> to vector<256x128xf32>
    %68 = arith.truncf %67 : vector<256x128xf32> to vector<256x128xbf16>
    %c8 = arith.constant 8 : index
    %c0_60 = arith.constant 0 : index
    %c0_61 = arith.constant 0 : index
    %69 = vector.load %arg2[%c8, %c0_60, %c0_61] : memref<9x128x128xbf16, #tpu.memory_space<vmem>>, vector<1x128x128xbf16>
    %70 = vector.shape_cast %69 : vector<1x128x128xbf16> to vector<128x128xbf16>
    %cst_62 = arith.constant dense<0.000000e+00> : vector<256x128xf32>
    %71 = tpu.matmul %68, %70, %cst_62 {dimension_numbers = #tpu.dot_dimension_numbers<[1], [0], [0], [1], [0, 0, 1, 1], [], []>} : vector<256x128xbf16>, vector<128x128xbf16>, vector<256x128xf32> -> vector<256x128xf32>
    %72 = arith.addf %64, %71 : vector<256x128xf32>
    %73 = arith.truncf %72 : vector<256x128xf32> to vector<256x128xbf16>
    %c0_63 = arith.constant 0 : index
    %c0_64 = arith.constant 0 : index
    %c0_65 = arith.constant 0 : index
    %74 = vector.load %arg3[%c0_63, %c0_64, %c0_65] : memref<1x256x128xbf16, #tpu.memory_space<vmem>>, vector<1x256x128xbf16>
    %75 = vector.shape_cast %74 : vector<1x256x128xbf16> to vector<256x128xbf16>
    %76 = vector.shape_cast %73 : vector<256x128xbf16> to vector<1x256x128xbf16>
    tpu.vector_store %arg3[%c0_63, %c0_64, %c0_65], %76 {strides = array<i32>} : memref<1x256x128xbf16, #tpu.memory_space<vmem>>, vector<1x256x128xbf16>,
    %cst_66 = arith.constant dense<0.000000e+00> : vector<128xf32>
    %77 = vector.multi_reduction <add>, %72, %cst_66 [0] : vector<256x128xf32> to vector<128xf32>
    %78 = vector.shape_cast %77 : vector<128xf32> to vector<1x128xf32>
    %c0_67 = arith.constant 0 : index
    %c0_68 = arith.constant 0 : index
    %c0_69 = arith.constant 0 : index
    %79 = vector.load %arg4[%c0_67, %c0_68, %c0_69] : memref<1x2x128xf32, #tpu.memory_space<vmem>>, vector<1x1x128xf32>
    %80 = vector.shape_cast %79 : vector<1x1x128xf32> to vector<1x128xf32>
    %81 = vector.shape_cast %78 : vector<1x128xf32> to vector<1x1x128xf32>
    tpu.vector_store %arg4[%c0_67, %c0_68, %c0_69], %81 {strides = array<i32>} : memref<1x2x128xf32, #tpu.memory_space<vmem>>, vector<1x1x128xf32>,
    %82 = arith.mulf %72, %72 : vector<256x128xf32>
    %cst_70 = arith.constant dense<0.000000e+00> : vector<128xf32>
    %83 = vector.multi_reduction <add>, %82, %cst_70 [0] : vector<256x128xf32> to vector<128xf32>
    %84 = vector.shape_cast %83 : vector<128xf32> to vector<1x128xf32>
    %c0_71 = arith.constant 0 : index
    %c1_72 = arith.constant 1 : index
    %c0_73 = arith.constant 0 : index
    %85 = vector.load %arg4[%c0_71, %c1_72, %c0_73] : memref<1x2x128xf32, #tpu.memory_space<vmem>>, vector<1x1x128xf32>
    %86 = vector.shape_cast %85 : vector<1x1x128xf32> to vector<1x128xf32>
    %87 = vector.shape_cast %84 : vector<1x128xf32> to vector<1x1x128xf32>
    tpu.vector_store %arg4[%c0_71, %c1_72, %c0_73], %87 {strides = array<i32>} : memref<1x2x128xf32, #tpu.memory_space<vmem>>, vector<1x1x128xf32>,
    return
  }
  func.func @transform_0(%arg0: i32) -> (i32, i32, i32, i32) {
    %c0_i32 = arith.constant 0 : i32
    %c0_i32_0 = arith.constant 0 : i32
    %c0_i32_1 = arith.constant 0 : i32
    %c0_i32_2 = arith.constant 0 : i32
    return %arg0, %c0_i32, %c0_i32_0, %c0_i32_1 : i32, i32, i32, i32
  }
  func.func @transform_1(%arg0: i32) -> (i32, i32, i32) {
    %c0_i32 = arith.constant 0 : i32
    %c0_i32_0 = arith.constant 0 : i32
    %c0_i32_1 = arith.constant 0 : i32
    %c0_i32_2 = arith.constant 0 : i32
    return %c0_i32, %c0_i32_0, %c0_i32_1 : i32, i32, i32
  }
  func.func @transform_2(%arg0: i32) -> (i32, i32, i32) {
    %c0_i32 = arith.constant 0 : i32
    %c0_i32_0 = arith.constant 0 : i32
    %c0_i32_1 = arith.constant 0 : i32
    return %arg0, %c0_i32, %c0_i32_0 : i32, i32, i32
  }
  func.func @transform_3(%arg0: i32) -> (i32, i32, i32) {
    %c0_i32 = arith.constant 0 : i32
    %c0_i32_0 = arith.constant 0 : i32
    %c0_i32_1 = arith.constant 0 : i32
    return %arg0, %c0_i32, %c0_i32_0 : i32, i32, i32
  }
}

module attributes {stable_mosaic.version = 11 : i64} {
  func.func @kernel(%arg0: i32, %arg1: memref<1x256x128xbf16, #tpu.memory_space<vmem>>, %arg2: memref<1x128xf32, #tpu.memory_space<vmem>>, %arg3: memref<1x128xf32, #tpu.memory_space<vmem>>, %arg4: memref<9x128x128xbf16, #tpu.memory_space<vmem>>, %arg5: memref<1x256x128xbf16, #tpu.memory_space<vmem>>, %arg6: memref<1x2x128xf32, #tpu.memory_space<vmem>>, %arg7: memref<18x18x128xf32, #tpu.memory_space<vmem>>) attributes {dimension_semantics = [#tpu.dimension_semantics<parallel>], iteration_bounds = array<i64: 2>, scalar_prefetch = 0 : i64, scratch_operands = 1 : i64, tpu.core_type = #tpu.core_type<tc>, window_params = [{transform_indices = @transform_0, window_bounds = array<i64: 1, 256, 128>}, {pipeline_mode = #tpu.pipeline_mode<synchronous>, transform_indices = @transform_1, window_bounds = array<i64: 1, 128>}, {pipeline_mode = #tpu.pipeline_mode<synchronous>, transform_indices = @transform_2, window_bounds = array<i64: 1, 128>}, {pipeline_mode = #tpu.pipeline_mode<synchronous>, transform_indices = @transform_3, window_bounds = array<i64: 9, 128, 128>}, {transform_indices = @transform_4, window_bounds = array<i64: 1, 256, 128>}, {transform_indices = @transform_5, window_bounds = array<i64: 1, 2, 128>}]} {
    %c0 = arith.constant 0 : index
    %c0_0 = arith.constant 0 : index
    %c0_1 = arith.constant 0 : index
    %0 = vector.load %arg1[%c0, %c0_0, %c0_1] : memref<1x256x128xbf16, #tpu.memory_space<vmem>>, vector<1x256x128xbf16>
    %1 = vector.shape_cast %0 : vector<1x256x128xbf16> to vector<256x128xbf16>
    %c0_2 = arith.constant 0 : index
    %c0_3 = arith.constant 0 : index
    %2 = vector.load %arg2[%c0_2, %c0_3] : memref<1x128xf32, #tpu.memory_space<vmem>>, vector<1x128xf32>
    %3 = arith.extf %1 : vector<256x128xbf16> to vector<256x128xf32>
    %4 = vector.broadcast %2 : vector<1x128xf32> to vector<256x128xf32>
    %5 = arith.mulf %3, %4 : vector<256x128xf32>
    %c0_4 = arith.constant 0 : index
    %c0_5 = arith.constant 0 : index
    %6 = vector.load %arg3[%c0_4, %c0_5] : memref<1x128xf32, #tpu.memory_space<vmem>>, vector<1x128xf32>
    %7 = vector.broadcast %6 : vector<1x128xf32> to vector<256x128xf32>
    %8 = arith.addf %5, %7 : vector<256x128xf32>
    %cst = arith.constant 0.000000e+00 : f32
    %9 = vector.broadcast %cst : f32 to vector<256x128xf32>
    %10 = arith.maximumf %8, %9 : vector<256x128xf32>
    %cst_6 = arith.constant 0.000000e+00 : f32
    %11 = vector.broadcast %cst_6 : f32 to vector<18x18x128xf32>
    %c0_7 = arith.constant 0 : index
    %c0_8 = arith.constant 0 : index
    %c0_9 = arith.constant 0 : index
    %12 = vector.load %arg7[%c0_7, %c0_8, %c0_9] : memref<18x18x128xf32, #tpu.memory_space<vmem>>, vector<18x18x128xf32>
    tpu.vector_store %arg7[%c0_7, %c0_8, %c0_9], %11 {strides = array<i32>} : memref<18x18x128xf32, #tpu.memory_space<vmem>>, vector<18x18x128xf32>,
    %13 = vector.shape_cast %10 : vector<256x128xf32> to vector<16x16x128xf32>
    %c1 = arith.constant 1 : index
    %c1_10 = arith.constant 1 : index
    %c0_11 = arith.constant 0 : index
    %14 = vector.load %arg7[%c1, %c1_10, %c0_11] : memref<18x18x128xf32, #tpu.memory_space<vmem>>, vector<16x16x128xf32>
    tpu.vector_store %arg7[%c1, %c1_10, %c0_11], %13 {strides = array<i32>} : memref<18x18x128xf32, #tpu.memory_space<vmem>>, vector<16x16x128xf32>,
    %cst_12 = arith.constant 0.000000e+00 : f32
    %15 = vector.broadcast %cst_12 : f32 to vector<256x128xf32>
    %c0_13 = arith.constant 0 : index
    %c0_14 = arith.constant 0 : index
    %c0_15 = arith.constant 0 : index
    %16 = vector.load %arg7[%c0_13, %c0_14, %c0_15] : memref<18x18x128xf32, #tpu.memory_space<vmem>>, vector<16x16x128xf32>
    %17 = vector.shape_cast %16 : vector<16x16x128xf32> to vector<256x128xf32>
    %18 = arith.truncf %17 : vector<256x128xf32> to vector<256x128xbf16>
    %c0_16 = arith.constant 0 : index
    %c0_17 = arith.constant 0 : index
    %c0_18 = arith.constant 0 : index
    %19 = vector.load %arg4[%c0_16, %c0_17, %c0_18] : memref<9x128x128xbf16, #tpu.memory_space<vmem>>, vector<1x128x128xbf16>
    %20 = vector.shape_cast %19 : vector<1x128x128xbf16> to vector<128x128xbf16>
    %cst_19 = arith.constant dense<0.000000e+00> : vector<256x128xf32>
    %21 = tpu.matmul %18, %20, %cst_19 {dimension_numbers = #tpu.dot_dimension_numbers<[1], [0], [0], [1], [0, 0, 1, 1], [], []>} : vector<256x128xbf16>, vector<128x128xbf16>, vector<256x128xf32> -> vector<256x128xf32>
    %22 = arith.addf %15, %21 : vector<256x128xf32>
    %c0_20 = arith.constant 0 : index
    %c1_21 = arith.constant 1 : index
    %c0_22 = arith.constant 0 : index
    %23 = vector.load %arg7[%c0_20, %c1_21, %c0_22] : memref<18x18x128xf32, #tpu.memory_space<vmem>>, vector<16x16x128xf32>
    %24 = vector.shape_cast %23 : vector<16x16x128xf32> to vector<256x128xf32>
    %25 = arith.truncf %24 : vector<256x128xf32> to vector<256x128xbf16>
    %c1_23 = arith.constant 1 : index
    %c0_24 = arith.constant 0 : index
    %c0_25 = arith.constant 0 : index
    %26 = vector.load %arg4[%c1_23, %c0_24, %c0_25] : memref<9x128x128xbf16, #tpu.memory_space<vmem>>, vector<1x128x128xbf16>
    %27 = vector.shape_cast %26 : vector<1x128x128xbf16> to vector<128x128xbf16>
    %cst_26 = arith.constant dense<0.000000e+00> : vector<256x128xf32>
    %28 = tpu.matmul %25, %27, %cst_26 {dimension_numbers = #tpu.dot_dimension_numbers<[1], [0], [0], [1], [0, 0, 1, 1], [], []>} : vector<256x128xbf16>, vector<128x128xbf16>, vector<256x128xf32> -> vector<256x128xf32>
    %29 = arith.addf %22, %28 : vector<256x128xf32>
    %c0_27 = arith.constant 0 : index
    %c2 = arith.constant 2 : index
    %c0_28 = arith.constant 0 : index
    %30 = vector.load %arg7[%c0_27, %c2, %c0_28] : memref<18x18x128xf32, #tpu.memory_space<vmem>>, vector<16x16x128xf32>
    %31 = vector.shape_cast %30 : vector<16x16x128xf32> to vector<256x128xf32>
    %32 = arith.truncf %31 : vector<256x128xf32> to vector<256x128xbf16>
    %c2_29 = arith.constant 2 : index
    %c0_30 = arith.constant 0 : index
    %c0_31 = arith.constant 0 : index
    %33 = vector.load %arg4[%c2_29, %c0_30, %c0_31] : memref<9x128x128xbf16, #tpu.memory_space<vmem>>, vector<1x128x128xbf16>
    %34 = vector.shape_cast %33 : vector<1x128x128xbf16> to vector<128x128xbf16>
    %cst_32 = arith.constant dense<0.000000e+00> : vector<256x128xf32>
    %35 = tpu.matmul %32, %34, %cst_32 {dimension_numbers = #tpu.dot_dimension_numbers<[1], [0], [0], [1], [0, 0, 1, 1], [], []>} : vector<256x128xbf16>, vector<128x128xbf16>, vector<256x128xf32> -> vector<256x128xf32>
    %36 = arith.addf %29, %35 : vector<256x128xf32>
    %c1_33 = arith.constant 1 : index
    %c0_34 = arith.constant 0 : index
    %c0_35 = arith.constant 0 : index
    %37 = vector.load %arg7[%c1_33, %c0_34, %c0_35] : memref<18x18x128xf32, #tpu.memory_space<vmem>>, vector<16x16x128xf32>
    %38 = vector.shape_cast %37 : vector<16x16x128xf32> to vector<256x128xf32>
    %39 = arith.truncf %38 : vector<256x128xf32> to vector<256x128xbf16>
    %c3 = arith.constant 3 : index
    %c0_36 = arith.constant 0 : index
    %c0_37 = arith.constant 0 : index
    %40 = vector.load %arg4[%c3, %c0_36, %c0_37] : memref<9x128x128xbf16, #tpu.memory_space<vmem>>, vector<1x128x128xbf16>
    %41 = vector.shape_cast %40 : vector<1x128x128xbf16> to vector<128x128xbf16>
    %cst_38 = arith.constant dense<0.000000e+00> : vector<256x128xf32>
    %42 = tpu.matmul %39, %41, %cst_38 {dimension_numbers = #tpu.dot_dimension_numbers<[1], [0], [0], [1], [0, 0, 1, 1], [], []>} : vector<256x128xbf16>, vector<128x128xbf16>, vector<256x128xf32> -> vector<256x128xf32>
    %43 = arith.addf %36, %42 : vector<256x128xf32>
    %c1_39 = arith.constant 1 : index
    %c1_40 = arith.constant 1 : index
    %c0_41 = arith.constant 0 : index
    %44 = vector.load %arg7[%c1_39, %c1_40, %c0_41] : memref<18x18x128xf32, #tpu.memory_space<vmem>>, vector<16x16x128xf32>
    %45 = vector.shape_cast %44 : vector<16x16x128xf32> to vector<256x128xf32>
    %46 = arith.truncf %45 : vector<256x128xf32> to vector<256x128xbf16>
    %c4 = arith.constant 4 : index
    %c0_42 = arith.constant 0 : index
    %c0_43 = arith.constant 0 : index
    %47 = vector.load %arg4[%c4, %c0_42, %c0_43] : memref<9x128x128xbf16, #tpu.memory_space<vmem>>, vector<1x128x128xbf16>
    %48 = vector.shape_cast %47 : vector<1x128x128xbf16> to vector<128x128xbf16>
    %cst_44 = arith.constant dense<0.000000e+00> : vector<256x128xf32>
    %49 = tpu.matmul %46, %48, %cst_44 {dimension_numbers = #tpu.dot_dimension_numbers<[1], [0], [0], [1], [0, 0, 1, 1], [], []>} : vector<256x128xbf16>, vector<128x128xbf16>, vector<256x128xf32> -> vector<256x128xf32>
    %50 = arith.addf %43, %49 : vector<256x128xf32>
    %c1_45 = arith.constant 1 : index
    %c2_46 = arith.constant 2 : index
    %c0_47 = arith.constant 0 : index
    %51 = vector.load %arg7[%c1_45, %c2_46, %c0_47] : memref<18x18x128xf32, #tpu.memory_space<vmem>>, vector<16x16x128xf32>
    %52 = vector.shape_cast %51 : vector<16x16x128xf32> to vector<256x128xf32>
    %53 = arith.truncf %52 : vector<256x128xf32> to vector<256x128xbf16>
    %c5 = arith.constant 5 : index
    %c0_48 = arith.constant 0 : index
    %c0_49 = arith.constant 0 : index
    %54 = vector.load %arg4[%c5, %c0_48, %c0_49] : memref<9x128x128xbf16, #tpu.memory_space<vmem>>, vector<1x128x128xbf16>
    %55 = vector.shape_cast %54 : vector<1x128x128xbf16> to vector<128x128xbf16>
    %cst_50 = arith.constant dense<0.000000e+00> : vector<256x128xf32>
    %56 = tpu.matmul %53, %55, %cst_50 {dimension_numbers = #tpu.dot_dimension_numbers<[1], [0], [0], [1], [0, 0, 1, 1], [], []>} : vector<256x128xbf16>, vector<128x128xbf16>, vector<256x128xf32> -> vector<256x128xf32>
    %57 = arith.addf %50, %56 : vector<256x128xf32>
    %c2_51 = arith.constant 2 : index
    %c0_52 = arith.constant 0 : index
    %c0_53 = arith.constant 0 : index
    %58 = vector.load %arg7[%c2_51, %c0_52, %c0_53] : memref<18x18x128xf32, #tpu.memory_space<vmem>>, vector<16x16x128xf32>
    %59 = vector.shape_cast %58 : vector<16x16x128xf32> to vector<256x128xf32>
    %60 = arith.truncf %59 : vector<256x128xf32> to vector<256x128xbf16>
    %c6 = arith.constant 6 : index
    %c0_54 = arith.constant 0 : index
    %c0_55 = arith.constant 0 : index
    %61 = vector.load %arg4[%c6, %c0_54, %c0_55] : memref<9x128x128xbf16, #tpu.memory_space<vmem>>, vector<1x128x128xbf16>
    %62 = vector.shape_cast %61 : vector<1x128x128xbf16> to vector<128x128xbf16>
    %cst_56 = arith.constant dense<0.000000e+00> : vector<256x128xf32>
    %63 = tpu.matmul %60, %62, %cst_56 {dimension_numbers = #tpu.dot_dimension_numbers<[1], [0], [0], [1], [0, 0, 1, 1], [], []>} : vector<256x128xbf16>, vector<128x128xbf16>, vector<256x128xf32> -> vector<256x128xf32>
    %64 = arith.addf %57, %63 : vector<256x128xf32>
    %c2_57 = arith.constant 2 : index
    %c1_58 = arith.constant 1 : index
    %c0_59 = arith.constant 0 : index
    %65 = vector.load %arg7[%c2_57, %c1_58, %c0_59] : memref<18x18x128xf32, #tpu.memory_space<vmem>>, vector<16x16x128xf32>
    %66 = vector.shape_cast %65 : vector<16x16x128xf32> to vector<256x128xf32>
    %67 = arith.truncf %66 : vector<256x128xf32> to vector<256x128xbf16>
    %c7 = arith.constant 7 : index
    %c0_60 = arith.constant 0 : index
    %c0_61 = arith.constant 0 : index
    %68 = vector.load %arg4[%c7, %c0_60, %c0_61] : memref<9x128x128xbf16, #tpu.memory_space<vmem>>, vector<1x128x128xbf16>
    %69 = vector.shape_cast %68 : vector<1x128x128xbf16> to vector<128x128xbf16>
    %cst_62 = arith.constant dense<0.000000e+00> : vector<256x128xf32>
    %70 = tpu.matmul %67, %69, %cst_62 {dimension_numbers = #tpu.dot_dimension_numbers<[1], [0], [0], [1], [0, 0, 1, 1], [], []>} : vector<256x128xbf16>, vector<128x128xbf16>, vector<256x128xf32> -> vector<256x128xf32>
    %71 = arith.addf %64, %70 : vector<256x128xf32>
    %c2_63 = arith.constant 2 : index
    %c2_64 = arith.constant 2 : index
    %c0_65 = arith.constant 0 : index
    %72 = vector.load %arg7[%c2_63, %c2_64, %c0_65] : memref<18x18x128xf32, #tpu.memory_space<vmem>>, vector<16x16x128xf32>
    %73 = vector.shape_cast %72 : vector<16x16x128xf32> to vector<256x128xf32>
    %74 = arith.truncf %73 : vector<256x128xf32> to vector<256x128xbf16>
    %c8 = arith.constant 8 : index
    %c0_66 = arith.constant 0 : index
    %c0_67 = arith.constant 0 : index
    %75 = vector.load %arg4[%c8, %c0_66, %c0_67] : memref<9x128x128xbf16, #tpu.memory_space<vmem>>, vector<1x128x128xbf16>
    %76 = vector.shape_cast %75 : vector<1x128x128xbf16> to vector<128x128xbf16>
    %cst_68 = arith.constant dense<0.000000e+00> : vector<256x128xf32>
    %77 = tpu.matmul %74, %76, %cst_68 {dimension_numbers = #tpu.dot_dimension_numbers<[1], [0], [0], [1], [0, 0, 1, 1], [], []>} : vector<256x128xbf16>, vector<128x128xbf16>, vector<256x128xf32> -> vector<256x128xf32>
    %78 = arith.addf %71, %77 : vector<256x128xf32>
    %79 = arith.truncf %78 : vector<256x128xf32> to vector<256x128xbf16>
    %c0_69 = arith.constant 0 : index
    %c0_70 = arith.constant 0 : index
    %c0_71 = arith.constant 0 : index
    %80 = vector.load %arg5[%c0_69, %c0_70, %c0_71] : memref<1x256x128xbf16, #tpu.memory_space<vmem>>, vector<1x256x128xbf16>
    %81 = vector.shape_cast %80 : vector<1x256x128xbf16> to vector<256x128xbf16>
    %82 = vector.shape_cast %79 : vector<256x128xbf16> to vector<1x256x128xbf16>
    tpu.vector_store %arg5[%c0_69, %c0_70, %c0_71], %82 {strides = array<i32>} : memref<1x256x128xbf16, #tpu.memory_space<vmem>>, vector<1x256x128xbf16>,
    %cst_72 = arith.constant dense<0.000000e+00> : vector<128xf32>
    %83 = vector.multi_reduction <add>, %78, %cst_72 [0] : vector<256x128xf32> to vector<128xf32>
    %84 = vector.shape_cast %83 : vector<128xf32> to vector<1x128xf32>
    %c0_73 = arith.constant 0 : index
    %c0_74 = arith.constant 0 : index
    %c0_75 = arith.constant 0 : index
    %85 = vector.load %arg6[%c0_73, %c0_74, %c0_75] : memref<1x2x128xf32, #tpu.memory_space<vmem>>, vector<1x1x128xf32>
    %86 = vector.shape_cast %85 : vector<1x1x128xf32> to vector<1x128xf32>
    %87 = vector.shape_cast %84 : vector<1x128xf32> to vector<1x1x128xf32>
    tpu.vector_store %arg6[%c0_73, %c0_74, %c0_75], %87 {strides = array<i32>} : memref<1x2x128xf32, #tpu.memory_space<vmem>>, vector<1x1x128xf32>,
    %88 = arith.mulf %78, %78 : vector<256x128xf32>
    %cst_76 = arith.constant dense<0.000000e+00> : vector<128xf32>
    %89 = vector.multi_reduction <add>, %88, %cst_76 [0] : vector<256x128xf32> to vector<128xf32>
    %90 = vector.shape_cast %89 : vector<128xf32> to vector<1x128xf32>
    %c0_77 = arith.constant 0 : index
    %c1_78 = arith.constant 1 : index
    %c0_79 = arith.constant 0 : index
    %91 = vector.load %arg6[%c0_77, %c1_78, %c0_79] : memref<1x2x128xf32, #tpu.memory_space<vmem>>, vector<1x1x128xf32>
    %92 = vector.shape_cast %91 : vector<1x1x128xf32> to vector<1x128xf32>
    %93 = vector.shape_cast %90 : vector<1x128xf32> to vector<1x1x128xf32>
    tpu.vector_store %arg6[%c0_77, %c1_78, %c0_79], %93 {strides = array<i32>} : memref<1x2x128xf32, #tpu.memory_space<vmem>>, vector<1x1x128xf32>,
    return
  }
  func.func @transform_0(%arg0: i32) -> (i32, i32, i32) {
    %c0_i32 = arith.constant 0 : i32
    %c0_i32_0 = arith.constant 0 : i32
    %c0_i32_1 = arith.constant 0 : i32
    return %arg0, %c0_i32, %c0_i32_0 : i32, i32, i32
  }
  func.func @transform_1(%arg0: i32) -> (i32, i32) {
    %c0_i32 = arith.constant 0 : i32
    %c0_i32_0 = arith.constant 0 : i32
    %c0_i32_1 = arith.constant 0 : i32
    return %c0_i32, %c0_i32_0 : i32, i32
  }
  func.func @transform_2(%arg0: i32) -> (i32, i32) {
    %c0_i32 = arith.constant 0 : i32
    %c0_i32_0 = arith.constant 0 : i32
    %c0_i32_1 = arith.constant 0 : i32
    return %c0_i32, %c0_i32_0 : i32, i32
  }
  func.func @transform_3(%arg0: i32) -> (i32, i32, i32) {
    %c0_i32 = arith.constant 0 : i32
    %c0_i32_0 = arith.constant 0 : i32
    %c0_i32_1 = arith.constant 0 : i32
    %c0_i32_2 = arith.constant 0 : i32
    return %c0_i32, %c0_i32_0, %c0_i32_1 : i32, i32, i32
  }
  func.func @transform_4(%arg0: i32) -> (i32, i32, i32) {
    %c0_i32 = arith.constant 0 : i32
    %c0_i32_0 = arith.constant 0 : i32
    %c0_i32_1 = arith.constant 0 : i32
    return %arg0, %c0_i32, %c0_i32_0 : i32, i32, i32
  }
  func.func @transform_5(%arg0: i32) -> (i32, i32, i32) {
    %c0_i32 = arith.constant 0 : i32
    %c0_i32_0 = arith.constant 0 : i32
    %c0_i32_1 = arith.constant 0 : i32
    return %arg0, %c0_i32, %c0_i32_0 : i32, i32, i32
  }
}

module attributes {stable_mosaic.version = 11 : i64} {
  func.func @kernel(%arg0: i32, %arg1: memref<1x256x128xbf16, #tpu.memory_space<vmem>>, %arg2: memref<1x128xf32, #tpu.memory_space<vmem>>, %arg3: memref<1x128xf32, #tpu.memory_space<vmem>>, %arg4: memref<1x18x18x128xf32, #tpu.memory_space<vmem>>, %arg5: memref<128x128xbf16, #tpu.memory_space<vmem>>, %arg6: memref<1x18x18x128xf32, #tpu.memory_space<vmem>>) attributes {dimension_semantics = [#tpu.dimension_semantics<parallel>], iteration_bounds = array<i64: 2>, scalar_prefetch = 0 : i64, scratch_operands = 0 : i64, tpu.core_type = #tpu.core_type<tc>, window_params = [{transform_indices = @transform_0, window_bounds = array<i64: 1, 256, 128>}, {pipeline_mode = #tpu.pipeline_mode<synchronous>, transform_indices = @transform_1, window_bounds = array<i64: 1, 128>}, {pipeline_mode = #tpu.pipeline_mode<synchronous>, transform_indices = @transform_2, window_bounds = array<i64: 1, 128>}, {transform_indices = @transform_3, window_bounds = array<i64: 1, 18, 18, 128>}, {pipeline_mode = #tpu.pipeline_mode<synchronous>, transform_indices = @transform_4, window_bounds = array<i64: 128, 128>}, {transform_indices = @transform_5, window_bounds = array<i64: 1, 18, 18, 128>}]} {
    %c0 = arith.constant 0 : index
    %c0_0 = arith.constant 0 : index
    %c0_1 = arith.constant 0 : index
    %0 = vector.load %arg1[%c0, %c0_0, %c0_1] : memref<1x256x128xbf16, #tpu.memory_space<vmem>>, vector<1x256x128xbf16>
    %1 = vector.shape_cast %0 : vector<1x256x128xbf16> to vector<256x128xbf16>
    %c0_2 = arith.constant 0 : index
    %c0_3 = arith.constant 0 : index
    %2 = vector.load %arg2[%c0_2, %c0_3] : memref<1x128xf32, #tpu.memory_space<vmem>>, vector<1x128xf32>
    %3 = arith.extf %1 : vector<256x128xbf16> to vector<256x128xf32>
    %4 = vector.broadcast %2 : vector<1x128xf32> to vector<256x128xf32>
    %5 = arith.mulf %3, %4 : vector<256x128xf32>
    %c0_4 = arith.constant 0 : index
    %c0_5 = arith.constant 0 : index
    %6 = vector.load %arg3[%c0_4, %c0_5] : memref<1x128xf32, #tpu.memory_space<vmem>>, vector<1x128xf32>
    %7 = vector.broadcast %6 : vector<1x128xf32> to vector<256x128xf32>
    %8 = arith.addf %5, %7 : vector<256x128xf32>
    %c0_6 = arith.constant 0 : index
    %c1 = arith.constant 1 : index
    %c1_7 = arith.constant 1 : index
    %c0_8 = arith.constant 0 : index
    %9 = vector.load %arg4[%c0_6, %c1, %c1_7, %c0_8] : memref<1x18x18x128xf32, #tpu.memory_space<vmem>>, vector<1x16x16x128xf32>
    %10 = vector.shape_cast %9 : vector<1x16x16x128xf32> to vector<16x16x128xf32>
    %11 = vector.shape_cast %10 : vector<16x16x128xf32> to vector<256x128xf32>
    %12 = arith.truncf %11 : vector<256x128xf32> to vector<256x128xbf16>
    %c0_9 = arith.constant 0 : index
    %c0_10 = arith.constant 0 : index
    %13 = vector.load %arg5[%c0_9, %c0_10] : memref<128x128xbf16, #tpu.memory_space<vmem>>, vector<128x128xbf16>
    %cst = arith.constant dense<0.000000e+00> : vector<256x128xf32>
    %14 = tpu.matmul %12, %13, %cst {dimension_numbers = #tpu.dot_dimension_numbers<[1], [0], [0], [1], [0, 0, 1, 1], [], []>} : vector<256x128xbf16>, vector<128x128xbf16>, vector<256x128xf32> -> vector<256x128xf32>
    %15 = arith.addf %8, %14 : vector<256x128xf32>
    %cst_11 = arith.constant 0.000000e+00 : f32
    %16 = vector.broadcast %cst_11 : f32 to vector<256x128xf32>
    %17 = arith.maximumf %15, %16 : vector<256x128xf32>
    %cst_12 = arith.constant 0.000000e+00 : f32
    %18 = vector.broadcast %cst_12 : f32 to vector<1x18x18x128xf32>
    %c0_13 = arith.constant 0 : index
    %c0_14 = arith.constant 0 : index
    %c0_15 = arith.constant 0 : index
    %c0_16 = arith.constant 0 : index
    %19 = vector.load %arg6[%c0_13, %c0_14, %c0_15, %c0_16] : memref<1x18x18x128xf32, #tpu.memory_space<vmem>>, vector<1x18x18x128xf32>
    tpu.vector_store %arg6[%c0_13, %c0_14, %c0_15, %c0_16], %18 {strides = array<i32>} : memref<1x18x18x128xf32, #tpu.memory_space<vmem>>, vector<1x18x18x128xf32>,
    %20 = vector.shape_cast %17 : vector<256x128xf32> to vector<16x16x128xf32>
    %c0_17 = arith.constant 0 : index
    %c1_18 = arith.constant 1 : index
    %c1_19 = arith.constant 1 : index
    %c0_20 = arith.constant 0 : index
    %21 = vector.load %arg6[%c0_17, %c1_18, %c1_19, %c0_20] : memref<1x18x18x128xf32, #tpu.memory_space<vmem>>, vector<1x16x16x128xf32>
    %22 = vector.shape_cast %21 : vector<1x16x16x128xf32> to vector<16x16x128xf32>
    %23 = vector.shape_cast %20 : vector<16x16x128xf32> to vector<1x16x16x128xf32>
    tpu.vector_store %arg6[%c0_17, %c1_18, %c1_19, %c0_20], %23 {strides = array<i32>} : memref<1x18x18x128xf32, #tpu.memory_space<vmem>>, vector<1x16x16x128xf32>,
    return
  }
  func.func @transform_0(%arg0: i32) -> (i32, i32, i32) {
    %c0_i32 = arith.constant 0 : i32
    %c0_i32_0 = arith.constant 0 : i32
    %c0_i32_1 = arith.constant 0 : i32
    return %arg0, %c0_i32, %c0_i32_0 : i32, i32, i32
  }
  func.func @transform_1(%arg0: i32) -> (i32, i32) {
    %c0_i32 = arith.constant 0 : i32
    %c0_i32_0 = arith.constant 0 : i32
    %c0_i32_1 = arith.constant 0 : i32
    return %c0_i32, %c0_i32_0 : i32, i32
  }
  func.func @transform_2(%arg0: i32) -> (i32, i32) {
    %c0_i32 = arith.constant 0 : i32
    %c0_i32_0 = arith.constant 0 : i32
    %c0_i32_1 = arith.constant 0 : i32
    return %c0_i32, %c0_i32_0 : i32, i32
  }
  func.func @transform_3(%arg0: i32) -> (i32, i32, i32, i32) {
    %c0_i32 = arith.constant 0 : i32
    %c0_i32_0 = arith.constant 0 : i32
    %c0_i32_1 = arith.constant 0 : i32
    %c0_i32_2 = arith.constant 0 : i32
    return %arg0, %c0_i32, %c0_i32_0, %c0_i32_1 : i32, i32, i32, i32
  }
  func.func @transform_4(%arg0: i32) -> (i32, i32) {
    %c0_i32 = arith.constant 0 : i32
    %c0_i32_0 = arith.constant 0 : i32
    %c0_i32_1 = arith.constant 0 : i32
    return %c0_i32, %c0_i32_0 : i32, i32
  }
  func.func @transform_5(%arg0: i32) -> (i32, i32, i32, i32) {
    %c0_i32 = arith.constant 0 : i32
    %c0_i32_0 = arith.constant 0 : i32
    %c0_i32_1 = arith.constant 0 : i32
    %c0_i32_2 = arith.constant 0 : i32
    return %arg0, %c0_i32, %c0_i32_0, %c0_i32_1 : i32, i32, i32, i32
  }
}

module attributes {stable_mosaic.version = 11 : i64} {
  func.func @kernel(%arg0: i32, %arg1: memref<1x256x128xbf16, #tpu.memory_space<vmem>>, %arg2: memref<1x128xf32, #tpu.memory_space<vmem>>, %arg3: memref<1x128xf32, #tpu.memory_space<vmem>>, %arg4: memref<1x18x18x128xf32, #tpu.memory_space<vmem>>, %arg5: memref<128x128xbf16, #tpu.memory_space<vmem>>, %arg6: memref<128x128xf32, #tpu.memory_space<vmem>>, %arg7: memref<1x128xf32, #tpu.memory_space<vmem>>, %arg8: memref<1x1x128xf32, #tpu.memory_space<vmem>>) attributes {dimension_semantics = [#tpu.dimension_semantics<parallel>], iteration_bounds = array<i64: 2>, scalar_prefetch = 0 : i64, scratch_operands = 0 : i64, tpu.core_type = #tpu.core_type<tc>, window_params = [{transform_indices = @transform_0, window_bounds = array<i64: 1, 256, 128>}, {pipeline_mode = #tpu.pipeline_mode<synchronous>, transform_indices = @transform_1, window_bounds = array<i64: 1, 128>}, {pipeline_mode = #tpu.pipeline_mode<synchronous>, transform_indices = @transform_2, window_bounds = array<i64: 1, 128>}, {transform_indices = @transform_3, window_bounds = array<i64: 1, 18, 18, 128>}, {pipeline_mode = #tpu.pipeline_mode<synchronous>, transform_indices = @transform_4, window_bounds = array<i64: 128, 128>}, {pipeline_mode = #tpu.pipeline_mode<synchronous>, transform_indices = @transform_5, window_bounds = array<i64: 128, 128>}, {pipeline_mode = #tpu.pipeline_mode<synchronous>, transform_indices = @transform_6, window_bounds = array<i64: 1, 128>}, {transform_indices = @transform_7, window_bounds = array<i64: 1, 1, 128>}]} {
    %c0 = arith.constant 0 : index
    %c0_0 = arith.constant 0 : index
    %c0_1 = arith.constant 0 : index
    %0 = vector.load %arg1[%c0, %c0_0, %c0_1] : memref<1x256x128xbf16, #tpu.memory_space<vmem>>, vector<1x256x128xbf16>
    %1 = vector.shape_cast %0 : vector<1x256x128xbf16> to vector<256x128xbf16>
    %c0_2 = arith.constant 0 : index
    %c0_3 = arith.constant 0 : index
    %2 = vector.load %arg2[%c0_2, %c0_3] : memref<1x128xf32, #tpu.memory_space<vmem>>, vector<1x128xf32>
    %3 = arith.extf %1 : vector<256x128xbf16> to vector<256x128xf32>
    %4 = vector.broadcast %2 : vector<1x128xf32> to vector<256x128xf32>
    %5 = arith.mulf %3, %4 : vector<256x128xf32>
    %c0_4 = arith.constant 0 : index
    %c0_5 = arith.constant 0 : index
    %6 = vector.load %arg3[%c0_4, %c0_5] : memref<1x128xf32, #tpu.memory_space<vmem>>, vector<1x128xf32>
    %7 = vector.broadcast %6 : vector<1x128xf32> to vector<256x128xf32>
    %8 = arith.addf %5, %7 : vector<256x128xf32>
    %c0_6 = arith.constant 0 : index
    %c1 = arith.constant 1 : index
    %c1_7 = arith.constant 1 : index
    %c0_8 = arith.constant 0 : index
    %9 = vector.load %arg4[%c0_6, %c1, %c1_7, %c0_8] : memref<1x18x18x128xf32, #tpu.memory_space<vmem>>, vector<1x16x16x128xf32>
    %10 = vector.shape_cast %9 : vector<1x16x16x128xf32> to vector<16x16x128xf32>
    %11 = vector.shape_cast %10 : vector<16x16x128xf32> to vector<256x128xf32>
    %12 = arith.truncf %11 : vector<256x128xf32> to vector<256x128xbf16>
    %c0_9 = arith.constant 0 : index
    %c0_10 = arith.constant 0 : index
    %13 = vector.load %arg5[%c0_9, %c0_10] : memref<128x128xbf16, #tpu.memory_space<vmem>>, vector<128x128xbf16>
    %cst = arith.constant dense<0.000000e+00> : vector<256x128xf32>
    %14 = tpu.matmul %12, %13, %cst {dimension_numbers = #tpu.dot_dimension_numbers<[1], [0], [0], [1], [0, 0, 1, 1], [], []>} : vector<256x128xbf16>, vector<128x128xbf16>, vector<256x128xf32> -> vector<256x128xf32>
    %15 = arith.addf %8, %14 : vector<256x128xf32>
    %cst_11 = arith.constant 0.000000e+00 : f32
    %16 = vector.broadcast %cst_11 : f32 to vector<256x128xf32>
    %17 = arith.maximumf %15, %16 : vector<256x128xf32>
    %cst_12 = arith.constant dense<0.000000e+00> : vector<128xf32>
    %18 = vector.multi_reduction <add>, %17, %cst_12 [0] : vector<256x128xf32> to vector<128xf32>
    %19 = vector.shape_cast %18 : vector<128xf32> to vector<1x128xf32>
    %cst_13 = arith.constant 2.560000e+02 : f32
    %20 = vector.broadcast %cst_13 : f32 to vector<1x128xf32>
    %21 = arith.divf %19, %20 : vector<1x128xf32>
    %c0_14 = arith.constant 0 : index
    %c0_15 = arith.constant 0 : index
    %22 = vector.load %arg6[%c0_14, %c0_15] : memref<128x128xf32, #tpu.memory_space<vmem>>, vector<128x128xf32>
    %cst_16 = arith.constant dense<0.000000e+00> : vector<1x128xf32>
    %23 = tpu.matmul %21, %22, %cst_16 {dimension_numbers = #tpu.dot_dimension_numbers<[1], [0], [0], [1], [0, 0, 1, 1], [], []>} : vector<1x128xf32>, vector<128x128xf32>, vector<1x128xf32> -> vector<1x128xf32>
    %c0_17 = arith.constant 0 : index
    %c0_18 = arith.constant 0 : index
    %24 = vector.load %arg7[%c0_17, %c0_18] : memref<1x128xf32, #tpu.memory_space<vmem>>, vector<1x128xf32>
    %25 = arith.addf %23, %24 : vector<1x128xf32>
    %c0_19 = arith.constant 0 : index
    %c0_20 = arith.constant 0 : index
    %c0_21 = arith.constant 0 : index
    %26 = vector.load %arg8[%c0_19, %c0_20, %c0_21] : memref<1x1x128xf32, #tpu.memory_space<vmem>>, vector<1x1x128xf32>
    %27 = vector.shape_cast %26 : vector<1x1x128xf32> to vector<1x128xf32>
    %28 = vector.shape_cast %25 : vector<1x128xf32> to vector<1x1x128xf32>
    tpu.vector_store %arg8[%c0_19, %c0_20, %c0_21], %28 {strides = array<i32>} : memref<1x1x128xf32, #tpu.memory_space<vmem>>, vector<1x1x128xf32>,
    return
  }
  func.func @transform_0(%arg0: i32) -> (i32, i32, i32) {
    %c0_i32 = arith.constant 0 : i32
    %c0_i32_0 = arith.constant 0 : i32
    %c0_i32_1 = arith.constant 0 : i32
    return %arg0, %c0_i32, %c0_i32_0 : i32, i32, i32
  }
  func.func @transform_1(%arg0: i32) -> (i32, i32) {
    %c0_i32 = arith.constant 0 : i32
    %c0_i32_0 = arith.constant 0 : i32
    %c0_i32_1 = arith.constant 0 : i32
    return %c0_i32, %c0_i32_0 : i32, i32
  }
  func.func @transform_2(%arg0: i32) -> (i32, i32) {
    %c0_i32 = arith.constant 0 : i32
    %c0_i32_0 = arith.constant 0 : i32
    %c0_i32_1 = arith.constant 0 : i32
    return %c0_i32, %c0_i32_0 : i32, i32
  }
  func.func @transform_3(%arg0: i32) -> (i32, i32, i32, i32) {
    %c0_i32 = arith.constant 0 : i32
    %c0_i32_0 = arith.constant 0 : i32
    %c0_i32_1 = arith.constant 0 : i32
    %c0_i32_2 = arith.constant 0 : i32
    return %arg0, %c0_i32, %c0_i32_0, %c0_i32_1 : i32, i32, i32, i32
  }
  func.func @transform_4(%arg0: i32) -> (i32, i32) {
    %c0_i32 = arith.constant 0 : i32
    %c0_i32_0 = arith.constant 0 : i32
    %c0_i32_1 = arith.constant 0 : i32
    return %c0_i32, %c0_i32_0 : i32, i32
  }
  func.func @transform_5(%arg0: i32) -> (i32, i32) {
    %c0_i32 = arith.constant 0 : i32
    %c0_i32_0 = arith.constant 0 : i32
    %c0_i32_1 = arith.constant 0 : i32
    return %c0_i32, %c0_i32_0 : i32, i32
  }
  func.func @transform_6(%arg0: i32) -> (i32, i32) {
    %c0_i32 = arith.constant 0 : i32
    %c0_i32_0 = arith.constant 0 : i32
    %c0_i32_1 = arith.constant 0 : i32
    return %c0_i32, %c0_i32_0 : i32, i32
  }
  func.func @transform_7(%arg0: i32) -> (i32, i32, i32) {
    %c0_i32 = arith.constant 0 : i32
    %c0_i32_0 = arith.constant 0 : i32
    %c0_i32_1 = arith.constant 0 : i32
    return %arg0, %c0_i32, %c0_i32_0 : i32, i32, i32
  }
}

</mosaic_0001>

<llo_original>
// kernel: forward.11
$region0: #{forward.11}
  #allocation0 [shape = 'u32[]', space=smem, size = 0x4, offset = 0x4, fixed_abs, tag = 'smem constant byte address 0x4 - core index']
  #allocation1 [shape = 'u32[144,128]{1,0:T(1,128)}', space=vmem, size = 0x12000, scoped, tag = 'internal scratch']
  %s0 = inlined_call_operand.vmem [shape: bf16[2,256,128], index: 0, kind: input, shape index: {}]
  %s1 = inlined_call_operand.vmem [shape: bf16[128,128], index: 1, kind: input, shape index: {}]
  %s2 = inlined_call_operand.vmem [shape: f32[1,128], index: 2, kind: input, shape index: {}]
  %s3 = inlined_call_operand.vmem [shape: bf16[2,256,128], index: 3, kind: output, shape index: {0}]
  %s4 = inlined_call_operand.vmem [shape: f32[2,2,128], index: 4, kind: output, shape index: {1}]
  %5 = xla_tuple %s3, %s4
  %s6 = sld [smem:[#allocation0]]
  $region53: #{forward.11} parent=0
    _
  %s8 = ssub.s32 1, %s6
  %s9 = scalar_select 0, %s8, %s6
  loop: start=0, step=1, limit=4
  $region2: #{forward.11} parent=0 // loop_pre_header
    _
  $region3: #{forward.11} parent=0 // loop_header
    %s11 = sphi 0, %s15
    %p12 = scmp.ge.s32.totalorder %s11, 4
    %s21 = sphi 0, %s23
    %s24 = sphi 0, %s21
    %s25 = sphi 0, %s24
    %s41 = sphi 0, %s25
    %s45 = sphi 0, %s45
    %s47 = sphi 0, %s45
    %s48 = sphi 0, %s47
    %s62 = sphi 0, %s48
    %s66 = sphi 0, %s66
    %s68 = sphi 0, %s66
    %s69 = sphi 0, %s68
    %s83 = sphi 0, %s69
    %s89 = sphi 0, %s91
    %s92 = sphi 0, %s89
    %s93 = sphi 0, %s92
    %s109 = sphi 0, %s93
    %s115 = sphi 0, %s117
    %s118 = sphi 0, %s115
    %s119 = sphi 0, %s118
    %s135 = sphi 0, %s119
  $region4: #{forward.11} parent=0 // loop_header_branch
    %14 = sbr.rel (%p12) target = $region8
  $region5: #{forward.11} parent=0 // loop_body
    %s16 = ssub.s32 %s11, 1
    %s17 = ssub.s32 %s11, 2
    %s18 = sadd.s32 %s11, 1
    %s19 = ssub.s32 %s11, %s18
    %p20 = scmp.eq.s32.totalorder %s19, 0
    %s22 = sadd.s32 %s21, 1
    %s23 = scalar_select %p20, %s21, %s22
    %p26 = pneg %p20
    %p27 = scmp.eq.s32.totalorder %s11, 1
    %p28 = por %p26, %p27
    %p29 = scmp.ne.s32.totalorder %s21, %s24
    %p30 = scmp.eq.s32.totalorder %s11, 0
    %p31 = por %p29, %p30
    %p32 = scmp.ne.s32.totalorder %s21, %s24
    %p33 = scmp.eq.s32.totalorder %s16, 1
    %p34 = por %p32, %p33
    %p35 = scmp.ne.s32.totalorder %s24, %s25
    %p36 = scmp.eq.s32.totalorder %s16, 0
    %p37 = por %p35, %p36
    %p38 = scmp.ne.s32.totalorder %s24, %s25
    %p39 = scmp.eq.s32.totalorder %s17, 1
    %p40 = por %p38, %p39
    %p42 = scmp.ne.s32.totalorder %s25, %s41
    %p43 = scmp.eq.s32.totalorder %s17, 0
    %p44 = por %p42, %p43
    %s46 = sadd.s32 %s45, 1
    %p49 = scmp.eq.s32.totalorder %s11, 1
    %p50 = scmp.ne.s32.totalorder %s45, %s47
    %p51 = scmp.eq.s32.totalorder %s11, 0
    %p52 = por %p50, %p51
    %p53 = scmp.ne.s32.totalorder %s45, %s47
    %p54 = scmp.eq.s32.totalorder %s16, 1
    %p55 = por %p53, %p54
    %p56 = scmp.ne.s32.totalorder %s47, %s48
    %p57 = scmp.eq.s32.totalorder %s16, 0
    %p58 = por %p56, %p57
    %p59 = scmp.ne.s32.totalorder %s47, %s48
    %p60 = scmp.eq.s32.totalorder %s17, 1
    %p61 = por %p59, %p60
    %p63 = scmp.ne.s32.totalorder %s48, %s62
    %p64 = scmp.eq.s32.totalorder %s17, 0
    %p65 = por %p63, %p64
    %s67 = sadd.s32 %s66, 1
    %p70 = scmp.eq.s32.totalorder %s11, 1
    %p71 = scmp.ne.s32.totalorder %s66, %s68
    %p72 = scmp.eq.s32.totalorder %s11, 0
    %p73 = por %p71, %p72
    %p74 = scmp.ne.s32.totalorder %s66, %s68
    %p75 = scmp.eq.s32.totalorder %s16, 1
    %p76 = por %p74, %p75
    %p77 = scmp.ne.s32.totalorder %s68, %s69
    %p78 = scmp.eq.s32.totalorder %s16, 0
    %p79 = por %p77, %p78
    %p80 = scmp.ne.s32.totalorder %s68, %s69
    %p81 = scmp.eq.s32.totalorder %s17, 1
    %p82 = por %p80, %p81
    %p84 = scmp.ne.s32.totalorder %s69, %s83
    %p85 = scmp.eq.s32.totalorder %s17, 0
    %p86 = por %p84, %p85
    %s87 = ssub.s32 %s11, %s18
    %p88 = scmp.eq.s32.totalorder %s87, 0
    %s90 = sadd.s32 %s89, 1
    %s91 = scalar_select %p88, %s89, %s90
    %p94 = pneg %p88
    %p95 = scmp.eq.s32.totalorder %s11, 1
    %p96 = por %p94, %p95
    %p97 = scmp.ne.s32.totalorder %s89, %s92
    %p98 = scmp.eq.s32.totalorder %s11, 0
    %p99 = por %p97, %p98
    %p100 = scmp.ne.s32.totalorder %s89, %s92
    %p101 = scmp.eq.s32.totalorder %s16, 1
    %p102 = por %p100, %p101
    %p103 = scmp.ne.s32.totalorder %s92, %s93
    %p104 = scmp.eq.s32.totalorder %s16, 0
    %p105 = por %p103, %p104
    %p106 = scmp.ne.s32.totalorder %s92, %s93
    %p107 = scmp.eq.s32.totalorder %s17, 1
    %p108 = por %p106, %p107
    %p110 = scmp.ne.s32.totalorder %s93, %s109
    %p111 = scmp.eq.s32.totalorder %s17, 0
    %p112 = por %p110, %p111
    %s113 = ssub.s32 %s11, %s18
    %p114 = scmp.eq.s32.totalorder %s113, 0
    %s116 = sadd.s32 %s115, 1
    %s117 = scalar_select %p114, %s115, %s116
    %p120 = pneg %p114
    %p121 = scmp.eq.s32.totalorder %s11, 1
    %p122 = por %p120, %p121
    %p123 = scmp.ne.s32.totalorder %s115, %s118
    %p124 = scmp.eq.s32.totalorder %s11, 0
    %p125 = por %p123, %p124
    %p126 = scmp.ne.s32.totalorder %s115, %s118
    %p127 = scmp.eq.s32.totalorder %s16, 1
    %p128 = por %p126, %p127
    %p129 = scmp.ne.s32.totalorder %s118, %s119
    %p130 = scmp.eq.s32.totalorder %s16, 0
    %p131 = por %p129, %p130
    %p132 = scmp.ne.s32.totalorder %s118, %s119
    %p133 = scmp.eq.s32.totalorder %s17, 1
    %p134 = por %p132, %p133
    %p136 = scmp.ne.s32.totalorder %s119, %s135
    %p137 = scmp.eq.s32.totalorder %s17, 0
    %p138 = por %p136, %p137
    %p139 = scmp.le.s32.totalorder 1, %s11
    %p140 = scmp.lt.s32.totalorder %s11, 3
    %p141 = pnand %p139, %p140
    %p142 = pneg %p141
    // Predicated region
    $region9: #{forward.11} parent=5 // pred_check
      _
    $region10: #{forward.11} parent=5 // pred_check_branch
      %144 = sbr.rel (%p141) target = $region12
    $region11: #{forward.11} parent=5 // pred_region
      %s145 = ssub.s32 %s11, 1
      // Predicated region
      $region13: #{forward.11} parent=11 // pred_check
        %p146 = pneg %p58
      $region14: #{forward.11} parent=11 // pred_check_branch
        %148 = sbr.rel (%p146) target = $region16
      $region15: #{forward.11} parent=11 // pred_region
        _
      $region16: #{forward.11} parent=11 // pred_fallthru
        _
      // Predicated region
      $region17: #{forward.11} parent=11 // pred_check
        %p149 = pneg %p79
      $region18: #{forward.11} parent=11 // pred_check_branch
        %151 = sbr.rel (%p149) target = $region20
      $region19: #{forward.11} parent=11 // pred_region
        _
      $region20: #{forward.11} parent=11 // pred_fallthru
        _
    $region12: #{forward.11} parent=5 // pred_fallthru
      _
    %p152 = scmp.lt.s32.totalorder %s11, 2
    // Predicated region
    $region21: #{forward.11} parent=5 // pred_check
      %p153 = pneg %p152
    $region22: #{forward.11} parent=5 // pred_check_branch
      %155 = sbr.rel (%p153) target = $region24
    $region23: #{forward.11} parent=5 // pred_region
      // Predicated region
      $region25: #{forward.11} parent=23 // pred_check
        %p156 = pneg %p31
      $region26: #{forward.11} parent=23 // pred_check_branch
        %158 = sbr.rel (%p156) target = $region28
      $region27: #{forward.11} parent=23 // pred_region
        %p159 = scmp.lt.s32.totalorder %s11, 1
        %s160 = scalar_select %p159, %s11, 1
        %s161 = smul.addr %s160, 32
        %s162 = smul.addr %s161, 4
        %s163 = scalar_lea.vmem %s0, %s162
      $region28: #{forward.11} parent=23 // pred_fallthru
        _
    $region24: #{forward.11} parent=5 // pred_fallthru
      _
    %p164 = scmp.le.s32.totalorder 1, %s11
    %p165 = scmp.lt.s32.totalorder %s11, 3
    %p166 = pnand %p164, %p165
    %p167 = pneg %p166
    // Predicated region
    $region29: #{forward.11} parent=5 // pred_check
      _
    $region30: #{forward.11} parent=5 // pred_check_branch
      %169 = sbr.rel (%p166) target = $region32
    $region31: #{forward.11} parent=5 // pred_region
      %s170 = ssub.s32 %s11, 1
      %p171 = scmp.lt.s32.totalorder %s16, 1
      %s172 = scalar_select %p171, %s16, 1
      %s173 = smul.addr %s172, 32
      %s174 = smul.addr %s173, 4
      %s175 = scalar_lea.vmem %s0, %s174
      %p176 = pneg %p37
      %p177 = pneg %p34
      %p178 = pneg %p58
      %p179 = pneg %p55
      %p180 = pneg %p79
      %p181 = pneg %p76
      %p182 = pneg %p105
      %p183 = pneg %p102
      %p184 = scmp.lt.s32.totalorder %s16, 1
      %s185 = scalar_select %p184, %s16, 1
      %s186 = smul.addr %s185, 32
      %s187 = smul.addr %s186, 4
      %s188 = scalar_lea.vmem %s3, %s187
      %p189 = pneg %p131
      %p190 = pneg %p128
      %p191 = scmp.lt.s32.totalorder %s16, 1
      %s192 = scalar_select %p191, %s16, 1
      %s193 = smul.addr %s192, 2
      %s194 = scalar_lea.vmem %s4, %s193
      %p195 = scmp.lt.s32.totalorder %s16, 1
      %s196 = scalar_select %p195, %s16, 1
      %s197 = smul.addr %s196, 32
      %s198 = smul.addr %s197, 4
      %s199 = scalar_lea.vmem %s0, %s198
      %p200 = scmp.lt.s32.totalorder %s16, 1
      %s201 = scalar_select %p200, %s16, 1
      %s202 = smul.addr %s201, 32
      %s203 = smul.addr %s202, 4
      %s204 = scalar_lea.vmem %s3, %s203
      %p205 = scmp.lt.s32.totalorder %s16, 1
      %s206 = scalar_select %p205, %s16, 1
      %s207 = smul.addr %s206, 2
      %s208 = scalar_lea.vmem %s4, %s207
      %v210 = vld [vmem:[%s199] sm:$0xf]
      %v211 = vld [vmem:[%s199 + $0x4] sm:$0xf]
      %v212 = vld [vmem:[%s199 + $0x8] sm:$0xf]
      %v213 = vld [vmem:[%s199 + $0xc] sm:$0xf]
      %v214 = vld [vmem:[%s199 + $0x10] sm:$0xf]
      %v215 = vld [vmem:[%s199 + $0x14] sm:$0xf]
      %v216 = vld [vmem:[%s199 + $0x18] sm:$0xf]
      %v217 = vld [vmem:[%s199 + $0x1c] sm:$0xf]
      %v218 = vld [vmem:[%s199 + $0x20] sm:$0xf]
      %v219 = vld [vmem:[%s199 + $0x24] sm:$0xf]
      %v220 = vld [vmem:[%s199 + $0x28] sm:$0xf]
      %v221 = vld [vmem:[%s199 + $0x2c] sm:$0xf]
      %v222 = vld [vmem:[%s199 + $0x30] sm:$0xf]
      %v223 = vld [vmem:[%s199 + $0x34] sm:$0xf]
      %v224 = vld [vmem:[%s199 + $0x38] sm:$0xf]
      %v225 = vld [vmem:[%s199 + $0x3c] sm:$0xf]
      %v226 = vld [vmem:[%s199 + $0x40] sm:$0xf]
      %v227 = vld [vmem:[%s199 + $0x44] sm:$0xf]
      %v228 = vld [vmem:[%s199 + $0x48] sm:$0xf]
      %v229 = vld [vmem:[%s199 + $0x4c] sm:$0xf]
      %v230 = vld [vmem:[%s199 + $0x50] sm:$0xf]
      %v231 = vld [vmem:[%s199 + $0x54] sm:$0xf]
      %v232 = vld [vmem:[%s199 + $0x58] sm:$0xf]
      %v233 = vld [vmem:[%s199 + $0x5c] sm:$0xf]
      %v234 = vld [vmem:[%s199 + $0x60] sm:$0xf]
      %v235 = vld [vmem:[%s199 + $0x64] sm:$0xf]
      %v236 = vld [vmem:[%s199 + $0x68] sm:$0xf]
      %v237 = vld [vmem:[%s199 + $0x6c] sm:$0xf]
      %v238 = vld [vmem:[%s199 + $0x70] sm:$0xf]
      %v239 = vld [vmem:[%s199 + $0x74] sm:$0xf]
      %v240 = vld [vmem:[%s199 + $0x78] sm:$0xf]
      %v241 = vld [vmem:[%s199 + $0x7c] sm:$0xf]
      %v242 = vld [vmem:[%s1] sm:$0xf]
      %v243 = vld [vmem:[%s1 + $0x4] sm:$0xf]
      %v244 = vld [vmem:[%s1 + $0x8] sm:$0xf]
      %v245 = vld [vmem:[%s1 + $0xc] sm:$0xf]
      %v246 = vld [vmem:[%s1 + $0x10] sm:$0xf]
      %v247 = vld [vmem:[%s1 + $0x14] sm:$0xf]
      %v248 = vld [vmem:[%s1 + $0x18] sm:$0xf]
      %v249 = vld [vmem:[%s1 + $0x1c] sm:$0xf]
      %v250 = vld [vmem:[%s1 + $0x20] sm:$0xf]
      %v251 = vld [vmem:[%s1 + $0x24] sm:$0xf]
      %v252 = vld [vmem:[%s1 + $0x28] sm:$0xf]
      %v253 = vld [vmem:[%s1 + $0x2c] sm:$0xf]
      %v254 = vld [vmem:[%s1 + $0x30] sm:$0xf]
      %v255 = vld [vmem:[%s1 + $0x34] sm:$0xf]
      %v256 = vld [vmem:[%s1 + $0x38] sm:$0xf]
      %v257 = vld [vmem:[%s1 + $0x3c] sm:$0xf]
      %v258 = vld [vmem:[%s2] sm:$0x1]
      %v260 = vlaneseq
      %v261 = vshrl.u32 %v260, 7
      %v262 = vsub.s32 0, %v261
      %v263 = vrot.slane %v258, %v262
      %v297 = vunpack.c.l.b16 %v210
      %v298 = vunpack.c.l.b16 %v211
      %v299 = vunpack.c.l.b16 %v212
      %v300 = vunpack.c.l.b16 %v213
      %v301 = vunpack.c.l.b16 %v214
      %v302 = vunpack.c.l.b16 %v215
      %v303 = vunpack.c.l.b16 %v216
      %v304 = vunpack.c.l.b16 %v217
      %v305 = vunpack.c.l.b16 %v218
      %v306 = vunpack.c.l.b16 %v219
      %v307 = vunpack.c.l.b16 %v220
      %v308 = vunpack.c.l.b16 %v221
      %v309 = vunpack.c.l.b16 %v222
      %v310 = vunpack.c.l.b16 %v223
      %v311 = vunpack.c.l.b16 %v224
      %v312 = vunpack.c.l.b16 %v225
      %v313 = vunpack.c.l.b16 %v226
      %v314 = vunpack.c.l.b16 %v227
      %v315 = vunpack.c.l.b16 %v228
      %v316 = vunpack.c.l.b16 %v229
      %v317 = vunpack.c.l.b16 %v230
      %v318 = vunpack.c.l.b16 %v231
      %v319 = vunpack.c.l.b16 %v232
      %v320 = vunpack.c.l.b16 %v233
      %v321 = vunpack.c.l.b16 %v234
      %v322 = vunpack.c.l.b16 %v235
      %v323 = vunpack.c.l.b16 %v236
      %v324 = vunpack.c.l.b16 %v237
      %v325 = vunpack.c.l.b16 %v238
      %v326 = vunpack.c.l.b16 %v239
      %v327 = vunpack.c.l.b16 %v240
      %v328 = vunpack.c.l.b16 %v241
      %v329 = vpack.c.b16 %v298, %v297
      %v330 = vpack.c.b16 %v300, %v299
      %v331 = vpack.c.b16 %v302, %v301
      %v332 = vpack.c.b16 %v304, %v303
      %v333 = vpack.c.b16 %v306, %v305
      %v334 = vpack.c.b16 %v308, %v307
      %v335 = vpack.c.b16 %v310, %v309
      %v336 = vpack.c.b16 %v312, %v311
      %v337 = vpack.c.b16 %v314, %v313
      %v338 = vpack.c.b16 %v316, %v315
      %v339 = vpack.c.b16 %v318, %v317
      %v340 = vpack.c.b16 %v320, %v319
      %v341 = vpack.c.b16 %v322, %v321
      %v342 = vpack.c.b16 %v324, %v323
      %v343 = vpack.c.b16 %v326, %v325
      %v344 = vpack.c.b16 %v328, %v327
      %v377 = vunpack.c.l.b16 %v242
      %v378 = vunpack.c.l.b16 %v243
      %v379 = vunpack.c.l.b16 %v244
      %v380 = vunpack.c.l.b16 %v245
      %v381 = vunpack.c.l.b16 %v246
      %v382 = vunpack.c.l.b16 %v247
      %v383 = vunpack.c.l.b16 %v248
      %v384 = vunpack.c.l.b16 %v249
      %v385 = vunpack.c.l.b16 %v250
      %v386 = vunpack.c.l.b16 %v251
      %v387 = vunpack.c.l.b16 %v252
      %v388 = vunpack.c.l.b16 %v253
      %v389 = vunpack.c.l.b16 %v254
      %v390 = vunpack.c.l.b16 %v255
      %v391 = vunpack.c.l.b16 %v256
      %v392 = vunpack.c.l.b16 %v257
      %v393 = vpack.c.b16 %v378, %v377
      %v394 = vpack.c.b16 %v380, %v379
      %v395 = vpack.c.b16 %v382, %v381
      %v396 = vpack.c.b16 %v384, %v383
      %v397 = vpack.c.b16 %v386, %v385
      %v398 = vpack.c.b16 %v388, %v387
      %v399 = vpack.c.b16 %v390, %v389
      %v400 = vpack.c.b16 %v392, %v391
      %409 = vmatprep.subr.bf16.mxu0 0
      %410 = vmatpush1.bf16.msra.mxu0 %v400
      %411 = vmatprep.subr.bf16.mxu0 0
      %412 = vmatpush1.bf16.msra.mxu0 %v399
      %413 = vmatprep.subr.bf16.mxu0 0
      %414 = vmatpush1.bf16.msra.mxu0 %v398
      %415 = vmatprep.subr.bf16.mxu0 0
      %416 = vmatpush1.bf16.msra.mxu0 %v397
      %417 = vmatprep.subr.bf16.mxu0 0
      %418 = vmatpush1.bf16.msra.mxu0 %v396
      %419 = vmatprep.subr.bf16.mxu0 0
      %420 = vmatpush1.bf16.msra.mxu0 %v395
      %421 = vmatprep.subr.bf16.mxu0 0
      %422 = vmatpush1.bf16.msra.mxu0 %v394
      %423 = vmatprep.subr.bf16.mxu0 0
      %424 = vmatpush1.bf16.msra.mxu0 %v393
      %425 = vmatprep.subr.bf16.mxu0 0
      %426 = vmatpush2.bf16.msra.mxu0 0
      %427 = vmatprep.subr.bf16.mxu0 0
      %428 = vmatpush2.bf16.msra.mxu0 0
      %429 = vmatprep.subr.bf16.mxu0 0
      %430 = vmatpush2.bf16.msra.mxu0 0
      %431 = vmatprep.subr.bf16.mxu0 0
      %432 = vmatpush2.bf16.msra.mxu0 0
      %433 = vmatprep.subr.bf16.mxu0 0
      %434 = vmatpush2.bf16.msra.mxu0 0
      %435 = vmatprep.subr.bf16.mxu0 0
      %436 = vmatpush2.bf16.msra.mxu0 0
      %437 = vmatprep.subr.bf16.mxu0 0
      %438 = vmatpush2.bf16.msra.mxu0 0
      %439 = vmatprep.subr.bf16.mxu0 0
      %440 = vmatpush2.bf16.msra.mxu0 0
      %441 = vmatprep.mubr.bf16.mxu0 0
      %442 = vmatmul.mubr.bf16.gmra.mxu0 %v329
      %v443 = vpop.f32.mrf.mxu0
      %v444 = vadd.f32 %v263, %v443
      %v445 = vpop.f32.mrf.mxu0
      %v446 = vpop.f32.mrf.mxu0
      %v447 = vadd.f32 %v263, %v446
      %v448 = vpop.f32.mrf.mxu0
      %449 = vmatprep.mubr.bf16.mxu0 0
      %450 = vmatmul.mubr.bf16.gmra.mxu0 %v330
      %v451 = vpop.f32.mrf.mxu0
      %v452 = vadd.f32 %v263, %v451
      %v453 = vpop.f32.mrf.mxu0
      %v454 = vpop.f32.mrf.mxu0
      %v455 = vadd.f32 %v263, %v454
      %v456 = vpop.f32.mrf.mxu0
      %457 = vmatprep.mubr.bf16.mxu0 0
      %458 = vmatmul.mubr.bf16.gmra.mxu0 %v331
      %v459 = vpop.f32.mrf.mxu0
      %v460 = vadd.f32 %v263, %v459
      %v461 = vpop.f32.mrf.mxu0
      %v462 = vpop.f32.mrf.mxu0
      %v463 = vadd.f32 %v263, %v462
      %v464 = vpop.f32.mrf.mxu0
      %465 = vmatprep.mubr.bf16.mxu0 0
      %466 = vmatmul.mubr.bf16.gmra.mxu0 %v332
      %v467 = vpop.f32.mrf.mxu0
      %v468 = vadd.f32 %v263, %v467
      %v469 = vpop.f32.mrf.mxu0
      %v470 = vpop.f32.mrf.mxu0
      %v471 = vadd.f32 %v263, %v470
      %v472 = vpop.f32.mrf.mxu0
      %473 = vmatprep.mubr.bf16.mxu0 0
      %474 = vmatmul.mubr.bf16.gmra.mxu0 %v333
      %v475 = vpop.f32.mrf.mxu0
      %v476 = vadd.f32 %v263, %v475
      %v477 = vpop.f32.mrf.mxu0
      %v478 = vpop.f32.mrf.mxu0
      %v479 = vadd.f32 %v263, %v478
      %v480 = vpop.f32.mrf.mxu0
      %481 = vmatprep.mubr.bf16.mxu0 0
      %482 = vmatmul.mubr.bf16.gmra.mxu0 %v334
      %v483 = vpop.f32.mrf.mxu0
      %v484 = vadd.f32 %v263, %v483
      %v485 = vpop.f32.mrf.mxu0
      %v486 = vpop.f32.mrf.mxu0
      %v487 = vadd.f32 %v263, %v486
      %v488 = vpop.f32.mrf.mxu0
      %489 = vmatprep.mubr.bf16.mxu0 0
      %490 = vmatmul.mubr.bf16.gmra.mxu0 %v335
      %v491 = vpop.f32.mrf.mxu0
      %v492 = vadd.f32 %v263, %v491
      %v493 = vpop.f32.mrf.mxu0
      %v494 = vpop.f32.mrf.mxu0
      %v495 = vadd.f32 %v263, %v494
      %v496 = vpop.f32.mrf.mxu0
      %497 = vmatprep.mubr.bf16.mxu0 0
      %498 = vmatmul.mubr.bf16.gmra.mxu0 %v336
      %v499 = vpop.f32.mrf.mxu0
      %v500 = vadd.f32 %v263, %v499
      %v501 = vpop.f32.mrf.mxu0
      %v502 = vpop.f32.mrf.mxu0
      %v503 = vadd.f32 %v263, %v502
      %v504 = vpop.f32.mrf.mxu0
      %505 = vmatprep.mubr.bf16.mxu0 0
      %506 = vmatmul.mubr.bf16.gmra.mxu0 %v337
      %v507 = vpop.f32.mrf.mxu0
      %v508 = vadd.f32 %v263, %v507
      %v509 = vpop.f32.mrf.mxu0
      %v510 = vpop.f32.mrf.mxu0
      %v511 = vadd.f32 %v263, %v510
      %v512 = vpop.f32.mrf.mxu0
      %513 = vmatprep.mubr.bf16.mxu0 0
      %514 = vmatmul.mubr.bf16.gmra.mxu0 %v338
      %v515 = vpop.f32.mrf.mxu0
      %v516 = vadd.f32 %v263, %v515
      %v517 = vpop.f32.mrf.mxu0
      %v518 = vpop.f32.mrf.mxu0
      %v519 = vadd.f32 %v263, %v518
      %v520 = vpop.f32.mrf.mxu0
      %521 = vmatprep.mubr.bf16.mxu0 0
      %522 = vmatmul.mubr.bf16.gmra.mxu0 %v339
      %v523 = vpop.f32.mrf.mxu0
      %v524 = vadd.f32 %v263, %v523
      %v525 = vpop.f32.mrf.mxu0
      %v526 = vpop.f32.mrf.mxu0
      %v527 = vadd.f32 %v263, %v526
      %v528 = vpop.f32.mrf.mxu0
      %529 = vmatprep.mubr.bf16.mxu0 0
      %530 = vmatmul.mubr.bf16.gmra.mxu0 %v340
      %v531 = vpop.f32.mrf.mxu0
      %v532 = vadd.f32 %v263, %v531
      %v533 = vpop.f32.mrf.mxu0
      %v534 = vpop.f32.mrf.mxu0
      %v535 = vadd.f32 %v263, %v534
      %v536 = vpop.f32.mrf.mxu0
      %537 = vmatprep.mubr.bf16.mxu0 0
      %538 = vmatmul.mubr.bf16.gmra.mxu0 %v341
      %v539 = vpop.f32.mrf.mxu0
      %v540 = vadd.f32 %v263, %v539
      %v541 = vpop.f32.mrf.mxu0
      %v542 = vpop.f32.mrf.mxu0
      %v543 = vadd.f32 %v263, %v542
      %v544 = vpop.f32.mrf.mxu0
      %545 = vmatprep.mubr.bf16.mxu0 0
      %546 = vmatmul.mubr.bf16.gmra.mxu0 %v342
      %v547 = vpop.f32.mrf.mxu0
      %v548 = vadd.f32 %v263, %v547
      %v549 = vpop.f32.mrf.mxu0
      %v550 = vpop.f32.mrf.mxu0
      %v551 = vadd.f32 %v263, %v550
      %v552 = vpop.f32.mrf.mxu0
      %553 = vmatprep.mubr.bf16.mxu0 0
      %554 = vmatmul.mubr.bf16.gmra.mxu0 %v343
      %v555 = vpop.f32.mrf.mxu0
      %v556 = vadd.f32 %v263, %v555
      %v557 = vpop.f32.mrf.mxu0
      %v558 = vpop.f32.mrf.mxu0
      %v559 = vadd.f32 %v263, %v558
      %v560 = vpop.f32.mrf.mxu0
      %561 = vmatprep.mubr.bf16.mxu0 0
      %562 = vmatmul.mubr.bf16.gmra.mxu0 %v344
      %v563 = vpop.f32.mrf.mxu0
      %v564 = vadd.f32 %v263, %v563
      %v565 = vpop.f32.mrf.mxu0
      %v566 = vpop.f32.mrf.mxu0
      %v567 = vadd.f32 %v263, %v566
      %v568 = vpop.f32.mrf.mxu0
      %569 = vdwg.mxu0
      %v570 = vpack.c.bf16 %v447, %v444
      %v571 = vpack.c.bf16 %v455, %v452
      %v572 = vpack.c.bf16 %v463, %v460
      %v573 = vpack.c.bf16 %v471, %v468
      %v574 = vpack.c.bf16 %v479, %v476
      %v575 = vpack.c.bf16 %v487, %v484
      %v576 = vpack.c.bf16 %v495, %v492
      %v577 = vpack.c.bf16 %v503, %v500
      %v578 = vpack.c.bf16 %v511, %v508
      %v579 = vpack.c.bf16 %v519, %v516
      %v580 = vpack.c.bf16 %v527, %v524
      %v581 = vpack.c.bf16 %v535, %v532
      %v582 = vpack.c.bf16 %v543, %v540
      %v583 = vpack.c.bf16 %v551, %v548
      %v584 = vpack.c.bf16 %v559, %v556
      %v585 = vpack.c.bf16 %v567, %v564
      %v602 = vunpack.c.l.b16 %v570
      %v603 = vunpack.c.h.b16 %v570
      %v604 = vunpack.c.l.b16 %v571
      %v605 = vunpack.c.h.b16 %v571
      %v606 = vunpack.c.l.b16 %v572
      %v607 = vunpack.c.h.b16 %v572
      %v608 = vunpack.c.l.b16 %v573
      %v609 = vunpack.c.h.b16 %v573
      %v610 = vunpack.c.l.b16 %v574
      %v611 = vunpack.c.h.b16 %v574
      %v612 = vunpack.c.l.b16 %v575
      %v613 = vunpack.c.h.b16 %v575
      %v614 = vunpack.c.l.b16 %v576
      %v615 = vunpack.c.h.b16 %v576
      %v616 = vunpack.c.l.b16 %v577
      %v617 = vunpack.c.h.b16 %v577
      %v618 = vunpack.c.l.b16 %v578
      %v619 = vunpack.c.h.b16 %v578
      %v620 = vunpack.c.l.b16 %v579
      %v621 = vunpack.c.h.b16 %v579
      %v622 = vunpack.c.l.b16 %v580
      %v623 = vunpack.c.h.b16 %v580
      %v624 = vunpack.c.l.b16 %v581
      %v625 = vunpack.c.h.b16 %v581
      %v626 = vunpack.c.l.b16 %v582
      %v627 = vunpack.c.h.b16 %v582
      %v628 = vunpack.c.l.b16 %v583
      %v629 = vunpack.c.h.b16 %v583
      %v630 = vunpack.c.l.b16 %v584
      %v631 = vunpack.c.h.b16 %v584
      %v632 = vunpack.c.l.b16 %v585
      %v633 = vunpack.c.h.b16 %v585
      %v634 = vpack.c.b16 %v602, %v602
      %v635 = vpack.c.b16 %v603, %v603
      %v636 = vpack.c.b16 %v604, %v604
      %v637 = vpack.c.b16 %v605, %v605
      %v638 = vpack.c.b16 %v606, %v606
      %v639 = vpack.c.b16 %v607, %v607
      %v640 = vpack.c.b16 %v608, %v608
      %v641 = vpack.c.b16 %v609, %v609
      %v642 = vpack.c.b16 %v610, %v610
      %v643 = vpack.c.b16 %v611, %v611
      %v644 = vpack.c.b16 %v612, %v612
      %v645 = vpack.c.b16 %v613, %v613
      %v646 = vpack.c.b16 %v614, %v614
      %v647 = vpack.c.b16 %v615, %v615
      %v648 = vpack.c.b16 %v616, %v616
      %v649 = vpack.c.b16 %v617, %v617
      %v650 = vpack.c.b16 %v618, %v618
      %v651 = vpack.c.b16 %v619, %v619
      %v652 = vpack.c.b16 %v620, %v620
      %v653 = vpack.c.b16 %v621, %v621
      %v654 = vpack.c.b16 %v622, %v622
      %v655 = vpack.c.b16 %v623, %v623
      %v656 = vpack.c.b16 %v624, %v624
      %v657 = vpack.c.b16 %v625, %v625
      %v658 = vpack.c.b16 %v626, %v626
      %v659 = vpack.c.b16 %v627, %v627
      %v660 = vpack.c.b16 %v628, %v628
      %v661 = vpack.c.b16 %v629, %v629
      %v662 = vpack.c.b16 %v630, %v630
      %v663 = vpack.c.b16 %v631, %v631
      %v664 = vpack.c.b16 %v632, %v632
      %v665 = vpack.c.b16 %v633, %v633
      %698 = vst [vmem:[%s204] sm:$0xf] %v634
      %699 = vst [vmem:[%s204 + $0x4] sm:$0xf] %v635
      %700 = vst [vmem:[%s204 + $0x8] sm:$0xf] %v636
      %701 = vst [vmem:[%s204 + $0xc] sm:$0xf] %v637
      %702 = vst [vmem:[%s204 + $0x10] sm:$0xf] %v638
      %703 = vst [vmem:[%s204 + $0x14] sm:$0xf] %v639
      %704 = vst [vmem:[%s204 + $0x18] sm:$0xf] %v640
      %705 = vst [vmem:[%s204 + $0x1c] sm:$0xf] %v641
      %706 = vst [vmem:[%s204 + $0x20] sm:$0xf] %v642
      %707 = vst [vmem:[%s204 + $0x24] sm:$0xf] %v643
      %708 = vst [vmem:[%s204 + $0x28] sm:$0xf] %v644
      %709 = vst [vmem:[%s204 + $0x2c] sm:$0xf] %v645
      %710 = vst [vmem:[%s204 + $0x30] sm:$0xf] %v646
      %711 = vst [vmem:[%s204 + $0x34] sm:$0xf] %v647
      %712 = vst [vmem:[%s204 + $0x38] sm:$0xf] %v648
      %713 = vst [vmem:[%s204 + $0x3c] sm:$0xf] %v649
      %714 = vst [vmem:[%s204 + $0x40] sm:$0xf] %v650
      %715 = vst [vmem:[%s204 + $0x44] sm:$0xf] %v651
      %716 = vst [vmem:[%s204 + $0x48] sm:$0xf] %v652
      %717 = vst [vmem:[%s204 + $0x4c] sm:$0xf] %v653
      %718 = vst [vmem:[%s204 + $0x50] sm:$0xf] %v654
      %719 = vst [vmem:[%s204 + $0x54] sm:$0xf] %v655
      %720 = vst [vmem:[%s204 + $0x58] sm:$0xf] %v656
      %721 = vst [vmem:[%s204 + $0x5c] sm:$0xf] %v657
      %722 = vst [vmem:[%s204 + $0x60] sm:$0xf] %v658
      %723 = vst [vmem:[%s204 + $0x64] sm:$0xf] %v659
      %724 = vst [vmem:[%s204 + $0x68] sm:$0xf] %v660
      %725 = vst [vmem:[%s204 + $0x6c] sm:$0xf] %v661
      %726 = vst [vmem:[%s204 + $0x70] sm:$0xf] %v662
      %727 = vst [vmem:[%s204 + $0x74] sm:$0xf] %v663
      %728 = vst [vmem:[%s204 + $0x78] sm:$0xf] %v664
      %729 = vst [vmem:[%s204 + $0x7c] sm:$0xf] %v665
      %v730 = vadd.f32 %v444, %v447
      %v731 = vadd.f32 %v730, %v452
      %v732 = vadd.f32 %v731, %v455
      %v733 = vadd.f32 %v732, %v460
      %v734 = vadd.f32 %v733, %v463
      %v735 = vadd.f32 %v734, %v468
      %v736 = vadd.f32 %v735, %v471
      %v737 = vadd.f32 %v736, %v476
      %v738 = vadd.f32 %v737, %v479
      %v739 = vadd.f32 %v738, %v484
      %v740 = vadd.f32 %v739, %v487
      %v741 = vadd.f32 %v740, %v492
      %v742 = vadd.f32 %v741, %v495
      %v743 = vadd.f32 %v742, %v500
      %v744 = vadd.f32 %v743, %v503
      %v745 = vadd.f32 %v744, %v508
      %v746 = vadd.f32 %v745, %v511
      %v747 = vadd.f32 %v746, %v516
      %v748 = vadd.f32 %v747, %v519
      %v749 = vadd.f32 %v748, %v524
      %v750 = vadd.f32 %v749, %v527
      %v751 = vadd.f32 %v750, %v532
      %v752 = vadd.f32 %v751, %v535
      %v753 = vadd.f32 %v752, %v540
      %v754 = vadd.f32 %v753, %v543
      %v755 = vadd.f32 %v754, %v548
      %v756 = vadd.f32 %v755, %v551
      %v757 = vadd.f32 %v756, %v556
      %v758 = vadd.f32 %v757, %v559
      %v759 = vadd.f32 %v758, %v564
      %v760 = vadd.f32 %v759, %v567
      %v761 = vrot.slane %v760, 4
      %v762 = vadd.f32 %v760, %v761
      %v763 = vrot.slane %v762, 2
      %v764 = vadd.f32 %v762, %v763
      %v765 = vrot.slane %v764, 1
      %v766 = vadd.f32 %v764, %v765
      %767 = vst [vmem:[%s208] sm:$0x1] %v766
      %v768 = vmul.f32 %v444, %v444
      %v769 = vmul.f32 %v447, %v447
      %v770 = vmul.f32 %v452, %v452
      %v771 = vmul.f32 %v455, %v455
      %v772 = vmul.f32 %v460, %v460
      %v773 = vmul.f32 %v463, %v463
      %v774 = vmul.f32 %v468, %v468
      %v775 = vmul.f32 %v471, %v471
      %v776 = vmul.f32 %v476, %v476
      %v777 = vmul.f32 %v479, %v479
      %v778 = vmul.f32 %v484, %v484
      %v779 = vmul.f32 %v487, %v487
      %v780 = vmul.f32 %v492, %v492
      %v781 = vmul.f32 %v495, %v495
      %v782 = vmul.f32 %v500, %v500
      %v783 = vmul.f32 %v503, %v503
      %v784 = vmul.f32 %v508, %v508
      %v785 = vmul.f32 %v511, %v511
      %v786 = vmul.f32 %v516, %v516
      %v787 = vmul.f32 %v519, %v519
      %v788 = vmul.f32 %v524, %v524
      %v789 = vmul.f32 %v527, %v527
      %v790 = vmul.f32 %v532, %v532
      %v791 = vmul.f32 %v535, %v535
      %v792 = vmul.f32 %v540, %v540
      %v793 = vmul.f32 %v543, %v543
      %v794 = vmul.f32 %v548, %v548
      %v795 = vmul.f32 %v551, %v551
      %v796 = vmul.f32 %v556, %v556
      %v797 = vmul.f32 %v559, %v559
      %v798 = vmul.f32 %v564, %v564
      %v799 = vmul.f32 %v567, %v567
      %v800 = vadd.f32 %v768, %v769
      %v801 = vadd.f32 %v800, %v770
      %v802 = vadd.f32 %v801, %v771
      %v803 = vadd.f32 %v802, %v772
      %v804 = vadd.f32 %v803, %v773
      %v805 = vadd.f32 %v804, %v774
      %v806 = vadd.f32 %v805, %v775
      %v807 = vadd.f32 %v806, %v776
      %v808 = vadd.f32 %v807, %v777
      %v809 = vadd.f32 %v808, %v778
      %v810 = vadd.f32 %v809, %v779
      %v811 = vadd.f32 %v810, %v780
      %v812 = vadd.f32 %v811, %v781
      %v813 = vadd.f32 %v812, %v782
      %v814 = vadd.f32 %v813, %v783
      %v815 = vadd.f32 %v814, %v784
      %v816 = vadd.f32 %v815, %v785
      %v817 = vadd.f32 %v816, %v786
      %v818 = vadd.f32 %v817, %v787
      %v819 = vadd.f32 %v818, %v788
      %v820 = vadd.f32 %v819, %v789
      %v821 = vadd.f32 %v820, %v790
      %v822 = vadd.f32 %v821, %v791
      %v823 = vadd.f32 %v822, %v792
      %v824 = vadd.f32 %v823, %v793
      %v825 = vadd.f32 %v824, %v794
      %v826 = vadd.f32 %v825, %v795
      %v827 = vadd.f32 %v826, %v796
      %v828 = vadd.f32 %v827, %v797
      %v829 = vadd.f32 %v828, %v798
      %v830 = vadd.f32 %v829, %v799
      %v831 = vrot.slane %v830, 4
      %v832 = vadd.f32 %v830, %v831
      %v833 = vrot.slane %v832, 2
      %v834 = vadd.f32 %v832, %v833
      %v835 = vrot.slane %v834, 1
      %v836 = vadd.f32 %v834, %v835
      %837 = vst [vmem:[%s208 + $0x1] sm:$0x1] %v836
      %p838 = scmp.lt.s32.totalorder %s16, 1
      %s839 = scalar_select %p838, %s16, 1
      %s840 = smul.addr %s839, 32
      %s841 = smul.addr %s840, 4
      %s842 = scalar_lea.vmem %s3, %s841
      %p843 = scmp.lt.s32.totalorder %s16, 1
      %s844 = scalar_select %p843, %s16, 1
      %s845 = smul.addr %s844, 2
      %s846 = scalar_lea.vmem %s4, %s845
      // Predicated region
      $region33: #{forward.11} parent=31 // pred_check
        %p847 = pneg %p102
      $region34: #{forward.11} parent=31 // pred_check_branch
        %849 = sbr.rel (%p847) target = $region36
      $region35: #{forward.11} parent=31 // pred_region
        _
      $region36: #{forward.11} parent=31 // pred_fallthru
        _
      // Predicated region
      $region37: #{forward.11} parent=31 // pred_check
        %p850 = pneg %p128
      $region38: #{forward.11} parent=31 // pred_check_branch
        %852 = sbr.rel (%p850) target = $region40
      $region39: #{forward.11} parent=31 // pred_region
        _
      $region40: #{forward.11} parent=31 // pred_fallthru
        _
    $region32: #{forward.11} parent=5 // pred_fallthru
      _
    %p853 = scmp.le.s32.totalorder 2, %s11
    // Predicated region
    $region41: #{forward.11} parent=5 // pred_check
      %p854 = pneg %p853
    $region42: #{forward.11} parent=5 // pred_check_branch
      %856 = sbr.rel (%p854) target = $region44
    $region43: #{forward.11} parent=5 // pred_region
      %s857 = ssub.s32 %s11, 2
      // Predicated region
      $region45: #{forward.11} parent=43 // pred_check
        %p858 = pneg %p108
      $region46: #{forward.11} parent=43 // pred_check_branch
        %860 = sbr.rel (%p858) target = $region48
      $region47: #{forward.11} parent=43 // pred_region
        %p861 = scmp.lt.s32.totalorder %s17, 1
        %s862 = scalar_select %p861, %s17, 1
        %s863 = smul.addr %s862, 32
        %s864 = smul.addr %s863, 4
        %s865 = scalar_lea.vmem %s3, %s864
      $region48: #{forward.11} parent=43 // pred_fallthru
        _
      // Predicated region
      $region49: #{forward.11} parent=43 // pred_check
        %p866 = pneg %p134
      $region50: #{forward.11} parent=43 // pred_check_branch
        %868 = sbr.rel (%p866) target = $region52
      $region51: #{forward.11} parent=43 // pred_region
        %p869 = scmp.lt.s32.totalorder %s17, 1
        %s870 = scalar_select %p869, %s17, 1
        %s871 = smul.addr %s870, 2
        %s872 = scalar_lea.vmem %s4, %s871
      $region52: #{forward.11} parent=43 // pred_fallthru
        _
    $region44: #{forward.11} parent=5 // pred_fallthru
      _
  $region6: #{forward.11} parent=0 // loop_footer
    %s15 = sadd.s32 1, %s11
  $region7: #{forward.11} parent=0 // loop_footer_branch
    %10 = sbr.rel target = $region3
  $region8: #{forward.11} parent=0 // loop_exit
    _

// kernel: forward.12
$region0: #{forward.12}
  #allocation0 [shape = 'u32[]', space=smem, size = 0x4, offset = 0x4, fixed_abs, tag = 'smem constant byte address 0x4 - core index']
  #allocation1 [shape = 'u32[144,128]{1,0:T(1,128)}', space=vmem, size = 0x12000, scoped, tag = 'internal scratch']
  #allocation2 [shape = 'f32[18,18,128]{2,1,0:T(8,128)}', space=vmem, size = 0x36000, scoped, tag = 'scratch operand']
  %s0 = inlined_call_operand.vmem [shape: bf16[2,256,128], index: 0, kind: input, shape index: {}]
  %s1 = inlined_call_operand.vmem [shape: f32[1,128], index: 1, kind: input, shape index: {}]
  %s2 = inlined_call_operand.vmem [shape: f32[1,128], index: 2, kind: input, shape index: {}]
  %s3 = inlined_call_operand.vmem [shape: f32[2,18,18,128], index: 3, kind: output, shape index: {}]
  %s4 = sld [smem:[#allocation0]]
  $region45: #{forward.12} parent=0
    _
  %s6 = ssub.s32 1, %s4
  %s7 = scalar_select 0, %s6, %s4
  loop: start=0, step=1, limit=4
  $region2: #{forward.12} parent=0 // loop_pre_header
    _
  $region3: #{forward.12} parent=0 // loop_header
    %s9 = sphi 0, %s13
    %p10 = scmp.ge.s32.totalorder %s9, 4
    %s19 = sphi 0, %s21
    %s22 = sphi 0, %s19
    %s23 = sphi 0, %s22
    %s39 = sphi 0, %s23
    %s43 = sphi 0, %s43
    %s45 = sphi 0, %s43
    %s46 = sphi 0, %s45
    %s60 = sphi 0, %s46
    %s64 = sphi 0, %s64
    %s66 = sphi 0, %s64
    %s67 = sphi 0, %s66
    %s81 = sphi 0, %s67
    %s87 = sphi 0, %s89
    %s90 = sphi 0, %s87
    %s91 = sphi 0, %s90
    %s107 = sphi 0, %s91
  $region4: #{forward.12} parent=0 // loop_header_branch
    %12 = sbr.rel (%p10) target = $region8
  $region5: #{forward.12} parent=0 // loop_body
    %s14 = ssub.s32 %s9, 1
    %s15 = ssub.s32 %s9, 2
    %s16 = sadd.s32 %s9, 1
    %s17 = ssub.s32 %s9, %s16
    %p18 = scmp.eq.s32.totalorder %s17, 0
    %s20 = sadd.s32 %s19, 1
    %s21 = scalar_select %p18, %s19, %s20
    %p24 = pneg %p18
    %p25 = scmp.eq.s32.totalorder %s9, 1
    %p26 = por %p24, %p25
    %p27 = scmp.ne.s32.totalorder %s19, %s22
    %p28 = scmp.eq.s32.totalorder %s9, 0
    %p29 = por %p27, %p28
    %p30 = scmp.ne.s32.totalorder %s19, %s22
    %p31 = scmp.eq.s32.totalorder %s14, 1
    %p32 = por %p30, %p31
    %p33 = scmp.ne.s32.totalorder %s22, %s23
    %p34 = scmp.eq.s32.totalorder %s14, 0
    %p35 = por %p33, %p34
    %p36 = scmp.ne.s32.totalorder %s22, %s23
    %p37 = scmp.eq.s32.totalorder %s15, 1
    %p38 = por %p36, %p37
    %p40 = scmp.ne.s32.totalorder %s23, %s39
    %p41 = scmp.eq.s32.totalorder %s15, 0
    %p42 = por %p40, %p41
    %s44 = sadd.s32 %s43, 1
    %p47 = scmp.eq.s32.totalorder %s9, 1
    %p48 = scmp.ne.s32.totalorder %s43, %s45
    %p49 = scmp.eq.s32.totalorder %s9, 0
    %p50 = por %p48, %p49
    %p51 = scmp.ne.s32.totalorder %s43, %s45
    %p52 = scmp.eq.s32.totalorder %s14, 1
    %p53 = por %p51, %p52
    %p54 = scmp.ne.s32.totalorder %s45, %s46
    %p55 = scmp.eq.s32.totalorder %s14, 0
    %p56 = por %p54, %p55
    %p57 = scmp.ne.s32.totalorder %s45, %s46
    %p58 = scmp.eq.s32.totalorder %s15, 1
    %p59 = por %p57, %p58
    %p61 = scmp.ne.s32.totalorder %s46, %s60
    %p62 = scmp.eq.s32.totalorder %s15, 0
    %p63 = por %p61, %p62
    %s65 = sadd.s32 %s64, 1
    %p68 = scmp.eq.s32.totalorder %s9, 1
    %p69 = scmp.ne.s32.totalorder %s64, %s66
    %p70 = scmp.eq.s32.totalorder %s9, 0
    %p71 = por %p69, %p70
    %p72 = scmp.ne.s32.totalorder %s64, %s66
    %p73 = scmp.eq.s32.totalorder %s14, 1
    %p74 = por %p72, %p73
    %p75 = scmp.ne.s32.totalorder %s66, %s67
    %p76 = scmp.eq.s32.totalorder %s14, 0
    %p77 = por %p75, %p76
    %p78 = scmp.ne.s32.totalorder %s66, %s67
    %p79 = scmp.eq.s32.totalorder %s15, 1
    %p80 = por %p78, %p79
    %p82 = scmp.ne.s32.totalorder %s67, %s81
    %p83 = scmp.eq.s32.totalorder %s15, 0
    %p84 = por %p82, %p83
    %s85 = ssub.s32 %s9, %s16
    %p86 = scmp.eq.s32.totalorder %s85, 0
    %s88 = sadd.s32 %s87, 1
    %s89 = scalar_select %p86, %s87, %s88
    %p92 = pneg %p86
    %p93 = scmp.eq.s32.totalorder %s9, 1
    %p94 = por %p92, %p93
    %p95 = scmp.ne.s32.totalorder %s87, %s90
    %p96 = scmp.eq.s32.totalorder %s9, 0
    %p97 = por %p95, %p96
    %p98 = scmp.ne.s32.totalorder %s87, %s90
    %p99 = scmp.eq.s32.totalorder %s14, 1
    %p100 = por %p98, %p99
    %p101 = scmp.ne.s32.totalorder %s90, %s91
    %p102 = scmp.eq.s32.totalorder %s14, 0
    %p103 = por %p101, %p102
    %p104 = scmp.ne.s32.totalorder %s90, %s91
    %p105 = scmp.eq.s32.totalorder %s15, 1
    %p106 = por %p104, %p105
    %p108 = scmp.ne.s32.totalorder %s91, %s107
    %p109 = scmp.eq.s32.totalorder %s15, 0
    %p110 = por %p108, %p109
    %p111 = scmp.le.s32.totalorder 1, %s9
    %p112 = scmp.lt.s32.totalorder %s9, 3
    %p113 = pnand %p111, %p112
    %p114 = pneg %p113
    // Predicated region
    $region9: #{forward.12} parent=5 // pred_check
      _
    $region10: #{forward.12} parent=5 // pred_check_branch
      %116 = sbr.rel (%p113) target = $region12
    $region11: #{forward.12} parent=5 // pred_region
      %s117 = ssub.s32 %s9, 1
      // Predicated region
      $region13: #{forward.12} parent=11 // pred_check
        %p118 = pneg %p56
      $region14: #{forward.12} parent=11 // pred_check_branch
        %120 = sbr.rel (%p118) target = $region16
      $region15: #{forward.12} parent=11 // pred_region
        _
      $region16: #{forward.12} parent=11 // pred_fallthru
        _
      // Predicated region
      $region17: #{forward.12} parent=11 // pred_check
        %p121 = pneg %p77
      $region18: #{forward.12} parent=11 // pred_check_branch
        %123 = sbr.rel (%p121) target = $region20
      $region19: #{forward.12} parent=11 // pred_region
        _
      $region20: #{forward.12} parent=11 // pred_fallthru
        _
    $region12: #{forward.12} parent=5 // pred_fallthru
      _
    %p124 = scmp.lt.s32.totalorder %s9, 2
    // Predicated region
    $region21: #{forward.12} parent=5 // pred_check
      %p125 = pneg %p124
    $region22: #{forward.12} parent=5 // pred_check_branch
      %127 = sbr.rel (%p125) target = $region24
    $region23: #{forward.12} parent=5 // pred_region
      // Predicated region
      $region25: #{forward.12} parent=23 // pred_check
        %p128 = pneg %p29
      $region26: #{forward.12} parent=23 // pred_check_branch
        %130 = sbr.rel (%p128) target = $region28
      $region27: #{forward.12} parent=23 // pred_region
        %p131 = scmp.lt.s32.totalorder %s9, 1
        %s132 = scalar_select %p131, %s9, 1
        %s133 = smul.addr %s132, 32
        %s134 = smul.addr %s133, 4
        %s135 = scalar_lea.vmem %s0, %s134
      $region28: #{forward.12} parent=23 // pred_fallthru
        _
    $region24: #{forward.12} parent=5 // pred_fallthru
      _
    %p136 = scmp.le.s32.totalorder 1, %s9
    %p137 = scmp.lt.s32.totalorder %s9, 3
    %p138 = pnand %p136, %p137
    %p139 = pneg %p138
    // Predicated region
    $region29: #{forward.12} parent=5 // pred_check
      _
    $region30: #{forward.12} parent=5 // pred_check_branch
      %141 = sbr.rel (%p138) target = $region32
    $region31: #{forward.12} parent=5 // pred_region
      %s142 = ssub.s32 %s9, 1
      %p143 = scmp.lt.s32.totalorder %s14, 1
      %s144 = scalar_select %p143, %s14, 1
      %s145 = smul.addr %s144, 32
      %s146 = smul.addr %s145, 4
      %s147 = scalar_lea.vmem %s0, %s146
      %p148 = pneg %p35
      %p149 = pneg %p32
      %p150 = pneg %p56
      %p151 = pneg %p53
      %p152 = pneg %p77
      %p153 = pneg %p74
      %p154 = pneg %p103
      %p155 = pneg %p100
      %p156 = scmp.lt.s32.totalorder %s14, 1
      %s157 = scalar_select %p156, %s14, 1
      %s158 = smul.addr %s157, 54
      %s159 = smul.addr %s158, 8
      %s160 = scalar_lea.vmem %s3, %s159
      %p161 = scmp.lt.s32.totalorder %s14, 1
      %s162 = scalar_select %p161, %s14, 1
      %s163 = smul.addr %s162, 32
      %s164 = smul.addr %s163, 4
      %s165 = scalar_lea.vmem %s0, %s164
      %p166 = scmp.lt.s32.totalorder %s14, 1
      %s167 = scalar_select %p166, %s14, 1
      %s168 = smul.addr %s167, 54
      %s169 = smul.addr %s168, 8
      %s170 = scalar_lea.vmem %s3, %s169
      %v171 = vld [vmem:[%s165] sm:$0xf]
      %v172 = vld [vmem:[%s165 + $0x4] sm:$0xf]
      %v173 = vld [vmem:[%s165 + $0x8] sm:$0xf]
      %v174 = vld [vmem:[%s165 + $0xc] sm:$0xf]
      %v175 = vld [vmem:[%s165 + $0x10] sm:$0xf]
      %v176 = vld [vmem:[%s165 + $0x14] sm:$0xf]
      %v177 = vld [vmem:[%s165 + $0x18] sm:$0xf]
      %v178 = vld [vmem:[%s165 + $0x1c] sm:$0xf]
      %v179 = vld [vmem:[%s165 + $0x20] sm:$0xf]
      %v180 = vld [vmem:[%s165 + $0x24] sm:$0xf]
      %v181 = vld [vmem:[%s165 + $0x28] sm:$0xf]
      %v182 = vld [vmem:[%s165 + $0x2c] sm:$0xf]
      %v183 = vld [vmem:[%s165 + $0x30] sm:$0xf]
      %v184 = vld [vmem:[%s165 + $0x34] sm:$0xf]
      %v185 = vld [vmem:[%s165 + $0x38] sm:$0xf]
      %v186 = vld [vmem:[%s165 + $0x3c] sm:$0xf]
      %v187 = vld [vmem:[%s165 + $0x40] sm:$0xf]
      %v188 = vld [vmem:[%s165 + $0x44] sm:$0xf]
      %v189 = vld [vmem:[%s165 + $0x48] sm:$0xf]
      %v190 = vld [vmem:[%s165 + $0x4c] sm:$0xf]
      %v191 = vld [vmem:[%s165 + $0x50] sm:$0xf]
      %v192 = vld [vmem:[%s165 + $0x54] sm:$0xf]
      %v193 = vld [vmem:[%s165 + $0x58] sm:$0xf]
      %v194 = vld [vmem:[%s165 + $0x5c] sm:$0xf]
      %v195 = vld [vmem:[%s165 + $0x60] sm:$0xf]
      %v196 = vld [vmem:[%s165 + $0x64] sm:$0xf]
      %v197 = vld [vmem:[%s165 + $0x68] sm:$0xf]
      %v198 = vld [vmem:[%s165 + $0x6c] sm:$0xf]
      %v199 = vld [vmem:[%s165 + $0x70] sm:$0xf]
      %v200 = vld [vmem:[%s165 + $0x74] sm:$0xf]
      %v201 = vld [vmem:[%s165 + $0x78] sm:$0xf]
      %v202 = vld [vmem:[%s165 + $0x7c] sm:$0xf]
      %v203 = vld [vmem:[%s1] sm:$0x1]
      %v204 = vunpack.c.l.bf16 %v171
      %v205 = vunpack.c.l.bf16 %v172
      %v206 = vunpack.c.l.bf16 %v173
      %v207 = vunpack.c.l.bf16 %v174
      %v208 = vunpack.c.l.bf16 %v175
      %v209 = vunpack.c.l.bf16 %v176
      %v210 = vunpack.c.l.bf16 %v177
      %v211 = vunpack.c.l.bf16 %v178
      %v212 = vunpack.c.l.bf16 %v179
      %v213 = vunpack.c.l.bf16 %v180
      %v214 = vunpack.c.l.bf16 %v181
      %v215 = vunpack.c.l.bf16 %v182
      %v216 = vunpack.c.l.bf16 %v183
      %v217 = vunpack.c.l.bf16 %v184
      %v218 = vunpack.c.l.bf16 %v185
      %v219 = vunpack.c.l.bf16 %v186
      %v220 = vunpack.c.l.bf16 %v187
      %v221 = vunpack.c.l.bf16 %v188
      %v222 = vunpack.c.l.bf16 %v189
      %v223 = vunpack.c.l.bf16 %v190
      %v224 = vunpack.c.l.bf16 %v191
      %v225 = vunpack.c.l.bf16 %v192
      %v226 = vunpack.c.l.bf16 %v193
      %v227 = vunpack.c.l.bf16 %v194
      %v228 = vunpack.c.l.bf16 %v195
      %v229 = vunpack.c.l.bf16 %v196
      %v230 = vunpack.c.l.bf16 %v197
      %v231 = vunpack.c.l.bf16 %v198
      %v232 = vunpack.c.l.bf16 %v199
      %v233 = vunpack.c.l.bf16 %v200
      %v234 = vunpack.c.l.bf16 %v201
      %v235 = vunpack.c.l.bf16 %v202
      %v237 = vlaneseq
      %v238 = vshrl.u32 %v237, 7
      %v239 = vsub.s32 0, %v238
      %v240 = vrot.slane %v203, %v239
      %v242 = vmul.f32 %v204, %v240
      %v243 = vmul.f32 %v205, %v240
      %v244 = vmul.f32 %v206, %v240
      %v245 = vmul.f32 %v207, %v240
      %v246 = vmul.f32 %v208, %v240
      %v247 = vmul.f32 %v209, %v240
      %v248 = vmul.f32 %v210, %v240
      %v249 = vmul.f32 %v211, %v240
      %v250 = vmul.f32 %v212, %v240
      %v251 = vmul.f32 %v213, %v240
      %v252 = vmul.f32 %v214, %v240
      %v253 = vmul.f32 %v215, %v240
      %v254 = vmul.f32 %v216, %v240
      %v255 = vmul.f32 %v217, %v240
      %v256 = vmul.f32 %v218, %v240
      %v257 = vmul.f32 %v219, %v240
      %v258 = vmul.f32 %v220, %v240
      %v259 = vmul.f32 %v221, %v240
      %v260 = vmul.f32 %v222, %v240
      %v261 = vmul.f32 %v223, %v240
      %v262 = vmul.f32 %v224, %v240
      %v263 = vmul.f32 %v225, %v240
      %v264 = vmul.f32 %v226, %v240
      %v265 = vmul.f32 %v227, %v240
      %v266 = vmul.f32 %v228, %v240
      %v267 = vmul.f32 %v229, %v240
      %v268 = vmul.f32 %v230, %v240
      %v269 = vmul.f32 %v231, %v240
      %v270 = vmul.f32 %v232, %v240
      %v271 = vmul.f32 %v233, %v240
      %v272 = vmul.f32 %v234, %v240
      %v273 = vmul.f32 %v235, %v240
      %v274 = vld [vmem:[%s2] sm:$0x1]
      %v276 = vlaneseq
      %v277 = vshrl.u32 %v276, 7
      %v278 = vsub.s32 0, %v277
      %v279 = vrot.slane %v274, %v278
      %v281 = vadd.f32 %v242, %v279
      %v282 = vadd.f32 %v243, %v279
      %v283 = vadd.f32 %v244, %v279
      %v284 = vadd.f32 %v245, %v279
      %v285 = vadd.f32 %v246, %v279
      %v286 = vadd.f32 %v247, %v279
      %v287 = vadd.f32 %v248, %v279
      %v288 = vadd.f32 %v249, %v279
      %v289 = vadd.f32 %v250, %v279
      %v290 = vadd.f32 %v251, %v279
      %v291 = vadd.f32 %v252, %v279
      %v292 = vadd.f32 %v253, %v279
      %v293 = vadd.f32 %v254, %v279
      %v294 = vadd.f32 %v255, %v279
      %v295 = vadd.f32 %v256, %v279
      %v296 = vadd.f32 %v257, %v279
      %v297 = vadd.f32 %v258, %v279
      %v298 = vadd.f32 %v259, %v279
      %v299 = vadd.f32 %v260, %v279
      %v300 = vadd.f32 %v261, %v279
      %v301 = vadd.f32 %v262, %v279
      %v302 = vadd.f32 %v263, %v279
      %v303 = vadd.f32 %v264, %v279
      %v304 = vadd.f32 %v265, %v279
      %v305 = vadd.f32 %v266, %v279
      %v306 = vadd.f32 %v267, %v279
      %v307 = vadd.f32 %v268, %v279
      %v308 = vadd.f32 %v269, %v279
      %v309 = vadd.f32 %v270, %v279
      %v310 = vadd.f32 %v271, %v279
      %v311 = vadd.f32 %v272, %v279
      %v312 = vadd.f32 %v273, %v279
      %v313 = vmax.f32 %v281, 0.0
      %v314 = vmax.f32 %v282, 0.0
      %v315 = vmax.f32 %v283, 0.0
      %v316 = vmax.f32 %v284, 0.0
      %v317 = vmax.f32 %v285, 0.0
      %v318 = vmax.f32 %v286, 0.0
      %v319 = vmax.f32 %v287, 0.0
      %v320 = vmax.f32 %v288, 0.0
      %v321 = vmax.f32 %v289, 0.0
      %v322 = vmax.f32 %v290, 0.0
      %v323 = vmax.f32 %v291, 0.0
      %v324 = vmax.f32 %v292, 0.0
      %v325 = vmax.f32 %v293, 0.0
      %v326 = vmax.f32 %v294, 0.0
      %v327 = vmax.f32 %v295, 0.0
      %v328 = vmax.f32 %v296, 0.0
      %v329 = vmax.f32 %v297, 0.0
      %v330 = vmax.f32 %v298, 0.0
      %v331 = vmax.f32 %v299, 0.0
      %v332 = vmax.f32 %v300, 0.0
      %v333 = vmax.f32 %v301, 0.0
      %v334 = vmax.f32 %v302, 0.0
      %v335 = vmax.f32 %v303, 0.0
      %v336 = vmax.f32 %v304, 0.0
      %v337 = vmax.f32 %v305, 0.0
      %v338 = vmax.f32 %v306, 0.0
      %v339 = vmax.f32 %v307, 0.0
      %v340 = vmax.f32 %v308, 0.0
      %v341 = vmax.f32 %v309, 0.0
      %v342 = vmax.f32 %v310, 0.0
      %v343 = vmax.f32 %v311, 0.0
      %v344 = vmax.f32 %v312, 0.0
      %345 = vst [vmem:[#allocation2] sm:$0xff] 0.0
      %346 = vst [vmem:[#allocation2 + $0x8] sm:$0xff] 0.0
      %347 = vst [vmem:[#allocation2 + $0x10] sm:$0x3] 0.0
      %348 = vst [vmem:[#allocation2 + $0x18] sm:$0xff] 0.0
      %349 = vst [vmem:[#allocation2 + $0x20] sm:$0xff] 0.0
      %350 = vst [vmem:[#allocation2 + $0x28] sm:$0x3] 0.0
      %351 = vst [vmem:[#allocation2 + $0x30] sm:$0xff] 0.0
      %352 = vst [vmem:[#allocation2 + $0x38] sm:$0xff] 0.0
      %353 = vst [vmem:[#allocation2 + $0x40] sm:$0x3] 0.0
      %354 = vst [vmem:[#allocation2 + $0x48] sm:$0xff] 0.0
      %355 = vst [vmem:[#allocation2 + $0x50] sm:$0xff] 0.0
      %356 = vst [vmem:[#allocation2 + $0x58] sm:$0x3] 0.0
      %357 = vst [vmem:[#allocation2 + $0x60] sm:$0xff] 0.0
      %358 = vst [vmem:[#allocation2 + $0x68] sm:$0xff] 0.0
      %359 = vst [vmem:[#allocation2 + $0x70] sm:$0x3] 0.0
      %360 = vst [vmem:[#allocation2 + $0x78] sm:$0xff] 0.0
      %361 = vst [vmem:[#allocation2 + $0x80] sm:$0xff] 0.0
      %362 = vst [vmem:[#allocation2 + $0x88] sm:$0x3] 0.0
      %363 = vst [vmem:[#allocation2 + $0x90] sm:$0xff] 0.0
      %364 = vst [vmem:[#allocation2 + $0x98] sm:$0xff] 0.0
      %365 = vst [vmem:[#allocation2 + $0xa0] sm:$0x3] 0.0
      %366 = vst [vmem:[#allocation2 + $0xa8] sm:$0xff] 0.0
      %367 = vst [vmem:[#allocation2 + $0xb0] sm:$0xff] 0.0
      %368 = vst [vmem:[#allocation2 + $0xb8] sm:$0x3] 0.0
      %369 = vst [vmem:[#allocation2 + $0xc0] sm:$0xff] 0.0
      %370 = vst [vmem:[#allocation2 + $0xc8] sm:$0xff] 0.0
      %371 = vst [vmem:[#allocation2 + $0xd0] sm:$0x3] 0.0
      %372 = vst [vmem:[#allocation2 + $0xd8] sm:$0xff] 0.0
      %373 = vst [vmem:[#allocation2 + $0xe0] sm:$0xff] 0.0
      %374 = vst [vmem:[#allocation2 + $0xe8] sm:$0x3] 0.0
      %375 = vst [vmem:[#allocation2 + $0xf0] sm:$0xff] 0.0
      %376 = vst [vmem:[#allocation2 + $0xf8] sm:$0xff] 0.0
      %377 = vst [vmem:[#allocation2 + $0x100] sm:$0x3] 0.0
      %378 = vst [vmem:[#allocation2 + $0x108] sm:$0xff] 0.0
      %379 = vst [vmem:[#allocation2 + $0x110] sm:$0xff] 0.0
      %380 = vst [vmem:[#allocation2 + $0x118] sm:$0x3] 0.0
      %381 = vst [vmem:[#allocation2 + $0x120] sm:$0xff] 0.0
      %382 = vst [vmem:[#allocation2 + $0x128] sm:$0xff] 0.0
      %383 = vst [vmem:[#allocation2 + $0x130] sm:$0x3] 0.0
      %384 = vst [vmem:[#allocation2 + $0x138] sm:$0xff] 0.0
      %385 = vst [vmem:[#allocation2 + $0x140] sm:$0xff] 0.0
      %386 = vst [vmem:[#allocation2 + $0x148] sm:$0x3] 0.0
      %387 = vst [vmem:[#allocation2 + $0x150] sm:$0xff] 0.0
      %388 = vst [vmem:[#allocation2 + $0x158] sm:$0xff] 0.0
      %389 = vst [vmem:[#allocation2 + $0x160] sm:$0x3] 0.0
      %390 = vst [vmem:[#allocation2 + $0x168] sm:$0xff] 0.0
      %391 = vst [vmem:[#allocation2 + $0x170] sm:$0xff] 0.0
      %392 = vst [vmem:[#allocation2 + $0x178] sm:$0x3] 0.0
      %393 = vst [vmem:[#allocation2 + $0x180] sm:$0xff] 0.0
      %394 = vst [vmem:[#allocation2 + $0x188] sm:$0xff] 0.0
      %395 = vst [vmem:[#allocation2 + $0x190] sm:$0x3] 0.0
      %396 = vst [vmem:[#allocation2 + $0x198] sm:$0xff] 0.0
      %397 = vst [vmem:[#allocation2 + $0x1a0] sm:$0xff] 0.0
      %398 = vst [vmem:[#allocation2 + $0x1a8] sm:$0x3] 0.0
      %s399 = scalar_lea.vmem [#allocation2], 24
      %400 = vst [vmem:[%s399 + $0x1] sm:$0xff] %v313
      %401 = vst [vmem:[%s399 + $0x9] sm:$0xff] %v314
      %402 = vst [vmem:[%s399 + $0x19] sm:$0xff] %v315
      %403 = vst [vmem:[%s399 + $0x21] sm:$0xff] %v316
      %404 = vst [vmem:[%s399 + $0x31] sm:$0xff] %v317
      %405 = vst [vmem:[%s399 + $0x39] sm:$0xff] %v318
      %406 = vst [vmem:[%s399 + $0x49] sm:$0xff] %v319
      %407 = vst [vmem:[%s399 + $0x51] sm:$0xff] %v320
      %408 = vst [vmem:[%s399 + $0x61] sm:$0xff] %v321
      %409 = vst [vmem:[%s399 + $0x69] sm:$0xff] %v322
      %410 = vst [vmem:[%s399 + $0x79] sm:$0xff] %v323
      %411 = vst [vmem:[%s399 + $0x81] sm:$0xff] %v324
      %412 = vst [vmem:[%s399 + $0x91] sm:$0xff] %v325
      %413 = vst [vmem:[%s399 + $0x99] sm:$0xff] %v326
      %414 = vst [vmem:[%s399 + $0xa9] sm:$0xff] %v327
      %415 = vst [vmem:[%s399 + $0xb1] sm:$0xff] %v328
      %416 = vst [vmem:[%s399 + $0xc1] sm:$0xff] %v329
      %417 = vst [vmem:[%s399 + $0xc9] sm:$0xff] %v330
      %418 = vst [vmem:[%s399 + $0xd9] sm:$0xff] %v331
      %419 = vst [vmem:[%s399 + $0xe1] sm:$0xff] %v332
      %420 = vst [vmem:[%s399 + $0xf1] sm:$0xff] %v333
      %421 = vst [vmem:[%s399 + $0xf9] sm:$0xff] %v334
      %422 = vst [vmem:[%s399 + $0x109] sm:$0xff] %v335
      %423 = vst [vmem:[%s399 + $0x111] sm:$0xff] %v336
      %424 = vst [vmem:[%s399 + $0x121] sm:$0xff] %v337
      %425 = vst [vmem:[%s399 + $0x129] sm:$0xff] %v338
      %426 = vst [vmem:[%s399 + $0x139] sm:$0xff] %v339
      %427 = vst [vmem:[%s399 + $0x141] sm:$0xff] %v340
      %428 = vst [vmem:[%s399 + $0x151] sm:$0xff] %v341
      %429 = vst [vmem:[%s399 + $0x159] sm:$0xff] %v342
      %430 = vst [vmem:[%s399 + $0x169] sm:$0xff] %v343
      %431 = vst [vmem:[%s399 + $0x171] sm:$0xff] %v344
      %v432 = vld [vmem:[#allocation2] sm:$0xff]
      %v433 = vld [vmem:[#allocation2 + $0x8] sm:$0xff]
      %v434 = vld [vmem:[#allocation2 + $0x18] sm:$0xff]
      %v435 = vld [vmem:[#allocation2 + $0x20] sm:$0xff]
      %v436 = vld [vmem:[#allocation2 + $0x30] sm:$0xff]
      %v437 = vld [vmem:[#allocation2 + $0x38] sm:$0xff]
      %v438 = vld [vmem:[#allocation2 + $0x48] sm:$0xff]
      %v439 = vld [vmem:[#allocation2 + $0x50] sm:$0xff]
      %v440 = vld [vmem:[#allocation2 + $0x60] sm:$0xff]
      %v441 = vld [vmem:[#allocation2 + $0x68] sm:$0xff]
      %v442 = vld [vmem:[#allocation2 + $0x78] sm:$0xff]
      %v443 = vld [vmem:[#allocation2 + $0x80] sm:$0xff]
      %v444 = vld [vmem:[#allocation2 + $0x90] sm:$0xff]
      %v445 = vld [vmem:[#allocation2 + $0x98] sm:$0xff]
      %v446 = vld [vmem:[#allocation2 + $0xa8] sm:$0xff]
      %v447 = vld [vmem:[#allocation2 + $0xb0] sm:$0xff]
      %v448 = vld [vmem:[#allocation2 + $0xc0] sm:$0xff]
      %v449 = vld [vmem:[#allocation2 + $0xc8] sm:$0xff]
      %v450 = vld [vmem:[#allocation2 + $0xd8] sm:$0xff]
      %v451 = vld [vmem:[#allocation2 + $0xe0] sm:$0xff]
      %v452 = vld [vmem:[#allocation2 + $0xf0] sm:$0xff]
      %v453 = vld [vmem:[#allocation2 + $0xf8] sm:$0xff]
      %v454 = vld [vmem:[#allocation2 + $0x108] sm:$0xff]
      %v455 = vld [vmem:[#allocation2 + $0x110] sm:$0xff]
      %v456 = vld [vmem:[#allocation2 + $0x120] sm:$0xff]
      %v457 = vld [vmem:[#allocation2 + $0x128] sm:$0xff]
      %v458 = vld [vmem:[#allocation2 + $0x138] sm:$0xff]
      %v459 = vld [vmem:[#allocation2 + $0x140] sm:$0xff]
      %v460 = vld [vmem:[#allocation2 + $0x150] sm:$0xff]
      %v461 = vld [vmem:[#allocation2 + $0x158] sm:$0xff]
      %v462 = vld [vmem:[#allocation2 + $0x168] sm:$0xff]
      %v463 = vld [vmem:[#allocation2 + $0x170] sm:$0xff]
      %v464 = vld [vmem:[#allocation2 + $0x1] sm:$0xff]
      %v465 = vld [vmem:[#allocation2 + $0x9] sm:$0xff]
      %v466 = vld [vmem:[#allocation2 + $0x19] sm:$0xff]
      %v467 = vld [vmem:[#allocation2 + $0x21] sm:$0xff]
      %v468 = vld [vmem:[#allocation2 + $0x31] sm:$0xff]
      %v469 = vld [vmem:[#allocation2 + $0x39] sm:$0xff]
      %v470 = vld [vmem:[#allocation2 + $0x49] sm:$0xff]
      %v471 = vld [vmem:[#allocation2 + $0x51] sm:$0xff]
      %v472 = vld [vmem:[#allocation2 + $0x61] sm:$0xff]
      %v473 = vld [vmem:[#allocation2 + $0x69] sm:$0xff]
      %v474 = vld [vmem:[#allocation2 + $0x79] sm:$0xff]
      %v475 = vld [vmem:[#allocation2 + $0x81] sm:$0xff]
      %v476 = vld [vmem:[#allocation2 + $0x91] sm:$0xff]
      %v477 = vld [vmem:[#allocation2 + $0x99] sm:$0xff]
      %v478 = vld [vmem:[#allocation2 + $0xa9] sm:$0xff]
      %v479 = vld [vmem:[#allocation2 + $0xb1] sm:$0xff]
      %v480 = vld [vmem:[#allocation2 + $0xc1] sm:$0xff]
      %v481 = vld [vmem:[#allocation2 + $0xc9] sm:$0xff]
      %v482 = vld [vmem:[#allocation2 + $0xd9] sm:$0xff]
      %v483 = vld [vmem:[#allocation2 + $0xe1] sm:$0xff]
      %v484 = vld [vmem:[#allocation2 + $0xf1] sm:$0xff]
      %v485 = vld [vmem:[#allocation2 + $0xf9] sm:$0xff]
      %v486 = vld [vmem:[#allocation2 + $0x109] sm:$0xff]
      %v487 = vld [vmem:[#allocation2 + $0x111] sm:$0xff]
      %v488 = vld [vmem:[#allocation2 + $0x121] sm:$0xff]
      %v489 = vld [vmem:[#allocation2 + $0x129] sm:$0xff]
      %v490 = vld [vmem:[#allocation2 + $0x139] sm:$0xff]
      %v491 = vld [vmem:[#allocation2 + $0x141] sm:$0xff]
      %v492 = vld [vmem:[#allocation2 + $0x151] sm:$0xff]
      %v493 = vld [vmem:[#allocation2 + $0x159] sm:$0xff]
      %v494 = vld [vmem:[#allocation2 + $0x169] sm:$0xff]
      %v495 = vld [vmem:[#allocation2 + $0x171] sm:$0xff]
      %v496 = vmax.f32 %v432, %v464
      %v497 = vmax.f32 %v433, %v465
      %v498 = vmax.f32 %v434, %v466
      %v499 = vmax.f32 %v435, %v467
      %v500 = vmax.f32 %v436, %v468
      %v501 = vmax.f32 %v437, %v469
      %v502 = vmax.f32 %v438, %v470
      %v503 = vmax.f32 %v439, %v471
      %v504 = vmax.f32 %v440, %v472
      %v505 = vmax.f32 %v441, %v473
      %v506 = vmax.f32 %v442, %v474
      %v507 = vmax.f32 %v443, %v475
      %v508 = vmax.f32 %v444, %v476
      %v509 = vmax.f32 %v445, %v477
      %v510 = vmax.f32 %v446, %v478
      %v511 = vmax.f32 %v447, %v479
      %v512 = vmax.f32 %v448, %v480
      %v513 = vmax.f32 %v449, %v481
      %v514 = vmax.f32 %v450, %v482
      %v515 = vmax.f32 %v451, %v483
      %v516 = vmax.f32 %v452, %v484
      %v517 = vmax.f32 %v453, %v485
      %v518 = vmax.f32 %v454, %v486
      %v519 = vmax.f32 %v455, %v487
      %v520 = vmax.f32 %v456, %v488
      %v521 = vmax.f32 %v457, %v489
      %v522 = vmax.f32 %v458, %v490
      %v523 = vmax.f32 %v459, %v491
      %v524 = vmax.f32 %v460, %v492
      %v525 = vmax.f32 %v461, %v493
      %v526 = vmax.f32 %v462, %v494
      %v527 = vmax.f32 %v463, %v495
      %v528 = vld [vmem:[#allocation2 + $0x2] sm:$0xff]
      %v529 = vld [vmem:[#allocation2 + $0xa] sm:$0xff]
      %v530 = vld [vmem:[#allocation2 + $0x1a] sm:$0xff]
      %v531 = vld [vmem:[#allocation2 + $0x22] sm:$0xff]
      %v532 = vld [vmem:[#allocation2 + $0x32] sm:$0xff]
      %v533 = vld [vmem:[#allocation2 + $0x3a] sm:$0xff]
      %v534 = vld [vmem:[#allocation2 + $0x4a] sm:$0xff]
      %v535 = vld [vmem:[#allocation2 + $0x52] sm:$0xff]
      %v536 = vld [vmem:[#allocation2 + $0x62] sm:$0xff]
      %v537 = vld [vmem:[#allocation2 + $0x6a] sm:$0xff]
      %v538 = vld [vmem:[#allocation2 + $0x7a] sm:$0xff]
      %v539 = vld [vmem:[#allocation2 + $0x82] sm:$0xff]
      %v540 = vld [vmem:[#allocation2 + $0x92] sm:$0xff]
      %v541 = vld [vmem:[#allocation2 + $0x9a] sm:$0xff]
      %v542 = vld [vmem:[#allocation2 + $0xaa] sm:$0xff]
      %v543 = vld [vmem:[#allocation2 + $0xb2] sm:$0xff]
      %v544 = vld [vmem:[#allocation2 + $0xc2] sm:$0xff]
      %v545 = vld [vmem:[#allocation2 + $0xca] sm:$0xff]
      %v546 = vld [vmem:[#allocation2 + $0xda] sm:$0xff]
      %v547 = vld [vmem:[#allocation2 + $0xe2] sm:$0xff]
      %v548 = vld [vmem:[#allocation2 + $0xf2] sm:$0xff]
      %v549 = vld [vmem:[#allocation2 + $0xfa] sm:$0xff]
      %v550 = vld [vmem:[#allocation2 + $0x10a] sm:$0xff]
      %v551 = vld [vmem:[#allocation2 + $0x112] sm:$0xff]
      %v552 = vld [vmem:[#allocation2 + $0x122] sm:$0xff]
      %v553 = vld [vmem:[#allocation2 + $0x12a] sm:$0xff]
      %v554 = vld [vmem:[#allocation2 + $0x13a] sm:$0xff]
      %v555 = vld [vmem:[#allocation2 + $0x142] sm:$0xff]
      %v556 = vld [vmem:[#allocation2 + $0x152] sm:$0xff]
      %v557 = vld [vmem:[#allocation2 + $0x15a] sm:$0xff]
      %v558 = vld [vmem:[#allocation2 + $0x16a] sm:$0xff]
      %v559 = vld [vmem:[#allocation2 + $0x172] sm:$0xff]
      %v560 = vmax.f32 %v496, %v528
      %v561 = vmax.f32 %v497, %v529
      %v562 = vmax.f32 %v498, %v530
      %v563 = vmax.f32 %v499, %v531
      %v564 = vmax.f32 %v500, %v532
      %v565 = vmax.f32 %v501, %v533
      %v566 = vmax.f32 %v502, %v534
      %v567 = vmax.f32 %v503, %v535
      %v568 = vmax.f32 %v504, %v536
      %v569 = vmax.f32 %v505, %v537
      %v570 = vmax.f32 %v506, %v538
      %v571 = vmax.f32 %v507, %v539
      %v572 = vmax.f32 %v508, %v540
      %v573 = vmax.f32 %v509, %v541
      %v574 = vmax.f32 %v510, %v542
      %v575 = vmax.f32 %v511, %v543
      %v576 = vmax.f32 %v512, %v544
      %v577 = vmax.f32 %v513, %v545
      %v578 = vmax.f32 %v514, %v546
      %v579 = vmax.f32 %v515, %v547
      %v580 = vmax.f32 %v516, %v548
      %v581 = vmax.f32 %v517, %v549
      %v582 = vmax.f32 %v518, %v550
      %v583 = vmax.f32 %v519, %v551
      %v584 = vmax.f32 %v520, %v552
      %v585 = vmax.f32 %v521, %v553
      %v586 = vmax.f32 %v522, %v554
      %v587 = vmax.f32 %v523, %v555
      %v588 = vmax.f32 %v524, %v556
      %v589 = vmax.f32 %v525, %v557
      %v590 = vmax.f32 %v526, %v558
      %v591 = vmax.f32 %v527, %v559
      %v592 = vld [vmem:[%s399] sm:$0xff]
      %v593 = vld [vmem:[%s399 + $0x8] sm:$0xff]
      %v594 = vld [vmem:[%s399 + $0x18] sm:$0xff]
      %v595 = vld [vmem:[%s399 + $0x20] sm:$0xff]
      %v596 = vld [vmem:[%s399 + $0x30] sm:$0xff]
      %v597 = vld [vmem:[%s399 + $0x38] sm:$0xff]
      %v598 = vld [vmem:[%s399 + $0x48] sm:$0xff]
      %v599 = vld [vmem:[%s399 + $0x50] sm:$0xff]
      %v600 = vld [vmem:[%s399 + $0x60] sm:$0xff]
      %v601 = vld [vmem:[%s399 + $0x68] sm:$0xff]
      %v602 = vld [vmem:[%s399 + $0x78] sm:$0xff]
      %v603 = vld [vmem:[%s399 + $0x80] sm:$0xff]
      %v604 = vld [vmem:[%s399 + $0x90] sm:$0xff]
      %v605 = vld [vmem:[%s399 + $0x98] sm:$0xff]
      %v606 = vld [vmem:[%s399 + $0xa8] sm:$0xff]
      %v607 = vld [vmem:[%s399 + $0xb0] sm:$0xff]
      %v608 = vld [vmem:[%s399 + $0xc0] sm:$0xff]
      %v609 = vld [vmem:[%s399 + $0xc8] sm:$0xff]
      %v610 = vld [vmem:[%s399 + $0xd8] sm:$0xff]
      %v611 = vld [vmem:[%s399 + $0xe0] sm:$0xff]
      %v612 = vld [vmem:[%s399 + $0xf0] sm:$0xff]
      %v613 = vld [vmem:[%s399 + $0xf8] sm:$0xff]
      %v614 = vld [vmem:[%s399 + $0x108] sm:$0xff]
      %v615 = vld [vmem:[%s399 + $0x110] sm:$0xff]
      %v616 = vld [vmem:[%s399 + $0x120] sm:$0xff]
      %v617 = vld [vmem:[%s399 + $0x128] sm:$0xff]
      %v618 = vld [vmem:[%s399 + $0x138] sm:$0xff]
      %v619 = vld [vmem:[%s399 + $0x140] sm:$0xff]
      %v620 = vld [vmem:[%s399 + $0x150] sm:$0xff]
      %v621 = vld [vmem:[%s399 + $0x158] sm:$0xff]
      %v622 = vld [vmem:[%s399 + $0x168] sm:$0xff]
      %v623 = vld [vmem:[%s399 + $0x170] sm:$0xff]
      %v624 = vmax.f32 %v560, %v592
      %v625 = vmax.f32 %v561, %v593
      %v626 = vmax.f32 %v562, %v594
      %v627 = vmax.f32 %v563, %v595
      %v628 = vmax.f32 %v564, %v596
      %v629 = vmax.f32 %v565, %v597
      %v630 = vmax.f32 %v566, %v598
      %v631 = vmax.f32 %v567, %v599
      %v632 = vmax.f32 %v568, %v600
      %v633 = vmax.f32 %v569, %v601
      %v634 = vmax.f32 %v570, %v602
      %v635 = vmax.f32 %v571, %v603
      %v636 = vmax.f32 %v572, %v604
      %v637 = vmax.f32 %v573, %v605
      %v638 = vmax.f32 %v574, %v606
      %v639 = vmax.f32 %v575, %v607
      %v640 = vmax.f32 %v576, %v608
      %v641 = vmax.f32 %v577, %v609
      %v642 = vmax.f32 %v578, %v610
      %v643 = vmax.f32 %v579, %v611
      %v644 = vmax.f32 %v580, %v612
      %v645 = vmax.f32 %v581, %v613
      %v646 = vmax.f32 %v582, %v614
      %v647 = vmax.f32 %v583, %v615
      %v648 = vmax.f32 %v584, %v616
      %v649 = vmax.f32 %v585, %v617
      %v650 = vmax.f32 %v586, %v618
      %v651 = vmax.f32 %v587, %v619
      %v652 = vmax.f32 %v588, %v620
      %v653 = vmax.f32 %v589, %v621
      %v654 = vmax.f32 %v590, %v622
      %v655 = vmax.f32 %v591, %v623
      %v656 = vld [vmem:[%s399 + $0x1] sm:$0xff]
      %v657 = vld [vmem:[%s399 + $0x9] sm:$0xff]
      %v658 = vld [vmem:[%s399 + $0x19] sm:$0xff]
      %v659 = vld [vmem:[%s399 + $0x21] sm:$0xff]
      %v660 = vld [vmem:[%s399 + $0x31] sm:$0xff]
      %v661 = vld [vmem:[%s399 + $0x39] sm:$0xff]
      %v662 = vld [vmem:[%s399 + $0x49] sm:$0xff]
      %v663 = vld [vmem:[%s399 + $0x51] sm:$0xff]
      %v664 = vld [vmem:[%s399 + $0x61] sm:$0xff]
      %v665 = vld [vmem:[%s399 + $0x69] sm:$0xff]
      %v666 = vld [vmem:[%s399 + $0x79] sm:$0xff]
      %v667 = vld [vmem:[%s399 + $0x81] sm:$0xff]
      %v668 = vld [vmem:[%s399 + $0x91] sm:$0xff]
      %v669 = vld [vmem:[%s399 + $0x99] sm:$0xff]
      %v670 = vld [vmem:[%s399 + $0xa9] sm:$0xff]
      %v671 = vld [vmem:[%s399 + $0xb1] sm:$0xff]
      %v672 = vld [vmem:[%s399 + $0xc1] sm:$0xff]
      %v673 = vld [vmem:[%s399 + $0xc9] sm:$0xff]
      %v674 = vld [vmem:[%s399 + $0xd9] sm:$0xff]
      %v675 = vld [vmem:[%s399 + $0xe1] sm:$0xff]
      %v676 = vld [vmem:[%s399 + $0xf1] sm:$0xff]
      %v677 = vld [vmem:[%s399 + $0xf9] sm:$0xff]
      %v678 = vld [vmem:[%s399 + $0x109] sm:$0xff]
      %v679 = vld [vmem:[%s399 + $0x111] sm:$0xff]
      %v680 = vld [vmem:[%s399 + $0x121] sm:$0xff]
      %v681 = vld [vmem:[%s399 + $0x129] sm:$0xff]
      %v682 = vld [vmem:[%s399 + $0x139] sm:$0xff]
      %v683 = vld [vmem:[%s399 + $0x141] sm:$0xff]
      %v684 = vld [vmem:[%s399 + $0x151] sm:$0xff]
      %v685 = vld [vmem:[%s399 + $0x159] sm:$0xff]
      %v686 = vld [vmem:[%s399 + $0x169] sm:$0xff]
      %v687 = vld [vmem:[%s399 + $0x171] sm:$0xff]
      %v688 = vmax.f32 %v624, %v656
      %v689 = vmax.f32 %v625, %v657
      %v690 = vmax.f32 %v626, %v658
      %v691 = vmax.f32 %v627, %v659
      %v692 = vmax.f32 %v628, %v660
      %v693 = vmax.f32 %v629, %v661
      %v694 = vmax.f32 %v630, %v662
      %v695 = vmax.f32 %v631, %v663
      %v696 = vmax.f32 %v632, %v664
      %v697 = vmax.f32 %v633, %v665
      %v698 = vmax.f32 %v634, %v666
      %v699 = vmax.f32 %v635, %v667
      %v700 = vmax.f32 %v636, %v668
      %v701 = vmax.f32 %v637, %v669
      %v702 = vmax.f32 %v638, %v670
      %v703 = vmax.f32 %v639, %v671
      %v704 = vmax.f32 %v640, %v672
      %v705 = vmax.f32 %v641, %v673
      %v706 = vmax.f32 %v642, %v674
      %v707 = vmax.f32 %v643, %v675
      %v708 = vmax.f32 %v644, %v676
      %v709 = vmax.f32 %v645, %v677
      %v710 = vmax.f32 %v646, %v678
      %v711 = vmax.f32 %v647, %v679
      %v712 = vmax.f32 %v648, %v680
      %v713 = vmax.f32 %v649, %v681
      %v714 = vmax.f32 %v650, %v682
      %v715 = vmax.f32 %v651, %v683
      %v716 = vmax.f32 %v652, %v684
      %v717 = vmax.f32 %v653, %v685
      %v718 = vmax.f32 %v654, %v686
      %v719 = vmax.f32 %v655, %v687
      %v720 = vld [vmem:[%s399 + $0x2] sm:$0xff]
      %v721 = vld [vmem:[%s399 + $0xa] sm:$0xff]
      %v722 = vld [vmem:[%s399 + $0x1a] sm:$0xff]
      %v723 = vld [vmem:[%s399 + $0x22] sm:$0xff]
      %v724 = vld [vmem:[%s399 + $0x32] sm:$0xff]
      %v725 = vld [vmem:[%s399 + $0x3a] sm:$0xff]
      %v726 = vld [vmem:[%s399 + $0x4a] sm:$0xff]
      %v727 = vld [vmem:[%s399 + $0x52] sm:$0xff]
      %v728 = vld [vmem:[%s399 + $0x62] sm:$0xff]
      %v729 = vld [vmem:[%s399 + $0x6a] sm:$0xff]
      %v730 = vld [vmem:[%s399 + $0x7a] sm:$0xff]
      %v731 = vld [vmem:[%s399 + $0x82] sm:$0xff]
      %v732 = vld [vmem:[%s399 + $0x92] sm:$0xff]
      %v733 = vld [vmem:[%s399 + $0x9a] sm:$0xff]
      %v734 = vld [vmem:[%s399 + $0xaa] sm:$0xff]
      %v735 = vld [vmem:[%s399 + $0xb2] sm:$0xff]
      %v736 = vld [vmem:[%s399 + $0xc2] sm:$0xff]
      %v737 = vld [vmem:[%s399 + $0xca] sm:$0xff]
      %v738 = vld [vmem:[%s399 + $0xda] sm:$0xff]
      %v739 = vld [vmem:[%s399 + $0xe2] sm:$0xff]
      %v740 = vld [vmem:[%s399 + $0xf2] sm:$0xff]
      %v741 = vld [vmem:[%s399 + $0xfa] sm:$0xff]
      %v742 = vld [vmem:[%s399 + $0x10a] sm:$0xff]
      %v743 = vld [vmem:[%s399 + $0x112] sm:$0xff]
      %v744 = vld [vmem:[%s399 + $0x122] sm:$0xff]
      %v745 = vld [vmem:[%s399 + $0x12a] sm:$0xff]
      %v746 = vld [vmem:[%s399 + $0x13a] sm:$0xff]
      %v747 = vld [vmem:[%s399 + $0x142] sm:$0xff]
      %v748 = vld [vmem:[%s399 + $0x152] sm:$0xff]
      %v749 = vld [vmem:[%s399 + $0x15a] sm:$0xff]
      %v750 = vld [vmem:[%s399 + $0x16a] sm:$0xff]
      %v751 = vld [vmem:[%s399 + $0x172] sm:$0xff]
      %v752 = vmax.f32 %v688, %v720
      %v753 = vmax.f32 %v689, %v721
      %v754 = vmax.f32 %v690, %v722
      %v755 = vmax.f32 %v691, %v723
      %v756 = vmax.f32 %v692, %v724
      %v757 = vmax.f32 %v693, %v725
      %v758 = vmax.f32 %v694, %v726
      %v759 = vmax.f32 %v695, %v727
      %v760 = vmax.f32 %v696, %v728
      %v761 = vmax.f32 %v697, %v729
      %v762 = vmax.f32 %v698, %v730
      %v763 = vmax.f32 %v699, %v731
      %v764 = vmax.f32 %v700, %v732
      %v765 = vmax.f32 %v701, %v733
      %v766 = vmax.f32 %v702, %v734
      %v767 = vmax.f32 %v703, %v735
      %v768 = vmax.f32 %v704, %v736
      %v769 = vmax.f32 %v705, %v737
      %v770 = vmax.f32 %v706, %v738
      %v771 = vmax.f32 %v707, %v739
      %v772 = vmax.f32 %v708, %v740
      %v773 = vmax.f32 %v709, %v741
      %v774 = vmax.f32 %v710, %v742
      %v775 = vmax.f32 %v711, %v743
      %v776 = vmax.f32 %v712, %v744
      %v777 = vmax.f32 %v713, %v745
      %v778 = vmax.f32 %v714, %v746
      %v779 = vmax.f32 %v715, %v747
      %v780 = vmax.f32 %v716, %v748
      %v781 = vmax.f32 %v717, %v749
      %v782 = vmax.f32 %v718, %v750
      %v783 = vmax.f32 %v719, %v751
      %s784 = scalar_lea.vmem [#allocation2], 48
      %v785 = vld [vmem:[%s784] sm:$0xff]
      %v786 = vld [vmem:[%s784 + $0x8] sm:$0xff]
      %v787 = vld [vmem:[%s784 + $0x18] sm:$0xff]
      %v788 = vld [vmem:[%s784 + $0x20] sm:$0xff]
      %v789 = vld [vmem:[%s784 + $0x30] sm:$0xff]
      %v790 = vld [vmem:[%s784 + $0x38] sm:$0xff]
      %v791 = vld [vmem:[%s784 + $0x48] sm:$0xff]
      %v792 = vld [vmem:[%s784 + $0x50] sm:$0xff]
      %v793 = vld [vmem:[%s784 + $0x60] sm:$0xff]
      %v794 = vld [vmem:[%s784 + $0x68] sm:$0xff]
      %v795 = vld [vmem:[%s784 + $0x78] sm:$0xff]
      %v796 = vld [vmem:[%s784 + $0x80] sm:$0xff]
      %v797 = vld [vmem:[%s784 + $0x90] sm:$0xff]
      %v798 = vld [vmem:[%s784 + $0x98] sm:$0xff]
      %v799 = vld [vmem:[%s784 + $0xa8] sm:$0xff]
      %v800 = vld [vmem:[%s784 + $0xb0] sm:$0xff]
      %v801 = vld [vmem:[%s784 + $0xc0] sm:$0xff]
      %v802 = vld [vmem:[%s784 + $0xc8] sm:$0xff]
      %v803 = vld [vmem:[%s784 + $0xd8] sm:$0xff]
      %v804 = vld [vmem:[%s784 + $0xe0] sm:$0xff]
      %v805 = vld [vmem:[%s784 + $0xf0] sm:$0xff]
      %v806 = vld [vmem:[%s784 + $0xf8] sm:$0xff]
      %v807 = vld [vmem:[%s784 + $0x108] sm:$0xff]
      %v808 = vld [vmem:[%s784 + $0x110] sm:$0xff]
      %v809 = vld [vmem:[%s784 + $0x120] sm:$0xff]
      %v810 = vld [vmem:[%s784 + $0x128] sm:$0xff]
      %v811 = vld [vmem:[%s784 + $0x138] sm:$0xff]
      %v812 = vld [vmem:[%s784 + $0x140] sm:$0xff]
      %v813 = vld [vmem:[%s784 + $0x150] sm:$0xff]
      %v814 = vld [vmem:[%s784 + $0x158] sm:$0xff]
      %v815 = vld [vmem:[%s784 + $0x168] sm:$0xff]
      %v816 = vld [vmem:[%s784 + $0x170] sm:$0xff]
      %v817 = vmax.f32 %v752, %v785
      %v818 = vmax.f32 %v753, %v786
      %v819 = vmax.f32 %v754, %v787
      %v820 = vmax.f32 %v755, %v788
      %v821 = vmax.f32 %v756, %v789
      %v822 = vmax.f32 %v757, %v790
      %v823 = vmax.f32 %v758, %v791
      %v824 = vmax.f32 %v759, %v792
      %v825 = vmax.f32 %v760, %v793
      %v826 = vmax.f32 %v761, %v794
      %v827 = vmax.f32 %v762, %v795
      %v828 = vmax.f32 %v763, %v796
      %v829 = vmax.f32 %v764, %v797
      %v830 = vmax.f32 %v765, %v798
      %v831 = vmax.f32 %v766, %v799
      %v832 = vmax.f32 %v767, %v800
      %v833 = vmax.f32 %v768, %v801
      %v834 = vmax.f32 %v769, %v802
      %v835 = vmax.f32 %v770, %v803
      %v836 = vmax.f32 %v771, %v804
      %v837 = vmax.f32 %v772, %v805
      %v838 = vmax.f32 %v773, %v806
      %v839 = vmax.f32 %v774, %v807
      %v840 = vmax.f32 %v775, %v808
      %v841 = vmax.f32 %v776, %v809
      %v842 = vmax.f32 %v777, %v810
      %v843 = vmax.f32 %v778, %v811
      %v844 = vmax.f32 %v779, %v812
      %v845 = vmax.f32 %v780, %v813
      %v846 = vmax.f32 %v781, %v814
      %v847 = vmax.f32 %v782, %v815
      %v848 = vmax.f32 %v783, %v816
      %v849 = vld [vmem:[%s784 + $0x1] sm:$0xff]
      %v850 = vld [vmem:[%s784 + $0x9] sm:$0xff]
      %v851 = vld [vmem:[%s784 + $0x19] sm:$0xff]
      %v852 = vld [vmem:[%s784 + $0x21] sm:$0xff]
      %v853 = vld [vmem:[%s784 + $0x31] sm:$0xff]
      %v854 = vld [vmem:[%s784 + $0x39] sm:$0xff]
      %v855 = vld [vmem:[%s784 + $0x49] sm:$0xff]
      %v856 = vld [vmem:[%s784 + $0x51] sm:$0xff]
      %v857 = vld [vmem:[%s784 + $0x61] sm:$0xff]
      %v858 = vld [vmem:[%s784 + $0x69] sm:$0xff]
      %v859 = vld [vmem:[%s784 + $0x79] sm:$0xff]
      %v860 = vld [vmem:[%s784 + $0x81] sm:$0xff]
      %v861 = vld [vmem:[%s784 + $0x91] sm:$0xff]
      %v862 = vld [vmem:[%s784 + $0x99] sm:$0xff]
      %v863 = vld [vmem:[%s784 + $0xa9] sm:$0xff]
      %v864 = vld [vmem:[%s784 + $0xb1] sm:$0xff]
      %v865 = vld [vmem:[%s784 + $0xc1] sm:$0xff]
      %v866 = vld [vmem:[%s784 + $0xc9] sm:$0xff]
      %v867 = vld [vmem:[%s784 + $0xd9] sm:$0xff]
      %v868 = vld [vmem:[%s784 + $0xe1] sm:$0xff]
      %v869 = vld [vmem:[%s784 + $0xf1] sm:$0xff]
      %v870 = vld [vmem:[%s784 + $0xf9] sm:$0xff]
      %v871 = vld [vmem:[%s784 + $0x109] sm:$0xff]
      %v872 = vld [vmem:[%s784 + $0x111] sm:$0xff]
      %v873 = vld [vmem:[%s784 + $0x121] sm:$0xff]
      %v874 = vld [vmem:[%s784 + $0x129] sm:$0xff]
      %v875 = vld [vmem:[%s784 + $0x139] sm:$0xff]
      %v876 = vld [vmem:[%s784 + $0x141] sm:$0xff]
      %v877 = vld [vmem:[%s784 + $0x151] sm:$0xff]
      %v878 = vld [vmem:[%s784 + $0x159] sm:$0xff]
      %v879 = vld [vmem:[%s784 + $0x169] sm:$0xff]
      %v880 = vld [vmem:[%s784 + $0x171] sm:$0xff]
      %v881 = vmax.f32 %v817, %v849
      %v882 = vmax.f32 %v818, %v850
      %v883 = vmax.f32 %v819, %v851
      %v884 = vmax.f32 %v820, %v852
      %v885 = vmax.f32 %v821, %v853
      %v886 = vmax.f32 %v822, %v854
      %v887 = vmax.f32 %v823, %v855
      %v888 = vmax.f32 %v824, %v856
      %v889 = vmax.f32 %v825, %v857
      %v890 = vmax.f32 %v826, %v858
      %v891 = vmax.f32 %v827, %v859
      %v892 = vmax.f32 %v828, %v860
      %v893 = vmax.f32 %v829, %v861
      %v894 = vmax.f32 %v830, %v862
      %v895 = vmax.f32 %v831, %v863
      %v896 = vmax.f32 %v832, %v864
      %v897 = vmax.f32 %v833, %v865
      %v898 = vmax.f32 %v834, %v866
      %v899 = vmax.f32 %v835, %v867
      %v900 = vmax.f32 %v836, %v868
      %v901 = vmax.f32 %v837, %v869
      %v902 = vmax.f32 %v838, %v870
      %v903 = vmax.f32 %v839, %v871
      %v904 = vmax.f32 %v840, %v872
      %v905 = vmax.f32 %v841, %v873
      %v906 = vmax.f32 %v842, %v874
      %v907 = vmax.f32 %v843, %v875
      %v908 = vmax.f32 %v844, %v876
      %v909 = vmax.f32 %v845, %v877
      %v910 = vmax.f32 %v846, %v878
      %v911 = vmax.f32 %v847, %v879
      %v912 = vmax.f32 %v848, %v880
      %v913 = vld [vmem:[%s784 + $0x2] sm:$0xff]
      %v914 = vld [vmem:[%s784 + $0xa] sm:$0xff]
      %v915 = vld [vmem:[%s784 + $0x1a] sm:$0xff]
      %v916 = vld [vmem:[%s784 + $0x22] sm:$0xff]
      %v917 = vld [vmem:[%s784 + $0x32] sm:$0xff]
      %v918 = vld [vmem:[%s784 + $0x3a] sm:$0xff]
      %v919 = vld [vmem:[%s784 + $0x4a] sm:$0xff]
      %v920 = vld [vmem:[%s784 + $0x52] sm:$0xff]
      %v921 = vld [vmem:[%s784 + $0x62] sm:$0xff]
      %v922 = vld [vmem:[%s784 + $0x6a] sm:$0xff]
      %v923 = vld [vmem:[%s784 + $0x7a] sm:$0xff]
      %v924 = vld [vmem:[%s784 + $0x82] sm:$0xff]
      %v925 = vld [vmem:[%s784 + $0x92] sm:$0xff]
      %v926 = vld [vmem:[%s784 + $0x9a] sm:$0xff]
      %v927 = vld [vmem:[%s784 + $0xaa] sm:$0xff]
      %v928 = vld [vmem:[%s784 + $0xb2] sm:$0xff]
      %v929 = vld [vmem:[%s784 + $0xc2] sm:$0xff]
      %v930 = vld [vmem:[%s784 + $0xca] sm:$0xff]
      %v931 = vld [vmem:[%s784 + $0xda] sm:$0xff]
      %v932 = vld [vmem:[%s784 + $0xe2] sm:$0xff]
      %v933 = vld [vmem:[%s784 + $0xf2] sm:$0xff]
      %v934 = vld [vmem:[%s784 + $0xfa] sm:$0xff]
      %v935 = vld [vmem:[%s784 + $0x10a] sm:$0xff]
      %v936 = vld [vmem:[%s784 + $0x112] sm:$0xff]
      %v937 = vld [vmem:[%s784 + $0x122] sm:$0xff]
      %v938 = vld [vmem:[%s784 + $0x12a] sm:$0xff]
      %v939 = vld [vmem:[%s784 + $0x13a] sm:$0xff]
      %v940 = vld [vmem:[%s784 + $0x142] sm:$0xff]
      %v941 = vld [vmem:[%s784 + $0x152] sm:$0xff]
      %v942 = vld [vmem:[%s784 + $0x15a] sm:$0xff]
      %v943 = vld [vmem:[%s784 + $0x16a] sm:$0xff]
      %v944 = vld [vmem:[%s784 + $0x172] sm:$0xff]
      %v945 = vmax.f32 %v881, %v913
      %v946 = vmax.f32 %v882, %v914
      %v947 = vmax.f32 %v883, %v915
      %v948 = vmax.f32 %v884, %v916
      %v949 = vmax.f32 %v885, %v917
      %v950 = vmax.f32 %v886, %v918
      %v951 = vmax.f32 %v887, %v919
      %v952 = vmax.f32 %v888, %v920
      %v953 = vmax.f32 %v889, %v921
      %v954 = vmax.f32 %v890, %v922
      %v955 = vmax.f32 %v891, %v923
      %v956 = vmax.f32 %v892, %v924
      %v957 = vmax.f32 %v893, %v925
      %v958 = vmax.f32 %v894, %v926
      %v959 = vmax.f32 %v895, %v927
      %v960 = vmax.f32 %v896, %v928
      %v961 = vmax.f32 %v897, %v929
      %v962 = vmax.f32 %v898, %v930
      %v963 = vmax.f32 %v899, %v931
      %v964 = vmax.f32 %v900, %v932
      %v965 = vmax.f32 %v901, %v933
      %v966 = vmax.f32 %v902, %v934
      %v967 = vmax.f32 %v903, %v935
      %v968 = vmax.f32 %v904, %v936
      %v969 = vmax.f32 %v905, %v937
      %v970 = vmax.f32 %v906, %v938
      %v971 = vmax.f32 %v907, %v939
      %v972 = vmax.f32 %v908, %v940
      %v973 = vmax.f32 %v909, %v941
      %v974 = vmax.f32 %v910, %v942
      %v975 = vmax.f32 %v911, %v943
      %v976 = vmax.f32 %v912, %v944
      %977 = vst [vmem:[%s170] sm:$0xff] 0.0
      %978 = vst [vmem:[%s170 + $0x8] sm:$0xff] 0.0
      %979 = vst [vmem:[%s170 + $0x10] sm:$0x3] 0.0
      %980 = vst [vmem:[%s170 + $0x18] sm:$0xff] 0.0
      %981 = vst [vmem:[%s170 + $0x20] sm:$0xff] 0.0
      %982 = vst [vmem:[%s170 + $0x28] sm:$0x3] 0.0
      %983 = vst [vmem:[%s170 + $0x30] sm:$0xff] 0.0
      %984 = vst [vmem:[%s170 + $0x38] sm:$0xff] 0.0
      %985 = vst [vmem:[%s170 + $0x40] sm:$0x3] 0.0
      %986 = vst [vmem:[%s170 + $0x48] sm:$0xff] 0.0
      %987 = vst [vmem:[%s170 + $0x50] sm:$0xff] 0.0
      %988 = vst [vmem:[%s170 + $0x58] sm:$0x3] 0.0
      %989 = vst [vmem:[%s170 + $0x60] sm:$0xff] 0.0
      %990 = vst [vmem:[%s170 + $0x68] sm:$0xff] 0.0
      %991 = vst [vmem:[%s170 + $0x70] sm:$0x3] 0.0
      %992 = vst [vmem:[%s170 + $0x78] sm:$0xff] 0.0
      %993 = vst [vmem:[%s170 + $0x80] sm:$0xff] 0.0
      %994 = vst [vmem:[%s170 + $0x88] sm:$0x3] 0.0
      %995 = vst [vmem:[%s170 + $0x90] sm:$0xff] 0.0
      %996 = vst [vmem:[%s170 + $0x98] sm:$0xff] 0.0
      %997 = vst [vmem:[%s170 + $0xa0] sm:$0x3] 0.0
      %998 = vst [vmem:[%s170 + $0xa8] sm:$0xff] 0.0
      %999 = vst [vmem:[%s170 + $0xb0] sm:$0xff] 0.0
      %1000 = vst [vmem:[%s170 + $0xb8] sm:$0x3] 0.0
      %1001 = vst [vmem:[%s170 + $0xc0] sm:$0xff] 0.0
      %1002 = vst [vmem:[%s170 + $0xc8] sm:$0xff] 0.0
      %1003 = vst [vmem:[%s170 + $0xd0] sm:$0x3] 0.0
      %1004 = vst [vmem:[%s170 + $0xd8] sm:$0xff] 0.0
      %1005 = vst [vmem:[%s170 + $0xe0] sm:$0xff] 0.0
      %1006 = vst [vmem:[%s170 + $0xe8] sm:$0x3] 0.0
      %1007 = vst [vmem:[%s170 + $0xf0] sm:$0xff] 0.0
      %1008 = vst [vmem:[%s170 + $0xf8] sm:$0xff] 0.0
      %1009 = vst [vmem:[%s170 + $0x100] sm:$0x3] 0.0
      %1010 = vst [vmem:[%s170 + $0x108] sm:$0xff] 0.0
      %1011 = vst [vmem:[%s170 + $0x110] sm:$0xff] 0.0
      %1012 = vst [vmem:[%s170 + $0x118] sm:$0x3] 0.0
      %1013 = vst [vmem:[%s170 + $0x120] sm:$0xff] 0.0
      %1014 = vst [vmem:[%s170 + $0x128] sm:$0xff] 0.0
      %1015 = vst [vmem:[%s170 + $0x130] sm:$0x3] 0.0
      %1016 = vst [vmem:[%s170 + $0x138] sm:$0xff] 0.0
      %1017 = vst [vmem:[%s170 + $0x140] sm:$0xff] 0.0
      %1018 = vst [vmem:[%s170 + $0x148] sm:$0x3] 0.0
      %1019 = vst [vmem:[%s170 + $0x150] sm:$0xff] 0.0
      %1020 = vst [vmem:[%s170 + $0x158] sm:$0xff] 0.0
      %1021 = vst [vmem:[%s170 + $0x160] sm:$0x3] 0.0
      %1022 = vst [vmem:[%s170 + $0x168] sm:$0xff] 0.0
      %1023 = vst [vmem:[%s170 + $0x170] sm:$0xff] 0.0
      %1024 = vst [vmem:[%s170 + $0x178] sm:$0x3] 0.0
      %1025 = vst [vmem:[%s170 + $0x180] sm:$0xff] 0.0
      %1026 = vst [vmem:[%s170 + $0x188] sm:$0xff] 0.0
      %1027 = vst [vmem:[%s170 + $0x190] sm:$0x3] 0.0
      %1028 = vst [vmem:[%s170 + $0x198] sm:$0xff] 0.0
      %1029 = vst [vmem:[%s170 + $0x1a0] sm:$0xff] 0.0
      %1030 = vst [vmem:[%s170 + $0x1a8] sm:$0x3] 0.0
      %s1031 = scalar_lea.vmem %s170, 24
      %1032 = vst [vmem:[%s1031 + $0x1] sm:$0xff] %v945
      %1033 = vst [vmem:[%s1031 + $0x9] sm:$0xff] %v946
      %1034 = vst [vmem:[%s1031 + $0x19] sm:$0xff] %v947
      %1035 = vst [vmem:[%s1031 + $0x21] sm:$0xff] %v948
      %1036 = vst [vmem:[%s1031 + $0x31] sm:$0xff] %v949
      %1037 = vst [vmem:[%s1031 + $0x39] sm:$0xff] %v950
      %1038 = vst [vmem:[%s1031 + $0x49] sm:$0xff] %v951
      %1039 = vst [vmem:[%s1031 + $0x51] sm:$0xff] %v952
      %1040 = vst [vmem:[%s1031 + $0x61] sm:$0xff] %v953
      %1041 = vst [vmem:[%s1031 + $0x69] sm:$0xff] %v954
      %1042 = vst [vmem:[%s1031 + $0x79] sm:$0xff] %v955
      %1043 = vst [vmem:[%s1031 + $0x81] sm:$0xff] %v956
      %1044 = vst [vmem:[%s1031 + $0x91] sm:$0xff] %v957
      %1045 = vst [vmem:[%s1031 + $0x99] sm:$0xff] %v958
      %1046 = vst [vmem:[%s1031 + $0xa9] sm:$0xff] %v959
      %1047 = vst [vmem:[%s1031 + $0xb1] sm:$0xff] %v960
      %1048 = vst [vmem:[%s1031 + $0xc1] sm:$0xff] %v961
      %1049 = vst [vmem:[%s1031 + $0xc9] sm:$0xff] %v962
      %1050 = vst [vmem:[%s1031 + $0xd9] sm:$0xff] %v963
      %1051 = vst [vmem:[%s1031 + $0xe1] sm:$0xff] %v964
      %1052 = vst [vmem:[%s1031 + $0xf1] sm:$0xff] %v965
      %1053 = vst [vmem:[%s1031 + $0xf9] sm:$0xff] %v966
      %1054 = vst [vmem:[%s1031 + $0x109] sm:$0xff] %v967
      %1055 = vst [vmem:[%s1031 + $0x111] sm:$0xff] %v968
      %1056 = vst [vmem:[%s1031 + $0x121] sm:$0xff] %v969
      %1057 = vst [vmem:[%s1031 + $0x129] sm:$0xff] %v970
      %1058 = vst [vmem:[%s1031 + $0x139] sm:$0xff] %v971
      %1059 = vst [vmem:[%s1031 + $0x141] sm:$0xff] %v972
      %1060 = vst [vmem:[%s1031 + $0x151] sm:$0xff] %v973
      %1061 = vst [vmem:[%s1031 + $0x159] sm:$0xff] %v974
      %1062 = vst [vmem:[%s1031 + $0x169] sm:$0xff] %v975
      %1063 = vst [vmem:[%s1031 + $0x171] sm:$0xff] %v976
      %p1064 = scmp.lt.s32.totalorder %s14, 1
      %s1065 = scalar_select %p1064, %s14, 1
      %s1066 = smul.addr %s1065, 54
      %s1067 = smul.addr %s1066, 8
      %s1068 = scalar_lea.vmem %s3, %s1067
      // Predicated region
      $region33: #{forward.12} parent=31 // pred_check
        %p1069 = pneg %p100
      $region34: #{forward.12} parent=31 // pred_check_branch
        %1071 = sbr.rel (%p1069) target = $region36
      $region35: #{forward.12} parent=31 // pred_region
        _
      $region36: #{forward.12} parent=31 // pred_fallthru
        _
    $region32: #{forward.12} parent=5 // pred_fallthru
      _
    %p1072 = scmp.le.s32.totalorder 2, %s9
    // Predicated region
    $region37: #{forward.12} parent=5 // pred_check
      %p1073 = pneg %p1072
    $region38: #{forward.12} parent=5 // pred_check_branch
      %1075 = sbr.rel (%p1073) target = $region40
    $region39: #{forward.12} parent=5 // pred_region
      %s1076 = ssub.s32 %s9, 2
      // Predicated region
      $region41: #{forward.12} parent=39 // pred_check
        %p1077 = pneg %p106
      $region42: #{forward.12} parent=39 // pred_check_branch
        %1079 = sbr.rel (%p1077) target = $region44
      $region43: #{forward.12} parent=39 // pred_region
        %p1080 = scmp.lt.s32.totalorder %s15, 1
        %s1081 = scalar_select %p1080, %s15, 1
        %s1082 = smul.addr %s1081, 54
        %s1083 = smul.addr %s1082, 8
        %s1084 = scalar_lea.vmem %s3, %s1083
      $region44: #{forward.12} parent=39 // pred_fallthru
        _
    $region40: #{forward.12} parent=5 // pred_fallthru
      _
  $region6: #{forward.12} parent=0 // loop_footer
    %s13 = sadd.s32 1, %s9
  $region7: #{forward.12} parent=0 // loop_footer_branch
    %8 = sbr.rel target = $region3
  $region8: #{forward.12} parent=0 // loop_exit
    _

// kernel: forward.15
$region0: #{forward.15}
  #allocation0 [shape = 'u32[]', space=smem, size = 0x4, offset = 0x4, fixed_abs, tag = 'smem constant byte address 0x4 - core index']
  #allocation1 [shape = 'u32[144,128]{1,0:T(1,128)}', space=vmem, size = 0x12000, scoped, tag = 'internal scratch']
  %s0 = inlined_call_operand.vmem [shape: bf16[2,256,128], index: 0, kind: input, shape index: {}]
  %s1 = inlined_call_operand.vmem [shape: f32[1,128], index: 1, kind: input, shape index: {}]
  %s2 = inlined_call_operand.vmem [shape: f32[1,128], index: 2, kind: input, shape index: {}]
  %s3 = inlined_call_operand.vmem [shape: f32[2,18,18,128], index: 3, kind: input, shape index: {}]
  %s4 = inlined_call_operand.vmem [shape: bf16[128,128], index: 4, kind: input, shape index: {}]
  %s5 = inlined_call_operand.vmem [shape: f32[2,18,18,128], index: 5, kind: output, shape index: {}]
  %s6 = sld [smem:[#allocation0]]
  $region53: #{forward.15} parent=0
    _
  %s8 = ssub.s32 1, %s6
  %s9 = scalar_select 0, %s8, %s6
  loop: start=0, step=1, limit=4
  $region2: #{forward.15} parent=0 // loop_pre_header
    _
  $region3: #{forward.15} parent=0 // loop_header
    %s11 = sphi 0, %s15
    %p12 = scmp.ge.s32.totalorder %s11, 4
    %s21 = sphi 0, %s23
    %s24 = sphi 0, %s21
    %s25 = sphi 0, %s24
    %s41 = sphi 0, %s25
    %s45 = sphi 0, %s45
    %s47 = sphi 0, %s45
    %s48 = sphi 0, %s47
    %s62 = sphi 0, %s48
    %s66 = sphi 0, %s66
    %s68 = sphi 0, %s66
    %s69 = sphi 0, %s68
    %s83 = sphi 0, %s69
    %s89 = sphi 0, %s91
    %s92 = sphi 0, %s89
    %s93 = sphi 0, %s92
    %s109 = sphi 0, %s93
    %s113 = sphi 0, %s113
    %s115 = sphi 0, %s113
    %s116 = sphi 0, %s115
    %s130 = sphi 0, %s116
    %s136 = sphi 0, %s138
    %s139 = sphi 0, %s136
    %s140 = sphi 0, %s139
    %s156 = sphi 0, %s140
  $region4: #{forward.15} parent=0 // loop_header_branch
    %14 = sbr.rel (%p12) target = $region8
  $region5: #{forward.15} parent=0 // loop_body
    %s16 = ssub.s32 %s11, 1
    %s17 = ssub.s32 %s11, 2
    %s18 = sadd.s32 %s11, 1
    %s19 = ssub.s32 %s11, %s18
    %p20 = scmp.eq.s32.totalorder %s19, 0
    %s22 = sadd.s32 %s21, 1
    %s23 = scalar_select %p20, %s21, %s22
    %p26 = pneg %p20
    %p27 = scmp.eq.s32.totalorder %s11, 1
    %p28 = por %p26, %p27
    %p29 = scmp.ne.s32.totalorder %s21, %s24
    %p30 = scmp.eq.s32.totalorder %s11, 0
    %p31 = por %p29, %p30
    %p32 = scmp.ne.s32.totalorder %s21, %s24
    %p33 = scmp.eq.s32.totalorder %s16, 1
    %p34 = por %p32, %p33
    %p35 = scmp.ne.s32.totalorder %s24, %s25
    %p36 = scmp.eq.s32.totalorder %s16, 0
    %p37 = por %p35, %p36
    %p38 = scmp.ne.s32.totalorder %s24, %s25
    %p39 = scmp.eq.s32.totalorder %s17, 1
    %p40 = por %p38, %p39
    %p42 = scmp.ne.s32.totalorder %s25, %s41
    %p43 = scmp.eq.s32.totalorder %s17, 0
    %p44 = por %p42, %p43
    %s46 = sadd.s32 %s45, 1
    %p49 = scmp.eq.s32.totalorder %s11, 1
    %p50 = scmp.ne.s32.totalorder %s45, %s47
    %p51 = scmp.eq.s32.totalorder %s11, 0
    %p52 = por %p50, %p51
    %p53 = scmp.ne.s32.totalorder %s45, %s47
    %p54 = scmp.eq.s32.totalorder %s16, 1
    %p55 = por %p53, %p54
    %p56 = scmp.ne.s32.totalorder %s47, %s48
    %p57 = scmp.eq.s32.totalorder %s16, 0
    %p58 = por %p56, %p57
    %p59 = scmp.ne.s32.totalorder %s47, %s48
    %p60 = scmp.eq.s32.totalorder %s17, 1
    %p61 = por %p59, %p60
    %p63 = scmp.ne.s32.totalorder %s48, %s62
    %p64 = scmp.eq.s32.totalorder %s17, 0
    %p65 = por %p63, %p64
    %s67 = sadd.s32 %s66, 1
    %p70 = scmp.eq.s32.totalorder %s11, 1
    %p71 = scmp.ne.s32.totalorder %s66, %s68
    %p72 = scmp.eq.s32.totalorder %s11, 0
    %p73 = por %p71, %p72
    %p74 = scmp.ne.s32.totalorder %s66, %s68
    %p75 = scmp.eq.s32.totalorder %s16, 1
    %p76 = por %p74, %p75
    %p77 = scmp.ne.s32.totalorder %s68, %s69
    %p78 = scmp.eq.s32.totalorder %s16, 0
    %p79 = por %p77, %p78
    %p80 = scmp.ne.s32.totalorder %s68, %s69
    %p81 = scmp.eq.s32.totalorder %s17, 1
    %p82 = por %p80, %p81
    %p84 = scmp.ne.s32.totalorder %s69, %s83
    %p85 = scmp.eq.s32.totalorder %s17, 0
    %p86 = por %p84, %p85
    %s87 = ssub.s32 %s11, %s18
    %p88 = scmp.eq.s32.totalorder %s87, 0
    %s90 = sadd.s32 %s89, 1
    %s91 = scalar_select %p88, %s89, %s90
    %p94 = pneg %p88
    %p95 = scmp.eq.s32.totalorder %s11, 1
    %p96 = por %p94, %p95
    %p97 = scmp.ne.s32.totalorder %s89, %s92
    %p98 = scmp.eq.s32.totalorder %s11, 0
    %p99 = por %p97, %p98
    %p100 = scmp.ne.s32.totalorder %s89, %s92
    %p101 = scmp.eq.s32.totalorder %s16, 1
    %p102 = por %p100, %p101
    %p103 = scmp.ne.s32.totalorder %s92, %s93
    %p104 = scmp.eq.s32.totalorder %s16, 0
    %p105 = por %p103, %p104
    %p106 = scmp.ne.s32.totalorder %s92, %s93
    %p107 = scmp.eq.s32.totalorder %s17, 1
    %p108 = por %p106, %p107
    %p110 = scmp.ne.s32.totalorder %s93, %s109
    %p111 = scmp.eq.s32.totalorder %s17, 0
    %p112 = por %p110, %p111
    %s114 = sadd.s32 %s113, 1
    %p117 = scmp.eq.s32.totalorder %s11, 1
    %p118 = scmp.ne.s32.totalorder %s113, %s115
    %p119 = scmp.eq.s32.totalorder %s11, 0
    %p120 = por %p118, %p119
    %p121 = scmp.ne.s32.totalorder %s113, %s115
    %p122 = scmp.eq.s32.totalorder %s16, 1
    %p123 = por %p121, %p122
    %p124 = scmp.ne.s32.totalorder %s115, %s116
    %p125 = scmp.eq.s32.totalorder %s16, 0
    %p126 = por %p124, %p125
    %p127 = scmp.ne.s32.totalorder %s115, %s116
    %p128 = scmp.eq.s32.totalorder %s17, 1
    %p129 = por %p127, %p128
    %p131 = scmp.ne.s32.totalorder %s116, %s130
    %p132 = scmp.eq.s32.totalorder %s17, 0
    %p133 = por %p131, %p132
    %s134 = ssub.s32 %s11, %s18
    %p135 = scmp.eq.s32.totalorder %s134, 0
    %s137 = sadd.s32 %s136, 1
    %s138 = scalar_select %p135, %s136, %s137
    %p141 = pneg %p135
    %p142 = scmp.eq.s32.totalorder %s11, 1
    %p143 = por %p141, %p142
    %p144 = scmp.ne.s32.totalorder %s136, %s139
    %p145 = scmp.eq.s32.totalorder %s11, 0
    %p146 = por %p144, %p145
    %p147 = scmp.ne.s32.totalorder %s136, %s139
    %p148 = scmp.eq.s32.totalorder %s16, 1
    %p149 = por %p147, %p148
    %p150 = scmp.ne.s32.totalorder %s139, %s140
    %p151 = scmp.eq.s32.totalorder %s16, 0
    %p152 = por %p150, %p151
    %p153 = scmp.ne.s32.totalorder %s139, %s140
    %p154 = scmp.eq.s32.totalorder %s17, 1
    %p155 = por %p153, %p154
    %p157 = scmp.ne.s32.totalorder %s140, %s156
    %p158 = scmp.eq.s32.totalorder %s17, 0
    %p159 = por %p157, %p158
    %p160 = scmp.le.s32.totalorder 1, %s11
    %p161 = scmp.lt.s32.totalorder %s11, 3
    %p162 = pnand %p160, %p161
    %p163 = pneg %p162
    // Predicated region
    $region9: #{forward.15} parent=5 // pred_check
      _
    $region10: #{forward.15} parent=5 // pred_check_branch
      %165 = sbr.rel (%p162) target = $region12
    $region11: #{forward.15} parent=5 // pred_region
      %s166 = ssub.s32 %s11, 1
      // Predicated region
      $region13: #{forward.15} parent=11 // pred_check
        %p167 = pneg %p58
      $region14: #{forward.15} parent=11 // pred_check_branch
        %169 = sbr.rel (%p167) target = $region16
      $region15: #{forward.15} parent=11 // pred_region
        _
      $region16: #{forward.15} parent=11 // pred_fallthru
        _
      // Predicated region
      $region17: #{forward.15} parent=11 // pred_check
        %p170 = pneg %p79
      $region18: #{forward.15} parent=11 // pred_check_branch
        %172 = sbr.rel (%p170) target = $region20
      $region19: #{forward.15} parent=11 // pred_region
        _
      $region20: #{forward.15} parent=11 // pred_fallthru
        _
      // Predicated region
      $region21: #{forward.15} parent=11 // pred_check
        %p173 = pneg %p126
      $region22: #{forward.15} parent=11 // pred_check_branch
        %175 = sbr.rel (%p173) target = $region24
      $region23: #{forward.15} parent=11 // pred_region
        _
      $region24: #{forward.15} parent=11 // pred_fallthru
        _
    $region12: #{forward.15} parent=5 // pred_fallthru
      _
    %p176 = scmp.lt.s32.totalorder %s11, 2
    // Predicated region
    $region25: #{forward.15} parent=5 // pred_check
      %p177 = pneg %p176
    $region26: #{forward.15} parent=5 // pred_check_branch
      %179 = sbr.rel (%p177) target = $region28
    $region27: #{forward.15} parent=5 // pred_region
      // Predicated region
      $region29: #{forward.15} parent=27 // pred_check
        %p180 = pneg %p31
      $region30: #{forward.15} parent=27 // pred_check_branch
        %182 = sbr.rel (%p180) target = $region32
      $region31: #{forward.15} parent=27 // pred_region
        %p183 = scmp.lt.s32.totalorder %s11, 1
        %s184 = scalar_select %p183, %s11, 1
        %s185 = smul.addr %s184, 32
        %s186 = smul.addr %s185, 4
        %s187 = scalar_lea.vmem %s0, %s186
      $region32: #{forward.15} parent=27 // pred_fallthru
        _
      // Predicated region
      $region33: #{forward.15} parent=27 // pred_check
        %p188 = pneg %p99
      $region34: #{forward.15} parent=27 // pred_check_branch
        %190 = sbr.rel (%p188) target = $region36
      $region35: #{forward.15} parent=27 // pred_region
        %p191 = scmp.lt.s32.totalorder %s11, 1
        %s192 = scalar_select %p191, %s11, 1
        %s193 = smul.addr %s192, 54
        %s194 = smul.addr %s193, 8
        %s195 = scalar_lea.vmem %s3, %s194
      $region36: #{forward.15} parent=27 // pred_fallthru
        _
    $region28: #{forward.15} parent=5 // pred_fallthru
      _
    %p196 = scmp.le.s32.totalorder 1, %s11
    %p197 = scmp.lt.s32.totalorder %s11, 3
    %p198 = pnand %p196, %p197
    %p199 = pneg %p198
    // Predicated region
    $region37: #{forward.15} parent=5 // pred_check
      _
    $region38: #{forward.15} parent=5 // pred_check_branch
      %201 = sbr.rel (%p198) target = $region40
    $region39: #{forward.15} parent=5 // pred_region
      %s202 = ssub.s32 %s11, 1
      %p203 = scmp.lt.s32.totalorder %s16, 1
      %s204 = scalar_select %p203, %s16, 1
      %s205 = smul.addr %s204, 32
      %s206 = smul.addr %s205, 4
      %s207 = scalar_lea.vmem %s0, %s206
      %p208 = pneg %p37
      %p209 = pneg %p34
      %p210 = pneg %p58
      %p211 = pneg %p55
      %p212 = pneg %p79
      %p213 = pneg %p76
      %p214 = scmp.lt.s32.totalorder %s16, 1
      %s215 = scalar_select %p214, %s16, 1
      %s216 = smul.addr %s215, 54
      %s217 = smul.addr %s216, 8
      %s218 = scalar_lea.vmem %s3, %s217
      %p219 = pneg %p105
      %p220 = pneg %p102
      %p221 = pneg %p126
      %p222 = pneg %p123
      %p223 = pneg %p152
      %p224 = pneg %p149
      %p225 = scmp.lt.s32.totalorder %s16, 1
      %s226 = scalar_select %p225, %s16, 1
      %s227 = smul.addr %s226, 54
      %s228 = smul.addr %s227, 8
      %s229 = scalar_lea.vmem %s5, %s228
      %p230 = scmp.lt.s32.totalorder %s16, 1
      %s231 = scalar_select %p230, %s16, 1
      %s232 = smul.addr %s231, 32
      %s233 = smul.addr %s232, 4
      %s234 = scalar_lea.vmem %s0, %s233
      %p235 = scmp.lt.s32.totalorder %s16, 1
      %s236 = scalar_select %p235, %s16, 1
      %s237 = smul.addr %s236, 54
      %s238 = smul.addr %s237, 8
      %s239 = scalar_lea.vmem %s3, %s238
      %p240 = scmp.lt.s32.totalorder %s16, 1
      %s241 = scalar_select %p240, %s16, 1
      %s242 = smul.addr %s241, 54
      %s243 = smul.addr %s242, 8
      %s244 = scalar_lea.vmem %s5, %s243
      %v246 = vld [vmem:[%s234] sm:$0xf]
      %v247 = vld [vmem:[%s234 + $0x4] sm:$0xf]
      %v248 = vld [vmem:[%s234 + $0x8] sm:$0xf]
      %v249 = vld [vmem:[%s234 + $0xc] sm:$0xf]
      %v250 = vld [vmem:[%s234 + $0x10] sm:$0xf]
      %v251 = vld [vmem:[%s234 + $0x14] sm:$0xf]
      %v252 = vld [vmem:[%s234 + $0x18] sm:$0xf]
      %v253 = vld [vmem:[%s234 + $0x1c] sm:$0xf]
      %v254 = vld [vmem:[%s234 + $0x20] sm:$0xf]
      %v255 = vld [vmem:[%s234 + $0x24] sm:$0xf]
      %v256 = vld [vmem:[%s234 + $0x28] sm:$0xf]
      %v257 = vld [vmem:[%s234 + $0x2c] sm:$0xf]
      %v258 = vld [vmem:[%s234 + $0x30] sm:$0xf]
      %v259 = vld [vmem:[%s234 + $0x34] sm:$0xf]
      %v260 = vld [vmem:[%s234 + $0x38] sm:$0xf]
      %v261 = vld [vmem:[%s234 + $0x3c] sm:$0xf]
      %v262 = vld [vmem:[%s234 + $0x40] sm:$0xf]
      %v263 = vld [vmem:[%s234 + $0x44] sm:$0xf]
      %v264 = vld [vmem:[%s234 + $0x48] sm:$0xf]
      %v265 = vld [vmem:[%s234 + $0x4c] sm:$0xf]
      %v266 = vld [vmem:[%s234 + $0x50] sm:$0xf]
      %v267 = vld [vmem:[%s234 + $0x54] sm:$0xf]
      %v268 = vld [vmem:[%s234 + $0x58] sm:$0xf]
      %v269 = vld [vmem:[%s234 + $0x5c] sm:$0xf]
      %v270 = vld [vmem:[%s234 + $0x60] sm:$0xf]
      %v271 = vld [vmem:[%s234 + $0x64] sm:$0xf]
      %v272 = vld [vmem:[%s234 + $0x68] sm:$0xf]
      %v273 = vld [vmem:[%s234 + $0x6c] sm:$0xf]
      %v274 = vld [vmem:[%s234 + $0x70] sm:$0xf]
      %v275 = vld [vmem:[%s234 + $0x74] sm:$0xf]
      %v276 = vld [vmem:[%s234 + $0x78] sm:$0xf]
      %v277 = vld [vmem:[%s234 + $0x7c] sm:$0xf]
      %v278 = vld [vmem:[%s1] sm:$0x1]
      %v279 = vunpack.c.l.bf16 %v246
      %v280 = vunpack.c.l.bf16 %v247
      %v281 = vunpack.c.l.bf16 %v248
      %v282 = vunpack.c.l.bf16 %v249
      %v283 = vunpack.c.l.bf16 %v250
      %v284 = vunpack.c.l.bf16 %v251
      %v285 = vunpack.c.l.bf16 %v252
      %v286 = vunpack.c.l.bf16 %v253
      %v287 = vunpack.c.l.bf16 %v254
      %v288 = vunpack.c.l.bf16 %v255
      %v289 = vunpack.c.l.bf16 %v256
      %v290 = vunpack.c.l.bf16 %v257
      %v291 = vunpack.c.l.bf16 %v258
      %v292 = vunpack.c.l.bf16 %v259
      %v293 = vunpack.c.l.bf16 %v260
      %v294 = vunpack.c.l.bf16 %v261
      %v295 = vunpack.c.l.bf16 %v262
      %v296 = vunpack.c.l.bf16 %v263
      %v297 = vunpack.c.l.bf16 %v264
      %v298 = vunpack.c.l.bf16 %v265
      %v299 = vunpack.c.l.bf16 %v266
      %v300 = vunpack.c.l.bf16 %v267
      %v301 = vunpack.c.l.bf16 %v268
      %v302 = vunpack.c.l.bf16 %v269
      %v303 = vunpack.c.l.bf16 %v270
      %v304 = vunpack.c.l.bf16 %v271
      %v305 = vunpack.c.l.bf16 %v272
      %v306 = vunpack.c.l.bf16 %v273
      %v307 = vunpack.c.l.bf16 %v274
      %v308 = vunpack.c.l.bf16 %v275
      %v309 = vunpack.c.l.bf16 %v276
      %v310 = vunpack.c.l.bf16 %v277
      %v312 = vlaneseq
      %v313 = vshrl.u32 %v312, 7
      %v314 = vsub.s32 0, %v313
      %v315 = vrot.slane %v278, %v314
      %v317 = vmul.f32 %v279, %v315
      %v318 = vmul.f32 %v280, %v315
      %v319 = vmul.f32 %v281, %v315
      %v320 = vmul.f32 %v282, %v315
      %v321 = vmul.f32 %v283, %v315
      %v322 = vmul.f32 %v284, %v315
      %v323 = vmul.f32 %v285, %v315
      %v324 = vmul.f32 %v286, %v315
      %v325 = vmul.f32 %v287, %v315
      %v326 = vmul.f32 %v288, %v315
      %v327 = vmul.f32 %v289, %v315
      %v328 = vmul.f32 %v290, %v315
      %v329 = vmul.f32 %v291, %v315
      %v330 = vmul.f32 %v292, %v315
      %v331 = vmul.f32 %v293, %v315
      %v332 = vmul.f32 %v294, %v315
      %v333 = vmul.f32 %v295, %v315
      %v334 = vmul.f32 %v296, %v315
      %v335 = vmul.f32 %v297, %v315
      %v336 = vmul.f32 %v298, %v315
      %v337 = vmul.f32 %v299, %v315
      %v338 = vmul.f32 %v300, %v315
      %v339 = vmul.f32 %v301, %v315
      %v340 = vmul.f32 %v302, %v315
      %v341 = vmul.f32 %v303, %v315
      %v342 = vmul.f32 %v304, %v315
      %v343 = vmul.f32 %v305, %v315
      %v344 = vmul.f32 %v306, %v315
      %v345 = vmul.f32 %v307, %v315
      %v346 = vmul.f32 %v308, %v315
      %v347 = vmul.f32 %v309, %v315
      %v348 = vmul.f32 %v310, %v315
      %v349 = vld [vmem:[%s2] sm:$0x1]
      %v351 = vlaneseq
      %v352 = vshrl.u32 %v351, 7
      %v353 = vsub.s32 0, %v352
      %v354 = vrot.slane %v349, %v353
      %v356 = vadd.f32 %v317, %v354
      %v357 = vadd.f32 %v318, %v354
      %v358 = vadd.f32 %v319, %v354
      %v359 = vadd.f32 %v320, %v354
      %v360 = vadd.f32 %v321, %v354
      %v361 = vadd.f32 %v322, %v354
      %v362 = vadd.f32 %v323, %v354
      %v363 = vadd.f32 %v324, %v354
      %v364 = vadd.f32 %v325, %v354
      %v365 = vadd.f32 %v326, %v354
      %v366 = vadd.f32 %v327, %v354
      %v367 = vadd.f32 %v328, %v354
      %v368 = vadd.f32 %v329, %v354
      %v369 = vadd.f32 %v330, %v354
      %v370 = vadd.f32 %v331, %v354
      %v371 = vadd.f32 %v332, %v354
      %v372 = vadd.f32 %v333, %v354
      %v373 = vadd.f32 %v334, %v354
      %v374 = vadd.f32 %v335, %v354
      %v375 = vadd.f32 %v336, %v354
      %v376 = vadd.f32 %v337, %v354
      %v377 = vadd.f32 %v338, %v354
      %v378 = vadd.f32 %v339, %v354
      %v379 = vadd.f32 %v340, %v354
      %v380 = vadd.f32 %v341, %v354
      %v381 = vadd.f32 %v342, %v354
      %v382 = vadd.f32 %v343, %v354
      %v383 = vadd.f32 %v344, %v354
      %v384 = vadd.f32 %v345, %v354
      %v385 = vadd.f32 %v346, %v354
      %v386 = vadd.f32 %v347, %v354
      %v387 = vadd.f32 %v348, %v354
      %s388 = scalar_lea.vmem %s239, 24
      %v389 = vld [vmem:[%s388 + $0x1] sm:$0xff]
      %v390 = vld [vmem:[%s388 + $0x9] sm:$0xff]
      %v391 = vld [vmem:[%s388 + $0x19] sm:$0xff]
      %v392 = vld [vmem:[%s388 + $0x21] sm:$0xff]
      %v393 = vld [vmem:[%s388 + $0x31] sm:$0xff]
      %v394 = vld [vmem:[%s388 + $0x39] sm:$0xff]
      %v395 = vld [vmem:[%s388 + $0x49] sm:$0xff]
      %v396 = vld [vmem:[%s388 + $0x51] sm:$0xff]
      %v397 = vld [vmem:[%s388 + $0x61] sm:$0xff]
      %v398 = vld [vmem:[%s388 + $0x69] sm:$0xff]
      %v399 = vld [vmem:[%s388 + $0x79] sm:$0xff]
      %v400 = vld [vmem:[%s388 + $0x81] sm:$0xff]
      %v401 = vld [vmem:[%s388 + $0x91] sm:$0xff]
      %v402 = vld [vmem:[%s388 + $0x99] sm:$0xff]
      %v403 = vld [vmem:[%s388 + $0xa9] sm:$0xff]
      %v404 = vld [vmem:[%s388 + $0xb1] sm:$0xff]
      %v405 = vld [vmem:[%s388 + $0xc1] sm:$0xff]
      %v406 = vld [vmem:[%s388 + $0xc9] sm:$0xff]
      %v407 = vld [vmem:[%s388 + $0xd9] sm:$0xff]
      %v408 = vld [vmem:[%s388 + $0xe1] sm:$0xff]
      %v409 = vld [vmem:[%s388 + $0xf1] sm:$0xff]
      %v410 = vld [vmem:[%s388 + $0xf9] sm:$0xff]
      %v411 = vld [vmem:[%s388 + $0x109] sm:$0xff]
      %v412 = vld [vmem:[%s388 + $0x111] sm:$0xff]
      %v413 = vld [vmem:[%s388 + $0x121] sm:$0xff]
      %v414 = vld [vmem:[%s388 + $0x129] sm:$0xff]
      %v415 = vld [vmem:[%s388 + $0x139] sm:$0xff]
      %v416 = vld [vmem:[%s388 + $0x141] sm:$0xff]
      %v417 = vld [vmem:[%s388 + $0x151] sm:$0xff]
      %v418 = vld [vmem:[%s388 + $0x159] sm:$0xff]
      %v419 = vld [vmem:[%s388 + $0x169] sm:$0xff]
      %v420 = vld [vmem:[%s388 + $0x171] sm:$0xff]
      %v421 = vpack.c.bf16 %v390, %v389
      %v422 = vpack.c.bf16 %v392, %v391
      %v423 = vpack.c.bf16 %v394, %v393
      %v424 = vpack.c.bf16 %v396, %v395
      %v425 = vpack.c.bf16 %v398, %v397
      %v426 = vpack.c.bf16 %v400, %v399
      %v427 = vpack.c.bf16 %v402, %v401
      %v428 = vpack.c.bf16 %v404, %v403
      %v429 = vpack.c.bf16 %v406, %v405
      %v430 = vpack.c.bf16 %v408, %v407
      %v431 = vpack.c.bf16 %v410, %v409
      %v432 = vpack.c.bf16 %v412, %v411
      %v433 = vpack.c.bf16 %v414, %v413
      %v434 = vpack.c.bf16 %v416, %v415
      %v435 = vpack.c.bf16 %v418, %v417
      %v436 = vpack.c.bf16 %v420, %v419
      %v437 = vld [vmem:[%s4] sm:$0xf]
      %v438 = vld [vmem:[%s4 + $0x4] sm:$0xf]
      %v439 = vld [vmem:[%s4 + $0x8] sm:$0xf]
      %v440 = vld [vmem:[%s4 + $0xc] sm:$0xf]
      %v441 = vld [vmem:[%s4 + $0x10] sm:$0xf]
      %v442 = vld [vmem:[%s4 + $0x14] sm:$0xf]
      %v443 = vld [vmem:[%s4 + $0x18] sm:$0xf]
      %v444 = vld [vmem:[%s4 + $0x1c] sm:$0xf]
      %v445 = vld [vmem:[%s4 + $0x20] sm:$0xf]
      %v446 = vld [vmem:[%s4 + $0x24] sm:$0xf]
      %v447 = vld [vmem:[%s4 + $0x28] sm:$0xf]
      %v448 = vld [vmem:[%s4 + $0x2c] sm:$0xf]
      %v449 = vld [vmem:[%s4 + $0x30] sm:$0xf]
      %v450 = vld [vmem:[%s4 + $0x34] sm:$0xf]
      %v451 = vld [vmem:[%s4 + $0x38] sm:$0xf]
      %v452 = vld [vmem:[%s4 + $0x3c] sm:$0xf]
      %v469 = vunpack.c.l.b16 %v437
      %v470 = vunpack.c.l.b16 %v438
      %v471 = vunpack.c.l.b16 %v439
      %v472 = vunpack.c.l.b16 %v440
      %v473 = vunpack.c.l.b16 %v441
      %v474 = vunpack.c.l.b16 %v442
      %v475 = vunpack.c.l.b16 %v443
      %v476 = vunpack.c.l.b16 %v444
      %v477 = vunpack.c.l.b16 %v445
      %v478 = vunpack.c.l.b16 %v446
      %v479 = vunpack.c.l.b16 %v447
      %v480 = vunpack.c.l.b16 %v448
      %v481 = vunpack.c.l.b16 %v449
      %v482 = vunpack.c.l.b16 %v450
      %v483 = vunpack.c.l.b16 %v451
      %v484 = vunpack.c.l.b16 %v452
      %v485 = vpack.c.b16 %v470, %v469
      %v486 = vpack.c.b16 %v472, %v471
      %v487 = vpack.c.b16 %v474, %v473
      %v488 = vpack.c.b16 %v476, %v475
      %v489 = vpack.c.b16 %v478, %v477
      %v490 = vpack.c.b16 %v480, %v479
      %v491 = vpack.c.b16 %v482, %v481
      %v492 = vpack.c.b16 %v484, %v483
      %501 = vmatprep.subr.bf16.mxu0 0
      %502 = vmatpush1.bf16.msra.mxu0 %v492
      %503 = vmatprep.subr.bf16.mxu0 0
      %504 = vmatpush1.bf16.msra.mxu0 %v491
      %505 = vmatprep.subr.bf16.mxu0 0
      %506 = vmatpush1.bf16.msra.mxu0 %v490
      %507 = vmatprep.subr.bf16.mxu0 0
      %508 = vmatpush1.bf16.msra.mxu0 %v489
      %509 = vmatprep.subr.bf16.mxu0 0
      %510 = vmatpush1.bf16.msra.mxu0 %v488
      %511 = vmatprep.subr.bf16.mxu0 0
      %512 = vmatpush1.bf16.msra.mxu0 %v487
      %513 = vmatprep.subr.bf16.mxu0 0
      %514 = vmatpush1.bf16.msra.mxu0 %v486
      %515 = vmatprep.subr.bf16.mxu0 0
      %516 = vmatpush1.bf16.msra.mxu0 %v485
      %517 = vmatprep.subr.bf16.mxu0 0
      %518 = vmatpush2.bf16.msra.mxu0 0
      %519 = vmatprep.subr.bf16.mxu0 0
      %520 = vmatpush2.bf16.msra.mxu0 0
      %521 = vmatprep.subr.bf16.mxu0 0
      %522 = vmatpush2.bf16.msra.mxu0 0
      %523 = vmatprep.subr.bf16.mxu0 0
      %524 = vmatpush2.bf16.msra.mxu0 0
      %525 = vmatprep.subr.bf16.mxu0 0
      %526 = vmatpush2.bf16.msra.mxu0 0
      %527 = vmatprep.subr.bf16.mxu0 0
      %528 = vmatpush2.bf16.msra.mxu0 0
      %529 = vmatprep.subr.bf16.mxu0 0
      %530 = vmatpush2.bf16.msra.mxu0 0
      %531 = vmatprep.subr.bf16.mxu0 0
      %532 = vmatpush2.bf16.msra.mxu0 0
      %533 = vmatprep.mubr.bf16.mxu0 0
      %534 = vmatmul.mubr.bf16.gmra.mxu0 %v421
      %v535 = vpop.f32.mrf.mxu0
      %v536 = vadd.f32 0.0, %v535
      %v537 = vpop.f32.mrf.mxu0
      %v538 = vpop.f32.mrf.mxu0
      %v539 = vadd.f32 0.0, %v538
      %v540 = vpop.f32.mrf.mxu0
      %541 = vmatprep.mubr.bf16.mxu0 0
      %542 = vmatmul.mubr.bf16.gmra.mxu0 %v422
      %v543 = vpop.f32.mrf.mxu0
      %v544 = vadd.f32 0.0, %v543
      %v545 = vpop.f32.mrf.mxu0
      %v546 = vpop.f32.mrf.mxu0
      %v547 = vadd.f32 0.0, %v546
      %v548 = vpop.f32.mrf.mxu0
      %549 = vmatprep.mubr.bf16.mxu0 0
      %550 = vmatmul.mubr.bf16.gmra.mxu0 %v423
      %v551 = vpop.f32.mrf.mxu0
      %v552 = vadd.f32 0.0, %v551
      %v553 = vpop.f32.mrf.mxu0
      %v554 = vpop.f32.mrf.mxu0
      %v555 = vadd.f32 0.0, %v554
      %v556 = vpop.f32.mrf.mxu0
      %557 = vmatprep.mubr.bf16.mxu0 0
      %558 = vmatmul.mubr.bf16.gmra.mxu0 %v424
      %v559 = vpop.f32.mrf.mxu0
      %v560 = vadd.f32 0.0, %v559
      %v561 = vpop.f32.mrf.mxu0
      %v562 = vpop.f32.mrf.mxu0
      %v563 = vadd.f32 0.0, %v562
      %v564 = vpop.f32.mrf.mxu0
      %565 = vmatprep.mubr.bf16.mxu0 0
      %566 = vmatmul.mubr.bf16.gmra.mxu0 %v425
      %v567 = vpop.f32.mrf.mxu0
      %v568 = vadd.f32 0.0, %v567
      %v569 = vpop.f32.mrf.mxu0
      %v570 = vpop.f32.mrf.mxu0
      %v571 = vadd.f32 0.0, %v570
      %v572 = vpop.f32.mrf.mxu0
      %573 = vmatprep.mubr.bf16.mxu0 0
      %574 = vmatmul.mubr.bf16.gmra.mxu0 %v426
      %v575 = vpop.f32.mrf.mxu0
      %v576 = vadd.f32 0.0, %v575
      %v577 = vpop.f32.mrf.mxu0
      %v578 = vpop.f32.mrf.mxu0
      %v579 = vadd.f32 0.0, %v578
      %v580 = vpop.f32.mrf.mxu0
      %581 = vmatprep.mubr.bf16.mxu0 0
      %582 = vmatmul.mubr.bf16.gmra.mxu0 %v427
      %v583 = vpop.f32.mrf.mxu0
      %v584 = vadd.f32 0.0, %v583
      %v585 = vpop.f32.mrf.mxu0
      %v586 = vpop.f32.mrf.mxu0
      %v587 = vadd.f32 0.0, %v586
      %v588 = vpop.f32.mrf.mxu0
      %589 = vmatprep.mubr.bf16.mxu0 0
      %590 = vmatmul.mubr.bf16.gmra.mxu0 %v428
      %v591 = vpop.f32.mrf.mxu0
      %v592 = vadd.f32 0.0, %v591
      %v593 = vpop.f32.mrf.mxu0
      %v594 = vpop.f32.mrf.mxu0
      %v595 = vadd.f32 0.0, %v594
      %v596 = vpop.f32.mrf.mxu0
      %597 = vmatprep.mubr.bf16.mxu0 0
      %598 = vmatmul.mubr.bf16.gmra.mxu0 %v429
      %v599 = vpop.f32.mrf.mxu0
      %v600 = vadd.f32 0.0, %v599
      %v601 = vpop.f32.mrf.mxu0
      %v602 = vpop.f32.mrf.mxu0
      %v603 = vadd.f32 0.0, %v602
      %v604 = vpop.f32.mrf.mxu0
      %605 = vmatprep.mubr.bf16.mxu0 0
      %606 = vmatmul.mubr.bf16.gmra.mxu0 %v430
      %v607 = vpop.f32.mrf.mxu0
      %v608 = vadd.f32 0.0, %v607
      %v609 = vpop.f32.mrf.mxu0
      %v610 = vpop.f32.mrf.mxu0
      %v611 = vadd.f32 0.0, %v610
      %v612 = vpop.f32.mrf.mxu0
      %613 = vmatprep.mubr.bf16.mxu0 0
      %614 = vmatmul.mubr.bf16.gmra.mxu0 %v431
      %v615 = vpop.f32.mrf.mxu0
      %v616 = vadd.f32 0.0, %v615
      %v617 = vpop.f32.mrf.mxu0
      %v618 = vpop.f32.mrf.mxu0
      %v619 = vadd.f32 0.0, %v618
      %v620 = vpop.f32.mrf.mxu0
      %621 = vmatprep.mubr.bf16.mxu0 0
      %622 = vmatmul.mubr.bf16.gmra.mxu0 %v432
      %v623 = vpop.f32.mrf.mxu0
      %v624 = vadd.f32 0.0, %v623
      %v625 = vpop.f32.mrf.mxu0
      %v626 = vpop.f32.mrf.mxu0
      %v627 = vadd.f32 0.0, %v626
      %v628 = vpop.f32.mrf.mxu0
      %629 = vmatprep.mubr.bf16.mxu0 0
      %630 = vmatmul.mubr.bf16.gmra.mxu0 %v433
      %v631 = vpop.f32.mrf.mxu0
      %v632 = vadd.f32 0.0, %v631
      %v633 = vpop.f32.mrf.mxu0
      %v634 = vpop.f32.mrf.mxu0
      %v635 = vadd.f32 0.0, %v634
      %v636 = vpop.f32.mrf.mxu0
      %637 = vmatprep.mubr.bf16.mxu0 0
      %638 = vmatmul.mubr.bf16.gmra.mxu0 %v434
      %v639 = vpop.f32.mrf.mxu0
      %v640 = vadd.f32 0.0, %v639
      %v641 = vpop.f32.mrf.mxu0
      %v642 = vpop.f32.mrf.mxu0
      %v643 = vadd.f32 0.0, %v642
      %v644 = vpop.f32.mrf.mxu0
      %645 = vmatprep.mubr.bf16.mxu0 0
      %646 = vmatmul.mubr.bf16.gmra.mxu0 %v435
      %v647 = vpop.f32.mrf.mxu0
      %v648 = vadd.f32 0.0, %v647
      %v649 = vpop.f32.mrf.mxu0
      %v650 = vpop.f32.mrf.mxu0
      %v651 = vadd.f32 0.0, %v650
      %v652 = vpop.f32.mrf.mxu0
      %653 = vmatprep.mubr.bf16.mxu0 0
      %654 = vmatmul.mubr.bf16.gmra.mxu0 %v436
      %v655 = vpop.f32.mrf.mxu0
      %v656 = vadd.f32 0.0, %v655
      %v657 = vpop.f32.mrf.mxu0
      %v658 = vpop.f32.mrf.mxu0
      %v659 = vadd.f32 0.0, %v658
      %v660 = vpop.f32.mrf.mxu0
      %661 = vdwg.mxu0
      %v662 = vadd.f32 %v356, %v536
      %v663 = vadd.f32 %v357, %v539
      %v664 = vadd.f32 %v358, %v544
      %v665 = vadd.f32 %v359, %v547
      %v666 = vadd.f32 %v360, %v552
      %v667 = vadd.f32 %v361, %v555
      %v668 = vadd.f32 %v362, %v560
      %v669 = vadd.f32 %v363, %v563
      %v670 = vadd.f32 %v364, %v568
      %v671 = vadd.f32 %v365, %v571
      %v672 = vadd.f32 %v366, %v576
      %v673 = vadd.f32 %v367, %v579
      %v674 = vadd.f32 %v368, %v584
      %v675 = vadd.f32 %v369, %v587
      %v676 = vadd.f32 %v370, %v592
      %v677 = vadd.f32 %v371, %v595
      %v678 = vadd.f32 %v372, %v600
      %v679 = vadd.f32 %v373, %v603
      %v680 = vadd.f32 %v374, %v608
      %v681 = vadd.f32 %v375, %v611
      %v682 = vadd.f32 %v376, %v616
      %v683 = vadd.f32 %v377, %v619
      %v684 = vadd.f32 %v378, %v624
      %v685 = vadd.f32 %v379, %v627
      %v686 = vadd.f32 %v380, %v632
      %v687 = vadd.f32 %v381, %v635
      %v688 = vadd.f32 %v382, %v640
      %v689 = vadd.f32 %v383, %v643
      %v690 = vadd.f32 %v384, %v648
      %v691 = vadd.f32 %v385, %v651
      %v692 = vadd.f32 %v386, %v656
      %v693 = vadd.f32 %v387, %v659
      %v694 = vmax.f32 %v662, 0.0
      %v695 = vmax.f32 %v663, 0.0
      %v696 = vmax.f32 %v664, 0.0
      %v697 = vmax.f32 %v665, 0.0
      %v698 = vmax.f32 %v666, 0.0
      %v699 = vmax.f32 %v667, 0.0
      %v700 = vmax.f32 %v668, 0.0
      %v701 = vmax.f32 %v669, 0.0
      %v702 = vmax.f32 %v670, 0.0
      %v703 = vmax.f32 %v671, 0.0
      %v704 = vmax.f32 %v672, 0.0
      %v705 = vmax.f32 %v673, 0.0
      %v706 = vmax.f32 %v674, 0.0
      %v707 = vmax.f32 %v675, 0.0
      %v708 = vmax.f32 %v676, 0.0
      %v709 = vmax.f32 %v677, 0.0
      %v710 = vmax.f32 %v678, 0.0
      %v711 = vmax.f32 %v679, 0.0
      %v712 = vmax.f32 %v680, 0.0
      %v713 = vmax.f32 %v681, 0.0
      %v714 = vmax.f32 %v682, 0.0
      %v715 = vmax.f32 %v683, 0.0
      %v716 = vmax.f32 %v684, 0.0
      %v717 = vmax.f32 %v685, 0.0
      %v718 = vmax.f32 %v686, 0.0
      %v719 = vmax.f32 %v687, 0.0
      %v720 = vmax.f32 %v688, 0.0
      %v721 = vmax.f32 %v689, 0.0
      %v722 = vmax.f32 %v690, 0.0
      %v723 = vmax.f32 %v691, 0.0
      %v724 = vmax.f32 %v692, 0.0
      %v725 = vmax.f32 %v693, 0.0
      %726 = vst [vmem:[%s244] sm:$0xff] 0.0
      %727 = vst [vmem:[%s244 + $0x8] sm:$0xff] 0.0
      %728 = vst [vmem:[%s244 + $0x10] sm:$0x3] 0.0
      %729 = vst [vmem:[%s244 + $0x18] sm:$0xff] 0.0
      %730 = vst [vmem:[%s244 + $0x20] sm:$0xff] 0.0
      %731 = vst [vmem:[%s244 + $0x28] sm:$0x3] 0.0
      %732 = vst [vmem:[%s244 + $0x30] sm:$0xff] 0.0
      %733 = vst [vmem:[%s244 + $0x38] sm:$0xff] 0.0
      %734 = vst [vmem:[%s244 + $0x40] sm:$0x3] 0.0
      %735 = vst [vmem:[%s244 + $0x48] sm:$0xff] 0.0
      %736 = vst [vmem:[%s244 + $0x50] sm:$0xff] 0.0
      %737 = vst [vmem:[%s244 + $0x58] sm:$0x3] 0.0
      %738 = vst [vmem:[%s244 + $0x60] sm:$0xff] 0.0
      %739 = vst [vmem:[%s244 + $0x68] sm:$0xff] 0.0
      %740 = vst [vmem:[%s244 + $0x70] sm:$0x3] 0.0
      %741 = vst [vmem:[%s244 + $0x78] sm:$0xff] 0.0
      %742 = vst [vmem:[%s244 + $0x80] sm:$0xff] 0.0
      %743 = vst [vmem:[%s244 + $0x88] sm:$0x3] 0.0
      %744 = vst [vmem:[%s244 + $0x90] sm:$0xff] 0.0
      %745 = vst [vmem:[%s244 + $0x98] sm:$0xff] 0.0
      %746 = vst [vmem:[%s244 + $0xa0] sm:$0x3] 0.0
      %747 = vst [vmem:[%s244 + $0xa8] sm:$0xff] 0.0
      %748 = vst [vmem:[%s244 + $0xb0] sm:$0xff] 0.0
      %749 = vst [vmem:[%s244 + $0xb8] sm:$0x3] 0.0
      %750 = vst [vmem:[%s244 + $0xc0] sm:$0xff] 0.0
      %751 = vst [vmem:[%s244 + $0xc8] sm:$0xff] 0.0
      %752 = vst [vmem:[%s244 + $0xd0] sm:$0x3] 0.0
      %753 = vst [vmem:[%s244 + $0xd8] sm:$0xff] 0.0
      %754 = vst [vmem:[%s244 + $0xe0] sm:$0xff] 0.0
      %755 = vst [vmem:[%s244 + $0xe8] sm:$0x3] 0.0
      %756 = vst [vmem:[%s244 + $0xf0] sm:$0xff] 0.0
      %757 = vst [vmem:[%s244 + $0xf8] sm:$0xff] 0.0
      %758 = vst [vmem:[%s244 + $0x100] sm:$0x3] 0.0
      %759 = vst [vmem:[%s244 + $0x108] sm:$0xff] 0.0
      %760 = vst [vmem:[%s244 + $0x110] sm:$0xff] 0.0
      %761 = vst [vmem:[%s244 + $0x118] sm:$0x3] 0.0
      %762 = vst [vmem:[%s244 + $0x120] sm:$0xff] 0.0
      %763 = vst [vmem:[%s244 + $0x128] sm:$0xff] 0.0
      %764 = vst [vmem:[%s244 + $0x130] sm:$0x3] 0.0
      %765 = vst [vmem:[%s244 + $0x138] sm:$0xff] 0.0
      %766 = vst [vmem:[%s244 + $0x140] sm:$0xff] 0.0
      %767 = vst [vmem:[%s244 + $0x148] sm:$0x3] 0.0
      %768 = vst [vmem:[%s244 + $0x150] sm:$0xff] 0.0
      %769 = vst [vmem:[%s244 + $0x158] sm:$0xff] 0.0
      %770 = vst [vmem:[%s244 + $0x160] sm:$0x3] 0.0
      %771 = vst [vmem:[%s244 + $0x168] sm:$0xff] 0.0
      %772 = vst [vmem:[%s244 + $0x170] sm:$0xff] 0.0
      %773 = vst [vmem:[%s244 + $0x178] sm:$0x3] 0.0
      %774 = vst [vmem:[%s244 + $0x180] sm:$0xff] 0.0
      %775 = vst [vmem:[%s244 + $0x188] sm:$0xff] 0.0
      %776 = vst [vmem:[%s244 + $0x190] sm:$0x3] 0.0
      %777 = vst [vmem:[%s244 + $0x198] sm:$0xff] 0.0
      %778 = vst [vmem:[%s244 + $0x1a0] sm:$0xff] 0.0
      %779 = vst [vmem:[%s244 + $0x1a8] sm:$0x3] 0.0
      %s780 = scalar_lea.vmem %s244, 24
      %781 = vst [vmem:[%s780 + $0x1] sm:$0xff] %v694
      %782 = vst [vmem:[%s780 + $0x9] sm:$0xff] %v695
      %783 = vst [vmem:[%s780 + $0x19] sm:$0xff] %v696
      %784 = vst [vmem:[%s780 + $0x21] sm:$0xff] %v697
      %785 = vst [vmem:[%s780 + $0x31] sm:$0xff] %v698
      %786 = vst [vmem:[%s780 + $0x39] sm:$0xff] %v699
      %787 = vst [vmem:[%s780 + $0x49] sm:$0xff] %v700
      %788 = vst [vmem:[%s780 + $0x51] sm:$0xff] %v701
      %789 = vst [vmem:[%s780 + $0x61] sm:$0xff] %v702
      %790 = vst [vmem:[%s780 + $0x69] sm:$0xff] %v703
      %791 = vst [vmem:[%s780 + $0x79] sm:$0xff] %v704
      %792 = vst [vmem:[%s780 + $0x81] sm:$0xff] %v705
      %793 = vst [vmem:[%s780 + $0x91] sm:$0xff] %v706
      %794 = vst [vmem:[%s780 + $0x99] sm:$0xff] %v707
      %795 = vst [vmem:[%s780 + $0xa9] sm:$0xff] %v708
      %796 = vst [vmem:[%s780 + $0xb1] sm:$0xff] %v709
      %797 = vst [vmem:[%s780 + $0xc1] sm:$0xff] %v710
      %798 = vst [vmem:[%s780 + $0xc9] sm:$0xff] %v711
      %799 = vst [vmem:[%s780 + $0xd9] sm:$0xff] %v712
      %800 = vst [vmem:[%s780 + $0xe1] sm:$0xff] %v713
      %801 = vst [vmem:[%s780 + $0xf1] sm:$0xff] %v714
      %802 = vst [vmem:[%s780 + $0xf9] sm:$0xff] %v715
      %803 = vst [vmem:[%s780 + $0x109] sm:$0xff] %v716
      %804 = vst [vmem:[%s780 + $0x111] sm:$0xff] %v717
      %805 = vst [vmem:[%s780 + $0x121] sm:$0xff] %v718
      %806 = vst [vmem:[%s780 + $0x129] sm:$0xff] %v719
      %807 = vst [vmem:[%s780 + $0x139] sm:$0xff] %v720
      %808 = vst [vmem:[%s780 + $0x141] sm:$0xff] %v721
      %809 = vst [vmem:[%s780 + $0x151] sm:$0xff] %v722
      %810 = vst [vmem:[%s780 + $0x159] sm:$0xff] %v723
      %811 = vst [vmem:[%s780 + $0x169] sm:$0xff] %v724
      %812 = vst [vmem:[%s780 + $0x171] sm:$0xff] %v725
      %p813 = scmp.lt.s32.totalorder %s16, 1
      %s814 = scalar_select %p813, %s16, 1
      %s815 = smul.addr %s814, 54
      %s816 = smul.addr %s815, 8
      %s817 = scalar_lea.vmem %s5, %s816
      // Predicated region
      $region41: #{forward.15} parent=39 // pred_check
        %p818 = pneg %p149
      $region42: #{forward.15} parent=39 // pred_check_branch
        %820 = sbr.rel (%p818) target = $region44
      $region43: #{forward.15} parent=39 // pred_region
        _
      $region44: #{forward.15} parent=39 // pred_fallthru
        _
    $region40: #{forward.15} parent=5 // pred_fallthru
      _
    %p821 = scmp.le.s32.totalorder 2, %s11
    // Predicated region
    $region45: #{forward.15} parent=5 // pred_check
      %p822 = pneg %p821
    $region46: #{forward.15} parent=5 // pred_check_branch
      %824 = sbr.rel (%p822) target = $region48
    $region47: #{forward.15} parent=5 // pred_region
      %s825 = ssub.s32 %s11, 2
      // Predicated region
      $region49: #{forward.15} parent=47 // pred_check
        %p826 = pneg %p155
      $region50: #{forward.15} parent=47 // pred_check_branch
        %828 = sbr.rel (%p826) target = $region52
      $region51: #{forward.15} parent=47 // pred_region
        %p829 = scmp.lt.s32.totalorder %s17, 1
        %s830 = scalar_select %p829, %s17, 1
        %s831 = smul.addr %s830, 54
        %s832 = smul.addr %s831, 8
        %s833 = scalar_lea.vmem %s5, %s832
      $region52: #{forward.15} parent=47 // pred_fallthru
        _
    $region48: #{forward.15} parent=5 // pred_fallthru
      _
  $region6: #{forward.15} parent=0 // loop_footer
    %s15 = sadd.s32 1, %s11
  $region7: #{forward.15} parent=0 // loop_footer_branch
    %10 = sbr.rel target = $region3
  $region8: #{forward.15} parent=0 // loop_exit
    _

// kernel: forward.13
$region0: #{forward.13}
  #allocation0 [shape = 'u32[]', space=smem, size = 0x4, offset = 0x4, fixed_abs, tag = 'smem constant byte address 0x4 - core index']
  #allocation1 [shape = 'u32[144,128]{1,0:T(1,128)}', space=vmem, size = 0x12000, scoped, tag = 'internal scratch']
  %s0 = inlined_call_operand.vmem [shape: f32[2,18,18,128], index: 0, kind: input, shape index: {}]
  %s1 = inlined_call_operand.vmem [shape: bf16[9,128,128], index: 1, kind: input, shape index: {}]
  %s2 = inlined_call_operand.vmem [shape: bf16[2,256,128], index: 2, kind: output, shape index: {0}]
  %s3 = inlined_call_operand.vmem [shape: f32[2,2,128], index: 3, kind: output, shape index: {1}]
  %4 = xla_tuple %s2, %s3
  %s5 = sld [smem:[#allocation0]]
  $region49: #{forward.13} parent=0
    _
  %s7 = ssub.s32 1, %s5
  %s8 = scalar_select 0, %s7, %s5
  loop: start=0, step=1, limit=4
  $region2: #{forward.13} parent=0 // loop_pre_header
    _
  $region3: #{forward.13} parent=0 // loop_header
    %s10 = sphi 0, %s14
    %p11 = scmp.ge.s32.totalorder %s10, 4
    %s20 = sphi 0, %s22
    %s23 = sphi 0, %s20
    %s24 = sphi 0, %s23
    %s40 = sphi 0, %s24
    %s44 = sphi 0, %s44
    %s46 = sphi 0, %s44
    %s47 = sphi 0, %s46
    %s61 = sphi 0, %s47
    %s67 = sphi 0, %s69
    %s70 = sphi 0, %s67
    %s71 = sphi 0, %s70
    %s87 = sphi 0, %s71
    %s93 = sphi 0, %s95
    %s96 = sphi 0, %s93
    %s97 = sphi 0, %s96
    %s113 = sphi 0, %s97
  $region4: #{forward.13} parent=0 // loop_header_branch
    %13 = sbr.rel (%p11) target = $region8
  $region5: #{forward.13} parent=0 // loop_body
    %s15 = ssub.s32 %s10, 1
    %s16 = ssub.s32 %s10, 2
    %s17 = sadd.s32 %s10, 1
    %s18 = ssub.s32 %s10, %s17
    %p19 = scmp.eq.s32.totalorder %s18, 0
    %s21 = sadd.s32 %s20, 1
    %s22 = scalar_select %p19, %s20, %s21
    %p25 = pneg %p19
    %p26 = scmp.eq.s32.totalorder %s10, 1
    %p27 = por %p25, %p26
    %p28 = scmp.ne.s32.totalorder %s20, %s23
    %p29 = scmp.eq.s32.totalorder %s10, 0
    %p30 = por %p28, %p29
    %p31 = scmp.ne.s32.totalorder %s20, %s23
    %p32 = scmp.eq.s32.totalorder %s15, 1
    %p33 = por %p31, %p32
    %p34 = scmp.ne.s32.totalorder %s23, %s24
    %p35 = scmp.eq.s32.totalorder %s15, 0
    %p36 = por %p34, %p35
    %p37 = scmp.ne.s32.totalorder %s23, %s24
    %p38 = scmp.eq.s32.totalorder %s16, 1
    %p39 = por %p37, %p38
    %p41 = scmp.ne.s32.totalorder %s24, %s40
    %p42 = scmp.eq.s32.totalorder %s16, 0
    %p43 = por %p41, %p42
    %s45 = sadd.s32 %s44, 1
    %p48 = scmp.eq.s32.totalorder %s10, 1
    %p49 = scmp.ne.s32.totalorder %s44, %s46
    %p50 = scmp.eq.s32.totalorder %s10, 0
    %p51 = por %p49, %p50
    %p52 = scmp.ne.s32.totalorder %s44, %s46
    %p53 = scmp.eq.s32.totalorder %s15, 1
    %p54 = por %p52, %p53
    %p55 = scmp.ne.s32.totalorder %s46, %s47
    %p56 = scmp.eq.s32.totalorder %s15, 0
    %p57 = por %p55, %p56
    %p58 = scmp.ne.s32.totalorder %s46, %s47
    %p59 = scmp.eq.s32.totalorder %s16, 1
    %p60 = por %p58, %p59
    %p62 = scmp.ne.s32.totalorder %s47, %s61
    %p63 = scmp.eq.s32.totalorder %s16, 0
    %p64 = por %p62, %p63
    %s65 = ssub.s32 %s10, %s17
    %p66 = scmp.eq.s32.totalorder %s65, 0
    %s68 = sadd.s32 %s67, 1
    %s69 = scalar_select %p66, %s67, %s68
    %p72 = pneg %p66
    %p73 = scmp.eq.s32.totalorder %s10, 1
    %p74 = por %p72, %p73
    %p75 = scmp.ne.s32.totalorder %s67, %s70
    %p76 = scmp.eq.s32.totalorder %s10, 0
    %p77 = por %p75, %p76
    %p78 = scmp.ne.s32.totalorder %s67, %s70
    %p79 = scmp.eq.s32.totalorder %s15, 1
    %p80 = por %p78, %p79
    %p81 = scmp.ne.s32.totalorder %s70, %s71
    %p82 = scmp.eq.s32.totalorder %s15, 0
    %p83 = por %p81, %p82
    %p84 = scmp.ne.s32.totalorder %s70, %s71
    %p85 = scmp.eq.s32.totalorder %s16, 1
    %p86 = por %p84, %p85
    %p88 = scmp.ne.s32.totalorder %s71, %s87
    %p89 = scmp.eq.s32.totalorder %s16, 0
    %p90 = por %p88, %p89
    %s91 = ssub.s32 %s10, %s17
    %p92 = scmp.eq.s32.totalorder %s91, 0
    %s94 = sadd.s32 %s93, 1
    %s95 = scalar_select %p92, %s93, %s94
    %p98 = pneg %p92
    %p99 = scmp.eq.s32.totalorder %s10, 1
    %p100 = por %p98, %p99
    %p101 = scmp.ne.s32.totalorder %s93, %s96
    %p102 = scmp.eq.s32.totalorder %s10, 0
    %p103 = por %p101, %p102
    %p104 = scmp.ne.s32.totalorder %s93, %s96
    %p105 = scmp.eq.s32.totalorder %s15, 1
    %p106 = por %p104, %p105
    %p107 = scmp.ne.s32.totalorder %s96, %s97
    %p108 = scmp.eq.s32.totalorder %s15, 0
    %p109 = por %p107, %p108
    %p110 = scmp.ne.s32.totalorder %s96, %s97
    %p111 = scmp.eq.s32.totalorder %s16, 1
    %p112 = por %p110, %p111
    %p114 = scmp.ne.s32.totalorder %s97, %s113
    %p115 = scmp.eq.s32.totalorder %s16, 0
    %p116 = por %p114, %p115
    %p117 = scmp.le.s32.totalorder 1, %s10
    %p118 = scmp.lt.s32.totalorder %s10, 3
    %p119 = pnand %p117, %p118
    %p120 = pneg %p119
    // Predicated region
    $region9: #{forward.13} parent=5 // pred_check
      _
    $region10: #{forward.13} parent=5 // pred_check_branch
      %122 = sbr.rel (%p119) target = $region12
    $region11: #{forward.13} parent=5 // pred_region
      %s123 = ssub.s32 %s10, 1
      // Predicated region
      $region13: #{forward.13} parent=11 // pred_check
        %p124 = pneg %p57
      $region14: #{forward.13} parent=11 // pred_check_branch
        %126 = sbr.rel (%p124) target = $region16
      $region15: #{forward.13} parent=11 // pred_region
        _
      $region16: #{forward.13} parent=11 // pred_fallthru
        _
    $region12: #{forward.13} parent=5 // pred_fallthru
      _
    %p127 = scmp.lt.s32.totalorder %s10, 2
    // Predicated region
    $region17: #{forward.13} parent=5 // pred_check
      %p128 = pneg %p127
    $region18: #{forward.13} parent=5 // pred_check_branch
      %130 = sbr.rel (%p128) target = $region20
    $region19: #{forward.13} parent=5 // pred_region
      // Predicated region
      $region21: #{forward.13} parent=19 // pred_check
        %p131 = pneg %p30
      $region22: #{forward.13} parent=19 // pred_check_branch
        %133 = sbr.rel (%p131) target = $region24
      $region23: #{forward.13} parent=19 // pred_region
        %p134 = scmp.lt.s32.totalorder %s10, 1
        %s135 = scalar_select %p134, %s10, 1
        %s136 = smul.addr %s135, 54
        %s137 = smul.addr %s136, 8
        %s138 = scalar_lea.vmem %s0, %s137
      $region24: #{forward.13} parent=19 // pred_fallthru
        _
    $region20: #{forward.13} parent=5 // pred_fallthru
      _
    %p139 = scmp.le.s32.totalorder 1, %s10
    %p140 = scmp.lt.s32.totalorder %s10, 3
    %p141 = pnand %p139, %p140
    %p142 = pneg %p141
    // Predicated region
    $region25: #{forward.13} parent=5 // pred_check
      _
    $region26: #{forward.13} parent=5 // pred_check_branch
      %144 = sbr.rel (%p141) target = $region28
    $region27: #{forward.13} parent=5 // pred_region
      %s145 = ssub.s32 %s10, 1
      %p146 = scmp.lt.s32.totalorder %s15, 1
      %s147 = scalar_select %p146, %s15, 1
      %s148 = smul.addr %s147, 54
      %s149 = smul.addr %s148, 8
      %s150 = scalar_lea.vmem %s0, %s149
      %p151 = pneg %p36
      %p152 = pneg %p33
      %p153 = pneg %p57
      %p154 = pneg %p54
      %p155 = pneg %p83
      %p156 = pneg %p80
      %p157 = scmp.lt.s32.totalorder %s15, 1
      %s158 = scalar_select %p157, %s15, 1
      %s159 = smul.addr %s158, 32
      %s160 = smul.addr %s159, 4
      %s161 = scalar_lea.vmem %s2, %s160
      %p162 = pneg %p109
      %p163 = pneg %p106
      %p164 = scmp.lt.s32.totalorder %s15, 1
      %s165 = scalar_select %p164, %s15, 1
      %s166 = smul.addr %s165, 2
      %s167 = scalar_lea.vmem %s3, %s166
      %p168 = scmp.lt.s32.totalorder %s15, 1
      %s169 = scalar_select %p168, %s15, 1
      %s170 = smul.addr %s169, 54
      %s171 = smul.addr %s170, 8
      %s172 = scalar_lea.vmem %s0, %s171
      %p173 = scmp.lt.s32.totalorder %s15, 1
      %s174 = scalar_select %p173, %s15, 1
      %s175 = smul.addr %s174, 32
      %s176 = smul.addr %s175, 4
      %s177 = scalar_lea.vmem %s2, %s176
      %p178 = scmp.lt.s32.totalorder %s15, 1
      %s179 = scalar_select %p178, %s15, 1
      %s180 = smul.addr %s179, 2
      %s181 = scalar_lea.vmem %s3, %s180
      %v183 = vld [vmem:[%s172] sm:$0xff]
      %v184 = vld [vmem:[%s172 + $0x8] sm:$0xff]
      %v185 = vld [vmem:[%s172 + $0x18] sm:$0xff]
      %v186 = vld [vmem:[%s172 + $0x20] sm:$0xff]
      %v187 = vld [vmem:[%s172 + $0x30] sm:$0xff]
      %v188 = vld [vmem:[%s172 + $0x38] sm:$0xff]
      %v189 = vld [vmem:[%s172 + $0x48] sm:$0xff]
      %v190 = vld [vmem:[%s172 + $0x50] sm:$0xff]
      %v191 = vld [vmem:[%s172 + $0x60] sm:$0xff]
      %v192 = vld [vmem:[%s172 + $0x68] sm:$0xff]
      %v193 = vld [vmem:[%s172 + $0x78] sm:$0xff]
      %v194 = vld [vmem:[%s172 + $0x80] sm:$0xff]
      %v195 = vld [vmem:[%s172 + $0x90] sm:$0xff]
      %v196 = vld [vmem:[%s172 + $0x98] sm:$0xff]
      %v197 = vld [vmem:[%s172 + $0xa8] sm:$0xff]
      %v198 = vld [vmem:[%s172 + $0xb0] sm:$0xff]
      %v199 = vld [vmem:[%s172 + $0xc0] sm:$0xff]
      %v200 = vld [vmem:[%s172 + $0xc8] sm:$0xff]
      %v201 = vld [vmem:[%s172 + $0xd8] sm:$0xff]
      %v202 = vld [vmem:[%s172 + $0xe0] sm:$0xff]
      %v203 = vld [vmem:[%s172 + $0xf0] sm:$0xff]
      %v204 = vld [vmem:[%s172 + $0xf8] sm:$0xff]
      %v205 = vld [vmem:[%s172 + $0x108] sm:$0xff]
      %v206 = vld [vmem:[%s172 + $0x110] sm:$0xff]
      %v207 = vld [vmem:[%s172 + $0x120] sm:$0xff]
      %v208 = vld [vmem:[%s172 + $0x128] sm:$0xff]
      %v209 = vld [vmem:[%s172 + $0x138] sm:$0xff]
      %v210 = vld [vmem:[%s172 + $0x140] sm:$0xff]
      %v211 = vld [vmem:[%s172 + $0x150] sm:$0xff]
      %v212 = vld [vmem:[%s172 + $0x158] sm:$0xff]
      %v213 = vld [vmem:[%s172 + $0x168] sm:$0xff]
      %v214 = vld [vmem:[%s172 + $0x170] sm:$0xff]
      %v215 = vpack.c.bf16 %v184, %v183
      %v216 = vpack.c.bf16 %v186, %v185
      %v217 = vpack.c.bf16 %v188, %v187
      %v218 = vpack.c.bf16 %v190, %v189
      %v219 = vpack.c.bf16 %v192, %v191
      %v220 = vpack.c.bf16 %v194, %v193
      %v221 = vpack.c.bf16 %v196, %v195
      %v222 = vpack.c.bf16 %v198, %v197
      %v223 = vpack.c.bf16 %v200, %v199
      %v224 = vpack.c.bf16 %v202, %v201
      %v225 = vpack.c.bf16 %v204, %v203
      %v226 = vpack.c.bf16 %v206, %v205
      %v227 = vpack.c.bf16 %v208, %v207
      %v228 = vpack.c.bf16 %v210, %v209
      %v229 = vpack.c.bf16 %v212, %v211
      %v230 = vpack.c.bf16 %v214, %v213
      %v231 = vld [vmem:[%s1] sm:$0xf]
      %v232 = vld [vmem:[%s1 + $0x4] sm:$0xf]
      %v233 = vld [vmem:[%s1 + $0x8] sm:$0xf]
      %v234 = vld [vmem:[%s1 + $0xc] sm:$0xf]
      %v235 = vld [vmem:[%s1 + $0x10] sm:$0xf]
      %v236 = vld [vmem:[%s1 + $0x14] sm:$0xf]
      %v237 = vld [vmem:[%s1 + $0x18] sm:$0xf]
      %v238 = vld [vmem:[%s1 + $0x1c] sm:$0xf]
      %v239 = vld [vmem:[%s1 + $0x20] sm:$0xf]
      %v240 = vld [vmem:[%s1 + $0x24] sm:$0xf]
      %v241 = vld [vmem:[%s1 + $0x28] sm:$0xf]
      %v242 = vld [vmem:[%s1 + $0x2c] sm:$0xf]
      %v243 = vld [vmem:[%s1 + $0x30] sm:$0xf]
      %v244 = vld [vmem:[%s1 + $0x34] sm:$0xf]
      %v245 = vld [vmem:[%s1 + $0x38] sm:$0xf]
      %v246 = vld [vmem:[%s1 + $0x3c] sm:$0xf]
      %v247 = vld [vmem:[%s172 + $0x1] sm:$0xff]
      %v248 = vld [vmem:[%s172 + $0x9] sm:$0xff]
      %v249 = vld [vmem:[%s172 + $0x19] sm:$0xff]
      %v250 = vld [vmem:[%s172 + $0x21] sm:$0xff]
      %v251 = vld [vmem:[%s172 + $0x31] sm:$0xff]
      %v252 = vld [vmem:[%s172 + $0x39] sm:$0xff]
      %v253 = vld [vmem:[%s172 + $0x49] sm:$0xff]
      %v254 = vld [vmem:[%s172 + $0x51] sm:$0xff]
      %v255 = vld [vmem:[%s172 + $0x61] sm:$0xff]
      %v256 = vld [vmem:[%s172 + $0x69] sm:$0xff]
      %v257 = vld [vmem:[%s172 + $0x79] sm:$0xff]
      %v258 = vld [vmem:[%s172 + $0x81] sm:$0xff]
      %v259 = vld [vmem:[%s172 + $0x91] sm:$0xff]
      %v260 = vld [vmem:[%s172 + $0x99] sm:$0xff]
      %v261 = vld [vmem:[%s172 + $0xa9] sm:$0xff]
      %v262 = vld [vmem:[%s172 + $0xb1] sm:$0xff]
      %v263 = vld [vmem:[%s172 + $0xc1] sm:$0xff]
      %v264 = vld [vmem:[%s172 + $0xc9] sm:$0xff]
      %v265 = vld [vmem:[%s172 + $0xd9] sm:$0xff]
      %v266 = vld [vmem:[%s172 + $0xe1] sm:$0xff]
      %v267 = vld [vmem:[%s172 + $0xf1] sm:$0xff]
      %v268 = vld [vmem:[%s172 + $0xf9] sm:$0xff]
      %v269 = vld [vmem:[%s172 + $0x109] sm:$0xff]
      %v270 = vld [vmem:[%s172 + $0x111] sm:$0xff]
      %v271 = vld [vmem:[%s172 + $0x121] sm:$0xff]
      %v272 = vld [vmem:[%s172 + $0x129] sm:$0xff]
      %v273 = vld [vmem:[%s172 + $0x139] sm:$0xff]
      %v274 = vld [vmem:[%s172 + $0x141] sm:$0xff]
      %v275 = vld [vmem:[%s172 + $0x151] sm:$0xff]
      %v276 = vld [vmem:[%s172 + $0x159] sm:$0xff]
      %v277 = vld [vmem:[%s172 + $0x169] sm:$0xff]
      %v278 = vld [vmem:[%s172 + $0x171] sm:$0xff]
      %v279 = vpack.c.bf16 %v248, %v247
      %v280 = vpack.c.bf16 %v250, %v249
      %v281 = vpack.c.bf16 %v252, %v251
      %v282 = vpack.c.bf16 %v254, %v253
      %v283 = vpack.c.bf16 %v256, %v255
      %v284 = vpack.c.bf16 %v258, %v257
      %v285 = vpack.c.bf16 %v260, %v259
      %v286 = vpack.c.bf16 %v262, %v261
      %v287 = vpack.c.bf16 %v264, %v263
      %v288 = vpack.c.bf16 %v266, %v265
      %v289 = vpack.c.bf16 %v268, %v267
      %v290 = vpack.c.bf16 %v270, %v269
      %v291 = vpack.c.bf16 %v272, %v271
      %v292 = vpack.c.bf16 %v274, %v273
      %v293 = vpack.c.bf16 %v276, %v275
      %v294 = vpack.c.bf16 %v278, %v277
      %s295 = scalar_lea.vmem %s1, 64
      %v296 = vld [vmem:[%s295] sm:$0xf]
      %v297 = vld [vmem:[%s295 + $0x4] sm:$0xf]
      %v298 = vld [vmem:[%s295 + $0x8] sm:$0xf]
      %v299 = vld [vmem:[%s295 + $0xc] sm:$0xf]
      %v300 = vld [vmem:[%s295 + $0x10] sm:$0xf]
      %v301 = vld [vmem:[%s295 + $0x14] sm:$0xf]
      %v302 = vld [vmem:[%s295 + $0x18] sm:$0xf]
      %v303 = vld [vmem:[%s295 + $0x1c] sm:$0xf]
      %v304 = vld [vmem:[%s295 + $0x20] sm:$0xf]
      %v305 = vld [vmem:[%s295 + $0x24] sm:$0xf]
      %v306 = vld [vmem:[%s295 + $0x28] sm:$0xf]
      %v307 = vld [vmem:[%s295 + $0x2c] sm:$0xf]
      %v308 = vld [vmem:[%s295 + $0x30] sm:$0xf]
      %v309 = vld [vmem:[%s295 + $0x34] sm:$0xf]
      %v310 = vld [vmem:[%s295 + $0x38] sm:$0xf]
      %v311 = vld [vmem:[%s295 + $0x3c] sm:$0xf]
      %v328 = vunpack.c.l.b16 %v296
      %v329 = vunpack.c.l.b16 %v297
      %v330 = vunpack.c.l.b16 %v298
      %v331 = vunpack.c.l.b16 %v299
      %v332 = vunpack.c.l.b16 %v300
      %v333 = vunpack.c.l.b16 %v301
      %v334 = vunpack.c.l.b16 %v302
      %v335 = vunpack.c.l.b16 %v303
      %v336 = vunpack.c.l.b16 %v304
      %v337 = vunpack.c.l.b16 %v305
      %v338 = vunpack.c.l.b16 %v306
      %v339 = vunpack.c.l.b16 %v307
      %v340 = vunpack.c.l.b16 %v308
      %v341 = vunpack.c.l.b16 %v309
      %v342 = vunpack.c.l.b16 %v310
      %v343 = vunpack.c.l.b16 %v311
      %v344 = vpack.c.b16 %v329, %v328
      %v345 = vpack.c.b16 %v331, %v330
      %v346 = vpack.c.b16 %v333, %v332
      %v347 = vpack.c.b16 %v335, %v334
      %v348 = vpack.c.b16 %v337, %v336
      %v349 = vpack.c.b16 %v339, %v338
      %v350 = vpack.c.b16 %v341, %v340
      %v351 = vpack.c.b16 %v343, %v342
      %360 = vmatprep.subr.bf16.mxu0 0
      %361 = vmatpush1.bf16.msra.mxu0 %v351
      %362 = vmatprep.subr.bf16.mxu0 0
      %363 = vmatpush1.bf16.msra.mxu0 %v350
      %364 = vmatprep.subr.bf16.mxu0 0
      %365 = vmatpush1.bf16.msra.mxu0 %v349
      %366 = vmatprep.subr.bf16.mxu0 0
      %367 = vmatpush1.bf16.msra.mxu0 %v348
      %368 = vmatprep.subr.bf16.mxu0 0
      %369 = vmatpush1.bf16.msra.mxu0 %v347
      %370 = vmatprep.subr.bf16.mxu0 0
      %371 = vmatpush1.bf16.msra.mxu0 %v346
      %372 = vmatprep.subr.bf16.mxu0 0
      %373 = vmatpush1.bf16.msra.mxu0 %v345
      %374 = vmatprep.subr.bf16.mxu0 0
      %375 = vmatpush1.bf16.msra.mxu0 %v344
      %376 = vmatprep.subr.bf16.mxu0 0
      %377 = vmatpush2.bf16.msra.mxu0 0
      %378 = vmatprep.subr.bf16.mxu0 0
      %379 = vmatpush2.bf16.msra.mxu0 0
      %380 = vmatprep.subr.bf16.mxu0 0
      %381 = vmatpush2.bf16.msra.mxu0 0
      %382 = vmatprep.subr.bf16.mxu0 0
      %383 = vmatpush2.bf16.msra.mxu0 0
      %384 = vmatprep.subr.bf16.mxu0 0
      %385 = vmatpush2.bf16.msra.mxu0 0
      %386 = vmatprep.subr.bf16.mxu0 0
      %387 = vmatpush2.bf16.msra.mxu0 0
      %388 = vmatprep.subr.bf16.mxu0 0
      %389 = vmatpush2.bf16.msra.mxu0 0
      %390 = vmatprep.subr.bf16.mxu0 0
      %391 = vmatpush2.bf16.msra.mxu0 0
      %392 = vmatprep.mubr.bf16.mxu0 0
      %393 = vmatmul.mubr.bf16.gmra.mxu0 %v279
      %v394 = vpop.f32.mrf.mxu0
      %v395 = vadd.f32 0.0, %v394
      %v396 = vpop.f32.mrf.mxu0
      %v397 = vpop.f32.mrf.mxu0
      %v398 = vadd.f32 0.0, %v397
      %v399 = vpop.f32.mrf.mxu0
      %400 = vmatprep.mubr.bf16.mxu0 0
      %401 = vmatmul.mubr.bf16.gmra.mxu0 %v280
      %v402 = vpop.f32.mrf.mxu0
      %v403 = vadd.f32 0.0, %v402
      %v404 = vpop.f32.mrf.mxu0
      %v405 = vpop.f32.mrf.mxu0
      %v406 = vadd.f32 0.0, %v405
      %v407 = vpop.f32.mrf.mxu0
      %408 = vmatprep.mubr.bf16.mxu0 0
      %409 = vmatmul.mubr.bf16.gmra.mxu0 %v281
      %v410 = vpop.f32.mrf.mxu0
      %v411 = vadd.f32 0.0, %v410
      %v412 = vpop.f32.mrf.mxu0
      %v413 = vpop.f32.mrf.mxu0
      %v414 = vadd.f32 0.0, %v413
      %v415 = vpop.f32.mrf.mxu0
      %416 = vmatprep.mubr.bf16.mxu0 0
      %417 = vmatmul.mubr.bf16.gmra.mxu0 %v282
      %v418 = vpop.f32.mrf.mxu0
      %v419 = vadd.f32 0.0, %v418
      %v420 = vpop.f32.mrf.mxu0
      %v421 = vpop.f32.mrf.mxu0
      %v422 = vadd.f32 0.0, %v421
      %v423 = vpop.f32.mrf.mxu0
      %424 = vmatprep.mubr.bf16.mxu0 0
      %425 = vmatmul.mubr.bf16.gmra.mxu0 %v283
      %v426 = vpop.f32.mrf.mxu0
      %v427 = vadd.f32 0.0, %v426
      %v428 = vpop.f32.mrf.mxu0
      %v429 = vpop.f32.mrf.mxu0
      %v430 = vadd.f32 0.0, %v429
      %v431 = vpop.f32.mrf.mxu0
      %432 = vmatprep.mubr.bf16.mxu0 0
      %433 = vmatmul.mubr.bf16.gmra.mxu0 %v284
      %v434 = vpop.f32.mrf.mxu0
      %v435 = vadd.f32 0.0, %v434
      %v436 = vpop.f32.mrf.mxu0
      %v437 = vpop.f32.mrf.mxu0
      %v438 = vadd.f32 0.0, %v437
      %v439 = vpop.f32.mrf.mxu0
      %440 = vmatprep.mubr.bf16.mxu0 0
      %441 = vmatmul.mubr.bf16.gmra.mxu0 %v285
      %v442 = vpop.f32.mrf.mxu0
      %v443 = vadd.f32 0.0, %v442
      %v444 = vpop.f32.mrf.mxu0
      %v445 = vpop.f32.mrf.mxu0
      %v446 = vadd.f32 0.0, %v445
      %v447 = vpop.f32.mrf.mxu0
      %448 = vmatprep.mubr.bf16.mxu0 0
      %449 = vmatmul.mubr.bf16.gmra.mxu0 %v286
      %v450 = vpop.f32.mrf.mxu0
      %v451 = vadd.f32 0.0, %v450
      %v452 = vpop.f32.mrf.mxu0
      %v453 = vpop.f32.mrf.mxu0
      %v454 = vadd.f32 0.0, %v453
      %v455 = vpop.f32.mrf.mxu0
      %456 = vmatprep.mubr.bf16.mxu0 0
      %457 = vmatmul.mubr.bf16.gmra.mxu0 %v287
      %v458 = vpop.f32.mrf.mxu0
      %v459 = vadd.f32 0.0, %v458
      %v460 = vpop.f32.mrf.mxu0
      %v461 = vpop.f32.mrf.mxu0
      %v462 = vadd.f32 0.0, %v461
      %v463 = vpop.f32.mrf.mxu0
      %464 = vmatprep.mubr.bf16.mxu0 0
      %465 = vmatmul.mubr.bf16.gmra.mxu0 %v288
      %v466 = vpop.f32.mrf.mxu0
      %v467 = vadd.f32 0.0, %v466
      %v468 = vpop.f32.mrf.mxu0
      %v469 = vpop.f32.mrf.mxu0
      %v470 = vadd.f32 0.0, %v469
      %v471 = vpop.f32.mrf.mxu0
      %472 = vmatprep.mubr.bf16.mxu0 0
      %473 = vmatmul.mubr.bf16.gmra.mxu0 %v289
      %v474 = vpop.f32.mrf.mxu0
      %v475 = vadd.f32 0.0, %v474
      %v476 = vpop.f32.mrf.mxu0
      %v477 = vpop.f32.mrf.mxu0
      %v478 = vadd.f32 0.0, %v477
      %v479 = vpop.f32.mrf.mxu0
      %480 = vmatprep.mubr.bf16.mxu0 0
      %481 = vmatmul.mubr.bf16.gmra.mxu0 %v290
      %v482 = vpop.f32.mrf.mxu0
      %v483 = vadd.f32 0.0, %v482
      %v484 = vpop.f32.mrf.mxu0
      %v485 = vpop.f32.mrf.mxu0
      %v486 = vadd.f32 0.0, %v485
      %v487 = vpop.f32.mrf.mxu0
      %488 = vmatprep.mubr.bf16.mxu0 0
      %489 = vmatmul.mubr.bf16.gmra.mxu0 %v291
      %v490 = vpop.f32.mrf.mxu0
      %v491 = vadd.f32 0.0, %v490
      %v492 = vpop.f32.mrf.mxu0
      %v493 = vpop.f32.mrf.mxu0
      %v494 = vadd.f32 0.0, %v493
      %v495 = vpop.f32.mrf.mxu0
      %496 = vmatprep.mubr.bf16.mxu0 0
      %497 = vmatmul.mubr.bf16.gmra.mxu0 %v292
      %v498 = vpop.f32.mrf.mxu0
      %v499 = vadd.f32 0.0, %v498
      %v500 = vpop.f32.mrf.mxu0
      %v501 = vpop.f32.mrf.mxu0
      %v502 = vadd.f32 0.0, %v501
      %v503 = vpop.f32.mrf.mxu0
      %504 = vmatprep.mubr.bf16.mxu0 0
      %505 = vmatmul.mubr.bf16.gmra.mxu0 %v293
      %v506 = vpop.f32.mrf.mxu0
      %v507 = vadd.f32 0.0, %v506
      %v508 = vpop.f32.mrf.mxu0
      %v509 = vpop.f32.mrf.mxu0
      %v510 = vadd.f32 0.0, %v509
      %v511 = vpop.f32.mrf.mxu0
      %512 = vmatprep.mubr.bf16.mxu0 0
      %513 = vmatmul.mubr.bf16.gmra.mxu0 %v294
      %v514 = vpop.f32.mrf.mxu0
      %v515 = vadd.f32 0.0, %v514
      %v516 = vpop.f32.mrf.mxu0
      %v517 = vpop.f32.mrf.mxu0
      %v518 = vadd.f32 0.0, %v517
      %v519 = vpop.f32.mrf.mxu0
      %520 = vdwg.mxu0
      %v537 = vunpack.c.l.b16 %v231
      %v538 = vunpack.c.l.b16 %v232
      %v539 = vunpack.c.l.b16 %v233
      %v540 = vunpack.c.l.b16 %v234
      %v541 = vunpack.c.l.b16 %v235
      %v542 = vunpack.c.l.b16 %v236
      %v543 = vunpack.c.l.b16 %v237
      %v544 = vunpack.c.l.b16 %v238
      %v545 = vunpack.c.l.b16 %v239
      %v546 = vunpack.c.l.b16 %v240
      %v547 = vunpack.c.l.b16 %v241
      %v548 = vunpack.c.l.b16 %v242
      %v549 = vunpack.c.l.b16 %v243
      %v550 = vunpack.c.l.b16 %v244
      %v551 = vunpack.c.l.b16 %v245
      %v552 = vunpack.c.l.b16 %v246
      %v553 = vpack.c.b16 %v538, %v537
      %v554 = vpack.c.b16 %v540, %v539
      %v555 = vpack.c.b16 %v542, %v541
      %v556 = vpack.c.b16 %v544, %v543
      %v557 = vpack.c.b16 %v546, %v545
      %v558 = vpack.c.b16 %v548, %v547
      %v559 = vpack.c.b16 %v550, %v549
      %v560 = vpack.c.b16 %v552, %v551
      %569 = vmatprep.subr.bf16.mxu0 0
      %570 = vmatpush1.bf16.msra.mxu0 %v560
      %571 = vmatprep.subr.bf16.mxu0 0
      %572 = vmatpush1.bf16.msra.mxu0 %v559
      %573 = vmatprep.subr.bf16.mxu0 0
      %574 = vmatpush1.bf16.msra.mxu0 %v558
      %575 = vmatprep.subr.bf16.mxu0 0
      %576 = vmatpush1.bf16.msra.mxu0 %v557
      %577 = vmatprep.subr.bf16.mxu0 0
      %578 = vmatpush1.bf16.msra.mxu0 %v556
      %579 = vmatprep.subr.bf16.mxu0 0
      %580 = vmatpush1.bf16.msra.mxu0 %v555
      %581 = vmatprep.subr.bf16.mxu0 0
      %582 = vmatpush1.bf16.msra.mxu0 %v554
      %583 = vmatprep.subr.bf16.mxu0 0
      %584 = vmatpush1.bf16.msra.mxu0 %v553
      %585 = vmatprep.subr.bf16.mxu0 0
      %586 = vmatpush2.bf16.msra.mxu0 0
      %587 = vmatprep.subr.bf16.mxu0 0
      %588 = vmatpush2.bf16.msra.mxu0 0
      %589 = vmatprep.subr.bf16.mxu0 0
      %590 = vmatpush2.bf16.msra.mxu0 0
      %591 = vmatprep.subr.bf16.mxu0 0
      %592 = vmatpush2.bf16.msra.mxu0 0
      %593 = vmatprep.subr.bf16.mxu0 0
      %594 = vmatpush2.bf16.msra.mxu0 0
      %595 = vmatprep.subr.bf16.mxu0 0
      %596 = vmatpush2.bf16.msra.mxu0 0
      %597 = vmatprep.subr.bf16.mxu0 0
      %598 = vmatpush2.bf16.msra.mxu0 0
      %599 = vmatprep.subr.bf16.mxu0 0
      %600 = vmatpush2.bf16.msra.mxu0 0
      %601 = vmatprep.mubr.bf16.mxu0 0
      %602 = vmatmul.mubr.bf16.gmra.mxu0 %v215
      %v603 = vpop.f32.mrf.mxu0
      %v604 = vadd.f32 %v395, %v603
      %v605 = vpop.f32.mrf.mxu0
      %v606 = vpop.f32.mrf.mxu0
      %v607 = vadd.f32 %v398, %v606
      %v608 = vpop.f32.mrf.mxu0
      %609 = vmatprep.mubr.bf16.mxu0 0
      %610 = vmatmul.mubr.bf16.gmra.mxu0 %v216
      %v611 = vpop.f32.mrf.mxu0
      %v612 = vadd.f32 %v403, %v611
      %v613 = vpop.f32.mrf.mxu0
      %v614 = vpop.f32.mrf.mxu0
      %v615 = vadd.f32 %v406, %v614
      %v616 = vpop.f32.mrf.mxu0
      %617 = vmatprep.mubr.bf16.mxu0 0
      %618 = vmatmul.mubr.bf16.gmra.mxu0 %v217
      %v619 = vpop.f32.mrf.mxu0
      %v620 = vadd.f32 %v411, %v619
      %v621 = vpop.f32.mrf.mxu0
      %v622 = vpop.f32.mrf.mxu0
      %v623 = vadd.f32 %v414, %v622
      %v624 = vpop.f32.mrf.mxu0
      %625 = vmatprep.mubr.bf16.mxu0 0
      %626 = vmatmul.mubr.bf16.gmra.mxu0 %v218
      %v627 = vpop.f32.mrf.mxu0
      %v628 = vadd.f32 %v419, %v627
      %v629 = vpop.f32.mrf.mxu0
      %v630 = vpop.f32.mrf.mxu0
      %v631 = vadd.f32 %v422, %v630
      %v632 = vpop.f32.mrf.mxu0
      %633 = vmatprep.mubr.bf16.mxu0 0
      %634 = vmatmul.mubr.bf16.gmra.mxu0 %v219
      %v635 = vpop.f32.mrf.mxu0
      %v636 = vadd.f32 %v427, %v635
      %v637 = vpop.f32.mrf.mxu0
      %v638 = vpop.f32.mrf.mxu0
      %v639 = vadd.f32 %v430, %v638
      %v640 = vpop.f32.mrf.mxu0
      %641 = vmatprep.mubr.bf16.mxu0 0
      %642 = vmatmul.mubr.bf16.gmra.mxu0 %v220
      %v643 = vpop.f32.mrf.mxu0
      %v644 = vadd.f32 %v435, %v643
      %v645 = vpop.f32.mrf.mxu0
      %v646 = vpop.f32.mrf.mxu0
      %v647 = vadd.f32 %v438, %v646
      %v648 = vpop.f32.mrf.mxu0
      %649 = vmatprep.mubr.bf16.mxu0 0
      %650 = vmatmul.mubr.bf16.gmra.mxu0 %v221
      %v651 = vpop.f32.mrf.mxu0
      %v652 = vadd.f32 %v443, %v651
      %v653 = vpop.f32.mrf.mxu0
      %v654 = vpop.f32.mrf.mxu0
      %v655 = vadd.f32 %v446, %v654
      %v656 = vpop.f32.mrf.mxu0
      %657 = vmatprep.mubr.bf16.mxu0 0
      %658 = vmatmul.mubr.bf16.gmra.mxu0 %v222
      %v659 = vpop.f32.mrf.mxu0
      %v660 = vadd.f32 %v451, %v659
      %v661 = vpop.f32.mrf.mxu0
      %v662 = vpop.f32.mrf.mxu0
      %v663 = vadd.f32 %v454, %v662
      %v664 = vpop.f32.mrf.mxu0
      %665 = vmatprep.mubr.bf16.mxu0 0
      %666 = vmatmul.mubr.bf16.gmra.mxu0 %v223
      %v667 = vpop.f32.mrf.mxu0
      %v668 = vadd.f32 %v459, %v667
      %v669 = vpop.f32.mrf.mxu0
      %v670 = vpop.f32.mrf.mxu0
      %v671 = vadd.f32 %v462, %v670
      %v672 = vpop.f32.mrf.mxu0
      %673 = vmatprep.mubr.bf16.mxu0 0
      %674 = vmatmul.mubr.bf16.gmra.mxu0 %v224
      %v675 = vpop.f32.mrf.mxu0
      %v676 = vadd.f32 %v467, %v675
      %v677 = vpop.f32.mrf.mxu0
      %v678 = vpop.f32.mrf.mxu0
      %v679 = vadd.f32 %v470, %v678
      %v680 = vpop.f32.mrf.mxu0
      %681 = vmatprep.mubr.bf16.mxu0 0
      %682 = vmatmul.mubr.bf16.gmra.mxu0 %v225
      %v683 = vpop.f32.mrf.mxu0
      %v684 = vadd.f32 %v475, %v683
      %v685 = vpop.f32.mrf.mxu0
      %v686 = vpop.f32.mrf.mxu0
      %v687 = vadd.f32 %v478, %v686
      %v688 = vpop.f32.mrf.mxu0
      %689 = vmatprep.mubr.bf16.mxu0 0
      %690 = vmatmul.mubr.bf16.gmra.mxu0 %v226
      %v691 = vpop.f32.mrf.mxu0
      %v692 = vadd.f32 %v483, %v691
      %v693 = vpop.f32.mrf.mxu0
      %v694 = vpop.f32.mrf.mxu0
      %v695 = vadd.f32 %v486, %v694
      %v696 = vpop.f32.mrf.mxu0
      %697 = vmatprep.mubr.bf16.mxu0 0
      %698 = vmatmul.mubr.bf16.gmra.mxu0 %v227
      %v699 = vpop.f32.mrf.mxu0
      %v700 = vadd.f32 %v491, %v699
      %v701 = vpop.f32.mrf.mxu0
      %v702 = vpop.f32.mrf.mxu0
      %v703 = vadd.f32 %v494, %v702
      %v704 = vpop.f32.mrf.mxu0
      %705 = vmatprep.mubr.bf16.mxu0 0
      %706 = vmatmul.mubr.bf16.gmra.mxu0 %v228
      %v707 = vpop.f32.mrf.mxu0
      %v708 = vadd.f32 %v499, %v707
      %v709 = vpop.f32.mrf.mxu0
      %v710 = vpop.f32.mrf.mxu0
      %v711 = vadd.f32 %v502, %v710
      %v712 = vpop.f32.mrf.mxu0
      %713 = vmatprep.mubr.bf16.mxu0 0
      %714 = vmatmul.mubr.bf16.gmra.mxu0 %v229
      %v715 = vpop.f32.mrf.mxu0
      %v716 = vadd.f32 %v507, %v715
      %v717 = vpop.f32.mrf.mxu0
      %v718 = vpop.f32.mrf.mxu0
      %v719 = vadd.f32 %v510, %v718
      %v720 = vpop.f32.mrf.mxu0
      %721 = vmatprep.mubr.bf16.mxu0 0
      %722 = vmatmul.mubr.bf16.gmra.mxu0 %v230
      %v723 = vpop.f32.mrf.mxu0
      %v724 = vadd.f32 %v515, %v723
      %v725 = vpop.f32.mrf.mxu0
      %v726 = vpop.f32.mrf.mxu0
      %v727 = vadd.f32 %v518, %v726
      %v728 = vpop.f32.mrf.mxu0
      %729 = vdwg.mxu0
      %v730 = vld [vmem:[%s172 + $0x2] sm:$0xff]
      %v731 = vld [vmem:[%s172 + $0xa] sm:$0xff]
      %v732 = vld [vmem:[%s172 + $0x1a] sm:$0xff]
      %v733 = vld [vmem:[%s172 + $0x22] sm:$0xff]
      %v734 = vld [vmem:[%s172 + $0x32] sm:$0xff]
      %v735 = vld [vmem:[%s172 + $0x3a] sm:$0xff]
      %v736 = vld [vmem:[%s172 + $0x4a] sm:$0xff]
      %v737 = vld [vmem:[%s172 + $0x52] sm:$0xff]
      %v738 = vld [vmem:[%s172 + $0x62] sm:$0xff]
      %v739 = vld [vmem:[%s172 + $0x6a] sm:$0xff]
      %v740 = vld [vmem:[%s172 + $0x7a] sm:$0xff]
      %v741 = vld [vmem:[%s172 + $0x82] sm:$0xff]
      %v742 = vld [vmem:[%s172 + $0x92] sm:$0xff]
      %v743 = vld [vmem:[%s172 + $0x9a] sm:$0xff]
      %v744 = vld [vmem:[%s172 + $0xaa] sm:$0xff]
      %v745 = vld [vmem:[%s172 + $0xb2] sm:$0xff]
      %v746 = vld [vmem:[%s172 + $0xc2] sm:$0xff]
      %v747 = vld [vmem:[%s172 + $0xca] sm:$0xff]
      %v748 = vld [vmem:[%s172 + $0xda] sm:$0xff]
      %v749 = vld [vmem:[%s172 + $0xe2] sm:$0xff]
      %v750 = vld [vmem:[%s172 + $0xf2] sm:$0xff]
      %v751 = vld [vmem:[%s172 + $0xfa] sm:$0xff]
      %v752 = vld [vmem:[%s172 + $0x10a] sm:$0xff]
      %v753 = vld [vmem:[%s172 + $0x112] sm:$0xff]
      %v754 = vld [vmem:[%s172 + $0x122] sm:$0xff]
      %v755 = vld [vmem:[%s172 + $0x12a] sm:$0xff]
      %v756 = vld [vmem:[%s172 + $0x13a] sm:$0xff]
      %v757 = vld [vmem:[%s172 + $0x142] sm:$0xff]
      %v758 = vld [vmem:[%s172 + $0x152] sm:$0xff]
      %v759 = vld [vmem:[%s172 + $0x15a] sm:$0xff]
      %v760 = vld [vmem:[%s172 + $0x16a] sm:$0xff]
      %v761 = vld [vmem:[%s172 + $0x172] sm:$0xff]
      %v762 = vpack.c.bf16 %v731, %v730
      %v763 = vpack.c.bf16 %v733, %v732
      %v764 = vpack.c.bf16 %v735, %v734
      %v765 = vpack.c.bf16 %v737, %v736
      %v766 = vpack.c.bf16 %v739, %v738
      %v767 = vpack.c.bf16 %v741, %v740
      %v768 = vpack.c.bf16 %v743, %v742
      %v769 = vpack.c.bf16 %v745, %v744
      %v770 = vpack.c.bf16 %v747, %v746
      %v771 = vpack.c.bf16 %v749, %v748
      %v772 = vpack.c.bf16 %v751, %v750
      %v773 = vpack.c.bf16 %v753, %v752
      %v774 = vpack.c.bf16 %v755, %v754
      %v775 = vpack.c.bf16 %v757, %v756
      %v776 = vpack.c.bf16 %v759, %v758
      %v777 = vpack.c.bf16 %v761, %v760
      %s778 = scalar_lea.vmem %s1, 128
      %v779 = vld [vmem:[%s778] sm:$0xf]
      %v780 = vld [vmem:[%s778 + $0x4] sm:$0xf]
      %v781 = vld [vmem:[%s778 + $0x8] sm:$0xf]
      %v782 = vld [vmem:[%s778 + $0xc] sm:$0xf]
      %v783 = vld [vmem:[%s778 + $0x10] sm:$0xf]
      %v784 = vld [vmem:[%s778 + $0x14] sm:$0xf]
      %v785 = vld [vmem:[%s778 + $0x18] sm:$0xf]
      %v786 = vld [vmem:[%s778 + $0x1c] sm:$0xf]
      %v787 = vld [vmem:[%s778 + $0x20] sm:$0xf]
      %v788 = vld [vmem:[%s778 + $0x24] sm:$0xf]
      %v789 = vld [vmem:[%s778 + $0x28] sm:$0xf]
      %v790 = vld [vmem:[%s778 + $0x2c] sm:$0xf]
      %v791 = vld [vmem:[%s778 + $0x30] sm:$0xf]
      %v792 = vld [vmem:[%s778 + $0x34] sm:$0xf]
      %v793 = vld [vmem:[%s778 + $0x38] sm:$0xf]
      %v794 = vld [vmem:[%s778 + $0x3c] sm:$0xf]
      %v811 = vunpack.c.l.b16 %v779
      %v812 = vunpack.c.l.b16 %v780
      %v813 = vunpack.c.l.b16 %v781
      %v814 = vunpack.c.l.b16 %v782
      %v815 = vunpack.c.l.b16 %v783
      %v816 = vunpack.c.l.b16 %v784
      %v817 = vunpack.c.l.b16 %v785
      %v818 = vunpack.c.l.b16 %v786
      %v819 = vunpack.c.l.b16 %v787
      %v820 = vunpack.c.l.b16 %v788
      %v821 = vunpack.c.l.b16 %v789
      %v822 = vunpack.c.l.b16 %v790
      %v823 = vunpack.c.l.b16 %v791
      %v824 = vunpack.c.l.b16 %v792
      %v825 = vunpack.c.l.b16 %v793
      %v826 = vunpack.c.l.b16 %v794
      %v827 = vpack.c.b16 %v812, %v811
      %v828 = vpack.c.b16 %v814, %v813
      %v829 = vpack.c.b16 %v816, %v815
      %v830 = vpack.c.b16 %v818, %v817
      %v831 = vpack.c.b16 %v820, %v819
      %v832 = vpack.c.b16 %v822, %v821
      %v833 = vpack.c.b16 %v824, %v823
      %v834 = vpack.c.b16 %v826, %v825
      %843 = vmatprep.subr.bf16.mxu0 0
      %844 = vmatpush1.bf16.msra.mxu0 %v834
      %845 = vmatprep.subr.bf16.mxu0 0
      %846 = vmatpush1.bf16.msra.mxu0 %v833
      %847 = vmatprep.subr.bf16.mxu0 0
      %848 = vmatpush1.bf16.msra.mxu0 %v832
      %849 = vmatprep.subr.bf16.mxu0 0
      %850 = vmatpush1.bf16.msra.mxu0 %v831
      %851 = vmatprep.subr.bf16.mxu0 0
      %852 = vmatpush1.bf16.msra.mxu0 %v830
      %853 = vmatprep.subr.bf16.mxu0 0
      %854 = vmatpush1.bf16.msra.mxu0 %v829
      %855 = vmatprep.subr.bf16.mxu0 0
      %856 = vmatpush1.bf16.msra.mxu0 %v828
      %857 = vmatprep.subr.bf16.mxu0 0
      %858 = vmatpush1.bf16.msra.mxu0 %v827
      %859 = vmatprep.subr.bf16.mxu0 0
      %860 = vmatpush2.bf16.msra.mxu0 0
      %861 = vmatprep.subr.bf16.mxu0 0
      %862 = vmatpush2.bf16.msra.mxu0 0
      %863 = vmatprep.subr.bf16.mxu0 0
      %864 = vmatpush2.bf16.msra.mxu0 0
      %865 = vmatprep.subr.bf16.mxu0 0
      %866 = vmatpush2.bf16.msra.mxu0 0
      %867 = vmatprep.subr.bf16.mxu0 0
      %868 = vmatpush2.bf16.msra.mxu0 0
      %869 = vmatprep.subr.bf16.mxu0 0
      %870 = vmatpush2.bf16.msra.mxu0 0
      %871 = vmatprep.subr.bf16.mxu0 0
      %872 = vmatpush2.bf16.msra.mxu0 0
      %873 = vmatprep.subr.bf16.mxu0 0
      %874 = vmatpush2.bf16.msra.mxu0 0
      %875 = vmatprep.mubr.bf16.mxu0 0
      %876 = vmatmul.mubr.bf16.gmra.mxu0 %v762
      %v877 = vpop.f32.mrf.mxu0
      %v878 = vadd.f32 0.0, %v877
      %v879 = vpop.f32.mrf.mxu0
      %v880 = vpop.f32.mrf.mxu0
      %v881 = vadd.f32 0.0, %v880
      %v882 = vpop.f32.mrf.mxu0
      %883 = vmatprep.mubr.bf16.mxu0 0
      %884 = vmatmul.mubr.bf16.gmra.mxu0 %v763
      %v885 = vpop.f32.mrf.mxu0
      %v886 = vadd.f32 0.0, %v885
      %v887 = vpop.f32.mrf.mxu0
      %v888 = vpop.f32.mrf.mxu0
      %v889 = vadd.f32 0.0, %v888
      %v890 = vpop.f32.mrf.mxu0
      %891 = vmatprep.mubr.bf16.mxu0 0
      %892 = vmatmul.mubr.bf16.gmra.mxu0 %v764
      %v893 = vpop.f32.mrf.mxu0
      %v894 = vadd.f32 0.0, %v893
      %v895 = vpop.f32.mrf.mxu0
      %v896 = vpop.f32.mrf.mxu0
      %v897 = vadd.f32 0.0, %v896
      %v898 = vpop.f32.mrf.mxu0
      %899 = vmatprep.mubr.bf16.mxu0 0
      %900 = vmatmul.mubr.bf16.gmra.mxu0 %v765
      %v901 = vpop.f32.mrf.mxu0
      %v902 = vadd.f32 0.0, %v901
      %v903 = vpop.f32.mrf.mxu0
      %v904 = vpop.f32.mrf.mxu0
      %v905 = vadd.f32 0.0, %v904
      %v906 = vpop.f32.mrf.mxu0
      %907 = vmatprep.mubr.bf16.mxu0 0
      %908 = vmatmul.mubr.bf16.gmra.mxu0 %v766
      %v909 = vpop.f32.mrf.mxu0
      %v910 = vadd.f32 0.0, %v909
      %v911 = vpop.f32.mrf.mxu0
      %v912 = vpop.f32.mrf.mxu0
      %v913 = vadd.f32 0.0, %v912
      %v914 = vpop.f32.mrf.mxu0
      %915 = vmatprep.mubr.bf16.mxu0 0
      %916 = vmatmul.mubr.bf16.gmra.mxu0 %v767
      %v917 = vpop.f32.mrf.mxu0
      %v918 = vadd.f32 0.0, %v917
      %v919 = vpop.f32.mrf.mxu0
      %v920 = vpop.f32.mrf.mxu0
      %v921 = vadd.f32 0.0, %v920
      %v922 = vpop.f32.mrf.mxu0
      %923 = vmatprep.mubr.bf16.mxu0 0
      %924 = vmatmul.mubr.bf16.gmra.mxu0 %v768
      %v925 = vpop.f32.mrf.mxu0
      %v926 = vadd.f32 0.0, %v925
      %v927 = vpop.f32.mrf.mxu0
      %v928 = vpop.f32.mrf.mxu0
      %v929 = vadd.f32 0.0, %v928
      %v930 = vpop.f32.mrf.mxu0
      %931 = vmatprep.mubr.bf16.mxu0 0
      %932 = vmatmul.mubr.bf16.gmra.mxu0 %v769
      %v933 = vpop.f32.mrf.mxu0
      %v934 = vadd.f32 0.0, %v933
      %v935 = vpop.f32.mrf.mxu0
      %v936 = vpop.f32.mrf.mxu0
      %v937 = vadd.f32 0.0, %v936
      %v938 = vpop.f32.mrf.mxu0
      %939 = vmatprep.mubr.bf16.mxu0 0
      %940 = vmatmul.mubr.bf16.gmra.mxu0 %v770
      %v941 = vpop.f32.mrf.mxu0
      %v942 = vadd.f32 0.0, %v941
      %v943 = vpop.f32.mrf.mxu0
      %v944 = vpop.f32.mrf.mxu0
      %v945 = vadd.f32 0.0, %v944
      %v946 = vpop.f32.mrf.mxu0
      %947 = vmatprep.mubr.bf16.mxu0 0
      %948 = vmatmul.mubr.bf16.gmra.mxu0 %v771
      %v949 = vpop.f32.mrf.mxu0
      %v950 = vadd.f32 0.0, %v949
      %v951 = vpop.f32.mrf.mxu0
      %v952 = vpop.f32.mrf.mxu0
      %v953 = vadd.f32 0.0, %v952
      %v954 = vpop.f32.mrf.mxu0
      %955 = vmatprep.mubr.bf16.mxu0 0
      %956 = vmatmul.mubr.bf16.gmra.mxu0 %v772
      %v957 = vpop.f32.mrf.mxu0
      %v958 = vadd.f32 0.0, %v957
      %v959 = vpop.f32.mrf.mxu0
      %v960 = vpop.f32.mrf.mxu0
      %v961 = vadd.f32 0.0, %v960
      %v962 = vpop.f32.mrf.mxu0
      %963 = vmatprep.mubr.bf16.mxu0 0
      %964 = vmatmul.mubr.bf16.gmra.mxu0 %v773
      %v965 = vpop.f32.mrf.mxu0
      %v966 = vadd.f32 0.0, %v965
      %v967 = vpop.f32.mrf.mxu0
      %v968 = vpop.f32.mrf.mxu0
      %v969 = vadd.f32 0.0, %v968
      %v970 = vpop.f32.mrf.mxu0
      %971 = vmatprep.mubr.bf16.mxu0 0
      %972 = vmatmul.mubr.bf16.gmra.mxu0 %v774
      %v973 = vpop.f32.mrf.mxu0
      %v974 = vadd.f32 0.0, %v973
      %v975 = vpop.f32.mrf.mxu0
      %v976 = vpop.f32.mrf.mxu0
      %v977 = vadd.f32 0.0, %v976
      %v978 = vpop.f32.mrf.mxu0
      %979 = vmatprep.mubr.bf16.mxu0 0
      %980 = vmatmul.mubr.bf16.gmra.mxu0 %v775
      %v981 = vpop.f32.mrf.mxu0
      %v982 = vadd.f32 0.0, %v981
      %v983 = vpop.f32.mrf.mxu0
      %v984 = vpop.f32.mrf.mxu0
      %v985 = vadd.f32 0.0, %v984
      %v986 = vpop.f32.mrf.mxu0
      %987 = vmatprep.mubr.bf16.mxu0 0
      %988 = vmatmul.mubr.bf16.gmra.mxu0 %v776
      %v989 = vpop.f32.mrf.mxu0
      %v990 = vadd.f32 0.0, %v989
      %v991 = vpop.f32.mrf.mxu0
      %v992 = vpop.f32.mrf.mxu0
      %v993 = vadd.f32 0.0, %v992
      %v994 = vpop.f32.mrf.mxu0
      %995 = vmatprep.mubr.bf16.mxu0 0
      %996 = vmatmul.mubr.bf16.gmra.mxu0 %v777
      %v997 = vpop.f32.mrf.mxu0
      %v998 = vadd.f32 0.0, %v997
      %v999 = vpop.f32.mrf.mxu0
      %v1000 = vpop.f32.mrf.mxu0
      %v1001 = vadd.f32 0.0, %v1000
      %v1002 = vpop.f32.mrf.mxu0
      %1003 = vdwg.mxu0
      %v1004 = vadd.f32 %v604, %v878
      %v1005 = vadd.f32 %v607, %v881
      %v1006 = vadd.f32 %v612, %v886
      %v1007 = vadd.f32 %v615, %v889
      %v1008 = vadd.f32 %v620, %v894
      %v1009 = vadd.f32 %v623, %v897
      %v1010 = vadd.f32 %v628, %v902
      %v1011 = vadd.f32 %v631, %v905
      %v1012 = vadd.f32 %v636, %v910
      %v1013 = vadd.f32 %v639, %v913
      %v1014 = vadd.f32 %v644, %v918
      %v1015 = vadd.f32 %v647, %v921
      %v1016 = vadd.f32 %v652, %v926
      %v1017 = vadd.f32 %v655, %v929
      %v1018 = vadd.f32 %v660, %v934
      %v1019 = vadd.f32 %v663, %v937
      %v1020 = vadd.f32 %v668, %v942
      %v1021 = vadd.f32 %v671, %v945
      %v1022 = vadd.f32 %v676, %v950
      %v1023 = vadd.f32 %v679, %v953
      %v1024 = vadd.f32 %v684, %v958
      %v1025 = vadd.f32 %v687, %v961
      %v1026 = vadd.f32 %v692, %v966
      %v1027 = vadd.f32 %v695, %v969
      %v1028 = vadd.f32 %v700, %v974
      %v1029 = vadd.f32 %v703, %v977
      %v1030 = vadd.f32 %v708, %v982
      %v1031 = vadd.f32 %v711, %v985
      %v1032 = vadd.f32 %v716, %v990
      %v1033 = vadd.f32 %v719, %v993
      %v1034 = vadd.f32 %v724, %v998
      %v1035 = vadd.f32 %v727, %v1001
      %s1036 = scalar_lea.vmem %s172, 24
      %v1037 = vld [vmem:[%s1036] sm:$0xff]
      %v1038 = vld [vmem:[%s1036 + $0x8] sm:$0xff]
      %v1039 = vld [vmem:[%s1036 + $0x18] sm:$0xff]
      %v1040 = vld [vmem:[%s1036 + $0x20] sm:$0xff]
      %v1041 = vld [vmem:[%s1036 + $0x30] sm:$0xff]
      %v1042 = vld [vmem:[%s1036 + $0x38] sm:$0xff]
      %v1043 = vld [vmem:[%s1036 + $0x48] sm:$0xff]
      %v1044 = vld [vmem:[%s1036 + $0x50] sm:$0xff]
      %v1045 = vld [vmem:[%s1036 + $0x60] sm:$0xff]
      %v1046 = vld [vmem:[%s1036 + $0x68] sm:$0xff]
      %v1047 = vld [vmem:[%s1036 + $0x78] sm:$0xff]
      %v1048 = vld [vmem:[%s1036 + $0x80] sm:$0xff]
      %v1049 = vld [vmem:[%s1036 + $0x90] sm:$0xff]
      %v1050 = vld [vmem:[%s1036 + $0x98] sm:$0xff]
      %v1051 = vld [vmem:[%s1036 + $0xa8] sm:$0xff]
      %v1052 = vld [vmem:[%s1036 + $0xb0] sm:$0xff]
      %v1053 = vld [vmem:[%s1036 + $0xc0] sm:$0xff]
      %v1054 = vld [vmem:[%s1036 + $0xc8] sm:$0xff]
      %v1055 = vld [vmem:[%s1036 + $0xd8] sm:$0xff]
      %v1056 = vld [vmem:[%s1036 + $0xe0] sm:$0xff]
      %v1057 = vld [vmem:[%s1036 + $0xf0] sm:$0xff]
      %v1058 = vld [vmem:[%s1036 + $0xf8] sm:$0xff]
      %v1059 = vld [vmem:[%s1036 + $0x108] sm:$0xff]
      %v1060 = vld [vmem:[%s1036 + $0x110] sm:$0xff]
      %v1061 = vld [vmem:[%s1036 + $0x120] sm:$0xff]
      %v1062 = vld [vmem:[%s1036 + $0x128] sm:$0xff]
      %v1063 = vld [vmem:[%s1036 + $0x138] sm:$0xff]
      %v1064 = vld [vmem:[%s1036 + $0x140] sm:$0xff]
      %v1065 = vld [vmem:[%s1036 + $0x150] sm:$0xff]
      %v1066 = vld [vmem:[%s1036 + $0x158] sm:$0xff]
      %v1067 = vld [vmem:[%s1036 + $0x168] sm:$0xff]
      %v1068 = vld [vmem:[%s1036 + $0x170] sm:$0xff]
      %v1069 = vpack.c.bf16 %v1038, %v1037
      %v1070 = vpack.c.bf16 %v1040, %v1039
      %v1071 = vpack.c.bf16 %v1042, %v1041
      %v1072 = vpack.c.bf16 %v1044, %v1043
      %v1073 = vpack.c.bf16 %v1046, %v1045
      %v1074 = vpack.c.bf16 %v1048, %v1047
      %v1075 = vpack.c.bf16 %v1050, %v1049
      %v1076 = vpack.c.bf16 %v1052, %v1051
      %v1077 = vpack.c.bf16 %v1054, %v1053
      %v1078 = vpack.c.bf16 %v1056, %v1055
      %v1079 = vpack.c.bf16 %v1058, %v1057
      %v1080 = vpack.c.bf16 %v1060, %v1059
      %v1081 = vpack.c.bf16 %v1062, %v1061
      %v1082 = vpack.c.bf16 %v1064, %v1063
      %v1083 = vpack.c.bf16 %v1066, %v1065
      %v1084 = vpack.c.bf16 %v1068, %v1067
      %s1085 = scalar_lea.vmem %s1, 192
      %v1086 = vld [vmem:[%s1085] sm:$0xf]
      %v1087 = vld [vmem:[%s1085 + $0x4] sm:$0xf]
      %v1088 = vld [vmem:[%s1085 + $0x8] sm:$0xf]
      %v1089 = vld [vmem:[%s1085 + $0xc] sm:$0xf]
      %v1090 = vld [vmem:[%s1085 + $0x10] sm:$0xf]
      %v1091 = vld [vmem:[%s1085 + $0x14] sm:$0xf]
      %v1092 = vld [vmem:[%s1085 + $0x18] sm:$0xf]
      %v1093 = vld [vmem:[%s1085 + $0x1c] sm:$0xf]
      %v1094 = vld [vmem:[%s1085 + $0x20] sm:$0xf]
      %v1095 = vld [vmem:[%s1085 + $0x24] sm:$0xf]
      %v1096 = vld [vmem:[%s1085 + $0x28] sm:$0xf]
      %v1097 = vld [vmem:[%s1085 + $0x2c] sm:$0xf]
      %v1098 = vld [vmem:[%s1085 + $0x30] sm:$0xf]
      %v1099 = vld [vmem:[%s1085 + $0x34] sm:$0xf]
      %v1100 = vld [vmem:[%s1085 + $0x38] sm:$0xf]
      %v1101 = vld [vmem:[%s1085 + $0x3c] sm:$0xf]
      %v1118 = vunpack.c.l.b16 %v1086
      %v1119 = vunpack.c.l.b16 %v1087
      %v1120 = vunpack.c.l.b16 %v1088
      %v1121 = vunpack.c.l.b16 %v1089
      %v1122 = vunpack.c.l.b16 %v1090
      %v1123 = vunpack.c.l.b16 %v1091
      %v1124 = vunpack.c.l.b16 %v1092
      %v1125 = vunpack.c.l.b16 %v1093
      %v1126 = vunpack.c.l.b16 %v1094
      %v1127 = vunpack.c.l.b16 %v1095
      %v1128 = vunpack.c.l.b16 %v1096
      %v1129 = vunpack.c.l.b16 %v1097
      %v1130 = vunpack.c.l.b16 %v1098
      %v1131 = vunpack.c.l.b16 %v1099
      %v1132 = vunpack.c.l.b16 %v1100
      %v1133 = vunpack.c.l.b16 %v1101
      %v1134 = vpack.c.b16 %v1119, %v1118
      %v1135 = vpack.c.b16 %v1121, %v1120
      %v1136 = vpack.c.b16 %v1123, %v1122
      %v1137 = vpack.c.b16 %v1125, %v1124
      %v1138 = vpack.c.b16 %v1127, %v1126
      %v1139 = vpack.c.b16 %v1129, %v1128
      %v1140 = vpack.c.b16 %v1131, %v1130
      %v1141 = vpack.c.b16 %v1133, %v1132
      %1150 = vmatprep.subr.bf16.mxu0 0
      %1151 = vmatpush1.bf16.msra.mxu0 %v1141
      %1152 = vmatprep.subr.bf16.mxu0 0
      %1153 = vmatpush1.bf16.msra.mxu0 %v1140
      %1154 = vmatprep.subr.bf16.mxu0 0
      %1155 = vmatpush1.bf16.msra.mxu0 %v1139
      %1156 = vmatprep.subr.bf16.mxu0 0
      %1157 = vmatpush1.bf16.msra.mxu0 %v1138
      %1158 = vmatprep.subr.bf16.mxu0 0
      %1159 = vmatpush1.bf16.msra.mxu0 %v1137
      %1160 = vmatprep.subr.bf16.mxu0 0
      %1161 = vmatpush1.bf16.msra.mxu0 %v1136
      %1162 = vmatprep.subr.bf16.mxu0 0
      %1163 = vmatpush1.bf16.msra.mxu0 %v1135
      %1164 = vmatprep.subr.bf16.mxu0 0
      %1165 = vmatpush1.bf16.msra.mxu0 %v1134
      %1166 = vmatprep.subr.bf16.mxu0 0
      %1167 = vmatpush2.bf16.msra.mxu0 0
      %1168 = vmatprep.subr.bf16.mxu0 0
      %1169 = vmatpush2.bf16.msra.mxu0 0
      %1170 = vmatprep.subr.bf16.mxu0 0
      %1171 = vmatpush2.bf16.msra.mxu0 0
      %1172 = vmatprep.subr.bf16.mxu0 0
      %1173 = vmatpush2.bf16.msra.mxu0 0
      %1174 = vmatprep.subr.bf16.mxu0 0
      %1175 = vmatpush2.bf16.msra.mxu0 0
      %1176 = vmatprep.subr.bf16.mxu0 0
      %1177 = vmatpush2.bf16.msra.mxu0 0
      %1178 = vmatprep.subr.bf16.mxu0 0
      %1179 = vmatpush2.bf16.msra.mxu0 0
      %1180 = vmatprep.subr.bf16.mxu0 0
      %1181 = vmatpush2.bf16.msra.mxu0 0
      %1182 = vmatprep.mubr.bf16.mxu0 0
      %1183 = vmatmul.mubr.bf16.gmra.mxu0 %v1069
      %v1184 = vpop.f32.mrf.mxu0
      %v1185 = vadd.f32 0.0, %v1184
      %v1186 = vpop.f32.mrf.mxu0
      %v1187 = vpop.f32.mrf.mxu0
      %v1188 = vadd.f32 0.0, %v1187
      %v1189 = vpop.f32.mrf.mxu0
      %1190 = vmatprep.mubr.bf16.mxu0 0
      %1191 = vmatmul.mubr.bf16.gmra.mxu0 %v1070
      %v1192 = vpop.f32.mrf.mxu0
      %v1193 = vadd.f32 0.0, %v1192
      %v1194 = vpop.f32.mrf.mxu0
      %v1195 = vpop.f32.mrf.mxu0
      %v1196 = vadd.f32 0.0, %v1195
      %v1197 = vpop.f32.mrf.mxu0
      %1198 = vmatprep.mubr.bf16.mxu0 0
      %1199 = vmatmul.mubr.bf16.gmra.mxu0 %v1071
      %v1200 = vpop.f32.mrf.mxu0
      %v1201 = vadd.f32 0.0, %v1200
      %v1202 = vpop.f32.mrf.mxu0
      %v1203 = vpop.f32.mrf.mxu0
      %v1204 = vadd.f32 0.0, %v1203
      %v1205 = vpop.f32.mrf.mxu0
      %1206 = vmatprep.mubr.bf16.mxu0 0
      %1207 = vmatmul.mubr.bf16.gmra.mxu0 %v1072
      %v1208 = vpop.f32.mrf.mxu0
      %v1209 = vadd.f32 0.0, %v1208
      %v1210 = vpop.f32.mrf.mxu0
      %v1211 = vpop.f32.mrf.mxu0
      %v1212 = vadd.f32 0.0, %v1211
      %v1213 = vpop.f32.mrf.mxu0
      %1214 = vmatprep.mubr.bf16.mxu0 0
      %1215 = vmatmul.mubr.bf16.gmra.mxu0 %v1073
      %v1216 = vpop.f32.mrf.mxu0
      %v1217 = vadd.f32 0.0, %v1216
      %v1218 = vpop.f32.mrf.mxu0
      %v1219 = vpop.f32.mrf.mxu0
      %v1220 = vadd.f32 0.0, %v1219
      %v1221 = vpop.f32.mrf.mxu0
      %1222 = vmatprep.mubr.bf16.mxu0 0
      %1223 = vmatmul.mubr.bf16.gmra.mxu0 %v1074
      %v1224 = vpop.f32.mrf.mxu0
      %v1225 = vadd.f32 0.0, %v1224
      %v1226 = vpop.f32.mrf.mxu0
      %v1227 = vpop.f32.mrf.mxu0
      %v1228 = vadd.f32 0.0, %v1227
      %v1229 = vpop.f32.mrf.mxu0
      %1230 = vmatprep.mubr.bf16.mxu0 0
      %1231 = vmatmul.mubr.bf16.gmra.mxu0 %v1075
      %v1232 = vpop.f32.mrf.mxu0
      %v1233 = vadd.f32 0.0, %v1232
      %v1234 = vpop.f32.mrf.mxu0
      %v1235 = vpop.f32.mrf.mxu0
      %v1236 = vadd.f32 0.0, %v1235
      %v1237 = vpop.f32.mrf.mxu0
      %1238 = vmatprep.mubr.bf16.mxu0 0
      %1239 = vmatmul.mubr.bf16.gmra.mxu0 %v1076
      %v1240 = vpop.f32.mrf.mxu0
      %v1241 = vadd.f32 0.0, %v1240
      %v1242 = vpop.f32.mrf.mxu0
      %v1243 = vpop.f32.mrf.mxu0
      %v1244 = vadd.f32 0.0, %v1243
      %v1245 = vpop.f32.mrf.mxu0
      %1246 = vmatprep.mubr.bf16.mxu0 0
      %1247 = vmatmul.mubr.bf16.gmra.mxu0 %v1077
      %v1248 = vpop.f32.mrf.mxu0
      %v1249 = vadd.f32 0.0, %v1248
      %v1250 = vpop.f32.mrf.mxu0
      %v1251 = vpop.f32.mrf.mxu0
      %v1252 = vadd.f32 0.0, %v1251
      %v1253 = vpop.f32.mrf.mxu0
      %1254 = vmatprep.mubr.bf16.mxu0 0
      %1255 = vmatmul.mubr.bf16.gmra.mxu0 %v1078
      %v1256 = vpop.f32.mrf.mxu0
      %v1257 = vadd.f32 0.0, %v1256
      %v1258 = vpop.f32.mrf.mxu0
      %v1259 = vpop.f32.mrf.mxu0
      %v1260 = vadd.f32 0.0, %v1259
      %v1261 = vpop.f32.mrf.mxu0
      %1262 = vmatprep.mubr.bf16.mxu0 0
      %1263 = vmatmul.mubr.bf16.gmra.mxu0 %v1079
      %v1264 = vpop.f32.mrf.mxu0
      %v1265 = vadd.f32 0.0, %v1264
      %v1266 = vpop.f32.mrf.mxu0
      %v1267 = vpop.f32.mrf.mxu0
      %v1268 = vadd.f32 0.0, %v1267
      %v1269 = vpop.f32.mrf.mxu0
      %1270 = vmatprep.mubr.bf16.mxu0 0
      %1271 = vmatmul.mubr.bf16.gmra.mxu0 %v1080
      %v1272 = vpop.f32.mrf.mxu0
      %v1273 = vadd.f32 0.0, %v1272
      %v1274 = vpop.f32.mrf.mxu0
      %v1275 = vpop.f32.mrf.mxu0
      %v1276 = vadd.f32 0.0, %v1275
      %v1277 = vpop.f32.mrf.mxu0
      %1278 = vmatprep.mubr.bf16.mxu0 0
      %1279 = vmatmul.mubr.bf16.gmra.mxu0 %v1081
      %v1280 = vpop.f32.mrf.mxu0
      %v1281 = vadd.f32 0.0, %v1280
      %v1282 = vpop.f32.mrf.mxu0
      %v1283 = vpop.f32.mrf.mxu0
      %v1284 = vadd.f32 0.0, %v1283
      %v1285 = vpop.f32.mrf.mxu0
      %1286 = vmatprep.mubr.bf16.mxu0 0
      %1287 = vmatmul.mubr.bf16.gmra.mxu0 %v1082
      %v1288 = vpop.f32.mrf.mxu0
      %v1289 = vadd.f32 0.0, %v1288
      %v1290 = vpop.f32.mrf.mxu0
      %v1291 = vpop.f32.mrf.mxu0
      %v1292 = vadd.f32 0.0, %v1291
      %v1293 = vpop.f32.mrf.mxu0
      %1294 = vmatprep.mubr.bf16.mxu0 0
      %1295 = vmatmul.mubr.bf16.gmra.mxu0 %v1083
      %v1296 = vpop.f32.mrf.mxu0
      %v1297 = vadd.f32 0.0, %v1296
      %v1298 = vpop.f32.mrf.mxu0
      %v1299 = vpop.f32.mrf.mxu0
      %v1300 = vadd.f32 0.0, %v1299
      %v1301 = vpop.f32.mrf.mxu0
      %1302 = vmatprep.mubr.bf16.mxu0 0
      %1303 = vmatmul.mubr.bf16.gmra.mxu0 %v1084
      %v1304 = vpop.f32.mrf.mxu0
      %v1305 = vadd.f32 0.0, %v1304
      %v1306 = vpop.f32.mrf.mxu0
      %v1307 = vpop.f32.mrf.mxu0
      %v1308 = vadd.f32 0.0, %v1307
      %v1309 = vpop.f32.mrf.mxu0
      %1310 = vdwg.mxu0
      %v1311 = vadd.f32 %v1004, %v1185
      %v1312 = vadd.f32 %v1005, %v1188
      %v1313 = vadd.f32 %v1006, %v1193
      %v1314 = vadd.f32 %v1007, %v1196
      %v1315 = vadd.f32 %v1008, %v1201
      %v1316 = vadd.f32 %v1009, %v1204
      %v1317 = vadd.f32 %v1010, %v1209
      %v1318 = vadd.f32 %v1011, %v1212
      %v1319 = vadd.f32 %v1012, %v1217
      %v1320 = vadd.f32 %v1013, %v1220
      %v1321 = vadd.f32 %v1014, %v1225
      %v1322 = vadd.f32 %v1015, %v1228
      %v1323 = vadd.f32 %v1016, %v1233
      %v1324 = vadd.f32 %v1017, %v1236
      %v1325 = vadd.f32 %v1018, %v1241
      %v1326 = vadd.f32 %v1019, %v1244
      %v1327 = vadd.f32 %v1020, %v1249
      %v1328 = vadd.f32 %v1021, %v1252
      %v1329 = vadd.f32 %v1022, %v1257
      %v1330 = vadd.f32 %v1023, %v1260
      %v1331 = vadd.f32 %v1024, %v1265
      %v1332 = vadd.f32 %v1025, %v1268
      %v1333 = vadd.f32 %v1026, %v1273
      %v1334 = vadd.f32 %v1027, %v1276
      %v1335 = vadd.f32 %v1028, %v1281
      %v1336 = vadd.f32 %v1029, %v1284
      %v1337 = vadd.f32 %v1030, %v1289
      %v1338 = vadd.f32 %v1031, %v1292
      %v1339 = vadd.f32 %v1032, %v1297
      %v1340 = vadd.f32 %v1033, %v1300
      %v1341 = vadd.f32 %v1034, %v1305
      %v1342 = vadd.f32 %v1035, %v1308
      %v1343 = vld [vmem:[%s1036 + $0x1] sm:$0xff]
      %v1344 = vld [vmem:[%s1036 + $0x9] sm:$0xff]
      %v1345 = vld [vmem:[%s1036 + $0x19] sm:$0xff]
      %v1346 = vld [vmem:[%s1036 + $0x21] sm:$0xff]
      %v1347 = vld [vmem:[%s1036 + $0x31] sm:$0xff]
      %v1348 = vld [vmem:[%s1036 + $0x39] sm:$0xff]
      %v1349 = vld [vmem:[%s1036 + $0x49] sm:$0xff]
      %v1350 = vld [vmem:[%s1036 + $0x51] sm:$0xff]
      %v1351 = vld [vmem:[%s1036 + $0x61] sm:$0xff]
      %v1352 = vld [vmem:[%s1036 + $0x69] sm:$0xff]
      %v1353 = vld [vmem:[%s1036 + $0x79] sm:$0xff]
      %v1354 = vld [vmem:[%s1036 + $0x81] sm:$0xff]
      %v1355 = vld [vmem:[%s1036 + $0x91] sm:$0xff]
      %v1356 = vld [vmem:[%s1036 + $0x99] sm:$0xff]
      %v1357 = vld [vmem:[%s1036 + $0xa9] sm:$0xff]
      %v1358 = vld [vmem:[%s1036 + $0xb1] sm:$0xff]
      %v1359 = vld [vmem:[%s1036 + $0xc1] sm:$0xff]
      %v1360 = vld [vmem:[%s1036 + $0xc9] sm:$0xff]
      %v1361 = vld [vmem:[%s1036 + $0xd9] sm:$0xff]
      %v1362 = vld [vmem:[%s1036 + $0xe1] sm:$0xff]
      %v1363 = vld [vmem:[%s1036 + $0xf1] sm:$0xff]
      %v1364 = vld [vmem:[%s1036 + $0xf9] sm:$0xff]
      %v1365 = vld [vmem:[%s1036 + $0x109] sm:$0xff]
      %v1366 = vld [vmem:[%s1036 + $0x111] sm:$0xff]
      %v1367 = vld [vmem:[%s1036 + $0x121] sm:$0xff]
      %v1368 = vld [vmem:[%s1036 + $0x129] sm:$0xff]
      %v1369 = vld [vmem:[%s1036 + $0x139] sm:$0xff]
      %v1370 = vld [vmem:[%s1036 + $0x141] sm:$0xff]
      %v1371 = vld [vmem:[%s1036 + $0x151] sm:$0xff]
      %v1372 = vld [vmem:[%s1036 + $0x159] sm:$0xff]
      %v1373 = vld [vmem:[%s1036 + $0x169] sm:$0xff]
      %v1374 = vld [vmem:[%s1036 + $0x171] sm:$0xff]
      %v1375 = vpack.c.bf16 %v1344, %v1343
      %v1376 = vpack.c.bf16 %v1346, %v1345
      %v1377 = vpack.c.bf16 %v1348, %v1347
      %v1378 = vpack.c.bf16 %v1350, %v1349
      %v1379 = vpack.c.bf16 %v1352, %v1351
      %v1380 = vpack.c.bf16 %v1354, %v1353
      %v1381 = vpack.c.bf16 %v1356, %v1355
      %v1382 = vpack.c.bf16 %v1358, %v1357
      %v1383 = vpack.c.bf16 %v1360, %v1359
      %v1384 = vpack.c.bf16 %v1362, %v1361
      %v1385 = vpack.c.bf16 %v1364, %v1363
      %v1386 = vpack.c.bf16 %v1366, %v1365
      %v1387 = vpack.c.bf16 %v1368, %v1367
      %v1388 = vpack.c.bf16 %v1370, %v1369
      %v1389 = vpack.c.bf16 %v1372, %v1371
      %v1390 = vpack.c.bf16 %v1374, %v1373
      %s1391 = scalar_lea.vmem %s1, 256
      %v1392 = vld [vmem:[%s1391] sm:$0xf]
      %v1393 = vld [vmem:[%s1391 + $0x4] sm:$0xf]
      %v1394 = vld [vmem:[%s1391 + $0x8] sm:$0xf]
      %v1395 = vld [vmem:[%s1391 + $0xc] sm:$0xf]
      %v1396 = vld [vmem:[%s1391 + $0x10] sm:$0xf]
      %v1397 = vld [vmem:[%s1391 + $0x14] sm:$0xf]
      %v1398 = vld [vmem:[%s1391 + $0x18] sm:$0xf]
      %v1399 = vld [vmem:[%s1391 + $0x1c] sm:$0xf]
      %v1400 = vld [vmem:[%s1391 + $0x20] sm:$0xf]
      %v1401 = vld [vmem:[%s1391 + $0x24] sm:$0xf]
      %v1402 = vld [vmem:[%s1391 + $0x28] sm:$0xf]
      %v1403 = vld [vmem:[%s1391 + $0x2c] sm:$0xf]
      %v1404 = vld [vmem:[%s1391 + $0x30] sm:$0xf]
      %v1405 = vld [vmem:[%s1391 + $0x34] sm:$0xf]
      %v1406 = vld [vmem:[%s1391 + $0x38] sm:$0xf]
      %v1407 = vld [vmem:[%s1391 + $0x3c] sm:$0xf]
      %v1424 = vunpack.c.l.b16 %v1392
      %v1425 = vunpack.c.l.b16 %v1393
      %v1426 = vunpack.c.l.b16 %v1394
      %v1427 = vunpack.c.l.b16 %v1395
      %v1428 = vunpack.c.l.b16 %v1396
      %v1429 = vunpack.c.l.b16 %v1397
      %v1430 = vunpack.c.l.b16 %v1398
      %v1431 = vunpack.c.l.b16 %v1399
      %v1432 = vunpack.c.l.b16 %v1400
      %v1433 = vunpack.c.l.b16 %v1401
      %v1434 = vunpack.c.l.b16 %v1402
      %v1435 = vunpack.c.l.b16 %v1403
      %v1436 = vunpack.c.l.b16 %v1404
      %v1437 = vunpack.c.l.b16 %v1405
      %v1438 = vunpack.c.l.b16 %v1406
      %v1439 = vunpack.c.l.b16 %v1407
      %v1440 = vpack.c.b16 %v1425, %v1424
      %v1441 = vpack.c.b16 %v1427, %v1426
      %v1442 = vpack.c.b16 %v1429, %v1428
      %v1443 = vpack.c.b16 %v1431, %v1430
      %v1444 = vpack.c.b16 %v1433, %v1432
      %v1445 = vpack.c.b16 %v1435, %v1434
      %v1446 = vpack.c.b16 %v1437, %v1436
      %v1447 = vpack.c.b16 %v1439, %v1438
      %1456 = vmatprep.subr.bf16.mxu0 0
      %1457 = vmatpush1.bf16.msra.mxu0 %v1447
      %1458 = vmatprep.subr.bf16.mxu0 0
      %1459 = vmatpush1.bf16.msra.mxu0 %v1446
      %1460 = vmatprep.subr.bf16.mxu0 0
      %1461 = vmatpush1.bf16.msra.mxu0 %v1445
      %1462 = vmatprep.subr.bf16.mxu0 0
      %1463 = vmatpush1.bf16.msra.mxu0 %v1444
      %1464 = vmatprep.subr.bf16.mxu0 0
      %1465 = vmatpush1.bf16.msra.mxu0 %v1443
      %1466 = vmatprep.subr.bf16.mxu0 0
      %1467 = vmatpush1.bf16.msra.mxu0 %v1442
      %1468 = vmatprep.subr.bf16.mxu0 0
      %1469 = vmatpush1.bf16.msra.mxu0 %v1441
      %1470 = vmatprep.subr.bf16.mxu0 0
      %1471 = vmatpush1.bf16.msra.mxu0 %v1440
      %1472 = vmatprep.subr.bf16.mxu0 0
      %1473 = vmatpush2.bf16.msra.mxu0 0
      %1474 = vmatprep.subr.bf16.mxu0 0
      %1475 = vmatpush2.bf16.msra.mxu0 0
      %1476 = vmatprep.subr.bf16.mxu0 0
      %1477 = vmatpush2.bf16.msra.mxu0 0
      %1478 = vmatprep.subr.bf16.mxu0 0
      %1479 = vmatpush2.bf16.msra.mxu0 0
      %1480 = vmatprep.subr.bf16.mxu0 0
      %1481 = vmatpush2.bf16.msra.mxu0 0
      %1482 = vmatprep.subr.bf16.mxu0 0
      %1483 = vmatpush2.bf16.msra.mxu0 0
      %1484 = vmatprep.subr.bf16.mxu0 0
      %1485 = vmatpush2.bf16.msra.mxu0 0
      %1486 = vmatprep.subr.bf16.mxu0 0
      %1487 = vmatpush2.bf16.msra.mxu0 0
      %1488 = vmatprep.mubr.bf16.mxu0 0
      %1489 = vmatmul.mubr.bf16.gmra.mxu0 %v1375
      %v1490 = vpop.f32.mrf.mxu0
      %v1491 = vadd.f32 0.0, %v1490
      %v1492 = vpop.f32.mrf.mxu0
      %v1493 = vpop.f32.mrf.mxu0
      %v1494 = vadd.f32 0.0, %v1493
      %v1495 = vpop.f32.mrf.mxu0
      %1496 = vmatprep.mubr.bf16.mxu0 0
      %1497 = vmatmul.mubr.bf16.gmra.mxu0 %v1376
      %v1498 = vpop.f32.mrf.mxu0
      %v1499 = vadd.f32 0.0, %v1498
      %v1500 = vpop.f32.mrf.mxu0
      %v1501 = vpop.f32.mrf.mxu0
      %v1502 = vadd.f32 0.0, %v1501
      %v1503 = vpop.f32.mrf.mxu0
      %1504 = vmatprep.mubr.bf16.mxu0 0
      %1505 = vmatmul.mubr.bf16.gmra.mxu0 %v1377
      %v1506 = vpop.f32.mrf.mxu0
      %v1507 = vadd.f32 0.0, %v1506
      %v1508 = vpop.f32.mrf.mxu0
      %v1509 = vpop.f32.mrf.mxu0
      %v1510 = vadd.f32 0.0, %v1509
      %v1511 = vpop.f32.mrf.mxu0
      %1512 = vmatprep.mubr.bf16.mxu0 0
      %1513 = vmatmul.mubr.bf16.gmra.mxu0 %v1378
      %v1514 = vpop.f32.mrf.mxu0
      %v1515 = vadd.f32 0.0, %v1514
      %v1516 = vpop.f32.mrf.mxu0
      %v1517 = vpop.f32.mrf.mxu0
      %v1518 = vadd.f32 0.0, %v1517
      %v1519 = vpop.f32.mrf.mxu0
      %1520 = vmatprep.mubr.bf16.mxu0 0
      %1521 = vmatmul.mubr.bf16.gmra.mxu0 %v1379
      %v1522 = vpop.f32.mrf.mxu0
      %v1523 = vadd.f32 0.0, %v1522
      %v1524 = vpop.f32.mrf.mxu0
      %v1525 = vpop.f32.mrf.mxu0
      %v1526 = vadd.f32 0.0, %v1525
      %v1527 = vpop.f32.mrf.mxu0
      %1528 = vmatprep.mubr.bf16.mxu0 0
      %1529 = vmatmul.mubr.bf16.gmra.mxu0 %v1380
      %v1530 = vpop.f32.mrf.mxu0
      %v1531 = vadd.f32 0.0, %v1530
      %v1532 = vpop.f32.mrf.mxu0
      %v1533 = vpop.f32.mrf.mxu0
      %v1534 = vadd.f32 0.0, %v1533
      %v1535 = vpop.f32.mrf.mxu0
      %1536 = vmatprep.mubr.bf16.mxu0 0
      %1537 = vmatmul.mubr.bf16.gmra.mxu0 %v1381
      %v1538 = vpop.f32.mrf.mxu0
      %v1539 = vadd.f32 0.0, %v1538
      %v1540 = vpop.f32.mrf.mxu0
      %v1541 = vpop.f32.mrf.mxu0
      %v1542 = vadd.f32 0.0, %v1541
      %v1543 = vpop.f32.mrf.mxu0
      %1544 = vmatprep.mubr.bf16.mxu0 0
      %1545 = vmatmul.mubr.bf16.gmra.mxu0 %v1382
      %v1546 = vpop.f32.mrf.mxu0
      %v1547 = vadd.f32 0.0, %v1546
      %v1548 = vpop.f32.mrf.mxu0
      %v1549 = vpop.f32.mrf.mxu0
      %v1550 = vadd.f32 0.0, %v1549
      %v1551 = vpop.f32.mrf.mxu0
      %1552 = vmatprep.mubr.bf16.mxu0 0
      %1553 = vmatmul.mubr.bf16.gmra.mxu0 %v1383
      %v1554 = vpop.f32.mrf.mxu0
      %v1555 = vadd.f32 0.0, %v1554
      %v1556 = vpop.f32.mrf.mxu0
      %v1557 = vpop.f32.mrf.mxu0
      %v1558 = vadd.f32 0.0, %v1557
      %v1559 = vpop.f32.mrf.mxu0
      %1560 = vmatprep.mubr.bf16.mxu0 0
      %1561 = vmatmul.mubr.bf16.gmra.mxu0 %v1384
      %v1562 = vpop.f32.mrf.mxu0
      %v1563 = vadd.f32 0.0, %v1562
      %v1564 = vpop.f32.mrf.mxu0
      %v1565 = vpop.f32.mrf.mxu0
      %v1566 = vadd.f32 0.0, %v1565
      %v1567 = vpop.f32.mrf.mxu0
      %1568 = vmatprep.mubr.bf16.mxu0 0
      %1569 = vmatmul.mubr.bf16.gmra.mxu0 %v1385
      %v1570 = vpop.f32.mrf.mxu0
      %v1571 = vadd.f32 0.0, %v1570
      %v1572 = vpop.f32.mrf.mxu0
      %v1573 = vpop.f32.mrf.mxu0
      %v1574 = vadd.f32 0.0, %v1573
      %v1575 = vpop.f32.mrf.mxu0
      %1576 = vmatprep.mubr.bf16.mxu0 0
      %1577 = vmatmul.mubr.bf16.gmra.mxu0 %v1386
      %v1578 = vpop.f32.mrf.mxu0
      %v1579 = vadd.f32 0.0, %v1578
      %v1580 = vpop.f32.mrf.mxu0
      %v1581 = vpop.f32.mrf.mxu0
      %v1582 = vadd.f32 0.0, %v1581
      %v1583 = vpop.f32.mrf.mxu0
      %1584 = vmatprep.mubr.bf16.mxu0 0
      %1585 = vmatmul.mubr.bf16.gmra.mxu0 %v1387
      %v1586 = vpop.f32.mrf.mxu0
      %v1587 = vadd.f32 0.0, %v1586
      %v1588 = vpop.f32.mrf.mxu0
      %v1589 = vpop.f32.mrf.mxu0
      %v1590 = vadd.f32 0.0, %v1589
      %v1591 = vpop.f32.mrf.mxu0
      %1592 = vmatprep.mubr.bf16.mxu0 0
      %1593 = vmatmul.mubr.bf16.gmra.mxu0 %v1388
      %v1594 = vpop.f32.mrf.mxu0
      %v1595 = vadd.f32 0.0, %v1594
      %v1596 = vpop.f32.mrf.mxu0
      %v1597 = vpop.f32.mrf.mxu0
      %v1598 = vadd.f32 0.0, %v1597
      %v1599 = vpop.f32.mrf.mxu0
      %1600 = vmatprep.mubr.bf16.mxu0 0
      %1601 = vmatmul.mubr.bf16.gmra.mxu0 %v1389
      %v1602 = vpop.f32.mrf.mxu0
      %v1603 = vadd.f32 0.0, %v1602
      %v1604 = vpop.f32.mrf.mxu0
      %v1605 = vpop.f32.mrf.mxu0
      %v1606 = vadd.f32 0.0, %v1605
      %v1607 = vpop.f32.mrf.mxu0
      %1608 = vmatprep.mubr.bf16.mxu0 0
      %1609 = vmatmul.mubr.bf16.gmra.mxu0 %v1390
      %v1610 = vpop.f32.mrf.mxu0
      %v1611 = vadd.f32 0.0, %v1610
      %v1612 = vpop.f32.mrf.mxu0
      %v1613 = vpop.f32.mrf.mxu0
      %v1614 = vadd.f32 0.0, %v1613
      %v1615 = vpop.f32.mrf.mxu0
      %1616 = vdwg.mxu0
      %v1617 = vadd.f32 %v1311, %v1491
      %v1618 = vadd.f32 %v1312, %v1494
      %v1619 = vadd.f32 %v1313, %v1499
      %v1620 = vadd.f32 %v1314, %v1502
      %v1621 = vadd.f32 %v1315, %v1507
      %v1622 = vadd.f32 %v1316, %v1510
      %v1623 = vadd.f32 %v1317, %v1515
      %v1624 = vadd.f32 %v1318, %v1518
      %v1625 = vadd.f32 %v1319, %v1523
      %v1626 = vadd.f32 %v1320, %v1526
      %v1627 = vadd.f32 %v1321, %v1531
      %v1628 = vadd.f32 %v1322, %v1534
      %v1629 = vadd.f32 %v1323, %v1539
      %v1630 = vadd.f32 %v1324, %v1542
      %v1631 = vadd.f32 %v1325, %v1547
      %v1632 = vadd.f32 %v1326, %v1550
      %v1633 = vadd.f32 %v1327, %v1555
      %v1634 = vadd.f32 %v1328, %v1558
      %v1635 = vadd.f32 %v1329, %v1563
      %v1636 = vadd.f32 %v1330, %v1566
      %v1637 = vadd.f32 %v1331, %v1571
      %v1638 = vadd.f32 %v1332, %v1574
      %v1639 = vadd.f32 %v1333, %v1579
      %v1640 = vadd.f32 %v1334, %v1582
      %v1641 = vadd.f32 %v1335, %v1587
      %v1642 = vadd.f32 %v1336, %v1590
      %v1643 = vadd.f32 %v1337, %v1595
      %v1644 = vadd.f32 %v1338, %v1598
      %v1645 = vadd.f32 %v1339, %v1603
      %v1646 = vadd.f32 %v1340, %v1606
      %v1647 = vadd.f32 %v1341, %v1611
      %v1648 = vadd.f32 %v1342, %v1614
      %v1649 = vld [vmem:[%s1036 + $0x2] sm:$0xff]
      %v1650 = vld [vmem:[%s1036 + $0xa] sm:$0xff]
      %v1651 = vld [vmem:[%s1036 + $0x1a] sm:$0xff]
      %v1652 = vld [vmem:[%s1036 + $0x22] sm:$0xff]
      %v1653 = vld [vmem:[%s1036 + $0x32] sm:$0xff]
      %v1654 = vld [vmem:[%s1036 + $0x3a] sm:$0xff]
      %v1655 = vld [vmem:[%s1036 + $0x4a] sm:$0xff]
      %v1656 = vld [vmem:[%s1036 + $0x52] sm:$0xff]
      %v1657 = vld [vmem:[%s1036 + $0x62] sm:$0xff]
      %v1658 = vld [vmem:[%s1036 + $0x6a] sm:$0xff]
      %v1659 = vld [vmem:[%s1036 + $0x7a] sm:$0xff]
      %v1660 = vld [vmem:[%s1036 + $0x82] sm:$0xff]
      %v1661 = vld [vmem:[%s1036 + $0x92] sm:$0xff]
      %v1662 = vld [vmem:[%s1036 + $0x9a] sm:$0xff]
      %v1663 = vld [vmem:[%s1036 + $0xaa] sm:$0xff]
      %v1664 = vld [vmem:[%s1036 + $0xb2] sm:$0xff]
      %v1665 = vld [vmem:[%s1036 + $0xc2] sm:$0xff]
      %v1666 = vld [vmem:[%s1036 + $0xca] sm:$0xff]
      %v1667 = vld [vmem:[%s1036 + $0xda] sm:$0xff]
      %v1668 = vld [vmem:[%s1036 + $0xe2] sm:$0xff]
      %v1669 = vld [vmem:[%s1036 + $0xf2] sm:$0xff]
      %v1670 = vld [vmem:[%s1036 + $0xfa] sm:$0xff]
      %v1671 = vld [vmem:[%s1036 + $0x10a] sm:$0xff]
      %v1672 = vld [vmem:[%s1036 + $0x112] sm:$0xff]
      %v1673 = vld [vmem:[%s1036 + $0x122] sm:$0xff]
      %v1674 = vld [vmem:[%s1036 + $0x12a] sm:$0xff]
      %v1675 = vld [vmem:[%s1036 + $0x13a] sm:$0xff]
      %v1676 = vld [vmem:[%s1036 + $0x142] sm:$0xff]
      %v1677 = vld [vmem:[%s1036 + $0x152] sm:$0xff]
      %v1678 = vld [vmem:[%s1036 + $0x15a] sm:$0xff]
      %v1679 = vld [vmem:[%s1036 + $0x16a] sm:$0xff]
      %v1680 = vld [vmem:[%s1036 + $0x172] sm:$0xff]
      %v1681 = vpack.c.bf16 %v1650, %v1649
      %v1682 = vpack.c.bf16 %v1652, %v1651
      %v1683 = vpack.c.bf16 %v1654, %v1653
      %v1684 = vpack.c.bf16 %v1656, %v1655
      %v1685 = vpack.c.bf16 %v1658, %v1657
      %v1686 = vpack.c.bf16 %v1660, %v1659
      %v1687 = vpack.c.bf16 %v1662, %v1661
      %v1688 = vpack.c.bf16 %v1664, %v1663
      %v1689 = vpack.c.bf16 %v1666, %v1665
      %v1690 = vpack.c.bf16 %v1668, %v1667
      %v1691 = vpack.c.bf16 %v1670, %v1669
      %v1692 = vpack.c.bf16 %v1672, %v1671
      %v1693 = vpack.c.bf16 %v1674, %v1673
      %v1694 = vpack.c.bf16 %v1676, %v1675
      %v1695 = vpack.c.bf16 %v1678, %v1677
      %v1696 = vpack.c.bf16 %v1680, %v1679
      %s1697 = scalar_lea.vmem %s1, 320
      %v1698 = vld [vmem:[%s1697] sm:$0xf]
      %v1699 = vld [vmem:[%s1697 + $0x4] sm:$0xf]
      %v1700 = vld [vmem:[%s1697 + $0x8] sm:$0xf]
      %v1701 = vld [vmem:[%s1697 + $0xc] sm:$0xf]
      %v1702 = vld [vmem:[%s1697 + $0x10] sm:$0xf]
      %v1703 = vld [vmem:[%s1697 + $0x14] sm:$0xf]
      %v1704 = vld [vmem:[%s1697 + $0x18] sm:$0xf]
      %v1705 = vld [vmem:[%s1697 + $0x1c] sm:$0xf]
      %v1706 = vld [vmem:[%s1697 + $0x20] sm:$0xf]
      %v1707 = vld [vmem:[%s1697 + $0x24] sm:$0xf]
      %v1708 = vld [vmem:[%s1697 + $0x28] sm:$0xf]
      %v1709 = vld [vmem:[%s1697 + $0x2c] sm:$0xf]
      %v1710 = vld [vmem:[%s1697 + $0x30] sm:$0xf]
      %v1711 = vld [vmem:[%s1697 + $0x34] sm:$0xf]
      %v1712 = vld [vmem:[%s1697 + $0x38] sm:$0xf]
      %v1713 = vld [vmem:[%s1697 + $0x3c] sm:$0xf]
      %v1730 = vunpack.c.l.b16 %v1698
      %v1731 = vunpack.c.l.b16 %v1699
      %v1732 = vunpack.c.l.b16 %v1700
      %v1733 = vunpack.c.l.b16 %v1701
      %v1734 = vunpack.c.l.b16 %v1702
      %v1735 = vunpack.c.l.b16 %v1703
      %v1736 = vunpack.c.l.b16 %v1704
      %v1737 = vunpack.c.l.b16 %v1705
      %v1738 = vunpack.c.l.b16 %v1706
      %v1739 = vunpack.c.l.b16 %v1707
      %v1740 = vunpack.c.l.b16 %v1708
      %v1741 = vunpack.c.l.b16 %v1709
      %v1742 = vunpack.c.l.b16 %v1710
      %v1743 = vunpack.c.l.b16 %v1711
      %v1744 = vunpack.c.l.b16 %v1712
      %v1745 = vunpack.c.l.b16 %v1713
      %v1746 = vpack.c.b16 %v1731, %v1730
      %v1747 = vpack.c.b16 %v1733, %v1732
      %v1748 = vpack.c.b16 %v1735, %v1734
      %v1749 = vpack.c.b16 %v1737, %v1736
      %v1750 = vpack.c.b16 %v1739, %v1738
      %v1751 = vpack.c.b16 %v1741, %v1740
      %v1752 = vpack.c.b16 %v1743, %v1742
      %v1753 = vpack.c.b16 %v1745, %v1744
      %1762 = vmatprep.subr.bf16.mxu0 0
      %1763 = vmatpush1.bf16.msra.mxu0 %v1753
      %1764 = vmatprep.subr.bf16.mxu0 0
      %1765 = vmatpush1.bf16.msra.mxu0 %v1752
      %1766 = vmatprep.subr.bf16.mxu0 0
      %1767 = vmatpush1.bf16.msra.mxu0 %v1751
      %1768 = vmatprep.subr.bf16.mxu0 0
      %1769 = vmatpush1.bf16.msra.mxu0 %v1750
      %1770 = vmatprep.subr.bf16.mxu0 0
      %1771 = vmatpush1.bf16.msra.mxu0 %v1749
      %1772 = vmatprep.subr.bf16.mxu0 0
      %1773 = vmatpush1.bf16.msra.mxu0 %v1748
      %1774 = vmatprep.subr.bf16.mxu0 0
      %1775 = vmatpush1.bf16.msra.mxu0 %v1747
      %1776 = vmatprep.subr.bf16.mxu0 0
      %1777 = vmatpush1.bf16.msra.mxu0 %v1746
      %1778 = vmatprep.subr.bf16.mxu0 0
      %1779 = vmatpush2.bf16.msra.mxu0 0
      %1780 = vmatprep.subr.bf16.mxu0 0
      %1781 = vmatpush2.bf16.msra.mxu0 0
      %1782 = vmatprep.subr.bf16.mxu0 0
      %1783 = vmatpush2.bf16.msra.mxu0 0
      %1784 = vmatprep.subr.bf16.mxu0 0
      %1785 = vmatpush2.bf16.msra.mxu0 0
      %1786 = vmatprep.subr.bf16.mxu0 0
      %1787 = vmatpush2.bf16.msra.mxu0 0
      %1788 = vmatprep.subr.bf16.mxu0 0
      %1789 = vmatpush2.bf16.msra.mxu0 0
      %1790 = vmatprep.subr.bf16.mxu0 0
      %1791 = vmatpush2.bf16.msra.mxu0 0
      %1792 = vmatprep.subr.bf16.mxu0 0
      %1793 = vmatpush2.bf16.msra.mxu0 0
      %1794 = vmatprep.mubr.bf16.mxu0 0
      %1795 = vmatmul.mubr.bf16.gmra.mxu0 %v1681
      %v1796 = vpop.f32.mrf.mxu0
      %v1797 = vadd.f32 0.0, %v1796
      %v1798 = vpop.f32.mrf.mxu0
      %v1799 = vpop.f32.mrf.mxu0
      %v1800 = vadd.f32 0.0, %v1799
      %v1801 = vpop.f32.mrf.mxu0
      %1802 = vmatprep.mubr.bf16.mxu0 0
      %1803 = vmatmul.mubr.bf16.gmra.mxu0 %v1682
      %v1804 = vpop.f32.mrf.mxu0
      %v1805 = vadd.f32 0.0, %v1804
      %v1806 = vpop.f32.mrf.mxu0
      %v1807 = vpop.f32.mrf.mxu0
      %v1808 = vadd.f32 0.0, %v1807
      %v1809 = vpop.f32.mrf.mxu0
      %1810 = vmatprep.mubr.bf16.mxu0 0
      %1811 = vmatmul.mubr.bf16.gmra.mxu0 %v1683
      %v1812 = vpop.f32.mrf.mxu0
      %v1813 = vadd.f32 0.0, %v1812
      %v1814 = vpop.f32.mrf.mxu0
      %v1815 = vpop.f32.mrf.mxu0
      %v1816 = vadd.f32 0.0, %v1815
      %v1817 = vpop.f32.mrf.mxu0
      %1818 = vmatprep.mubr.bf16.mxu0 0
      %1819 = vmatmul.mubr.bf16.gmra.mxu0 %v1684
      %v1820 = vpop.f32.mrf.mxu0
      %v1821 = vadd.f32 0.0, %v1820
      %v1822 = vpop.f32.mrf.mxu0
      %v1823 = vpop.f32.mrf.mxu0
      %v1824 = vadd.f32 0.0, %v1823
      %v1825 = vpop.f32.mrf.mxu0
      %1826 = vmatprep.mubr.bf16.mxu0 0
      %1827 = vmatmul.mubr.bf16.gmra.mxu0 %v1685
      %v1828 = vpop.f32.mrf.mxu0
      %v1829 = vadd.f32 0.0, %v1828
      %v1830 = vpop.f32.mrf.mxu0
      %v1831 = vpop.f32.mrf.mxu0
      %v1832 = vadd.f32 0.0, %v1831
      %v1833 = vpop.f32.mrf.mxu0
      %1834 = vmatprep.mubr.bf16.mxu0 0
      %1835 = vmatmul.mubr.bf16.gmra.mxu0 %v1686
      %v1836 = vpop.f32.mrf.mxu0
      %v1837 = vadd.f32 0.0, %v1836
      %v1838 = vpop.f32.mrf.mxu0
      %v1839 = vpop.f32.mrf.mxu0
      %v1840 = vadd.f32 0.0, %v1839
      %v1841 = vpop.f32.mrf.mxu0
      %1842 = vmatprep.mubr.bf16.mxu0 0
      %1843 = vmatmul.mubr.bf16.gmra.mxu0 %v1687
      %v1844 = vpop.f32.mrf.mxu0
      %v1845 = vadd.f32 0.0, %v1844
      %v1846 = vpop.f32.mrf.mxu0
      %v1847 = vpop.f32.mrf.mxu0
      %v1848 = vadd.f32 0.0, %v1847
      %v1849 = vpop.f32.mrf.mxu0
      %1850 = vmatprep.mubr.bf16.mxu0 0
      %1851 = vmatmul.mubr.bf16.gmra.mxu0 %v1688
      %v1852 = vpop.f32.mrf.mxu0
      %v1853 = vadd.f32 0.0, %v1852
      %v1854 = vpop.f32.mrf.mxu0
      %v1855 = vpop.f32.mrf.mxu0
      %v1856 = vadd.f32 0.0, %v1855
      %v1857 = vpop.f32.mrf.mxu0
      %1858 = vmatprep.mubr.bf16.mxu0 0
      %1859 = vmatmul.mubr.bf16.gmra.mxu0 %v1689
      %v1860 = vpop.f32.mrf.mxu0
      %v1861 = vadd.f32 0.0, %v1860
      %v1862 = vpop.f32.mrf.mxu0
      %v1863 = vpop.f32.mrf.mxu0
      %v1864 = vadd.f32 0.0, %v1863
      %v1865 = vpop.f32.mrf.mxu0
      %1866 = vmatprep.mubr.bf16.mxu0 0
      %1867 = vmatmul.mubr.bf16.gmra.mxu0 %v1690
      %v1868 = vpop.f32.mrf.mxu0
      %v1869 = vadd.f32 0.0, %v1868
      %v1870 = vpop.f32.mrf.mxu0
      %v1871 = vpop.f32.mrf.mxu0
      %v1872 = vadd.f32 0.0, %v1871
      %v1873 = vpop.f32.mrf.mxu0
      %1874 = vmatprep.mubr.bf16.mxu0 0
      %1875 = vmatmul.mubr.bf16.gmra.mxu0 %v1691
      %v1876 = vpop.f32.mrf.mxu0
      %v1877 = vadd.f32 0.0, %v1876
      %v1878 = vpop.f32.mrf.mxu0
      %v1879 = vpop.f32.mrf.mxu0
      %v1880 = vadd.f32 0.0, %v1879
      %v1881 = vpop.f32.mrf.mxu0
      %1882 = vmatprep.mubr.bf16.mxu0 0
      %1883 = vmatmul.mubr.bf16.gmra.mxu0 %v1692
      %v1884 = vpop.f32.mrf.mxu0
      %v1885 = vadd.f32 0.0, %v1884
      %v1886 = vpop.f32.mrf.mxu0
      %v1887 = vpop.f32.mrf.mxu0
      %v1888 = vadd.f32 0.0, %v1887
      %v1889 = vpop.f32.mrf.mxu0
      %1890 = vmatprep.mubr.bf16.mxu0 0
      %1891 = vmatmul.mubr.bf16.gmra.mxu0 %v1693
      %v1892 = vpop.f32.mrf.mxu0
      %v1893 = vadd.f32 0.0, %v1892
      %v1894 = vpop.f32.mrf.mxu0
      %v1895 = vpop.f32.mrf.mxu0
      %v1896 = vadd.f32 0.0, %v1895
      %v1897 = vpop.f32.mrf.mxu0
      %1898 = vmatprep.mubr.bf16.mxu0 0
      %1899 = vmatmul.mubr.bf16.gmra.mxu0 %v1694
      %v1900 = vpop.f32.mrf.mxu0
      %v1901 = vadd.f32 0.0, %v1900
      %v1902 = vpop.f32.mrf.mxu0
      %v1903 = vpop.f32.mrf.mxu0
      %v1904 = vadd.f32 0.0, %v1903
      %v1905 = vpop.f32.mrf.mxu0
      %1906 = vmatprep.mubr.bf16.mxu0 0
      %1907 = vmatmul.mubr.bf16.gmra.mxu0 %v1695
      %v1908 = vpop.f32.mrf.mxu0
      %v1909 = vadd.f32 0.0, %v1908
      %v1910 = vpop.f32.mrf.mxu0
      %v1911 = vpop.f32.mrf.mxu0
      %v1912 = vadd.f32 0.0, %v1911
      %v1913 = vpop.f32.mrf.mxu0
      %1914 = vmatprep.mubr.bf16.mxu0 0
      %1915 = vmatmul.mubr.bf16.gmra.mxu0 %v1696
      %v1916 = vpop.f32.mrf.mxu0
      %v1917 = vadd.f32 0.0, %v1916
      %v1918 = vpop.f32.mrf.mxu0
      %v1919 = vpop.f32.mrf.mxu0
      %v1920 = vadd.f32 0.0, %v1919
      %v1921 = vpop.f32.mrf.mxu0
      %1922 = vdwg.mxu0
      %v1923 = vadd.f32 %v1617, %v1797
      %v1924 = vadd.f32 %v1618, %v1800
      %v1925 = vadd.f32 %v1619, %v1805
      %v1926 = vadd.f32 %v1620, %v1808
      %v1927 = vadd.f32 %v1621, %v1813
      %v1928 = vadd.f32 %v1622, %v1816
      %v1929 = vadd.f32 %v1623, %v1821
      %v1930 = vadd.f32 %v1624, %v1824
      %v1931 = vadd.f32 %v1625, %v1829
      %v1932 = vadd.f32 %v1626, %v1832
      %v1933 = vadd.f32 %v1627, %v1837
      %v1934 = vadd.f32 %v1628, %v1840
      %v1935 = vadd.f32 %v1629, %v1845
      %v1936 = vadd.f32 %v1630, %v1848
      %v1937 = vadd.f32 %v1631, %v1853
      %v1938 = vadd.f32 %v1632, %v1856
      %v1939 = vadd.f32 %v1633, %v1861
      %v1940 = vadd.f32 %v1634, %v1864
      %v1941 = vadd.f32 %v1635, %v1869
      %v1942 = vadd.f32 %v1636, %v1872
      %v1943 = vadd.f32 %v1637, %v1877
      %v1944 = vadd.f32 %v1638, %v1880
      %v1945 = vadd.f32 %v1639, %v1885
      %v1946 = vadd.f32 %v1640, %v1888
      %v1947 = vadd.f32 %v1641, %v1893
      %v1948 = vadd.f32 %v1642, %v1896
      %v1949 = vadd.f32 %v1643, %v1901
      %v1950 = vadd.f32 %v1644, %v1904
      %v1951 = vadd.f32 %v1645, %v1909
      %v1952 = vadd.f32 %v1646, %v1912
      %v1953 = vadd.f32 %v1647, %v1917
      %v1954 = vadd.f32 %v1648, %v1920
      %s1955 = scalar_lea.vmem %s172, 48
      %v1956 = vld [vmem:[%s1955] sm:$0xff]
      %v1957 = vld [vmem:[%s1955 + $0x8] sm:$0xff]
      %v1958 = vld [vmem:[%s1955 + $0x18] sm:$0xff]
      %v1959 = vld [vmem:[%s1955 + $0x20] sm:$0xff]
      %v1960 = vld [vmem:[%s1955 + $0x30] sm:$0xff]
      %v1961 = vld [vmem:[%s1955 + $0x38] sm:$0xff]
      %v1962 = vld [vmem:[%s1955 + $0x48] sm:$0xff]
      %v1963 = vld [vmem:[%s1955 + $0x50] sm:$0xff]
      %v1964 = vld [vmem:[%s1955 + $0x60] sm:$0xff]
      %v1965 = vld [vmem:[%s1955 + $0x68] sm:$0xff]
      %v1966 = vld [vmem:[%s1955 + $0x78] sm:$0xff]
      %v1967 = vld [vmem:[%s1955 + $0x80] sm:$0xff]
      %v1968 = vld [vmem:[%s1955 + $0x90] sm:$0xff]
      %v1969 = vld [vmem:[%s1955 + $0x98] sm:$0xff]
      %v1970 = vld [vmem:[%s1955 + $0xa8] sm:$0xff]
      %v1971 = vld [vmem:[%s1955 + $0xb0] sm:$0xff]
      %v1972 = vld [vmem:[%s1955 + $0xc0] sm:$0xff]
      %v1973 = vld [vmem:[%s1955 + $0xc8] sm:$0xff]
      %v1974 = vld [vmem:[%s1955 + $0xd8] sm:$0xff]
      %v1975 = vld [vmem:[%s1955 + $0xe0] sm:$0xff]
      %v1976 = vld [vmem:[%s1955 + $0xf0] sm:$0xff]
      %v1977 = vld [vmem:[%s1955 + $0xf8] sm:$0xff]
      %v1978 = vld [vmem:[%s1955 + $0x108] sm:$0xff]
      %v1979 = vld [vmem:[%s1955 + $0x110] sm:$0xff]
      %v1980 = vld [vmem:[%s1955 + $0x120] sm:$0xff]
      %v1981 = vld [vmem:[%s1955 + $0x128] sm:$0xff]
      %v1982 = vld [vmem:[%s1955 + $0x138] sm:$0xff]
      %v1983 = vld [vmem:[%s1955 + $0x140] sm:$0xff]
      %v1984 = vld [vmem:[%s1955 + $0x150] sm:$0xff]
      %v1985 = vld [vmem:[%s1955 + $0x158] sm:$0xff]
      %v1986 = vld [vmem:[%s1955 + $0x168] sm:$0xff]
      %v1987 = vld [vmem:[%s1955 + $0x170] sm:$0xff]
      %v1988 = vpack.c.bf16 %v1957, %v1956
      %v1989 = vpack.c.bf16 %v1959, %v1958
      %v1990 = vpack.c.bf16 %v1961, %v1960
      %v1991 = vpack.c.bf16 %v1963, %v1962
      %v1992 = vpack.c.bf16 %v1965, %v1964
      %v1993 = vpack.c.bf16 %v1967, %v1966
      %v1994 = vpack.c.bf16 %v1969, %v1968
      %v1995 = vpack.c.bf16 %v1971, %v1970
      %v1996 = vpack.c.bf16 %v1973, %v1972
      %v1997 = vpack.c.bf16 %v1975, %v1974
      %v1998 = vpack.c.bf16 %v1977, %v1976
      %v1999 = vpack.c.bf16 %v1979, %v1978
      %v2000 = vpack.c.bf16 %v1981, %v1980
      %v2001 = vpack.c.bf16 %v1983, %v1982
      %v2002 = vpack.c.bf16 %v1985, %v1984
      %v2003 = vpack.c.bf16 %v1987, %v1986
      %s2004 = scalar_lea.vmem %s1, 384
      %v2005 = vld [vmem:[%s2004] sm:$0xf]
      %v2006 = vld [vmem:[%s2004 + $0x4] sm:$0xf]
      %v2007 = vld [vmem:[%s2004 + $0x8] sm:$0xf]
      %v2008 = vld [vmem:[%s2004 + $0xc] sm:$0xf]
      %v2009 = vld [vmem:[%s2004 + $0x10] sm:$0xf]
      %v2010 = vld [vmem:[%s2004 + $0x14] sm:$0xf]
      %v2011 = vld [vmem:[%s2004 + $0x18] sm:$0xf]
      %v2012 = vld [vmem:[%s2004 + $0x1c] sm:$0xf]
      %v2013 = vld [vmem:[%s2004 + $0x20] sm:$0xf]
      %v2014 = vld [vmem:[%s2004 + $0x24] sm:$0xf]
      %v2015 = vld [vmem:[%s2004 + $0x28] sm:$0xf]
      %v2016 = vld [vmem:[%s2004 + $0x2c] sm:$0xf]
      %v2017 = vld [vmem:[%s2004 + $0x30] sm:$0xf]
      %v2018 = vld [vmem:[%s2004 + $0x34] sm:$0xf]
      %v2019 = vld [vmem:[%s2004 + $0x38] sm:$0xf]
      %v2020 = vld [vmem:[%s2004 + $0x3c] sm:$0xf]
      %v2037 = vunpack.c.l.b16 %v2005
      %v2038 = vunpack.c.l.b16 %v2006
      %v2039 = vunpack.c.l.b16 %v2007
      %v2040 = vunpack.c.l.b16 %v2008
      %v2041 = vunpack.c.l.b16 %v2009
      %v2042 = vunpack.c.l.b16 %v2010
      %v2043 = vunpack.c.l.b16 %v2011
      %v2044 = vunpack.c.l.b16 %v2012
      %v2045 = vunpack.c.l.b16 %v2013
      %v2046 = vunpack.c.l.b16 %v2014
      %v2047 = vunpack.c.l.b16 %v2015
      %v2048 = vunpack.c.l.b16 %v2016
      %v2049 = vunpack.c.l.b16 %v2017
      %v2050 = vunpack.c.l.b16 %v2018
      %v2051 = vunpack.c.l.b16 %v2019
      %v2052 = vunpack.c.l.b16 %v2020
      %v2053 = vpack.c.b16 %v2038, %v2037
      %v2054 = vpack.c.b16 %v2040, %v2039
      %v2055 = vpack.c.b16 %v2042, %v2041
      %v2056 = vpack.c.b16 %v2044, %v2043
      %v2057 = vpack.c.b16 %v2046, %v2045
      %v2058 = vpack.c.b16 %v2048, %v2047
      %v2059 = vpack.c.b16 %v2050, %v2049
      %v2060 = vpack.c.b16 %v2052, %v2051
      %2069 = vmatprep.subr.bf16.mxu0 0
      %2070 = vmatpush1.bf16.msra.mxu0 %v2060
      %2071 = vmatprep.subr.bf16.mxu0 0
      %2072 = vmatpush1.bf16.msra.mxu0 %v2059
      %2073 = vmatprep.subr.bf16.mxu0 0
      %2074 = vmatpush1.bf16.msra.mxu0 %v2058
      %2075 = vmatprep.subr.bf16.mxu0 0
      %2076 = vmatpush1.bf16.msra.mxu0 %v2057
      %2077 = vmatprep.subr.bf16.mxu0 0
      %2078 = vmatpush1.bf16.msra.mxu0 %v2056
      %2079 = vmatprep.subr.bf16.mxu0 0
      %2080 = vmatpush1.bf16.msra.mxu0 %v2055
      %2081 = vmatprep.subr.bf16.mxu0 0
      %2082 = vmatpush1.bf16.msra.mxu0 %v2054
      %2083 = vmatprep.subr.bf16.mxu0 0
      %2084 = vmatpush1.bf16.msra.mxu0 %v2053
      %2085 = vmatprep.subr.bf16.mxu0 0
      %2086 = vmatpush2.bf16.msra.mxu0 0
      %2087 = vmatprep.subr.bf16.mxu0 0
      %2088 = vmatpush2.bf16.msra.mxu0 0
      %2089 = vmatprep.subr.bf16.mxu0 0
      %2090 = vmatpush2.bf16.msra.mxu0 0
      %2091 = vmatprep.subr.bf16.mxu0 0
      %2092 = vmatpush2.bf16.msra.mxu0 0
      %2093 = vmatprep.subr.bf16.mxu0 0
      %2094 = vmatpush2.bf16.msra.mxu0 0
      %2095 = vmatprep.subr.bf16.mxu0 0
      %2096 = vmatpush2.bf16.msra.mxu0 0
      %2097 = vmatprep.subr.bf16.mxu0 0
      %2098 = vmatpush2.bf16.msra.mxu0 0
      %2099 = vmatprep.subr.bf16.mxu0 0
      %2100 = vmatpush2.bf16.msra.mxu0 0
      %2101 = vmatprep.mubr.bf16.mxu0 0
      %2102 = vmatmul.mubr.bf16.gmra.mxu0 %v1988
      %v2103 = vpop.f32.mrf.mxu0
      %v2104 = vadd.f32 0.0, %v2103
      %v2105 = vpop.f32.mrf.mxu0
      %v2106 = vpop.f32.mrf.mxu0
      %v2107 = vadd.f32 0.0, %v2106
      %v2108 = vpop.f32.mrf.mxu0
      %2109 = vmatprep.mubr.bf16.mxu0 0
      %2110 = vmatmul.mubr.bf16.gmra.mxu0 %v1989
      %v2111 = vpop.f32.mrf.mxu0
      %v2112 = vadd.f32 0.0, %v2111
      %v2113 = vpop.f32.mrf.mxu0
      %v2114 = vpop.f32.mrf.mxu0
      %v2115 = vadd.f32 0.0, %v2114
      %v2116 = vpop.f32.mrf.mxu0
      %2117 = vmatprep.mubr.bf16.mxu0 0
      %2118 = vmatmul.mubr.bf16.gmra.mxu0 %v1990
      %v2119 = vpop.f32.mrf.mxu0
      %v2120 = vadd.f32 0.0, %v2119
      %v2121 = vpop.f32.mrf.mxu0
      %v2122 = vpop.f32.mrf.mxu0
      %v2123 = vadd.f32 0.0, %v2122
      %v2124 = vpop.f32.mrf.mxu0
      %2125 = vmatprep.mubr.bf16.mxu0 0
      %2126 = vmatmul.mubr.bf16.gmra.mxu0 %v1991
      %v2127 = vpop.f32.mrf.mxu0
      %v2128 = vadd.f32 0.0, %v2127
      %v2129 = vpop.f32.mrf.mxu0
      %v2130 = vpop.f32.mrf.mxu0
      %v2131 = vadd.f32 0.0, %v2130
      %v2132 = vpop.f32.mrf.mxu0
      %2133 = vmatprep.mubr.bf16.mxu0 0
      %2134 = vmatmul.mubr.bf16.gmra.mxu0 %v1992
      %v2135 = vpop.f32.mrf.mxu0
      %v2136 = vadd.f32 0.0, %v2135
      %v2137 = vpop.f32.mrf.mxu0
      %v2138 = vpop.f32.mrf.mxu0
      %v2139 = vadd.f32 0.0, %v2138
      %v2140 = vpop.f32.mrf.mxu0
      %2141 = vmatprep.mubr.bf16.mxu0 0
      %2142 = vmatmul.mubr.bf16.gmra.mxu0 %v1993
      %v2143 = vpop.f32.mrf.mxu0
      %v2144 = vadd.f32 0.0, %v2143
      %v2145 = vpop.f32.mrf.mxu0
      %v2146 = vpop.f32.mrf.mxu0
      %v2147 = vadd.f32 0.0, %v2146
      %v2148 = vpop.f32.mrf.mxu0
      %2149 = vmatprep.mubr.bf16.mxu0 0
      %2150 = vmatmul.mubr.bf16.gmra.mxu0 %v1994
      %v2151 = vpop.f32.mrf.mxu0
      %v2152 = vadd.f32 0.0, %v2151
      %v2153 = vpop.f32.mrf.mxu0
      %v2154 = vpop.f32.mrf.mxu0
      %v2155 = vadd.f32 0.0, %v2154
      %v2156 = vpop.f32.mrf.mxu0
      %2157 = vmatprep.mubr.bf16.mxu0 0
      %2158 = vmatmul.mubr.bf16.gmra.mxu0 %v1995
      %v2159 = vpop.f32.mrf.mxu0
      %v2160 = vadd.f32 0.0, %v2159
      %v2161 = vpop.f32.mrf.mxu0
      %v2162 = vpop.f32.mrf.mxu0
      %v2163 = vadd.f32 0.0, %v2162
      %v2164 = vpop.f32.mrf.mxu0
      %2165 = vmatprep.mubr.bf16.mxu0 0
      %2166 = vmatmul.mubr.bf16.gmra.mxu0 %v1996
      %v2167 = vpop.f32.mrf.mxu0
      %v2168 = vadd.f32 0.0, %v2167
      %v2169 = vpop.f32.mrf.mxu0
      %v2170 = vpop.f32.mrf.mxu0
      %v2171 = vadd.f32 0.0, %v2170
      %v2172 = vpop.f32.mrf.mxu0
      %2173 = vmatprep.mubr.bf16.mxu0 0
      %2174 = vmatmul.mubr.bf16.gmra.mxu0 %v1997
      %v2175 = vpop.f32.mrf.mxu0
      %v2176 = vadd.f32 0.0, %v2175
      %v2177 = vpop.f32.mrf.mxu0
      %v2178 = vpop.f32.mrf.mxu0
      %v2179 = vadd.f32 0.0, %v2178
      %v2180 = vpop.f32.mrf.mxu0
      %2181 = vmatprep.mubr.bf16.mxu0 0
      %2182 = vmatmul.mubr.bf16.gmra.mxu0 %v1998
      %v2183 = vpop.f32.mrf.mxu0
      %v2184 = vadd.f32 0.0, %v2183
      %v2185 = vpop.f32.mrf.mxu0
      %v2186 = vpop.f32.mrf.mxu0
      %v2187 = vadd.f32 0.0, %v2186
      %v2188 = vpop.f32.mrf.mxu0
      %2189 = vmatprep.mubr.bf16.mxu0 0
      %2190 = vmatmul.mubr.bf16.gmra.mxu0 %v1999
      %v2191 = vpop.f32.mrf.mxu0
      %v2192 = vadd.f32 0.0, %v2191
      %v2193 = vpop.f32.mrf.mxu0
      %v2194 = vpop.f32.mrf.mxu0
      %v2195 = vadd.f32 0.0, %v2194
      %v2196 = vpop.f32.mrf.mxu0
      %2197 = vmatprep.mubr.bf16.mxu0 0
      %2198 = vmatmul.mubr.bf16.gmra.mxu0 %v2000
      %v2199 = vpop.f32.mrf.mxu0
      %v2200 = vadd.f32 0.0, %v2199
      %v2201 = vpop.f32.mrf.mxu0
      %v2202 = vpop.f32.mrf.mxu0
      %v2203 = vadd.f32 0.0, %v2202
      %v2204 = vpop.f32.mrf.mxu0
      %2205 = vmatprep.mubr.bf16.mxu0 0
      %2206 = vmatmul.mubr.bf16.gmra.mxu0 %v2001
      %v2207 = vpop.f32.mrf.mxu0
      %v2208 = vadd.f32 0.0, %v2207
      %v2209 = vpop.f32.mrf.mxu0
      %v2210 = vpop.f32.mrf.mxu0
      %v2211 = vadd.f32 0.0, %v2210
      %v2212 = vpop.f32.mrf.mxu0
      %2213 = vmatprep.mubr.bf16.mxu0 0
      %2214 = vmatmul.mubr.bf16.gmra.mxu0 %v2002
      %v2215 = vpop.f32.mrf.mxu0
      %v2216 = vadd.f32 0.0, %v2215
      %v2217 = vpop.f32.mrf.mxu0
      %v2218 = vpop.f32.mrf.mxu0
      %v2219 = vadd.f32 0.0, %v2218
      %v2220 = vpop.f32.mrf.mxu0
      %2221 = vmatprep.mubr.bf16.mxu0 0
      %2222 = vmatmul.mubr.bf16.gmra.mxu0 %v2003
      %v2223 = vpop.f32.mrf.mxu0
      %v2224 = vadd.f32 0.0, %v2223
      %v2225 = vpop.f32.mrf.mxu0
      %v2226 = vpop.f32.mrf.mxu0
      %v2227 = vadd.f32 0.0, %v2226
      %v2228 = vpop.f32.mrf.mxu0
      %2229 = vdwg.mxu0
      %v2230 = vadd.f32 %v1923, %v2104
      %v2231 = vadd.f32 %v1924, %v2107
      %v2232 = vadd.f32 %v1925, %v2112
      %v2233 = vadd.f32 %v1926, %v2115
      %v2234 = vadd.f32 %v1927, %v2120
      %v2235 = vadd.f32 %v1928, %v2123
      %v2236 = vadd.f32 %v1929, %v2128
      %v2237 = vadd.f32 %v1930, %v2131
      %v2238 = vadd.f32 %v1931, %v2136
      %v2239 = vadd.f32 %v1932, %v2139
      %v2240 = vadd.f32 %v1933, %v2144
      %v2241 = vadd.f32 %v1934, %v2147
      %v2242 = vadd.f32 %v1935, %v2152
      %v2243 = vadd.f32 %v1936, %v2155
      %v2244 = vadd.f32 %v1937, %v2160
      %v2245 = vadd.f32 %v1938, %v2163
      %v2246 = vadd.f32 %v1939, %v2168
      %v2247 = vadd.f32 %v1940, %v2171
      %v2248 = vadd.f32 %v1941, %v2176
      %v2249 = vadd.f32 %v1942, %v2179
      %v2250 = vadd.f32 %v1943, %v2184
      %v2251 = vadd.f32 %v1944, %v2187
      %v2252 = vadd.f32 %v1945, %v2192
      %v2253 = vadd.f32 %v1946, %v2195
      %v2254 = vadd.f32 %v1947, %v2200
      %v2255 = vadd.f32 %v1948, %v2203
      %v2256 = vadd.f32 %v1949, %v2208
      %v2257 = vadd.f32 %v1950, %v2211
      %v2258 = vadd.f32 %v1951, %v2216
      %v2259 = vadd.f32 %v1952, %v2219
      %v2260 = vadd.f32 %v1953, %v2224
      %v2261 = vadd.f32 %v1954, %v2227
      %v2262 = vld [vmem:[%s1955 + $0x1] sm:$0xff]
      %v2263 = vld [vmem:[%s1955 + $0x9] sm:$0xff]
      %v2264 = vld [vmem:[%s1955 + $0x19] sm:$0xff]
      %v2265 = vld [vmem:[%s1955 + $0x21] sm:$0xff]
      %v2266 = vld [vmem:[%s1955 + $0x31] sm:$0xff]
      %v2267 = vld [vmem:[%s1955 + $0x39] sm:$0xff]
      %v2268 = vld [vmem:[%s1955 + $0x49] sm:$0xff]
      %v2269 = vld [vmem:[%s1955 + $0x51] sm:$0xff]
      %v2270 = vld [vmem:[%s1955 + $0x61] sm:$0xff]
      %v2271 = vld [vmem:[%s1955 + $0x69] sm:$0xff]
      %v2272 = vld [vmem:[%s1955 + $0x79] sm:$0xff]
      %v2273 = vld [vmem:[%s1955 + $0x81] sm:$0xff]
      %v2274 = vld [vmem:[%s1955 + $0x91] sm:$0xff]
      %v2275 = vld [vmem:[%s1955 + $0x99] sm:$0xff]
      %v2276 = vld [vmem:[%s1955 + $0xa9] sm:$0xff]
      %v2277 = vld [vmem:[%s1955 + $0xb1] sm:$0xff]
      %v2278 = vld [vmem:[%s1955 + $0xc1] sm:$0xff]
      %v2279 = vld [vmem:[%s1955 + $0xc9] sm:$0xff]
      %v2280 = vld [vmem:[%s1955 + $0xd9] sm:$0xff]
      %v2281 = vld [vmem:[%s1955 + $0xe1] sm:$0xff]
      %v2282 = vld [vmem:[%s1955 + $0xf1] sm:$0xff]
      %v2283 = vld [vmem:[%s1955 + $0xf9] sm:$0xff]
      %v2284 = vld [vmem:[%s1955 + $0x109] sm:$0xff]
      %v2285 = vld [vmem:[%s1955 + $0x111] sm:$0xff]
      %v2286 = vld [vmem:[%s1955 + $0x121] sm:$0xff]
      %v2287 = vld [vmem:[%s1955 + $0x129] sm:$0xff]
      %v2288 = vld [vmem:[%s1955 + $0x139] sm:$0xff]
      %v2289 = vld [vmem:[%s1955 + $0x141] sm:$0xff]
      %v2290 = vld [vmem:[%s1955 + $0x151] sm:$0xff]
      %v2291 = vld [vmem:[%s1955 + $0x159] sm:$0xff]
      %v2292 = vld [vmem:[%s1955 + $0x169] sm:$0xff]
      %v2293 = vld [vmem:[%s1955 + $0x171] sm:$0xff]
      %v2294 = vpack.c.bf16 %v2263, %v2262
      %v2295 = vpack.c.bf16 %v2265, %v2264
      %v2296 = vpack.c.bf16 %v2267, %v2266
      %v2297 = vpack.c.bf16 %v2269, %v2268
      %v2298 = vpack.c.bf16 %v2271, %v2270
      %v2299 = vpack.c.bf16 %v2273, %v2272
      %v2300 = vpack.c.bf16 %v2275, %v2274
      %v2301 = vpack.c.bf16 %v2277, %v2276
      %v2302 = vpack.c.bf16 %v2279, %v2278
      %v2303 = vpack.c.bf16 %v2281, %v2280
      %v2304 = vpack.c.bf16 %v2283, %v2282
      %v2305 = vpack.c.bf16 %v2285, %v2284
      %v2306 = vpack.c.bf16 %v2287, %v2286
      %v2307 = vpack.c.bf16 %v2289, %v2288
      %v2308 = vpack.c.bf16 %v2291, %v2290
      %v2309 = vpack.c.bf16 %v2293, %v2292
      %s2310 = scalar_lea.vmem %s1, 448
      %v2311 = vld [vmem:[%s2310] sm:$0xf]
      %v2312 = vld [vmem:[%s2310 + $0x4] sm:$0xf]
      %v2313 = vld [vmem:[%s2310 + $0x8] sm:$0xf]
      %v2314 = vld [vmem:[%s2310 + $0xc] sm:$0xf]
      %v2315 = vld [vmem:[%s2310 + $0x10] sm:$0xf]
      %v2316 = vld [vmem:[%s2310 + $0x14] sm:$0xf]
      %v2317 = vld [vmem:[%s2310 + $0x18] sm:$0xf]
      %v2318 = vld [vmem:[%s2310 + $0x1c] sm:$0xf]
      %v2319 = vld [vmem:[%s2310 + $0x20] sm:$0xf]
      %v2320 = vld [vmem:[%s2310 + $0x24] sm:$0xf]
      %v2321 = vld [vmem:[%s2310 + $0x28] sm:$0xf]
      %v2322 = vld [vmem:[%s2310 + $0x2c] sm:$0xf]
      %v2323 = vld [vmem:[%s2310 + $0x30] sm:$0xf]
      %v2324 = vld [vmem:[%s2310 + $0x34] sm:$0xf]
      %v2325 = vld [vmem:[%s2310 + $0x38] sm:$0xf]
      %v2326 = vld [vmem:[%s2310 + $0x3c] sm:$0xf]
      %v2343 = vunpack.c.l.b16 %v2311
      %v2344 = vunpack.c.l.b16 %v2312
      %v2345 = vunpack.c.l.b16 %v2313
      %v2346 = vunpack.c.l.b16 %v2314
      %v2347 = vunpack.c.l.b16 %v2315
      %v2348 = vunpack.c.l.b16 %v2316
      %v2349 = vunpack.c.l.b16 %v2317
      %v2350 = vunpack.c.l.b16 %v2318
      %v2351 = vunpack.c.l.b16 %v2319
      %v2352 = vunpack.c.l.b16 %v2320
      %v2353 = vunpack.c.l.b16 %v2321
      %v2354 = vunpack.c.l.b16 %v2322
      %v2355 = vunpack.c.l.b16 %v2323
      %v2356 = vunpack.c.l.b16 %v2324
      %v2357 = vunpack.c.l.b16 %v2325
      %v2358 = vunpack.c.l.b16 %v2326
      %v2359 = vpack.c.b16 %v2344, %v2343
      %v2360 = vpack.c.b16 %v2346, %v2345
      %v2361 = vpack.c.b16 %v2348, %v2347
      %v2362 = vpack.c.b16 %v2350, %v2349
      %v2363 = vpack.c.b16 %v2352, %v2351
      %v2364 = vpack.c.b16 %v2354, %v2353
      %v2365 = vpack.c.b16 %v2356, %v2355
      %v2366 = vpack.c.b16 %v2358, %v2357
      %2375 = vmatprep.subr.bf16.mxu0 0
      %2376 = vmatpush1.bf16.msra.mxu0 %v2366
      %2377 = vmatprep.subr.bf16.mxu0 0
      %2378 = vmatpush1.bf16.msra.mxu0 %v2365
      %2379 = vmatprep.subr.bf16.mxu0 0
      %2380 = vmatpush1.bf16.msra.mxu0 %v2364
      %2381 = vmatprep.subr.bf16.mxu0 0
      %2382 = vmatpush1.bf16.msra.mxu0 %v2363
      %2383 = vmatprep.subr.bf16.mxu0 0
      %2384 = vmatpush1.bf16.msra.mxu0 %v2362
      %2385 = vmatprep.subr.bf16.mxu0 0
      %2386 = vmatpush1.bf16.msra.mxu0 %v2361
      %2387 = vmatprep.subr.bf16.mxu0 0
      %2388 = vmatpush1.bf16.msra.mxu0 %v2360
      %2389 = vmatprep.subr.bf16.mxu0 0
      %2390 = vmatpush1.bf16.msra.mxu0 %v2359
      %2391 = vmatprep.subr.bf16.mxu0 0
      %2392 = vmatpush2.bf16.msra.mxu0 0
      %2393 = vmatprep.subr.bf16.mxu0 0
      %2394 = vmatpush2.bf16.msra.mxu0 0
      %2395 = vmatprep.subr.bf16.mxu0 0
      %2396 = vmatpush2.bf16.msra.mxu0 0
      %2397 = vmatprep.subr.bf16.mxu0 0
      %2398 = vmatpush2.bf16.msra.mxu0 0
      %2399 = vmatprep.subr.bf16.mxu0 0
      %2400 = vmatpush2.bf16.msra.mxu0 0
      %2401 = vmatprep.subr.bf16.mxu0 0
      %2402 = vmatpush2.bf16.msra.mxu0 0
      %2403 = vmatprep.subr.bf16.mxu0 0
      %2404 = vmatpush2.bf16.msra.mxu0 0
      %2405 = vmatprep.subr.bf16.mxu0 0
      %2406 = vmatpush2.bf16.msra.mxu0 0
      %2407 = vmatprep.mubr.bf16.mxu0 0
      %2408 = vmatmul.mubr.bf16.gmra.mxu0 %v2294
      %v2409 = vpop.f32.mrf.mxu0
      %v2410 = vadd.f32 0.0, %v2409
      %v2411 = vpop.f32.mrf.mxu0
      %v2412 = vpop.f32.mrf.mxu0
      %v2413 = vadd.f32 0.0, %v2412
      %v2414 = vpop.f32.mrf.mxu0
      %2415 = vmatprep.mubr.bf16.mxu0 0
      %2416 = vmatmul.mubr.bf16.gmra.mxu0 %v2295
      %v2417 = vpop.f32.mrf.mxu0
      %v2418 = vadd.f32 0.0, %v2417
      %v2419 = vpop.f32.mrf.mxu0
      %v2420 = vpop.f32.mrf.mxu0
      %v2421 = vadd.f32 0.0, %v2420
      %v2422 = vpop.f32.mrf.mxu0
      %2423 = vmatprep.mubr.bf16.mxu0 0
      %2424 = vmatmul.mubr.bf16.gmra.mxu0 %v2296
      %v2425 = vpop.f32.mrf.mxu0
      %v2426 = vadd.f32 0.0, %v2425
      %v2427 = vpop.f32.mrf.mxu0
      %v2428 = vpop.f32.mrf.mxu0
      %v2429 = vadd.f32 0.0, %v2428
      %v2430 = vpop.f32.mrf.mxu0
      %2431 = vmatprep.mubr.bf16.mxu0 0
      %2432 = vmatmul.mubr.bf16.gmra.mxu0 %v2297
      %v2433 = vpop.f32.mrf.mxu0
      %v2434 = vadd.f32 0.0, %v2433
      %v2435 = vpop.f32.mrf.mxu0
      %v2436 = vpop.f32.mrf.mxu0
      %v2437 = vadd.f32 0.0, %v2436
      %v2438 = vpop.f32.mrf.mxu0
      %2439 = vmatprep.mubr.bf16.mxu0 0
      %2440 = vmatmul.mubr.bf16.gmra.mxu0 %v2298
      %v2441 = vpop.f32.mrf.mxu0
      %v2442 = vadd.f32 0.0, %v2441
      %v2443 = vpop.f32.mrf.mxu0
      %v2444 = vpop.f32.mrf.mxu0
      %v2445 = vadd.f32 0.0, %v2444
      %v2446 = vpop.f32.mrf.mxu0
      %2447 = vmatprep.mubr.bf16.mxu0 0
      %2448 = vmatmul.mubr.bf16.gmra.mxu0 %v2299
      %v2449 = vpop.f32.mrf.mxu0
      %v2450 = vadd.f32 0.0, %v2449
      %v2451 = vpop.f32.mrf.mxu0
      %v2452 = vpop.f32.mrf.mxu0
      %v2453 = vadd.f32 0.0, %v2452
      %v2454 = vpop.f32.mrf.mxu0
      %2455 = vmatprep.mubr.bf16.mxu0 0
      %2456 = vmatmul.mubr.bf16.gmra.mxu0 %v2300
      %v2457 = vpop.f32.mrf.mxu0
      %v2458 = vadd.f32 0.0, %v2457
      %v2459 = vpop.f32.mrf.mxu0
      %v2460 = vpop.f32.mrf.mxu0
      %v2461 = vadd.f32 0.0, %v2460
      %v2462 = vpop.f32.mrf.mxu0
      %2463 = vmatprep.mubr.bf16.mxu0 0
      %2464 = vmatmul.mubr.bf16.gmra.mxu0 %v2301
      %v2465 = vpop.f32.mrf.mxu0
      %v2466 = vadd.f32 0.0, %v2465
      %v2467 = vpop.f32.mrf.mxu0
      %v2468 = vpop.f32.mrf.mxu0
      %v2469 = vadd.f32 0.0, %v2468
      %v2470 = vpop.f32.mrf.mxu0
      %2471 = vmatprep.mubr.bf16.mxu0 0
      %2472 = vmatmul.mubr.bf16.gmra.mxu0 %v2302
      %v2473 = vpop.f32.mrf.mxu0
      %v2474 = vadd.f32 0.0, %v2473
      %v2475 = vpop.f32.mrf.mxu0
      %v2476 = vpop.f32.mrf.mxu0
      %v2477 = vadd.f32 0.0, %v2476
      %v2478 = vpop.f32.mrf.mxu0
      %2479 = vmatprep.mubr.bf16.mxu0 0
      %2480 = vmatmul.mubr.bf16.gmra.mxu0 %v2303
      %v2481 = vpop.f32.mrf.mxu0
      %v2482 = vadd.f32 0.0, %v2481
      %v2483 = vpop.f32.mrf.mxu0
      %v2484 = vpop.f32.mrf.mxu0
      %v2485 = vadd.f32 0.0, %v2484
      %v2486 = vpop.f32.mrf.mxu0
      %2487 = vmatprep.mubr.bf16.mxu0 0
      %2488 = vmatmul.mubr.bf16.gmra.mxu0 %v2304
      %v2489 = vpop.f32.mrf.mxu0
      %v2490 = vadd.f32 0.0, %v2489
      %v2491 = vpop.f32.mrf.mxu0
      %v2492 = vpop.f32.mrf.mxu0
      %v2493 = vadd.f32 0.0, %v2492
      %v2494 = vpop.f32.mrf.mxu0
      %2495 = vmatprep.mubr.bf16.mxu0 0
      %2496 = vmatmul.mubr.bf16.gmra.mxu0 %v2305
      %v2497 = vpop.f32.mrf.mxu0
      %v2498 = vadd.f32 0.0, %v2497
      %v2499 = vpop.f32.mrf.mxu0
      %v2500 = vpop.f32.mrf.mxu0
      %v2501 = vadd.f32 0.0, %v2500
      %v2502 = vpop.f32.mrf.mxu0
      %2503 = vmatprep.mubr.bf16.mxu0 0
      %2504 = vmatmul.mubr.bf16.gmra.mxu0 %v2306
      %v2505 = vpop.f32.mrf.mxu0
      %v2506 = vadd.f32 0.0, %v2505
      %v2507 = vpop.f32.mrf.mxu0
      %v2508 = vpop.f32.mrf.mxu0
      %v2509 = vadd.f32 0.0, %v2508
      %v2510 = vpop.f32.mrf.mxu0
      %2511 = vmatprep.mubr.bf16.mxu0 0
      %2512 = vmatmul.mubr.bf16.gmra.mxu0 %v2307
      %v2513 = vpop.f32.mrf.mxu0
      %v2514 = vadd.f32 0.0, %v2513
      %v2515 = vpop.f32.mrf.mxu0
      %v2516 = vpop.f32.mrf.mxu0
      %v2517 = vadd.f32 0.0, %v2516
      %v2518 = vpop.f32.mrf.mxu0
      %2519 = vmatprep.mubr.bf16.mxu0 0
      %2520 = vmatmul.mubr.bf16.gmra.mxu0 %v2308
      %v2521 = vpop.f32.mrf.mxu0
      %v2522 = vadd.f32 0.0, %v2521
      %v2523 = vpop.f32.mrf.mxu0
      %v2524 = vpop.f32.mrf.mxu0
      %v2525 = vadd.f32 0.0, %v2524
      %v2526 = vpop.f32.mrf.mxu0
      %2527 = vmatprep.mubr.bf16.mxu0 0
      %2528 = vmatmul.mubr.bf16.gmra.mxu0 %v2309
      %v2529 = vpop.f32.mrf.mxu0
      %v2530 = vadd.f32 0.0, %v2529
      %v2531 = vpop.f32.mrf.mxu0
      %v2532 = vpop.f32.mrf.mxu0
      %v2533 = vadd.f32 0.0, %v2532
      %v2534 = vpop.f32.mrf.mxu0
      %2535 = vdwg.mxu0
      %v2536 = vadd.f32 %v2230, %v2410
      %v2537 = vadd.f32 %v2231, %v2413
      %v2538 = vadd.f32 %v2232, %v2418
      %v2539 = vadd.f32 %v2233, %v2421
      %v2540 = vadd.f32 %v2234, %v2426
      %v2541 = vadd.f32 %v2235, %v2429
      %v2542 = vadd.f32 %v2236, %v2434
      %v2543 = vadd.f32 %v2237, %v2437
      %v2544 = vadd.f32 %v2238, %v2442
      %v2545 = vadd.f32 %v2239, %v2445
      %v2546 = vadd.f32 %v2240, %v2450
      %v2547 = vadd.f32 %v2241, %v2453
      %v2548 = vadd.f32 %v2242, %v2458
      %v2549 = vadd.f32 %v2243, %v2461
      %v2550 = vadd.f32 %v2244, %v2466
      %v2551 = vadd.f32 %v2245, %v2469
      %v2552 = vadd.f32 %v2246, %v2474
      %v2553 = vadd.f32 %v2247, %v2477
      %v2554 = vadd.f32 %v2248, %v2482
      %v2555 = vadd.f32 %v2249, %v2485
      %v2556 = vadd.f32 %v2250, %v2490
      %v2557 = vadd.f32 %v2251, %v2493
      %v2558 = vadd.f32 %v2252, %v2498
      %v2559 = vadd.f32 %v2253, %v2501
      %v2560 = vadd.f32 %v2254, %v2506
      %v2561 = vadd.f32 %v2255, %v2509
      %v2562 = vadd.f32 %v2256, %v2514
      %v2563 = vadd.f32 %v2257, %v2517
      %v2564 = vadd.f32 %v2258, %v2522
      %v2565 = vadd.f32 %v2259, %v2525
      %v2566 = vadd.f32 %v2260, %v2530
      %v2567 = vadd.f32 %v2261, %v2533
      %v2568 = vld [vmem:[%s1955 + $0x2] sm:$0xff]
      %v2569 = vld [vmem:[%s1955 + $0xa] sm:$0xff]
      %v2570 = vld [vmem:[%s1955 + $0x1a] sm:$0xff]
      %v2571 = vld [vmem:[%s1955 + $0x22] sm:$0xff]
      %v2572 = vld [vmem:[%s1955 + $0x32] sm:$0xff]
      %v2573 = vld [vmem:[%s1955 + $0x3a] sm:$0xff]
      %v2574 = vld [vmem:[%s1955 + $0x4a] sm:$0xff]
      %v2575 = vld [vmem:[%s1955 + $0x52] sm:$0xff]
      %v2576 = vld [vmem:[%s1955 + $0x62] sm:$0xff]
      %v2577 = vld [vmem:[%s1955 + $0x6a] sm:$0xff]
      %v2578 = vld [vmem:[%s1955 + $0x7a] sm:$0xff]
      %v2579 = vld [vmem:[%s1955 + $0x82] sm:$0xff]
      %v2580 = vld [vmem:[%s1955 + $0x92] sm:$0xff]
      %v2581 = vld [vmem:[%s1955 + $0x9a] sm:$0xff]
      %v2582 = vld [vmem:[%s1955 + $0xaa] sm:$0xff]
      %v2583 = vld [vmem:[%s1955 + $0xb2] sm:$0xff]
      %v2584 = vld [vmem:[%s1955 + $0xc2] sm:$0xff]
      %v2585 = vld [vmem:[%s1955 + $0xca] sm:$0xff]
      %v2586 = vld [vmem:[%s1955 + $0xda] sm:$0xff]
      %v2587 = vld [vmem:[%s1955 + $0xe2] sm:$0xff]
      %v2588 = vld [vmem:[%s1955 + $0xf2] sm:$0xff]
      %v2589 = vld [vmem:[%s1955 + $0xfa] sm:$0xff]
      %v2590 = vld [vmem:[%s1955 + $0x10a] sm:$0xff]
      %v2591 = vld [vmem:[%s1955 + $0x112] sm:$0xff]
      %v2592 = vld [vmem:[%s1955 + $0x122] sm:$0xff]
      %v2593 = vld [vmem:[%s1955 + $0x12a] sm:$0xff]
      %v2594 = vld [vmem:[%s1955 + $0x13a] sm:$0xff]
      %v2595 = vld [vmem:[%s1955 + $0x142] sm:$0xff]
      %v2596 = vld [vmem:[%s1955 + $0x152] sm:$0xff]
      %v2597 = vld [vmem:[%s1955 + $0x15a] sm:$0xff]
      %v2598 = vld [vmem:[%s1955 + $0x16a] sm:$0xff]
      %v2599 = vld [vmem:[%s1955 + $0x172] sm:$0xff]
      %v2600 = vpack.c.bf16 %v2569, %v2568
      %v2601 = vpack.c.bf16 %v2571, %v2570
      %v2602 = vpack.c.bf16 %v2573, %v2572
      %v2603 = vpack.c.bf16 %v2575, %v2574
      %v2604 = vpack.c.bf16 %v2577, %v2576
      %v2605 = vpack.c.bf16 %v2579, %v2578
      %v2606 = vpack.c.bf16 %v2581, %v2580
      %v2607 = vpack.c.bf16 %v2583, %v2582
      %v2608 = vpack.c.bf16 %v2585, %v2584
      %v2609 = vpack.c.bf16 %v2587, %v2586
      %v2610 = vpack.c.bf16 %v2589, %v2588
      %v2611 = vpack.c.bf16 %v2591, %v2590
      %v2612 = vpack.c.bf16 %v2593, %v2592
      %v2613 = vpack.c.bf16 %v2595, %v2594
      %v2614 = vpack.c.bf16 %v2597, %v2596
      %v2615 = vpack.c.bf16 %v2599, %v2598
      %s2616 = scalar_lea.vmem %s1, 512
      %v2617 = vld [vmem:[%s2616] sm:$0xf]
      %v2618 = vld [vmem:[%s2616 + $0x4] sm:$0xf]
      %v2619 = vld [vmem:[%s2616 + $0x8] sm:$0xf]
      %v2620 = vld [vmem:[%s2616 + $0xc] sm:$0xf]
      %v2621 = vld [vmem:[%s2616 + $0x10] sm:$0xf]
      %v2622 = vld [vmem:[%s2616 + $0x14] sm:$0xf]
      %v2623 = vld [vmem:[%s2616 + $0x18] sm:$0xf]
      %v2624 = vld [vmem:[%s2616 + $0x1c] sm:$0xf]
      %v2625 = vld [vmem:[%s2616 + $0x20] sm:$0xf]
      %v2626 = vld [vmem:[%s2616 + $0x24] sm:$0xf]
      %v2627 = vld [vmem:[%s2616 + $0x28] sm:$0xf]
      %v2628 = vld [vmem:[%s2616 + $0x2c] sm:$0xf]
      %v2629 = vld [vmem:[%s2616 + $0x30] sm:$0xf]
      %v2630 = vld [vmem:[%s2616 + $0x34] sm:$0xf]
      %v2631 = vld [vmem:[%s2616 + $0x38] sm:$0xf]
      %v2632 = vld [vmem:[%s2616 + $0x3c] sm:$0xf]
      %v2649 = vunpack.c.l.b16 %v2617
      %v2650 = vunpack.c.l.b16 %v2618
      %v2651 = vunpack.c.l.b16 %v2619
      %v2652 = vunpack.c.l.b16 %v2620
      %v2653 = vunpack.c.l.b16 %v2621
      %v2654 = vunpack.c.l.b16 %v2622
      %v2655 = vunpack.c.l.b16 %v2623
      %v2656 = vunpack.c.l.b16 %v2624
      %v2657 = vunpack.c.l.b16 %v2625
      %v2658 = vunpack.c.l.b16 %v2626
      %v2659 = vunpack.c.l.b16 %v2627
      %v2660 = vunpack.c.l.b16 %v2628
      %v2661 = vunpack.c.l.b16 %v2629
      %v2662 = vunpack.c.l.b16 %v2630
      %v2663 = vunpack.c.l.b16 %v2631
      %v2664 = vunpack.c.l.b16 %v2632
      %v2665 = vpack.c.b16 %v2650, %v2649
      %v2666 = vpack.c.b16 %v2652, %v2651
      %v2667 = vpack.c.b16 %v2654, %v2653
      %v2668 = vpack.c.b16 %v2656, %v2655
      %v2669 = vpack.c.b16 %v2658, %v2657
      %v2670 = vpack.c.b16 %v2660, %v2659
      %v2671 = vpack.c.b16 %v2662, %v2661
      %v2672 = vpack.c.b16 %v2664, %v2663
      %2681 = vmatprep.subr.bf16.mxu0 0
      %2682 = vmatpush1.bf16.msra.mxu0 %v2672
      %2683 = vmatprep.subr.bf16.mxu0 0
      %2684 = vmatpush1.bf16.msra.mxu0 %v2671
      %2685 = vmatprep.subr.bf16.mxu0 0
      %2686 = vmatpush1.bf16.msra.mxu0 %v2670
      %2687 = vmatprep.subr.bf16.mxu0 0
      %2688 = vmatpush1.bf16.msra.mxu0 %v2669
      %2689 = vmatprep.subr.bf16.mxu0 0
      %2690 = vmatpush1.bf16.msra.mxu0 %v2668
      %2691 = vmatprep.subr.bf16.mxu0 0
      %2692 = vmatpush1.bf16.msra.mxu0 %v2667
      %2693 = vmatprep.subr.bf16.mxu0 0
      %2694 = vmatpush1.bf16.msra.mxu0 %v2666
      %2695 = vmatprep.subr.bf16.mxu0 0
      %2696 = vmatpush1.bf16.msra.mxu0 %v2665
      %2697 = vmatprep.subr.bf16.mxu0 0
      %2698 = vmatpush2.bf16.msra.mxu0 0
      %2699 = vmatprep.subr.bf16.mxu0 0
      %2700 = vmatpush2.bf16.msra.mxu0 0
      %2701 = vmatprep.subr.bf16.mxu0 0
      %2702 = vmatpush2.bf16.msra.mxu0 0
      %2703 = vmatprep.subr.bf16.mxu0 0
      %2704 = vmatpush2.bf16.msra.mxu0 0
      %2705 = vmatprep.subr.bf16.mxu0 0
      %2706 = vmatpush2.bf16.msra.mxu0 0
      %2707 = vmatprep.subr.bf16.mxu0 0
      %2708 = vmatpush2.bf16.msra.mxu0 0
      %2709 = vmatprep.subr.bf16.mxu0 0
      %2710 = vmatpush2.bf16.msra.mxu0 0
      %2711 = vmatprep.subr.bf16.mxu0 0
      %2712 = vmatpush2.bf16.msra.mxu0 0
      %2713 = vmatprep.mubr.bf16.mxu0 0
      %2714 = vmatmul.mubr.bf16.gmra.mxu0 %v2600
      %v2715 = vpop.f32.mrf.mxu0
      %v2716 = vadd.f32 0.0, %v2715
      %v2717 = vpop.f32.mrf.mxu0
      %v2718 = vpop.f32.mrf.mxu0
      %v2719 = vadd.f32 0.0, %v2718
      %v2720 = vpop.f32.mrf.mxu0
      %2721 = vmatprep.mubr.bf16.mxu0 0
      %2722 = vmatmul.mubr.bf16.gmra.mxu0 %v2601
      %v2723 = vpop.f32.mrf.mxu0
      %v2724 = vadd.f32 0.0, %v2723
      %v2725 = vpop.f32.mrf.mxu0
      %v2726 = vpop.f32.mrf.mxu0
      %v2727 = vadd.f32 0.0, %v2726
      %v2728 = vpop.f32.mrf.mxu0
      %2729 = vmatprep.mubr.bf16.mxu0 0
      %2730 = vmatmul.mubr.bf16.gmra.mxu0 %v2602
      %v2731 = vpop.f32.mrf.mxu0
      %v2732 = vadd.f32 0.0, %v2731
      %v2733 = vpop.f32.mrf.mxu0
      %v2734 = vpop.f32.mrf.mxu0
      %v2735 = vadd.f32 0.0, %v2734
      %v2736 = vpop.f32.mrf.mxu0
      %2737 = vmatprep.mubr.bf16.mxu0 0
      %2738 = vmatmul.mubr.bf16.gmra.mxu0 %v2603
      %v2739 = vpop.f32.mrf.mxu0
      %v2740 = vadd.f32 0.0, %v2739
      %v2741 = vpop.f32.mrf.mxu0
      %v2742 = vpop.f32.mrf.mxu0
      %v2743 = vadd.f32 0.0, %v2742
      %v2744 = vpop.f32.mrf.mxu0
      %2745 = vmatprep.mubr.bf16.mxu0 0
      %2746 = vmatmul.mubr.bf16.gmra.mxu0 %v2604
      %v2747 = vpop.f32.mrf.mxu0
      %v2748 = vadd.f32 0.0, %v2747
      %v2749 = vpop.f32.mrf.mxu0
      %v2750 = vpop.f32.mrf.mxu0
      %v2751 = vadd.f32 0.0, %v2750
      %v2752 = vpop.f32.mrf.mxu0
      %2753 = vmatprep.mubr.bf16.mxu0 0
      %2754 = vmatmul.mubr.bf16.gmra.mxu0 %v2605
      %v2755 = vpop.f32.mrf.mxu0
      %v2756 = vadd.f32 0.0, %v2755
      %v2757 = vpop.f32.mrf.mxu0
      %v2758 = vpop.f32.mrf.mxu0
      %v2759 = vadd.f32 0.0, %v2758
      %v2760 = vpop.f32.mrf.mxu0
      %2761 = vmatprep.mubr.bf16.mxu0 0
      %2762 = vmatmul.mubr.bf16.gmra.mxu0 %v2606
      %v2763 = vpop.f32.mrf.mxu0
      %v2764 = vadd.f32 0.0, %v2763
      %v2765 = vpop.f32.mrf.mxu0
      %v2766 = vpop.f32.mrf.mxu0
      %v2767 = vadd.f32 0.0, %v2766
      %v2768 = vpop.f32.mrf.mxu0
      %2769 = vmatprep.mubr.bf16.mxu0 0
      %2770 = vmatmul.mubr.bf16.gmra.mxu0 %v2607
      %v2771 = vpop.f32.mrf.mxu0
      %v2772 = vadd.f32 0.0, %v2771
      %v2773 = vpop.f32.mrf.mxu0
      %v2774 = vpop.f32.mrf.mxu0
      %v2775 = vadd.f32 0.0, %v2774
      %v2776 = vpop.f32.mrf.mxu0
      %2777 = vmatprep.mubr.bf16.mxu0 0
      %2778 = vmatmul.mubr.bf16.gmra.mxu0 %v2608
      %v2779 = vpop.f32.mrf.mxu0
      %v2780 = vadd.f32 0.0, %v2779
      %v2781 = vpop.f32.mrf.mxu0
      %v2782 = vpop.f32.mrf.mxu0
      %v2783 = vadd.f32 0.0, %v2782
      %v2784 = vpop.f32.mrf.mxu0
      %2785 = vmatprep.mubr.bf16.mxu0 0
      %2786 = vmatmul.mubr.bf16.gmra.mxu0 %v2609
      %v2787 = vpop.f32.mrf.mxu0
      %v2788 = vadd.f32 0.0, %v2787
      %v2789 = vpop.f32.mrf.mxu0
      %v2790 = vpop.f32.mrf.mxu0
      %v2791 = vadd.f32 0.0, %v2790
      %v2792 = vpop.f32.mrf.mxu0
      %2793 = vmatprep.mubr.bf16.mxu0 0
      %2794 = vmatmul.mubr.bf16.gmra.mxu0 %v2610
      %v2795 = vpop.f32.mrf.mxu0
      %v2796 = vadd.f32 0.0, %v2795
      %v2797 = vpop.f32.mrf.mxu0
      %v2798 = vpop.f32.mrf.mxu0
      %v2799 = vadd.f32 0.0, %v2798
      %v2800 = vpop.f32.mrf.mxu0
      %2801 = vmatprep.mubr.bf16.mxu0 0
      %2802 = vmatmul.mubr.bf16.gmra.mxu0 %v2611
      %v2803 = vpop.f32.mrf.mxu0
      %v2804 = vadd.f32 0.0, %v2803
      %v2805 = vpop.f32.mrf.mxu0
      %v2806 = vpop.f32.mrf.mxu0
      %v2807 = vadd.f32 0.0, %v2806
      %v2808 = vpop.f32.mrf.mxu0
      %2809 = vmatprep.mubr.bf16.mxu0 0
      %2810 = vmatmul.mubr.bf16.gmra.mxu0 %v2612
      %v2811 = vpop.f32.mrf.mxu0
      %v2812 = vadd.f32 0.0, %v2811
      %v2813 = vpop.f32.mrf.mxu0
      %v2814 = vpop.f32.mrf.mxu0
      %v2815 = vadd.f32 0.0, %v2814
      %v2816 = vpop.f32.mrf.mxu0
      %2817 = vmatprep.mubr.bf16.mxu0 0
      %2818 = vmatmul.mubr.bf16.gmra.mxu0 %v2613
      %v2819 = vpop.f32.mrf.mxu0
      %v2820 = vadd.f32 0.0, %v2819
      %v2821 = vpop.f32.mrf.mxu0
      %v2822 = vpop.f32.mrf.mxu0
      %v2823 = vadd.f32 0.0, %v2822
      %v2824 = vpop.f32.mrf.mxu0
      %2825 = vmatprep.mubr.bf16.mxu0 0
      %2826 = vmatmul.mubr.bf16.gmra.mxu0 %v2614
      %v2827 = vpop.f32.mrf.mxu0
      %v2828 = vadd.f32 0.0, %v2827
      %v2829 = vpop.f32.mrf.mxu0
      %v2830 = vpop.f32.mrf.mxu0
      %v2831 = vadd.f32 0.0, %v2830
      %v2832 = vpop.f32.mrf.mxu0
      %2833 = vmatprep.mubr.bf16.mxu0 0
      %2834 = vmatmul.mubr.bf16.gmra.mxu0 %v2615
      %v2835 = vpop.f32.mrf.mxu0
      %v2836 = vadd.f32 0.0, %v2835
      %v2837 = vpop.f32.mrf.mxu0
      %v2838 = vpop.f32.mrf.mxu0
      %v2839 = vadd.f32 0.0, %v2838
      %v2840 = vpop.f32.mrf.mxu0
      %2841 = vdwg.mxu0
      %v2842 = vadd.f32 %v2536, %v2716
      %v2843 = vadd.f32 %v2537, %v2719
      %v2844 = vadd.f32 %v2538, %v2724
      %v2845 = vadd.f32 %v2539, %v2727
      %v2846 = vadd.f32 %v2540, %v2732
      %v2847 = vadd.f32 %v2541, %v2735
      %v2848 = vadd.f32 %v2542, %v2740
      %v2849 = vadd.f32 %v2543, %v2743
      %v2850 = vadd.f32 %v2544, %v2748
      %v2851 = vadd.f32 %v2545, %v2751
      %v2852 = vadd.f32 %v2546, %v2756
      %v2853 = vadd.f32 %v2547, %v2759
      %v2854 = vadd.f32 %v2548, %v2764
      %v2855 = vadd.f32 %v2549, %v2767
      %v2856 = vadd.f32 %v2550, %v2772
      %v2857 = vadd.f32 %v2551, %v2775
      %v2858 = vadd.f32 %v2552, %v2780
      %v2859 = vadd.f32 %v2553, %v2783
      %v2860 = vadd.f32 %v2554, %v2788
      %v2861 = vadd.f32 %v2555, %v2791
      %v2862 = vadd.f32 %v2556, %v2796
      %v2863 = vadd.f32 %v2557, %v2799
      %v2864 = vadd.f32 %v2558, %v2804
      %v2865 = vadd.f32 %v2559, %v2807
      %v2866 = vadd.f32 %v2560, %v2812
      %v2867 = vadd.f32 %v2561, %v2815
      %v2868 = vadd.f32 %v2562, %v2820
      %v2869 = vadd.f32 %v2563, %v2823
      %v2870 = vadd.f32 %v2564, %v2828
      %v2871 = vadd.f32 %v2565, %v2831
      %v2872 = vadd.f32 %v2566, %v2836
      %v2873 = vadd.f32 %v2567, %v2839
      %v2874 = vpack.c.bf16 %v2843, %v2842
      %v2875 = vpack.c.bf16 %v2845, %v2844
      %v2876 = vpack.c.bf16 %v2847, %v2846
      %v2877 = vpack.c.bf16 %v2849, %v2848
      %v2878 = vpack.c.bf16 %v2851, %v2850
      %v2879 = vpack.c.bf16 %v2853, %v2852
      %v2880 = vpack.c.bf16 %v2855, %v2854
      %v2881 = vpack.c.bf16 %v2857, %v2856
      %v2882 = vpack.c.bf16 %v2859, %v2858
      %v2883 = vpack.c.bf16 %v2861, %v2860
      %v2884 = vpack.c.bf16 %v2863, %v2862
      %v2885 = vpack.c.bf16 %v2865, %v2864
      %v2886 = vpack.c.bf16 %v2867, %v2866
      %v2887 = vpack.c.bf16 %v2869, %v2868
      %v2888 = vpack.c.bf16 %v2871, %v2870
      %v2889 = vpack.c.bf16 %v2873, %v2872
      %v2906 = vunpack.c.l.b16 %v2874
      %v2907 = vunpack.c.h.b16 %v2874
      %v2908 = vunpack.c.l.b16 %v2875
      %v2909 = vunpack.c.h.b16 %v2875
      %v2910 = vunpack.c.l.b16 %v2876
      %v2911 = vunpack.c.h.b16 %v2876
      %v2912 = vunpack.c.l.b16 %v2877
      %v2913 = vunpack.c.h.b16 %v2877
      %v2914 = vunpack.c.l.b16 %v2878
      %v2915 = vunpack.c.h.b16 %v2878
      %v2916 = vunpack.c.l.b16 %v2879
      %v2917 = vunpack.c.h.b16 %v2879
      %v2918 = vunpack.c.l.b16 %v2880
      %v2919 = vunpack.c.h.b16 %v2880
      %v2920 = vunpack.c.l.b16 %v2881
      %v2921 = vunpack.c.h.b16 %v2881
      %v2922 = vunpack.c.l.b16 %v2882
      %v2923 = vunpack.c.h.b16 %v2882
      %v2924 = vunpack.c.l.b16 %v2883
      %v2925 = vunpack.c.h.b16 %v2883
      %v2926 = vunpack.c.l.b16 %v2884
      %v2927 = vunpack.c.h.b16 %v2884
      %v2928 = vunpack.c.l.b16 %v2885
      %v2929 = vunpack.c.h.b16 %v2885
      %v2930 = vunpack.c.l.b16 %v2886
      %v2931 = vunpack.c.h.b16 %v2886
      %v2932 = vunpack.c.l.b16 %v2887
      %v2933 = vunpack.c.h.b16 %v2887
      %v2934 = vunpack.c.l.b16 %v2888
      %v2935 = vunpack.c.h.b16 %v2888
      %v2936 = vunpack.c.l.b16 %v2889
      %v2937 = vunpack.c.h.b16 %v2889
      %v2938 = vpack.c.b16 %v2906, %v2906
      %v2939 = vpack.c.b16 %v2907, %v2907
      %v2940 = vpack.c.b16 %v2908, %v2908
      %v2941 = vpack.c.b16 %v2909, %v2909
      %v2942 = vpack.c.b16 %v2910, %v2910
      %v2943 = vpack.c.b16 %v2911, %v2911
      %v2944 = vpack.c.b16 %v2912, %v2912
      %v2945 = vpack.c.b16 %v2913, %v2913
      %v2946 = vpack.c.b16 %v2914, %v2914
      %v2947 = vpack.c.b16 %v2915, %v2915
      %v2948 = vpack.c.b16 %v2916, %v2916
      %v2949 = vpack.c.b16 %v2917, %v2917
      %v2950 = vpack.c.b16 %v2918, %v2918
      %v2951 = vpack.c.b16 %v2919, %v2919
      %v2952 = vpack.c.b16 %v2920, %v2920
      %v2953 = vpack.c.b16 %v2921, %v2921
      %v2954 = vpack.c.b16 %v2922, %v2922
      %v2955 = vpack.c.b16 %v2923, %v2923
      %v2956 = vpack.c.b16 %v2924, %v2924
      %v2957 = vpack.c.b16 %v2925, %v2925
      %v2958 = vpack.c.b16 %v2926, %v2926
      %v2959 = vpack.c.b16 %v2927, %v2927
      %v2960 = vpack.c.b16 %v2928, %v2928
      %v2961 = vpack.c.b16 %v2929, %v2929
      %v2962 = vpack.c.b16 %v2930, %v2930
      %v2963 = vpack.c.b16 %v2931, %v2931
      %v2964 = vpack.c.b16 %v2932, %v2932
      %v2965 = vpack.c.b16 %v2933, %v2933
      %v2966 = vpack.c.b16 %v2934, %v2934
      %v2967 = vpack.c.b16 %v2935, %v2935
      %v2968 = vpack.c.b16 %v2936, %v2936
      %v2969 = vpack.c.b16 %v2937, %v2937
      %3002 = vst [vmem:[%s177] sm:$0xf] %v2938
      %3003 = vst [vmem:[%s177 + $0x4] sm:$0xf] %v2939
      %3004 = vst [vmem:[%s177 + $0x8] sm:$0xf] %v2940
      %3005 = vst [vmem:[%s177 + $0xc] sm:$0xf] %v2941
      %3006 = vst [vmem:[%s177 + $0x10] sm:$0xf] %v2942
      %3007 = vst [vmem:[%s177 + $0x14] sm:$0xf] %v2943
      %3008 = vst [vmem:[%s177 + $0x18] sm:$0xf] %v2944
      %3009 = vst [vmem:[%s177 + $0x1c] sm:$0xf] %v2945
      %3010 = vst [vmem:[%s177 + $0x20] sm:$0xf] %v2946
      %3011 = vst [vmem:[%s177 + $0x24] sm:$0xf] %v2947
      %3012 = vst [vmem:[%s177 + $0x28] sm:$0xf] %v2948
      %3013 = vst [vmem:[%s177 + $0x2c] sm:$0xf] %v2949
      %3014 = vst [vmem:[%s177 + $0x30] sm:$0xf] %v2950
      %3015 = vst [vmem:[%s177 + $0x34] sm:$0xf] %v2951
      %3016 = vst [vmem:[%s177 + $0x38] sm:$0xf] %v2952
      %3017 = vst [vmem:[%s177 + $0x3c] sm:$0xf] %v2953
      %3018 = vst [vmem:[%s177 + $0x40] sm:$0xf] %v2954
      %3019 = vst [vmem:[%s177 + $0x44] sm:$0xf] %v2955
      %3020 = vst [vmem:[%s177 + $0x48] sm:$0xf] %v2956
      %3021 = vst [vmem:[%s177 + $0x4c] sm:$0xf] %v2957
      %3022 = vst [vmem:[%s177 + $0x50] sm:$0xf] %v2958
      %3023 = vst [vmem:[%s177 + $0x54] sm:$0xf] %v2959
      %3024 = vst [vmem:[%s177 + $0x58] sm:$0xf] %v2960
      %3025 = vst [vmem:[%s177 + $0x5c] sm:$0xf] %v2961
      %3026 = vst [vmem:[%s177 + $0x60] sm:$0xf] %v2962
      %3027 = vst [vmem:[%s177 + $0x64] sm:$0xf] %v2963
      %3028 = vst [vmem:[%s177 + $0x68] sm:$0xf] %v2964
      %3029 = vst [vmem:[%s177 + $0x6c] sm:$0xf] %v2965
      %3030 = vst [vmem:[%s177 + $0x70] sm:$0xf] %v2966
      %3031 = vst [vmem:[%s177 + $0x74] sm:$0xf] %v2967
      %3032 = vst [vmem:[%s177 + $0x78] sm:$0xf] %v2968
      %3033 = vst [vmem:[%s177 + $0x7c] sm:$0xf] %v2969
      %v3034 = vadd.f32 %v2842, %v2843
      %v3035 = vadd.f32 %v3034, %v2844
      %v3036 = vadd.f32 %v3035, %v2845
      %v3037 = vadd.f32 %v3036, %v2846
      %v3038 = vadd.f32 %v3037, %v2847
      %v3039 = vadd.f32 %v3038, %v2848
      %v3040 = vadd.f32 %v3039, %v2849
      %v3041 = vadd.f32 %v3040, %v2850
      %v3042 = vadd.f32 %v3041, %v2851
      %v3043 = vadd.f32 %v3042, %v2852
      %v3044 = vadd.f32 %v3043, %v2853
      %v3045 = vadd.f32 %v3044, %v2854
      %v3046 = vadd.f32 %v3045, %v2855
      %v3047 = vadd.f32 %v3046, %v2856
      %v3048 = vadd.f32 %v3047, %v2857
      %v3049 = vadd.f32 %v3048, %v2858
      %v3050 = vadd.f32 %v3049, %v2859
      %v3051 = vadd.f32 %v3050, %v2860
      %v3052 = vadd.f32 %v3051, %v2861
      %v3053 = vadd.f32 %v3052, %v2862
      %v3054 = vadd.f32 %v3053, %v2863
      %v3055 = vadd.f32 %v3054, %v2864
      %v3056 = vadd.f32 %v3055, %v2865
      %v3057 = vadd.f32 %v3056, %v2866
      %v3058 = vadd.f32 %v3057, %v2867
      %v3059 = vadd.f32 %v3058, %v2868
      %v3060 = vadd.f32 %v3059, %v2869
      %v3061 = vadd.f32 %v3060, %v2870
      %v3062 = vadd.f32 %v3061, %v2871
      %v3063 = vadd.f32 %v3062, %v2872
      %v3064 = vadd.f32 %v3063, %v2873
      %v3065 = vrot.slane %v3064, 4
      %v3066 = vadd.f32 %v3064, %v3065
      %v3067 = vrot.slane %v3066, 2
      %v3068 = vadd.f32 %v3066, %v3067
      %v3069 = vrot.slane %v3068, 1
      %v3070 = vadd.f32 %v3068, %v3069
      %3071 = vst [vmem:[%s181] sm:$0x1] %v3070
      %v3072 = vmul.f32 %v2842, %v2842
      %v3073 = vmul.f32 %v2843, %v2843
      %v3074 = vmul.f32 %v2844, %v2844
      %v3075 = vmul.f32 %v2845, %v2845
      %v3076 = vmul.f32 %v2846, %v2846
      %v3077 = vmul.f32 %v2847, %v2847
      %v3078 = vmul.f32 %v2848, %v2848
      %v3079 = vmul.f32 %v2849, %v2849
      %v3080 = vmul.f32 %v2850, %v2850
      %v3081 = vmul.f32 %v2851, %v2851
      %v3082 = vmul.f32 %v2852, %v2852
      %v3083 = vmul.f32 %v2853, %v2853
      %v3084 = vmul.f32 %v2854, %v2854
      %v3085 = vmul.f32 %v2855, %v2855
      %v3086 = vmul.f32 %v2856, %v2856
      %v3087 = vmul.f32 %v2857, %v2857
      %v3088 = vmul.f32 %v2858, %v2858
      %v3089 = vmul.f32 %v2859, %v2859
      %v3090 = vmul.f32 %v2860, %v2860
      %v3091 = vmul.f32 %v2861, %v2861
      %v3092 = vmul.f32 %v2862, %v2862
      %v3093 = vmul.f32 %v2863, %v2863
      %v3094 = vmul.f32 %v2864, %v2864
      %v3095 = vmul.f32 %v2865, %v2865
      %v3096 = vmul.f32 %v2866, %v2866
      %v3097 = vmul.f32 %v2867, %v2867
      %v3098 = vmul.f32 %v2868, %v2868
      %v3099 = vmul.f32 %v2869, %v2869
      %v3100 = vmul.f32 %v2870, %v2870
      %v3101 = vmul.f32 %v2871, %v2871
      %v3102 = vmul.f32 %v2872, %v2872
      %v3103 = vmul.f32 %v2873, %v2873
      %v3104 = vadd.f32 %v3072, %v3073
      %v3105 = vadd.f32 %v3104, %v3074
      %v3106 = vadd.f32 %v3105, %v3075
      %v3107 = vadd.f32 %v3106, %v3076
      %v3108 = vadd.f32 %v3107, %v3077
      %v3109 = vadd.f32 %v3108, %v3078
      %v3110 = vadd.f32 %v3109, %v3079
      %v3111 = vadd.f32 %v3110, %v3080
      %v3112 = vadd.f32 %v3111, %v3081
      %v3113 = vadd.f32 %v3112, %v3082
      %v3114 = vadd.f32 %v3113, %v3083
      %v3115 = vadd.f32 %v3114, %v3084
      %v3116 = vadd.f32 %v3115, %v3085
      %v3117 = vadd.f32 %v3116, %v3086
      %v3118 = vadd.f32 %v3117, %v3087
      %v3119 = vadd.f32 %v3118, %v3088
      %v3120 = vadd.f32 %v3119, %v3089
      %v3121 = vadd.f32 %v3120, %v3090
      %v3122 = vadd.f32 %v3121, %v3091
      %v3123 = vadd.f32 %v3122, %v3092
      %v3124 = vadd.f32 %v3123, %v3093
      %v3125 = vadd.f32 %v3124, %v3094
      %v3126 = vadd.f32 %v3125, %v3095
      %v3127 = vadd.f32 %v3126, %v3096
      %v3128 = vadd.f32 %v3127, %v3097
      %v3129 = vadd.f32 %v3128, %v3098
      %v3130 = vadd.f32 %v3129, %v3099
      %v3131 = vadd.f32 %v3130, %v3100
      %v3132 = vadd.f32 %v3131, %v3101
      %v3133 = vadd.f32 %v3132, %v3102
      %v3134 = vadd.f32 %v3133, %v3103
      %v3135 = vrot.slane %v3134, 4
      %v3136 = vadd.f32 %v3134, %v3135
      %v3137 = vrot.slane %v3136, 2
      %v3138 = vadd.f32 %v3136, %v3137
      %v3139 = vrot.slane %v3138, 1
      %v3140 = vadd.f32 %v3138, %v3139
      %3141 = vst [vmem:[%s181 + $0x1] sm:$0x1] %v3140
      %p3142 = scmp.lt.s32.totalorder %s15, 1
      %s3143 = scalar_select %p3142, %s15, 1
      %s3144 = smul.addr %s3143, 32
      %s3145 = smul.addr %s3144, 4
      %s3146 = scalar_lea.vmem %s2, %s3145
      %p3147 = scmp.lt.s32.totalorder %s15, 1
      %s3148 = scalar_select %p3147, %s15, 1
      %s3149 = smul.addr %s3148, 2
      %s3150 = scalar_lea.vmem %s3, %s3149
      // Predicated region
      $region29: #{forward.13} parent=27 // pred_check
        %p3151 = pneg %p80
      $region30: #{forward.13} parent=27 // pred_check_branch
        %3153 = sbr.rel (%p3151) target = $region32
      $region31: #{forward.13} parent=27 // pred_region
        _
      $region32: #{forward.13} parent=27 // pred_fallthru
        _
      // Predicated region
      $region33: #{forward.13} parent=27 // pred_check
        %p3154 = pneg %p106
      $region34: #{forward.13} parent=27 // pred_check_branch
        %3156 = sbr.rel (%p3154) target = $region36
      $region35: #{forward.13} parent=27 // pred_region
        _
      $region36: #{forward.13} parent=27 // pred_fallthru
        _
    $region28: #{forward.13} parent=5 // pred_fallthru
      _
    %p3157 = scmp.le.s32.totalorder 2, %s10
    // Predicated region
    $region37: #{forward.13} parent=5 // pred_check
      %p3158 = pneg %p3157
    $region38: #{forward.13} parent=5 // pred_check_branch
      %3160 = sbr.rel (%p3158) target = $region40
    $region39: #{forward.13} parent=5 // pred_region
      %s3161 = ssub.s32 %s10, 2
      // Predicated region
      $region41: #{forward.13} parent=39 // pred_check
        %p3162 = pneg %p86
      $region42: #{forward.13} parent=39 // pred_check_branch
        %3164 = sbr.rel (%p3162) target = $region44
      $region43: #{forward.13} parent=39 // pred_region
        %p3165 = scmp.lt.s32.totalorder %s16, 1
        %s3166 = scalar_select %p3165, %s16, 1
        %s3167 = smul.addr %s3166, 32
        %s3168 = smul.addr %s3167, 4
        %s3169 = scalar_lea.vmem %s2, %s3168
      $region44: #{forward.13} parent=39 // pred_fallthru
        _
      // Predicated region
      $region45: #{forward.13} parent=39 // pred_check
        %p3170 = pneg %p112
      $region46: #{forward.13} parent=39 // pred_check_branch
        %3172 = sbr.rel (%p3170) target = $region48
      $region47: #{forward.13} parent=39 // pred_region
        %p3173 = scmp.lt.s32.totalorder %s16, 1
        %s3174 = scalar_select %p3173, %s16, 1
        %s3175 = smul.addr %s3174, 2
        %s3176 = scalar_lea.vmem %s3, %s3175
      $region48: #{forward.13} parent=39 // pred_fallthru
        _
    $region40: #{forward.13} parent=5 // pred_fallthru
      _
  $region6: #{forward.13} parent=0 // loop_footer
    %s14 = sadd.s32 1, %s10
  $region7: #{forward.13} parent=0 // loop_footer_branch
    %9 = sbr.rel target = $region3
  $region8: #{forward.13} parent=0 // loop_exit
    _

// kernel: forward.14
$region0: #{forward.14}
  #allocation0 [shape = 'u32[]', space=smem, size = 0x4, offset = 0x4, fixed_abs, tag = 'smem constant byte address 0x4 - core index']
  #allocation1 [shape = 'u32[144,128]{1,0:T(1,128)}', space=vmem, size = 0x12000, scoped, tag = 'internal scratch']
  #allocation2 [shape = 'f32[18,18,128]{2,1,0:T(8,128)}', space=vmem, size = 0x36000, scoped, tag = 'scratch operand']
  %s0 = inlined_call_operand.vmem [shape: bf16[2,256,128], index: 0, kind: input, shape index: {}]
  %s1 = inlined_call_operand.vmem [shape: f32[1,128], index: 1, kind: input, shape index: {}]
  %s2 = inlined_call_operand.vmem [shape: f32[1,128], index: 2, kind: input, shape index: {}]
  %s3 = inlined_call_operand.vmem [shape: bf16[9,128,128], index: 3, kind: input, shape index: {}]
  %s4 = inlined_call_operand.vmem [shape: bf16[2,256,128], index: 4, kind: output, shape index: {0}]
  %s5 = inlined_call_operand.vmem [shape: f32[2,2,128], index: 5, kind: output, shape index: {1}]
  %6 = xla_tuple %s4, %s5
  %s7 = sld [smem:[#allocation0]]
  $region57: #{forward.14} parent=0
    _
  %s9 = ssub.s32 1, %s7
  %s10 = scalar_select 0, %s9, %s7
  loop: start=0, step=1, limit=4
  $region2: #{forward.14} parent=0 // loop_pre_header
    _
  $region3: #{forward.14} parent=0 // loop_header
    %s12 = sphi 0, %s16
    %p13 = scmp.ge.s32.totalorder %s12, 4
    %s22 = sphi 0, %s24
    %s25 = sphi 0, %s22
    %s26 = sphi 0, %s25
    %s42 = sphi 0, %s26
    %s46 = sphi 0, %s46
    %s48 = sphi 0, %s46
    %s49 = sphi 0, %s48
    %s63 = sphi 0, %s49
    %s67 = sphi 0, %s67
    %s69 = sphi 0, %s67
    %s70 = sphi 0, %s69
    %s84 = sphi 0, %s70
    %s88 = sphi 0, %s88
    %s90 = sphi 0, %s88
    %s91 = sphi 0, %s90
    %s105 = sphi 0, %s91
    %s111 = sphi 0, %s113
    %s114 = sphi 0, %s111
    %s115 = sphi 0, %s114
    %s131 = sphi 0, %s115
    %s137 = sphi 0, %s139
    %s140 = sphi 0, %s137
    %s141 = sphi 0, %s140
    %s157 = sphi 0, %s141
  $region4: #{forward.14} parent=0 // loop_header_branch
    %15 = sbr.rel (%p13) target = $region8
  $region5: #{forward.14} parent=0 // loop_body
    %s17 = ssub.s32 %s12, 1
    %s18 = ssub.s32 %s12, 2
    %s19 = sadd.s32 %s12, 1
    %s20 = ssub.s32 %s12, %s19
    %p21 = scmp.eq.s32.totalorder %s20, 0
    %s23 = sadd.s32 %s22, 1
    %s24 = scalar_select %p21, %s22, %s23
    %p27 = pneg %p21
    %p28 = scmp.eq.s32.totalorder %s12, 1
    %p29 = por %p27, %p28
    %p30 = scmp.ne.s32.totalorder %s22, %s25
    %p31 = scmp.eq.s32.totalorder %s12, 0
    %p32 = por %p30, %p31
    %p33 = scmp.ne.s32.totalorder %s22, %s25
    %p34 = scmp.eq.s32.totalorder %s17, 1
    %p35 = por %p33, %p34
    %p36 = scmp.ne.s32.totalorder %s25, %s26
    %p37 = scmp.eq.s32.totalorder %s17, 0
    %p38 = por %p36, %p37
    %p39 = scmp.ne.s32.totalorder %s25, %s26
    %p40 = scmp.eq.s32.totalorder %s18, 1
    %p41 = por %p39, %p40
    %p43 = scmp.ne.s32.totalorder %s26, %s42
    %p44 = scmp.eq.s32.totalorder %s18, 0
    %p45 = por %p43, %p44
    %s47 = sadd.s32 %s46, 1
    %p50 = scmp.eq.s32.totalorder %s12, 1
    %p51 = scmp.ne.s32.totalorder %s46, %s48
    %p52 = scmp.eq.s32.totalorder %s12, 0
    %p53 = por %p51, %p52
    %p54 = scmp.ne.s32.totalorder %s46, %s48
    %p55 = scmp.eq.s32.totalorder %s17, 1
    %p56 = por %p54, %p55
    %p57 = scmp.ne.s32.totalorder %s48, %s49
    %p58 = scmp.eq.s32.totalorder %s17, 0
    %p59 = por %p57, %p58
    %p60 = scmp.ne.s32.totalorder %s48, %s49
    %p61 = scmp.eq.s32.totalorder %s18, 1
    %p62 = por %p60, %p61
    %p64 = scmp.ne.s32.totalorder %s49, %s63
    %p65 = scmp.eq.s32.totalorder %s18, 0
    %p66 = por %p64, %p65
    %s68 = sadd.s32 %s67, 1
    %p71 = scmp.eq.s32.totalorder %s12, 1
    %p72 = scmp.ne.s32.totalorder %s67, %s69
    %p73 = scmp.eq.s32.totalorder %s12, 0
    %p74 = por %p72, %p73
    %p75 = scmp.ne.s32.totalorder %s67, %s69
    %p76 = scmp.eq.s32.totalorder %s17, 1
    %p77 = por %p75, %p76
    %p78 = scmp.ne.s32.totalorder %s69, %s70
    %p79 = scmp.eq.s32.totalorder %s17, 0
    %p80 = por %p78, %p79
    %p81 = scmp.ne.s32.totalorder %s69, %s70
    %p82 = scmp.eq.s32.totalorder %s18, 1
    %p83 = por %p81, %p82
    %p85 = scmp.ne.s32.totalorder %s70, %s84
    %p86 = scmp.eq.s32.totalorder %s18, 0
    %p87 = por %p85, %p86
    %s89 = sadd.s32 %s88, 1
    %p92 = scmp.eq.s32.totalorder %s12, 1
    %p93 = scmp.ne.s32.totalorder %s88, %s90
    %p94 = scmp.eq.s32.totalorder %s12, 0
    %p95 = por %p93, %p94
    %p96 = scmp.ne.s32.totalorder %s88, %s90
    %p97 = scmp.eq.s32.totalorder %s17, 1
    %p98 = por %p96, %p97
    %p99 = scmp.ne.s32.totalorder %s90, %s91
    %p100 = scmp.eq.s32.totalorder %s17, 0
    %p101 = por %p99, %p100
    %p102 = scmp.ne.s32.totalorder %s90, %s91
    %p103 = scmp.eq.s32.totalorder %s18, 1
    %p104 = por %p102, %p103
    %p106 = scmp.ne.s32.totalorder %s91, %s105
    %p107 = scmp.eq.s32.totalorder %s18, 0
    %p108 = por %p106, %p107
    %s109 = ssub.s32 %s12, %s19
    %p110 = scmp.eq.s32.totalorder %s109, 0
    %s112 = sadd.s32 %s111, 1
    %s113 = scalar_select %p110, %s111, %s112
    %p116 = pneg %p110
    %p117 = scmp.eq.s32.totalorder %s12, 1
    %p118 = por %p116, %p117
    %p119 = scmp.ne.s32.totalorder %s111, %s114
    %p120 = scmp.eq.s32.totalorder %s12, 0
    %p121 = por %p119, %p120
    %p122 = scmp.ne.s32.totalorder %s111, %s114
    %p123 = scmp.eq.s32.totalorder %s17, 1
    %p124 = por %p122, %p123
    %p125 = scmp.ne.s32.totalorder %s114, %s115
    %p126 = scmp.eq.s32.totalorder %s17, 0
    %p127 = por %p125, %p126
    %p128 = scmp.ne.s32.totalorder %s114, %s115
    %p129 = scmp.eq.s32.totalorder %s18, 1
    %p130 = por %p128, %p129
    %p132 = scmp.ne.s32.totalorder %s115, %s131
    %p133 = scmp.eq.s32.totalorder %s18, 0
    %p134 = por %p132, %p133
    %s135 = ssub.s32 %s12, %s19
    %p136 = scmp.eq.s32.totalorder %s135, 0
    %s138 = sadd.s32 %s137, 1
    %s139 = scalar_select %p136, %s137, %s138
    %p142 = pneg %p136
    %p143 = scmp.eq.s32.totalorder %s12, 1
    %p144 = por %p142, %p143
    %p145 = scmp.ne.s32.totalorder %s137, %s140
    %p146 = scmp.eq.s32.totalorder %s12, 0
    %p147 = por %p145, %p146
    %p148 = scmp.ne.s32.totalorder %s137, %s140
    %p149 = scmp.eq.s32.totalorder %s17, 1
    %p150 = por %p148, %p149
    %p151 = scmp.ne.s32.totalorder %s140, %s141
    %p152 = scmp.eq.s32.totalorder %s17, 0
    %p153 = por %p151, %p152
    %p154 = scmp.ne.s32.totalorder %s140, %s141
    %p155 = scmp.eq.s32.totalorder %s18, 1
    %p156 = por %p154, %p155
    %p158 = scmp.ne.s32.totalorder %s141, %s157
    %p159 = scmp.eq.s32.totalorder %s18, 0
    %p160 = por %p158, %p159
    %p161 = scmp.le.s32.totalorder 1, %s12
    %p162 = scmp.lt.s32.totalorder %s12, 3
    %p163 = pnand %p161, %p162
    %p164 = pneg %p163
    // Predicated region
    $region9: #{forward.14} parent=5 // pred_check
      _
    $region10: #{forward.14} parent=5 // pred_check_branch
      %166 = sbr.rel (%p163) target = $region12
    $region11: #{forward.14} parent=5 // pred_region
      %s167 = ssub.s32 %s12, 1
      // Predicated region
      $region13: #{forward.14} parent=11 // pred_check
        %p168 = pneg %p59
      $region14: #{forward.14} parent=11 // pred_check_branch
        %170 = sbr.rel (%p168) target = $region16
      $region15: #{forward.14} parent=11 // pred_region
        _
      $region16: #{forward.14} parent=11 // pred_fallthru
        _
      // Predicated region
      $region17: #{forward.14} parent=11 // pred_check
        %p171 = pneg %p80
      $region18: #{forward.14} parent=11 // pred_check_branch
        %173 = sbr.rel (%p171) target = $region20
      $region19: #{forward.14} parent=11 // pred_region
        _
      $region20: #{forward.14} parent=11 // pred_fallthru
        _
      // Predicated region
      $region21: #{forward.14} parent=11 // pred_check
        %p174 = pneg %p101
      $region22: #{forward.14} parent=11 // pred_check_branch
        %176 = sbr.rel (%p174) target = $region24
      $region23: #{forward.14} parent=11 // pred_region
        _
      $region24: #{forward.14} parent=11 // pred_fallthru
        _
    $region12: #{forward.14} parent=5 // pred_fallthru
      _
    %p177 = scmp.lt.s32.totalorder %s12, 2
    // Predicated region
    $region25: #{forward.14} parent=5 // pred_check
      %p178 = pneg %p177
    $region26: #{forward.14} parent=5 // pred_check_branch
      %180 = sbr.rel (%p178) target = $region28
    $region27: #{forward.14} parent=5 // pred_region
      // Predicated region
      $region29: #{forward.14} parent=27 // pred_check
        %p181 = pneg %p32
      $region30: #{forward.14} parent=27 // pred_check_branch
        %183 = sbr.rel (%p181) target = $region32
      $region31: #{forward.14} parent=27 // pred_region
        %p184 = scmp.lt.s32.totalorder %s12, 1
        %s185 = scalar_select %p184, %s12, 1
        %s186 = smul.addr %s185, 32
        %s187 = smul.addr %s186, 4
        %s188 = scalar_lea.vmem %s0, %s187
      $region32: #{forward.14} parent=27 // pred_fallthru
        _
    $region28: #{forward.14} parent=5 // pred_fallthru
      _
    %p189 = scmp.le.s32.totalorder 1, %s12
    %p190 = scmp.lt.s32.totalorder %s12, 3
    %p191 = pnand %p189, %p190
    %p192 = pneg %p191
    // Predicated region
    $region33: #{forward.14} parent=5 // pred_check
      _
    $region34: #{forward.14} parent=5 // pred_check_branch
      %194 = sbr.rel (%p191) target = $region36
    $region35: #{forward.14} parent=5 // pred_region
      %s195 = ssub.s32 %s12, 1
      %p196 = scmp.lt.s32.totalorder %s17, 1
      %s197 = scalar_select %p196, %s17, 1
      %s198 = smul.addr %s197, 32
      %s199 = smul.addr %s198, 4
      %s200 = scalar_lea.vmem %s0, %s199
      %p201 = pneg %p38
      %p202 = pneg %p35
      %p203 = pneg %p59
      %p204 = pneg %p56
      %p205 = pneg %p80
      %p206 = pneg %p77
      %p207 = pneg %p101
      %p208 = pneg %p98
      %p209 = pneg %p127
      %p210 = pneg %p124
      %p211 = scmp.lt.s32.totalorder %s17, 1
      %s212 = scalar_select %p211, %s17, 1
      %s213 = smul.addr %s212, 32
      %s214 = smul.addr %s213, 4
      %s215 = scalar_lea.vmem %s4, %s214
      %p216 = pneg %p153
      %p217 = pneg %p150
      %p218 = scmp.lt.s32.totalorder %s17, 1
      %s219 = scalar_select %p218, %s17, 1
      %s220 = smul.addr %s219, 2
      %s221 = scalar_lea.vmem %s5, %s220
      %p222 = scmp.lt.s32.totalorder %s17, 1
      %s223 = scalar_select %p222, %s17, 1
      %s224 = smul.addr %s223, 32
      %s225 = smul.addr %s224, 4
      %s226 = scalar_lea.vmem %s0, %s225
      %p227 = scmp.lt.s32.totalorder %s17, 1
      %s228 = scalar_select %p227, %s17, 1
      %s229 = smul.addr %s228, 32
      %s230 = smul.addr %s229, 4
      %s231 = scalar_lea.vmem %s4, %s230
      %p232 = scmp.lt.s32.totalorder %s17, 1
      %s233 = scalar_select %p232, %s17, 1
      %s234 = smul.addr %s233, 2
      %s235 = scalar_lea.vmem %s5, %s234
      %v237 = vld [vmem:[%s226] sm:$0xf]
      %v238 = vld [vmem:[%s226 + $0x4] sm:$0xf]
      %v239 = vld [vmem:[%s226 + $0x8] sm:$0xf]
      %v240 = vld [vmem:[%s226 + $0xc] sm:$0xf]
      %v241 = vld [vmem:[%s226 + $0x10] sm:$0xf]
      %v242 = vld [vmem:[%s226 + $0x14] sm:$0xf]
      %v243 = vld [vmem:[%s226 + $0x18] sm:$0xf]
      %v244 = vld [vmem:[%s226 + $0x1c] sm:$0xf]
      %v245 = vld [vmem:[%s226 + $0x20] sm:$0xf]
      %v246 = vld [vmem:[%s226 + $0x24] sm:$0xf]
      %v247 = vld [vmem:[%s226 + $0x28] sm:$0xf]
      %v248 = vld [vmem:[%s226 + $0x2c] sm:$0xf]
      %v249 = vld [vmem:[%s226 + $0x30] sm:$0xf]
      %v250 = vld [vmem:[%s226 + $0x34] sm:$0xf]
      %v251 = vld [vmem:[%s226 + $0x38] sm:$0xf]
      %v252 = vld [vmem:[%s226 + $0x3c] sm:$0xf]
      %v253 = vld [vmem:[%s226 + $0x40] sm:$0xf]
      %v254 = vld [vmem:[%s226 + $0x44] sm:$0xf]
      %v255 = vld [vmem:[%s226 + $0x48] sm:$0xf]
      %v256 = vld [vmem:[%s226 + $0x4c] sm:$0xf]
      %v257 = vld [vmem:[%s226 + $0x50] sm:$0xf]
      %v258 = vld [vmem:[%s226 + $0x54] sm:$0xf]
      %v259 = vld [vmem:[%s226 + $0x58] sm:$0xf]
      %v260 = vld [vmem:[%s226 + $0x5c] sm:$0xf]
      %v261 = vld [vmem:[%s226 + $0x60] sm:$0xf]
      %v262 = vld [vmem:[%s226 + $0x64] sm:$0xf]
      %v263 = vld [vmem:[%s226 + $0x68] sm:$0xf]
      %v264 = vld [vmem:[%s226 + $0x6c] sm:$0xf]
      %v265 = vld [vmem:[%s226 + $0x70] sm:$0xf]
      %v266 = vld [vmem:[%s226 + $0x74] sm:$0xf]
      %v267 = vld [vmem:[%s226 + $0x78] sm:$0xf]
      %v268 = vld [vmem:[%s226 + $0x7c] sm:$0xf]
      %v269 = vld [vmem:[%s1] sm:$0x1]
      %v270 = vunpack.c.l.bf16 %v237
      %v271 = vunpack.c.l.bf16 %v238
      %v272 = vunpack.c.l.bf16 %v239
      %v273 = vunpack.c.l.bf16 %v240
      %v274 = vunpack.c.l.bf16 %v241
      %v275 = vunpack.c.l.bf16 %v242
      %v276 = vunpack.c.l.bf16 %v243
      %v277 = vunpack.c.l.bf16 %v244
      %v278 = vunpack.c.l.bf16 %v245
      %v279 = vunpack.c.l.bf16 %v246
      %v280 = vunpack.c.l.bf16 %v247
      %v281 = vunpack.c.l.bf16 %v248
      %v282 = vunpack.c.l.bf16 %v249
      %v283 = vunpack.c.l.bf16 %v250
      %v284 = vunpack.c.l.bf16 %v251
      %v285 = vunpack.c.l.bf16 %v252
      %v286 = vunpack.c.l.bf16 %v253
      %v287 = vunpack.c.l.bf16 %v254
      %v288 = vunpack.c.l.bf16 %v255
      %v289 = vunpack.c.l.bf16 %v256
      %v290 = vunpack.c.l.bf16 %v257
      %v291 = vunpack.c.l.bf16 %v258
      %v292 = vunpack.c.l.bf16 %v259
      %v293 = vunpack.c.l.bf16 %v260
      %v294 = vunpack.c.l.bf16 %v261
      %v295 = vunpack.c.l.bf16 %v262
      %v296 = vunpack.c.l.bf16 %v263
      %v297 = vunpack.c.l.bf16 %v264
      %v298 = vunpack.c.l.bf16 %v265
      %v299 = vunpack.c.l.bf16 %v266
      %v300 = vunpack.c.l.bf16 %v267
      %v301 = vunpack.c.l.bf16 %v268
      %v303 = vlaneseq
      %v304 = vshrl.u32 %v303, 7
      %v305 = vsub.s32 0, %v304
      %v306 = vrot.slane %v269, %v305
      %v308 = vmul.f32 %v270, %v306
      %v309 = vmul.f32 %v271, %v306
      %v310 = vmul.f32 %v272, %v306
      %v311 = vmul.f32 %v273, %v306
      %v312 = vmul.f32 %v274, %v306
      %v313 = vmul.f32 %v275, %v306
      %v314 = vmul.f32 %v276, %v306
      %v315 = vmul.f32 %v277, %v306
      %v316 = vmul.f32 %v278, %v306
      %v317 = vmul.f32 %v279, %v306
      %v318 = vmul.f32 %v280, %v306
      %v319 = vmul.f32 %v281, %v306
      %v320 = vmul.f32 %v282, %v306
      %v321 = vmul.f32 %v283, %v306
      %v322 = vmul.f32 %v284, %v306
      %v323 = vmul.f32 %v285, %v306
      %v324 = vmul.f32 %v286, %v306
      %v325 = vmul.f32 %v287, %v306
      %v326 = vmul.f32 %v288, %v306
      %v327 = vmul.f32 %v289, %v306
      %v328 = vmul.f32 %v290, %v306
      %v329 = vmul.f32 %v291, %v306
      %v330 = vmul.f32 %v292, %v306
      %v331 = vmul.f32 %v293, %v306
      %v332 = vmul.f32 %v294, %v306
      %v333 = vmul.f32 %v295, %v306
      %v334 = vmul.f32 %v296, %v306
      %v335 = vmul.f32 %v297, %v306
      %v336 = vmul.f32 %v298, %v306
      %v337 = vmul.f32 %v299, %v306
      %v338 = vmul.f32 %v300, %v306
      %v339 = vmul.f32 %v301, %v306
      %v340 = vld [vmem:[%s2] sm:$0x1]
      %v342 = vlaneseq
      %v343 = vshrl.u32 %v342, 7
      %v344 = vsub.s32 0, %v343
      %v345 = vrot.slane %v340, %v344
      %v347 = vadd.f32 %v308, %v345
      %v348 = vadd.f32 %v309, %v345
      %v349 = vadd.f32 %v310, %v345
      %v350 = vadd.f32 %v311, %v345
      %v351 = vadd.f32 %v312, %v345
      %v352 = vadd.f32 %v313, %v345
      %v353 = vadd.f32 %v314, %v345
      %v354 = vadd.f32 %v315, %v345
      %v355 = vadd.f32 %v316, %v345
      %v356 = vadd.f32 %v317, %v345
      %v357 = vadd.f32 %v318, %v345
      %v358 = vadd.f32 %v319, %v345
      %v359 = vadd.f32 %v320, %v345
      %v360 = vadd.f32 %v321, %v345
      %v361 = vadd.f32 %v322, %v345
      %v362 = vadd.f32 %v323, %v345
      %v363 = vadd.f32 %v324, %v345
      %v364 = vadd.f32 %v325, %v345
      %v365 = vadd.f32 %v326, %v345
      %v366 = vadd.f32 %v327, %v345
      %v367 = vadd.f32 %v328, %v345
      %v368 = vadd.f32 %v329, %v345
      %v369 = vadd.f32 %v330, %v345
      %v370 = vadd.f32 %v331, %v345
      %v371 = vadd.f32 %v332, %v345
      %v372 = vadd.f32 %v333, %v345
      %v373 = vadd.f32 %v334, %v345
      %v374 = vadd.f32 %v335, %v345
      %v375 = vadd.f32 %v336, %v345
      %v376 = vadd.f32 %v337, %v345
      %v377 = vadd.f32 %v338, %v345
      %v378 = vadd.f32 %v339, %v345
      %v379 = vmax.f32 %v347, 0.0
      %v380 = vmax.f32 %v348, 0.0
      %v381 = vmax.f32 %v349, 0.0
      %v382 = vmax.f32 %v350, 0.0
      %v383 = vmax.f32 %v351, 0.0
      %v384 = vmax.f32 %v352, 0.0
      %v385 = vmax.f32 %v353, 0.0
      %v386 = vmax.f32 %v354, 0.0
      %v387 = vmax.f32 %v355, 0.0
      %v388 = vmax.f32 %v356, 0.0
      %v389 = vmax.f32 %v357, 0.0
      %v390 = vmax.f32 %v358, 0.0
      %v391 = vmax.f32 %v359, 0.0
      %v392 = vmax.f32 %v360, 0.0
      %v393 = vmax.f32 %v361, 0.0
      %v394 = vmax.f32 %v362, 0.0
      %v395 = vmax.f32 %v363, 0.0
      %v396 = vmax.f32 %v364, 0.0
      %v397 = vmax.f32 %v365, 0.0
      %v398 = vmax.f32 %v366, 0.0
      %v399 = vmax.f32 %v367, 0.0
      %v400 = vmax.f32 %v368, 0.0
      %v401 = vmax.f32 %v369, 0.0
      %v402 = vmax.f32 %v370, 0.0
      %v403 = vmax.f32 %v371, 0.0
      %v404 = vmax.f32 %v372, 0.0
      %v405 = vmax.f32 %v373, 0.0
      %v406 = vmax.f32 %v374, 0.0
      %v407 = vmax.f32 %v375, 0.0
      %v408 = vmax.f32 %v376, 0.0
      %v409 = vmax.f32 %v377, 0.0
      %v410 = vmax.f32 %v378, 0.0
      %411 = vst [vmem:[#allocation2] sm:$0xff] 0.0
      %412 = vst [vmem:[#allocation2 + $0x8] sm:$0xff] 0.0
      %413 = vst [vmem:[#allocation2 + $0x10] sm:$0x3] 0.0
      %414 = vst [vmem:[#allocation2 + $0x18] sm:$0xff] 0.0
      %415 = vst [vmem:[#allocation2 + $0x20] sm:$0xff] 0.0
      %416 = vst [vmem:[#allocation2 + $0x28] sm:$0x3] 0.0
      %417 = vst [vmem:[#allocation2 + $0x30] sm:$0xff] 0.0
      %418 = vst [vmem:[#allocation2 + $0x38] sm:$0xff] 0.0
      %419 = vst [vmem:[#allocation2 + $0x40] sm:$0x3] 0.0
      %420 = vst [vmem:[#allocation2 + $0x48] sm:$0xff] 0.0
      %421 = vst [vmem:[#allocation2 + $0x50] sm:$0xff] 0.0
      %422 = vst [vmem:[#allocation2 + $0x58] sm:$0x3] 0.0
      %423 = vst [vmem:[#allocation2 + $0x60] sm:$0xff] 0.0
      %424 = vst [vmem:[#allocation2 + $0x68] sm:$0xff] 0.0
      %425 = vst [vmem:[#allocation2 + $0x70] sm:$0x3] 0.0
      %426 = vst [vmem:[#allocation2 + $0x78] sm:$0xff] 0.0
      %427 = vst [vmem:[#allocation2 + $0x80] sm:$0xff] 0.0
      %428 = vst [vmem:[#allocation2 + $0x88] sm:$0x3] 0.0
      %429 = vst [vmem:[#allocation2 + $0x90] sm:$0xff] 0.0
      %430 = vst [vmem:[#allocation2 + $0x98] sm:$0xff] 0.0
      %431 = vst [vmem:[#allocation2 + $0xa0] sm:$0x3] 0.0
      %432 = vst [vmem:[#allocation2 + $0xa8] sm:$0xff] 0.0
      %433 = vst [vmem:[#allocation2 + $0xb0] sm:$0xff] 0.0
      %434 = vst [vmem:[#allocation2 + $0xb8] sm:$0x3] 0.0
      %435 = vst [vmem:[#allocation2 + $0xc0] sm:$0xff] 0.0
      %436 = vst [vmem:[#allocation2 + $0xc8] sm:$0xff] 0.0
      %437 = vst [vmem:[#allocation2 + $0xd0] sm:$0x3] 0.0
      %438 = vst [vmem:[#allocation2 + $0xd8] sm:$0xff] 0.0
      %439 = vst [vmem:[#allocation2 + $0xe0] sm:$0xff] 0.0
      %440 = vst [vmem:[#allocation2 + $0xe8] sm:$0x3] 0.0
      %441 = vst [vmem:[#allocation2 + $0xf0] sm:$0xff] 0.0
      %442 = vst [vmem:[#allocation2 + $0xf8] sm:$0xff] 0.0
      %443 = vst [vmem:[#allocation2 + $0x100] sm:$0x3] 0.0
      %444 = vst [vmem:[#allocation2 + $0x108] sm:$0xff] 0.0
      %445 = vst [vmem:[#allocation2 + $0x110] sm:$0xff] 0.0
      %446 = vst [vmem:[#allocation2 + $0x118] sm:$0x3] 0.0
      %447 = vst [vmem:[#allocation2 + $0x120] sm:$0xff] 0.0
      %448 = vst [vmem:[#allocation2 + $0x128] sm:$0xff] 0.0
      %449 = vst [vmem:[#allocation2 + $0x130] sm:$0x3] 0.0
      %450 = vst [vmem:[#allocation2 + $0x138] sm:$0xff] 0.0
      %451 = vst [vmem:[#allocation2 + $0x140] sm:$0xff] 0.0
      %452 = vst [vmem:[#allocation2 + $0x148] sm:$0x3] 0.0
      %453 = vst [vmem:[#allocation2 + $0x150] sm:$0xff] 0.0
      %454 = vst [vmem:[#allocation2 + $0x158] sm:$0xff] 0.0
      %455 = vst [vmem:[#allocation2 + $0x160] sm:$0x3] 0.0
      %456 = vst [vmem:[#allocation2 + $0x168] sm:$0xff] 0.0
      %457 = vst [vmem:[#allocation2 + $0x170] sm:$0xff] 0.0
      %458 = vst [vmem:[#allocation2 + $0x178] sm:$0x3] 0.0
      %459 = vst [vmem:[#allocation2 + $0x180] sm:$0xff] 0.0
      %460 = vst [vmem:[#allocation2 + $0x188] sm:$0xff] 0.0
      %461 = vst [vmem:[#allocation2 + $0x190] sm:$0x3] 0.0
      %462 = vst [vmem:[#allocation2 + $0x198] sm:$0xff] 0.0
      %463 = vst [vmem:[#allocation2 + $0x1a0] sm:$0xff] 0.0
      %464 = vst [vmem:[#allocation2 + $0x1a8] sm:$0x3] 0.0
      %s465 = scalar_lea.vmem [#allocation2], 24
      %466 = vst [vmem:[%s465 + $0x1] sm:$0xff] %v379
      %467 = vst [vmem:[%s465 + $0x9] sm:$0xff] %v380
      %468 = vst [vmem:[%s465 + $0x19] sm:$0xff] %v381
      %469 = vst [vmem:[%s465 + $0x21] sm:$0xff] %v382
      %470 = vst [vmem:[%s465 + $0x31] sm:$0xff] %v383
      %471 = vst [vmem:[%s465 + $0x39] sm:$0xff] %v384
      %472 = vst [vmem:[%s465 + $0x49] sm:$0xff] %v385
      %473 = vst [vmem:[%s465 + $0x51] sm:$0xff] %v386
      %474 = vst [vmem:[%s465 + $0x61] sm:$0xff] %v387
      %475 = vst [vmem:[%s465 + $0x69] sm:$0xff] %v388
      %476 = vst [vmem:[%s465 + $0x79] sm:$0xff] %v389
      %477 = vst [vmem:[%s465 + $0x81] sm:$0xff] %v390
      %478 = vst [vmem:[%s465 + $0x91] sm:$0xff] %v391
      %479 = vst [vmem:[%s465 + $0x99] sm:$0xff] %v392
      %480 = vst [vmem:[%s465 + $0xa9] sm:$0xff] %v393
      %481 = vst [vmem:[%s465 + $0xb1] sm:$0xff] %v394
      %482 = vst [vmem:[%s465 + $0xc1] sm:$0xff] %v395
      %483 = vst [vmem:[%s465 + $0xc9] sm:$0xff] %v396
      %484 = vst [vmem:[%s465 + $0xd9] sm:$0xff] %v397
      %485 = vst [vmem:[%s465 + $0xe1] sm:$0xff] %v398
      %486 = vst [vmem:[%s465 + $0xf1] sm:$0xff] %v399
      %487 = vst [vmem:[%s465 + $0xf9] sm:$0xff] %v400
      %488 = vst [vmem:[%s465 + $0x109] sm:$0xff] %v401
      %489 = vst [vmem:[%s465 + $0x111] sm:$0xff] %v402
      %490 = vst [vmem:[%s465 + $0x121] sm:$0xff] %v403
      %491 = vst [vmem:[%s465 + $0x129] sm:$0xff] %v404
      %492 = vst [vmem:[%s465 + $0x139] sm:$0xff] %v405
      %493 = vst [vmem:[%s465 + $0x141] sm:$0xff] %v406
      %494 = vst [vmem:[%s465 + $0x151] sm:$0xff] %v407
      %495 = vst [vmem:[%s465 + $0x159] sm:$0xff] %v408
      %496 = vst [vmem:[%s465 + $0x169] sm:$0xff] %v409
      %497 = vst [vmem:[%s465 + $0x171] sm:$0xff] %v410
      %v498 = vld [vmem:[#allocation2] sm:$0xff]
      %v499 = vld [vmem:[#allocation2 + $0x8] sm:$0xff]
      %v500 = vld [vmem:[#allocation2 + $0x18] sm:$0xff]
      %v501 = vld [vmem:[#allocation2 + $0x20] sm:$0xff]
      %v502 = vld [vmem:[#allocation2 + $0x30] sm:$0xff]
      %v503 = vld [vmem:[#allocation2 + $0x38] sm:$0xff]
      %v504 = vld [vmem:[#allocation2 + $0x48] sm:$0xff]
      %v505 = vld [vmem:[#allocation2 + $0x50] sm:$0xff]
      %v506 = vld [vmem:[#allocation2 + $0x60] sm:$0xff]
      %v507 = vld [vmem:[#allocation2 + $0x68] sm:$0xff]
      %v508 = vld [vmem:[#allocation2 + $0x78] sm:$0xff]
      %v509 = vld [vmem:[#allocation2 + $0x80] sm:$0xff]
      %v510 = vld [vmem:[#allocation2 + $0x90] sm:$0xff]
      %v511 = vld [vmem:[#allocation2 + $0x98] sm:$0xff]
      %v512 = vld [vmem:[#allocation2 + $0xa8] sm:$0xff]
      %v513 = vld [vmem:[#allocation2 + $0xb0] sm:$0xff]
      %v514 = vld [vmem:[#allocation2 + $0xc0] sm:$0xff]
      %v515 = vld [vmem:[#allocation2 + $0xc8] sm:$0xff]
      %v516 = vld [vmem:[#allocation2 + $0xd8] sm:$0xff]
      %v517 = vld [vmem:[#allocation2 + $0xe0] sm:$0xff]
      %v518 = vld [vmem:[#allocation2 + $0xf0] sm:$0xff]
      %v519 = vld [vmem:[#allocation2 + $0xf8] sm:$0xff]
      %v520 = vld [vmem:[#allocation2 + $0x108] sm:$0xff]
      %v521 = vld [vmem:[#allocation2 + $0x110] sm:$0xff]
      %v522 = vld [vmem:[#allocation2 + $0x120] sm:$0xff]
      %v523 = vld [vmem:[#allocation2 + $0x128] sm:$0xff]
      %v524 = vld [vmem:[#allocation2 + $0x138] sm:$0xff]
      %v525 = vld [vmem:[#allocation2 + $0x140] sm:$0xff]
      %v526 = vld [vmem:[#allocation2 + $0x150] sm:$0xff]
      %v527 = vld [vmem:[#allocation2 + $0x158] sm:$0xff]
      %v528 = vld [vmem:[#allocation2 + $0x168] sm:$0xff]
      %v529 = vld [vmem:[#allocation2 + $0x170] sm:$0xff]
      %v530 = vpack.c.bf16 %v499, %v498
      %v531 = vpack.c.bf16 %v501, %v500
      %v532 = vpack.c.bf16 %v503, %v502
      %v533 = vpack.c.bf16 %v505, %v504
      %v534 = vpack.c.bf16 %v507, %v506
      %v535 = vpack.c.bf16 %v509, %v508
      %v536 = vpack.c.bf16 %v511, %v510
      %v537 = vpack.c.bf16 %v513, %v512
      %v538 = vpack.c.bf16 %v515, %v514
      %v539 = vpack.c.bf16 %v517, %v516
      %v540 = vpack.c.bf16 %v519, %v518
      %v541 = vpack.c.bf16 %v521, %v520
      %v542 = vpack.c.bf16 %v523, %v522
      %v543 = vpack.c.bf16 %v525, %v524
      %v544 = vpack.c.bf16 %v527, %v526
      %v545 = vpack.c.bf16 %v529, %v528
      %v546 = vld [vmem:[%s3] sm:$0xf]
      %v547 = vld [vmem:[%s3 + $0x4] sm:$0xf]
      %v548 = vld [vmem:[%s3 + $0x8] sm:$0xf]
      %v549 = vld [vmem:[%s3 + $0xc] sm:$0xf]
      %v550 = vld [vmem:[%s3 + $0x10] sm:$0xf]
      %v551 = vld [vmem:[%s3 + $0x14] sm:$0xf]
      %v552 = vld [vmem:[%s3 + $0x18] sm:$0xf]
      %v553 = vld [vmem:[%s3 + $0x1c] sm:$0xf]
      %v554 = vld [vmem:[%s3 + $0x20] sm:$0xf]
      %v555 = vld [vmem:[%s3 + $0x24] sm:$0xf]
      %v556 = vld [vmem:[%s3 + $0x28] sm:$0xf]
      %v557 = vld [vmem:[%s3 + $0x2c] sm:$0xf]
      %v558 = vld [vmem:[%s3 + $0x30] sm:$0xf]
      %v559 = vld [vmem:[%s3 + $0x34] sm:$0xf]
      %v560 = vld [vmem:[%s3 + $0x38] sm:$0xf]
      %v561 = vld [vmem:[%s3 + $0x3c] sm:$0xf]
      %v562 = vld [vmem:[#allocation2 + $0x1] sm:$0xff]
      %v563 = vld [vmem:[#allocation2 + $0x9] sm:$0xff]
      %v564 = vld [vmem:[#allocation2 + $0x19] sm:$0xff]
      %v565 = vld [vmem:[#allocation2 + $0x21] sm:$0xff]
      %v566 = vld [vmem:[#allocation2 + $0x31] sm:$0xff]
      %v567 = vld [vmem:[#allocation2 + $0x39] sm:$0xff]
      %v568 = vld [vmem:[#allocation2 + $0x49] sm:$0xff]
      %v569 = vld [vmem:[#allocation2 + $0x51] sm:$0xff]
      %v570 = vld [vmem:[#allocation2 + $0x61] sm:$0xff]
      %v571 = vld [vmem:[#allocation2 + $0x69] sm:$0xff]
      %v572 = vld [vmem:[#allocation2 + $0x79] sm:$0xff]
      %v573 = vld [vmem:[#allocation2 + $0x81] sm:$0xff]
      %v574 = vld [vmem:[#allocation2 + $0x91] sm:$0xff]
      %v575 = vld [vmem:[#allocation2 + $0x99] sm:$0xff]
      %v576 = vld [vmem:[#allocation2 + $0xa9] sm:$0xff]
      %v577 = vld [vmem:[#allocation2 + $0xb1] sm:$0xff]
      %v578 = vld [vmem:[#allocation2 + $0xc1] sm:$0xff]
      %v579 = vld [vmem:[#allocation2 + $0xc9] sm:$0xff]
      %v580 = vld [vmem:[#allocation2 + $0xd9] sm:$0xff]
      %v581 = vld [vmem:[#allocation2 + $0xe1] sm:$0xff]
      %v582 = vld [vmem:[#allocation2 + $0xf1] sm:$0xff]
      %v583 = vld [vmem:[#allocation2 + $0xf9] sm:$0xff]
      %v584 = vld [vmem:[#allocation2 + $0x109] sm:$0xff]
      %v585 = vld [vmem:[#allocation2 + $0x111] sm:$0xff]
      %v586 = vld [vmem:[#allocation2 + $0x121] sm:$0xff]
      %v587 = vld [vmem:[#allocation2 + $0x129] sm:$0xff]
      %v588 = vld [vmem:[#allocation2 + $0x139] sm:$0xff]
      %v589 = vld [vmem:[#allocation2 + $0x141] sm:$0xff]
      %v590 = vld [vmem:[#allocation2 + $0x151] sm:$0xff]
      %v591 = vld [vmem:[#allocation2 + $0x159] sm:$0xff]
      %v592 = vld [vmem:[#allocation2 + $0x169] sm:$0xff]
      %v593 = vld [vmem:[#allocation2 + $0x171] sm:$0xff]
      %v594 = vpack.c.bf16 %v563, %v562
      %v595 = vpack.c.bf16 %v565, %v564
      %v596 = vpack.c.bf16 %v567, %v566
      %v597 = vpack.c.bf16 %v569, %v568
      %v598 = vpack.c.bf16 %v571, %v570
      %v599 = vpack.c.bf16 %v573, %v572
      %v600 = vpack.c.bf16 %v575, %v574
      %v601 = vpack.c.bf16 %v577, %v576
      %v602 = vpack.c.bf16 %v579, %v578
      %v603 = vpack.c.bf16 %v581, %v580
      %v604 = vpack.c.bf16 %v583, %v582
      %v605 = vpack.c.bf16 %v585, %v584
      %v606 = vpack.c.bf16 %v587, %v586
      %v607 = vpack.c.bf16 %v589, %v588
      %v608 = vpack.c.bf16 %v591, %v590
      %v609 = vpack.c.bf16 %v593, %v592
      %s610 = scalar_lea.vmem %s3, 64
      %v611 = vld [vmem:[%s610] sm:$0xf]
      %v612 = vld [vmem:[%s610 + $0x4] sm:$0xf]
      %v613 = vld [vmem:[%s610 + $0x8] sm:$0xf]
      %v614 = vld [vmem:[%s610 + $0xc] sm:$0xf]
      %v615 = vld [vmem:[%s610 + $0x10] sm:$0xf]
      %v616 = vld [vmem:[%s610 + $0x14] sm:$0xf]
      %v617 = vld [vmem:[%s610 + $0x18] sm:$0xf]
      %v618 = vld [vmem:[%s610 + $0x1c] sm:$0xf]
      %v619 = vld [vmem:[%s610 + $0x20] sm:$0xf]
      %v620 = vld [vmem:[%s610 + $0x24] sm:$0xf]
      %v621 = vld [vmem:[%s610 + $0x28] sm:$0xf]
      %v622 = vld [vmem:[%s610 + $0x2c] sm:$0xf]
      %v623 = vld [vmem:[%s610 + $0x30] sm:$0xf]
      %v624 = vld [vmem:[%s610 + $0x34] sm:$0xf]
      %v625 = vld [vmem:[%s610 + $0x38] sm:$0xf]
      %v626 = vld [vmem:[%s610 + $0x3c] sm:$0xf]
      %v643 = vunpack.c.l.b16 %v611
      %v644 = vunpack.c.l.b16 %v612
      %v645 = vunpack.c.l.b16 %v613
      %v646 = vunpack.c.l.b16 %v614
      %v647 = vunpack.c.l.b16 %v615
      %v648 = vunpack.c.l.b16 %v616
      %v649 = vunpack.c.l.b16 %v617
      %v650 = vunpack.c.l.b16 %v618
      %v651 = vunpack.c.l.b16 %v619
      %v652 = vunpack.c.l.b16 %v620
      %v653 = vunpack.c.l.b16 %v621
      %v654 = vunpack.c.l.b16 %v622
      %v655 = vunpack.c.l.b16 %v623
      %v656 = vunpack.c.l.b16 %v624
      %v657 = vunpack.c.l.b16 %v625
      %v658 = vunpack.c.l.b16 %v626
      %v659 = vpack.c.b16 %v644, %v643
      %v660 = vpack.c.b16 %v646, %v645
      %v661 = vpack.c.b16 %v648, %v647
      %v662 = vpack.c.b16 %v650, %v649
      %v663 = vpack.c.b16 %v652, %v651
      %v664 = vpack.c.b16 %v654, %v653
      %v665 = vpack.c.b16 %v656, %v655
      %v666 = vpack.c.b16 %v658, %v657
      %675 = vmatprep.subr.bf16.mxu0 0
      %676 = vmatpush1.bf16.msra.mxu0 %v666
      %677 = vmatprep.subr.bf16.mxu0 0
      %678 = vmatpush1.bf16.msra.mxu0 %v665
      %679 = vmatprep.subr.bf16.mxu0 0
      %680 = vmatpush1.bf16.msra.mxu0 %v664
      %681 = vmatprep.subr.bf16.mxu0 0
      %682 = vmatpush1.bf16.msra.mxu0 %v663
      %683 = vmatprep.subr.bf16.mxu0 0
      %684 = vmatpush1.bf16.msra.mxu0 %v662
      %685 = vmatprep.subr.bf16.mxu0 0
      %686 = vmatpush1.bf16.msra.mxu0 %v661
      %687 = vmatprep.subr.bf16.mxu0 0
      %688 = vmatpush1.bf16.msra.mxu0 %v660
      %689 = vmatprep.subr.bf16.mxu0 0
      %690 = vmatpush1.bf16.msra.mxu0 %v659
      %691 = vmatprep.subr.bf16.mxu0 0
      %692 = vmatpush2.bf16.msra.mxu0 0
      %693 = vmatprep.subr.bf16.mxu0 0
      %694 = vmatpush2.bf16.msra.mxu0 0
      %695 = vmatprep.subr.bf16.mxu0 0
      %696 = vmatpush2.bf16.msra.mxu0 0
      %697 = vmatprep.subr.bf16.mxu0 0
      %698 = vmatpush2.bf16.msra.mxu0 0
      %699 = vmatprep.subr.bf16.mxu0 0
      %700 = vmatpush2.bf16.msra.mxu0 0
      %701 = vmatprep.subr.bf16.mxu0 0
      %702 = vmatpush2.bf16.msra.mxu0 0
      %703 = vmatprep.subr.bf16.mxu0 0
      %704 = vmatpush2.bf16.msra.mxu0 0
      %705 = vmatprep.subr.bf16.mxu0 0
      %706 = vmatpush2.bf16.msra.mxu0 0
      %707 = vmatprep.mubr.bf16.mxu0 0
      %708 = vmatmul.mubr.bf16.gmra.mxu0 %v594
      %v709 = vpop.f32.mrf.mxu0
      %v710 = vadd.f32 0.0, %v709
      %v711 = vpop.f32.mrf.mxu0
      %v712 = vpop.f32.mrf.mxu0
      %v713 = vadd.f32 0.0, %v712
      %v714 = vpop.f32.mrf.mxu0
      %715 = vmatprep.mubr.bf16.mxu0 0
      %716 = vmatmul.mubr.bf16.gmra.mxu0 %v595
      %v717 = vpop.f32.mrf.mxu0
      %v718 = vadd.f32 0.0, %v717
      %v719 = vpop.f32.mrf.mxu0
      %v720 = vpop.f32.mrf.mxu0
      %v721 = vadd.f32 0.0, %v720
      %v722 = vpop.f32.mrf.mxu0
      %723 = vmatprep.mubr.bf16.mxu0 0
      %724 = vmatmul.mubr.bf16.gmra.mxu0 %v596
      %v725 = vpop.f32.mrf.mxu0
      %v726 = vadd.f32 0.0, %v725
      %v727 = vpop.f32.mrf.mxu0
      %v728 = vpop.f32.mrf.mxu0
      %v729 = vadd.f32 0.0, %v728
      %v730 = vpop.f32.mrf.mxu0
      %731 = vmatprep.mubr.bf16.mxu0 0
      %732 = vmatmul.mubr.bf16.gmra.mxu0 %v597
      %v733 = vpop.f32.mrf.mxu0
      %v734 = vadd.f32 0.0, %v733
      %v735 = vpop.f32.mrf.mxu0
      %v736 = vpop.f32.mrf.mxu0
      %v737 = vadd.f32 0.0, %v736
      %v738 = vpop.f32.mrf.mxu0
      %739 = vmatprep.mubr.bf16.mxu0 0
      %740 = vmatmul.mubr.bf16.gmra.mxu0 %v598
      %v741 = vpop.f32.mrf.mxu0
      %v742 = vadd.f32 0.0, %v741
      %v743 = vpop.f32.mrf.mxu0
      %v744 = vpop.f32.mrf.mxu0
      %v745 = vadd.f32 0.0, %v744
      %v746 = vpop.f32.mrf.mxu0
      %747 = vmatprep.mubr.bf16.mxu0 0
      %748 = vmatmul.mubr.bf16.gmra.mxu0 %v599
      %v749 = vpop.f32.mrf.mxu0
      %v750 = vadd.f32 0.0, %v749
      %v751 = vpop.f32.mrf.mxu0
      %v752 = vpop.f32.mrf.mxu0
      %v753 = vadd.f32 0.0, %v752
      %v754 = vpop.f32.mrf.mxu0
      %755 = vmatprep.mubr.bf16.mxu0 0
      %756 = vmatmul.mubr.bf16.gmra.mxu0 %v600
      %v757 = vpop.f32.mrf.mxu0
      %v758 = vadd.f32 0.0, %v757
      %v759 = vpop.f32.mrf.mxu0
      %v760 = vpop.f32.mrf.mxu0
      %v761 = vadd.f32 0.0, %v760
      %v762 = vpop.f32.mrf.mxu0
      %763 = vmatprep.mubr.bf16.mxu0 0
      %764 = vmatmul.mubr.bf16.gmra.mxu0 %v601
      %v765 = vpop.f32.mrf.mxu0
      %v766 = vadd.f32 0.0, %v765
      %v767 = vpop.f32.mrf.mxu0
      %v768 = vpop.f32.mrf.mxu0
      %v769 = vadd.f32 0.0, %v768
      %v770 = vpop.f32.mrf.mxu0
      %771 = vmatprep.mubr.bf16.mxu0 0
      %772 = vmatmul.mubr.bf16.gmra.mxu0 %v602
      %v773 = vpop.f32.mrf.mxu0
      %v774 = vadd.f32 0.0, %v773
      %v775 = vpop.f32.mrf.mxu0
      %v776 = vpop.f32.mrf.mxu0
      %v777 = vadd.f32 0.0, %v776
      %v778 = vpop.f32.mrf.mxu0
      %779 = vmatprep.mubr.bf16.mxu0 0
      %780 = vmatmul.mubr.bf16.gmra.mxu0 %v603
      %v781 = vpop.f32.mrf.mxu0
      %v782 = vadd.f32 0.0, %v781
      %v783 = vpop.f32.mrf.mxu0
      %v784 = vpop.f32.mrf.mxu0
      %v785 = vadd.f32 0.0, %v784
      %v786 = vpop.f32.mrf.mxu0
      %787 = vmatprep.mubr.bf16.mxu0 0
      %788 = vmatmul.mubr.bf16.gmra.mxu0 %v604
      %v789 = vpop.f32.mrf.mxu0
      %v790 = vadd.f32 0.0, %v789
      %v791 = vpop.f32.mrf.mxu0
      %v792 = vpop.f32.mrf.mxu0
      %v793 = vadd.f32 0.0, %v792
      %v794 = vpop.f32.mrf.mxu0
      %795 = vmatprep.mubr.bf16.mxu0 0
      %796 = vmatmul.mubr.bf16.gmra.mxu0 %v605
      %v797 = vpop.f32.mrf.mxu0
      %v798 = vadd.f32 0.0, %v797
      %v799 = vpop.f32.mrf.mxu0
      %v800 = vpop.f32.mrf.mxu0
      %v801 = vadd.f32 0.0, %v800
      %v802 = vpop.f32.mrf.mxu0
      %803 = vmatprep.mubr.bf16.mxu0 0
      %804 = vmatmul.mubr.bf16.gmra.mxu0 %v606
      %v805 = vpop.f32.mrf.mxu0
      %v806 = vadd.f32 0.0, %v805
      %v807 = vpop.f32.mrf.mxu0
      %v808 = vpop.f32.mrf.mxu0
      %v809 = vadd.f32 0.0, %v808
      %v810 = vpop.f32.mrf.mxu0
      %811 = vmatprep.mubr.bf16.mxu0 0
      %812 = vmatmul.mubr.bf16.gmra.mxu0 %v607
      %v813 = vpop.f32.mrf.mxu0
      %v814 = vadd.f32 0.0, %v813
      %v815 = vpop.f32.mrf.mxu0
      %v816 = vpop.f32.mrf.mxu0
      %v817 = vadd.f32 0.0, %v816
      %v818 = vpop.f32.mrf.mxu0
      %819 = vmatprep.mubr.bf16.mxu0 0
      %820 = vmatmul.mubr.bf16.gmra.mxu0 %v608
      %v821 = vpop.f32.mrf.mxu0
      %v822 = vadd.f32 0.0, %v821
      %v823 = vpop.f32.mrf.mxu0
      %v824 = vpop.f32.mrf.mxu0
      %v825 = vadd.f32 0.0, %v824
      %v826 = vpop.f32.mrf.mxu0
      %827 = vmatprep.mubr.bf16.mxu0 0
      %828 = vmatmul.mubr.bf16.gmra.mxu0 %v609
      %v829 = vpop.f32.mrf.mxu0
      %v830 = vadd.f32 0.0, %v829
      %v831 = vpop.f32.mrf.mxu0
      %v832 = vpop.f32.mrf.mxu0
      %v833 = vadd.f32 0.0, %v832
      %v834 = vpop.f32.mrf.mxu0
      %835 = vdwg.mxu0
      %v852 = vunpack.c.l.b16 %v546
      %v853 = vunpack.c.l.b16 %v547
      %v854 = vunpack.c.l.b16 %v548
      %v855 = vunpack.c.l.b16 %v549
      %v856 = vunpack.c.l.b16 %v550
      %v857 = vunpack.c.l.b16 %v551
      %v858 = vunpack.c.l.b16 %v552
      %v859 = vunpack.c.l.b16 %v553
      %v860 = vunpack.c.l.b16 %v554
      %v861 = vunpack.c.l.b16 %v555
      %v862 = vunpack.c.l.b16 %v556
      %v863 = vunpack.c.l.b16 %v557
      %v864 = vunpack.c.l.b16 %v558
      %v865 = vunpack.c.l.b16 %v559
      %v866 = vunpack.c.l.b16 %v560
      %v867 = vunpack.c.l.b16 %v561
      %v868 = vpack.c.b16 %v853, %v852
      %v869 = vpack.c.b16 %v855, %v854
      %v870 = vpack.c.b16 %v857, %v856
      %v871 = vpack.c.b16 %v859, %v858
      %v872 = vpack.c.b16 %v861, %v860
      %v873 = vpack.c.b16 %v863, %v862
      %v874 = vpack.c.b16 %v865, %v864
      %v875 = vpack.c.b16 %v867, %v866
      %884 = vmatprep.subr.bf16.mxu0 0
      %885 = vmatpush1.bf16.msra.mxu0 %v875
      %886 = vmatprep.subr.bf16.mxu0 0
      %887 = vmatpush1.bf16.msra.mxu0 %v874
      %888 = vmatprep.subr.bf16.mxu0 0
      %889 = vmatpush1.bf16.msra.mxu0 %v873
      %890 = vmatprep.subr.bf16.mxu0 0
      %891 = vmatpush1.bf16.msra.mxu0 %v872
      %892 = vmatprep.subr.bf16.mxu0 0
      %893 = vmatpush1.bf16.msra.mxu0 %v871
      %894 = vmatprep.subr.bf16.mxu0 0
      %895 = vmatpush1.bf16.msra.mxu0 %v870
      %896 = vmatprep.subr.bf16.mxu0 0
      %897 = vmatpush1.bf16.msra.mxu0 %v869
      %898 = vmatprep.subr.bf16.mxu0 0
      %899 = vmatpush1.bf16.msra.mxu0 %v868
      %900 = vmatprep.subr.bf16.mxu0 0
      %901 = vmatpush2.bf16.msra.mxu0 0
      %902 = vmatprep.subr.bf16.mxu0 0
      %903 = vmatpush2.bf16.msra.mxu0 0
      %904 = vmatprep.subr.bf16.mxu0 0
      %905 = vmatpush2.bf16.msra.mxu0 0
      %906 = vmatprep.subr.bf16.mxu0 0
      %907 = vmatpush2.bf16.msra.mxu0 0
      %908 = vmatprep.subr.bf16.mxu0 0
      %909 = vmatpush2.bf16.msra.mxu0 0
      %910 = vmatprep.subr.bf16.mxu0 0
      %911 = vmatpush2.bf16.msra.mxu0 0
      %912 = vmatprep.subr.bf16.mxu0 0
      %913 = vmatpush2.bf16.msra.mxu0 0
      %914 = vmatprep.subr.bf16.mxu0 0
      %915 = vmatpush2.bf16.msra.mxu0 0
      %916 = vmatprep.mubr.bf16.mxu0 0
      %917 = vmatmul.mubr.bf16.gmra.mxu0 %v530
      %v918 = vpop.f32.mrf.mxu0
      %v919 = vadd.f32 %v710, %v918
      %v920 = vpop.f32.mrf.mxu0
      %v921 = vpop.f32.mrf.mxu0
      %v922 = vadd.f32 %v713, %v921
      %v923 = vpop.f32.mrf.mxu0
      %924 = vmatprep.mubr.bf16.mxu0 0
      %925 = vmatmul.mubr.bf16.gmra.mxu0 %v531
      %v926 = vpop.f32.mrf.mxu0
      %v927 = vadd.f32 %v718, %v926
      %v928 = vpop.f32.mrf.mxu0
      %v929 = vpop.f32.mrf.mxu0
      %v930 = vadd.f32 %v721, %v929
      %v931 = vpop.f32.mrf.mxu0
      %932 = vmatprep.mubr.bf16.mxu0 0
      %933 = vmatmul.mubr.bf16.gmra.mxu0 %v532
      %v934 = vpop.f32.mrf.mxu0
      %v935 = vadd.f32 %v726, %v934
      %v936 = vpop.f32.mrf.mxu0
      %v937 = vpop.f32.mrf.mxu0
      %v938 = vadd.f32 %v729, %v937
      %v939 = vpop.f32.mrf.mxu0
      %940 = vmatprep.mubr.bf16.mxu0 0
      %941 = vmatmul.mubr.bf16.gmra.mxu0 %v533
      %v942 = vpop.f32.mrf.mxu0
      %v943 = vadd.f32 %v734, %v942
      %v944 = vpop.f32.mrf.mxu0
      %v945 = vpop.f32.mrf.mxu0
      %v946 = vadd.f32 %v737, %v945
      %v947 = vpop.f32.mrf.mxu0
      %948 = vmatprep.mubr.bf16.mxu0 0
      %949 = vmatmul.mubr.bf16.gmra.mxu0 %v534
      %v950 = vpop.f32.mrf.mxu0
      %v951 = vadd.f32 %v742, %v950
      %v952 = vpop.f32.mrf.mxu0
      %v953 = vpop.f32.mrf.mxu0
      %v954 = vadd.f32 %v745, %v953
      %v955 = vpop.f32.mrf.mxu0
      %956 = vmatprep.mubr.bf16.mxu0 0
      %957 = vmatmul.mubr.bf16.gmra.mxu0 %v535
      %v958 = vpop.f32.mrf.mxu0
      %v959 = vadd.f32 %v750, %v958
      %v960 = vpop.f32.mrf.mxu0
      %v961 = vpop.f32.mrf.mxu0
      %v962 = vadd.f32 %v753, %v961
      %v963 = vpop.f32.mrf.mxu0
      %964 = vmatprep.mubr.bf16.mxu0 0
      %965 = vmatmul.mubr.bf16.gmra.mxu0 %v536
      %v966 = vpop.f32.mrf.mxu0
      %v967 = vadd.f32 %v758, %v966
      %v968 = vpop.f32.mrf.mxu0
      %v969 = vpop.f32.mrf.mxu0
      %v970 = vadd.f32 %v761, %v969
      %v971 = vpop.f32.mrf.mxu0
      %972 = vmatprep.mubr.bf16.mxu0 0
      %973 = vmatmul.mubr.bf16.gmra.mxu0 %v537
      %v974 = vpop.f32.mrf.mxu0
      %v975 = vadd.f32 %v766, %v974
      %v976 = vpop.f32.mrf.mxu0
      %v977 = vpop.f32.mrf.mxu0
      %v978 = vadd.f32 %v769, %v977
      %v979 = vpop.f32.mrf.mxu0
      %980 = vmatprep.mubr.bf16.mxu0 0
      %981 = vmatmul.mubr.bf16.gmra.mxu0 %v538
      %v982 = vpop.f32.mrf.mxu0
      %v983 = vadd.f32 %v774, %v982
      %v984 = vpop.f32.mrf.mxu0
      %v985 = vpop.f32.mrf.mxu0
      %v986 = vadd.f32 %v777, %v985
      %v987 = vpop.f32.mrf.mxu0
      %988 = vmatprep.mubr.bf16.mxu0 0
      %989 = vmatmul.mubr.bf16.gmra.mxu0 %v539
      %v990 = vpop.f32.mrf.mxu0
      %v991 = vadd.f32 %v782, %v990
      %v992 = vpop.f32.mrf.mxu0
      %v993 = vpop.f32.mrf.mxu0
      %v994 = vadd.f32 %v785, %v993
      %v995 = vpop.f32.mrf.mxu0
      %996 = vmatprep.mubr.bf16.mxu0 0
      %997 = vmatmul.mubr.bf16.gmra.mxu0 %v540
      %v998 = vpop.f32.mrf.mxu0
      %v999 = vadd.f32 %v790, %v998
      %v1000 = vpop.f32.mrf.mxu0
      %v1001 = vpop.f32.mrf.mxu0
      %v1002 = vadd.f32 %v793, %v1001
      %v1003 = vpop.f32.mrf.mxu0
      %1004 = vmatprep.mubr.bf16.mxu0 0
      %1005 = vmatmul.mubr.bf16.gmra.mxu0 %v541
      %v1006 = vpop.f32.mrf.mxu0
      %v1007 = vadd.f32 %v798, %v1006
      %v1008 = vpop.f32.mrf.mxu0
      %v1009 = vpop.f32.mrf.mxu0
      %v1010 = vadd.f32 %v801, %v1009
      %v1011 = vpop.f32.mrf.mxu0
      %1012 = vmatprep.mubr.bf16.mxu0 0
      %1013 = vmatmul.mubr.bf16.gmra.mxu0 %v542
      %v1014 = vpop.f32.mrf.mxu0
      %v1015 = vadd.f32 %v806, %v1014
      %v1016 = vpop.f32.mrf.mxu0
      %v1017 = vpop.f32.mrf.mxu0
      %v1018 = vadd.f32 %v809, %v1017
      %v1019 = vpop.f32.mrf.mxu0
      %1020 = vmatprep.mubr.bf16.mxu0 0
      %1021 = vmatmul.mubr.bf16.gmra.mxu0 %v543
      %v1022 = vpop.f32.mrf.mxu0
      %v1023 = vadd.f32 %v814, %v1022
      %v1024 = vpop.f32.mrf.mxu0
      %v1025 = vpop.f32.mrf.mxu0
      %v1026 = vadd.f32 %v817, %v1025
      %v1027 = vpop.f32.mrf.mxu0
      %1028 = vmatprep.mubr.bf16.mxu0 0
      %1029 = vmatmul.mubr.bf16.gmra.mxu0 %v544
      %v1030 = vpop.f32.mrf.mxu0
      %v1031 = vadd.f32 %v822, %v1030
      %v1032 = vpop.f32.mrf.mxu0
      %v1033 = vpop.f32.mrf.mxu0
      %v1034 = vadd.f32 %v825, %v1033
      %v1035 = vpop.f32.mrf.mxu0
      %1036 = vmatprep.mubr.bf16.mxu0 0
      %1037 = vmatmul.mubr.bf16.gmra.mxu0 %v545
      %v1038 = vpop.f32.mrf.mxu0
      %v1039 = vadd.f32 %v830, %v1038
      %v1040 = vpop.f32.mrf.mxu0
      %v1041 = vpop.f32.mrf.mxu0
      %v1042 = vadd.f32 %v833, %v1041
      %v1043 = vpop.f32.mrf.mxu0
      %1044 = vdwg.mxu0
      %v1045 = vld [vmem:[#allocation2 + $0x2] sm:$0xff]
      %v1046 = vld [vmem:[#allocation2 + $0xa] sm:$0xff]
      %v1047 = vld [vmem:[#allocation2 + $0x1a] sm:$0xff]
      %v1048 = vld [vmem:[#allocation2 + $0x22] sm:$0xff]
      %v1049 = vld [vmem:[#allocation2 + $0x32] sm:$0xff]
      %v1050 = vld [vmem:[#allocation2 + $0x3a] sm:$0xff]
      %v1051 = vld [vmem:[#allocation2 + $0x4a] sm:$0xff]
      %v1052 = vld [vmem:[#allocation2 + $0x52] sm:$0xff]
      %v1053 = vld [vmem:[#allocation2 + $0x62] sm:$0xff]
      %v1054 = vld [vmem:[#allocation2 + $0x6a] sm:$0xff]
      %v1055 = vld [vmem:[#allocation2 + $0x7a] sm:$0xff]
      %v1056 = vld [vmem:[#allocation2 + $0x82] sm:$0xff]
      %v1057 = vld [vmem:[#allocation2 + $0x92] sm:$0xff]
      %v1058 = vld [vmem:[#allocation2 + $0x9a] sm:$0xff]
      %v1059 = vld [vmem:[#allocation2 + $0xaa] sm:$0xff]
      %v1060 = vld [vmem:[#allocation2 + $0xb2] sm:$0xff]
      %v1061 = vld [vmem:[#allocation2 + $0xc2] sm:$0xff]
      %v1062 = vld [vmem:[#allocation2 + $0xca] sm:$0xff]
      %v1063 = vld [vmem:[#allocation2 + $0xda] sm:$0xff]
      %v1064 = vld [vmem:[#allocation2 + $0xe2] sm:$0xff]
      %v1065 = vld [vmem:[#allocation2 + $0xf2] sm:$0xff]
      %v1066 = vld [vmem:[#allocation2 + $0xfa] sm:$0xff]
      %v1067 = vld [vmem:[#allocation2 + $0x10a] sm:$0xff]
      %v1068 = vld [vmem:[#allocation2 + $0x112] sm:$0xff]
      %v1069 = vld [vmem:[#allocation2 + $0x122] sm:$0xff]
      %v1070 = vld [vmem:[#allocation2 + $0x12a] sm:$0xff]
      %v1071 = vld [vmem:[#allocation2 + $0x13a] sm:$0xff]
      %v1072 = vld [vmem:[#allocation2 + $0x142] sm:$0xff]
      %v1073 = vld [vmem:[#allocation2 + $0x152] sm:$0xff]
      %v1074 = vld [vmem:[#allocation2 + $0x15a] sm:$0xff]
      %v1075 = vld [vmem:[#allocation2 + $0x16a] sm:$0xff]
      %v1076 = vld [vmem:[#allocation2 + $0x172] sm:$0xff]
      %v1077 = vpack.c.bf16 %v1046, %v1045
      %v1078 = vpack.c.bf16 %v1048, %v1047
      %v1079 = vpack.c.bf16 %v1050, %v1049
      %v1080 = vpack.c.bf16 %v1052, %v1051
      %v1081 = vpack.c.bf16 %v1054, %v1053
      %v1082 = vpack.c.bf16 %v1056, %v1055
      %v1083 = vpack.c.bf16 %v1058, %v1057
      %v1084 = vpack.c.bf16 %v1060, %v1059
      %v1085 = vpack.c.bf16 %v1062, %v1061
      %v1086 = vpack.c.bf16 %v1064, %v1063
      %v1087 = vpack.c.bf16 %v1066, %v1065
      %v1088 = vpack.c.bf16 %v1068, %v1067
      %v1089 = vpack.c.bf16 %v1070, %v1069
      %v1090 = vpack.c.bf16 %v1072, %v1071
      %v1091 = vpack.c.bf16 %v1074, %v1073
      %v1092 = vpack.c.bf16 %v1076, %v1075
      %s1093 = scalar_lea.vmem %s3, 128
      %v1094 = vld [vmem:[%s1093] sm:$0xf]
      %v1095 = vld [vmem:[%s1093 + $0x4] sm:$0xf]
      %v1096 = vld [vmem:[%s1093 + $0x8] sm:$0xf]
      %v1097 = vld [vmem:[%s1093 + $0xc] sm:$0xf]
      %v1098 = vld [vmem:[%s1093 + $0x10] sm:$0xf]
      %v1099 = vld [vmem:[%s1093 + $0x14] sm:$0xf]
      %v1100 = vld [vmem:[%s1093 + $0x18] sm:$0xf]
      %v1101 = vld [vmem:[%s1093 + $0x1c] sm:$0xf]
      %v1102 = vld [vmem:[%s1093 + $0x20] sm:$0xf]
      %v1103 = vld [vmem:[%s1093 + $0x24] sm:$0xf]
      %v1104 = vld [vmem:[%s1093 + $0x28] sm:$0xf]
      %v1105 = vld [vmem:[%s1093 + $0x2c] sm:$0xf]
      %v1106 = vld [vmem:[%s1093 + $0x30] sm:$0xf]
      %v1107 = vld [vmem:[%s1093 + $0x34] sm:$0xf]
      %v1108 = vld [vmem:[%s1093 + $0x38] sm:$0xf]
      %v1109 = vld [vmem:[%s1093 + $0x3c] sm:$0xf]
      %v1126 = vunpack.c.l.b16 %v1094
      %v1127 = vunpack.c.l.b16 %v1095
      %v1128 = vunpack.c.l.b16 %v1096
      %v1129 = vunpack.c.l.b16 %v1097
      %v1130 = vunpack.c.l.b16 %v1098
      %v1131 = vunpack.c.l.b16 %v1099
      %v1132 = vunpack.c.l.b16 %v1100
      %v1133 = vunpack.c.l.b16 %v1101
      %v1134 = vunpack.c.l.b16 %v1102
      %v1135 = vunpack.c.l.b16 %v1103
      %v1136 = vunpack.c.l.b16 %v1104
      %v1137 = vunpack.c.l.b16 %v1105
      %v1138 = vunpack.c.l.b16 %v1106
      %v1139 = vunpack.c.l.b16 %v1107
      %v1140 = vunpack.c.l.b16 %v1108
      %v1141 = vunpack.c.l.b16 %v1109
      %v1142 = vpack.c.b16 %v1127, %v1126
      %v1143 = vpack.c.b16 %v1129, %v1128
      %v1144 = vpack.c.b16 %v1131, %v1130
      %v1145 = vpack.c.b16 %v1133, %v1132
      %v1146 = vpack.c.b16 %v1135, %v1134
      %v1147 = vpack.c.b16 %v1137, %v1136
      %v1148 = vpack.c.b16 %v1139, %v1138
      %v1149 = vpack.c.b16 %v1141, %v1140
      %1158 = vmatprep.subr.bf16.mxu0 0
      %1159 = vmatpush1.bf16.msra.mxu0 %v1149
      %1160 = vmatprep.subr.bf16.mxu0 0
      %1161 = vmatpush1.bf16.msra.mxu0 %v1148
      %1162 = vmatprep.subr.bf16.mxu0 0
      %1163 = vmatpush1.bf16.msra.mxu0 %v1147
      %1164 = vmatprep.subr.bf16.mxu0 0
      %1165 = vmatpush1.bf16.msra.mxu0 %v1146
      %1166 = vmatprep.subr.bf16.mxu0 0
      %1167 = vmatpush1.bf16.msra.mxu0 %v1145
      %1168 = vmatprep.subr.bf16.mxu0 0
      %1169 = vmatpush1.bf16.msra.mxu0 %v1144
      %1170 = vmatprep.subr.bf16.mxu0 0
      %1171 = vmatpush1.bf16.msra.mxu0 %v1143
      %1172 = vmatprep.subr.bf16.mxu0 0
      %1173 = vmatpush1.bf16.msra.mxu0 %v1142
      %1174 = vmatprep.subr.bf16.mxu0 0
      %1175 = vmatpush2.bf16.msra.mxu0 0
      %1176 = vmatprep.subr.bf16.mxu0 0
      %1177 = vmatpush2.bf16.msra.mxu0 0
      %1178 = vmatprep.subr.bf16.mxu0 0
      %1179 = vmatpush2.bf16.msra.mxu0 0
      %1180 = vmatprep.subr.bf16.mxu0 0
      %1181 = vmatpush2.bf16.msra.mxu0 0
      %1182 = vmatprep.subr.bf16.mxu0 0
      %1183 = vmatpush2.bf16.msra.mxu0 0
      %1184 = vmatprep.subr.bf16.mxu0 0
      %1185 = vmatpush2.bf16.msra.mxu0 0
      %1186 = vmatprep.subr.bf16.mxu0 0
      %1187 = vmatpush2.bf16.msra.mxu0 0
      %1188 = vmatprep.subr.bf16.mxu0 0
      %1189 = vmatpush2.bf16.msra.mxu0 0
      %1190 = vmatprep.mubr.bf16.mxu0 0
      %1191 = vmatmul.mubr.bf16.gmra.mxu0 %v1077
      %v1192 = vpop.f32.mrf.mxu0
      %v1193 = vadd.f32 0.0, %v1192
      %v1194 = vpop.f32.mrf.mxu0
      %v1195 = vpop.f32.mrf.mxu0
      %v1196 = vadd.f32 0.0, %v1195
      %v1197 = vpop.f32.mrf.mxu0
      %1198 = vmatprep.mubr.bf16.mxu0 0
      %1199 = vmatmul.mubr.bf16.gmra.mxu0 %v1078
      %v1200 = vpop.f32.mrf.mxu0
      %v1201 = vadd.f32 0.0, %v1200
      %v1202 = vpop.f32.mrf.mxu0
      %v1203 = vpop.f32.mrf.mxu0
      %v1204 = vadd.f32 0.0, %v1203
      %v1205 = vpop.f32.mrf.mxu0
      %1206 = vmatprep.mubr.bf16.mxu0 0
      %1207 = vmatmul.mubr.bf16.gmra.mxu0 %v1079
      %v1208 = vpop.f32.mrf.mxu0
      %v1209 = vadd.f32 0.0, %v1208
      %v1210 = vpop.f32.mrf.mxu0
      %v1211 = vpop.f32.mrf.mxu0
      %v1212 = vadd.f32 0.0, %v1211
      %v1213 = vpop.f32.mrf.mxu0
      %1214 = vmatprep.mubr.bf16.mxu0 0
      %1215 = vmatmul.mubr.bf16.gmra.mxu0 %v1080
      %v1216 = vpop.f32.mrf.mxu0
      %v1217 = vadd.f32 0.0, %v1216
      %v1218 = vpop.f32.mrf.mxu0
      %v1219 = vpop.f32.mrf.mxu0
      %v1220 = vadd.f32 0.0, %v1219
      %v1221 = vpop.f32.mrf.mxu0
      %1222 = vmatprep.mubr.bf16.mxu0 0
      %1223 = vmatmul.mubr.bf16.gmra.mxu0 %v1081
      %v1224 = vpop.f32.mrf.mxu0
      %v1225 = vadd.f32 0.0, %v1224
      %v1226 = vpop.f32.mrf.mxu0
      %v1227 = vpop.f32.mrf.mxu0
      %v1228 = vadd.f32 0.0, %v1227
      %v1229 = vpop.f32.mrf.mxu0
      %1230 = vmatprep.mubr.bf16.mxu0 0
      %1231 = vmatmul.mubr.bf16.gmra.mxu0 %v1082
      %v1232 = vpop.f32.mrf.mxu0
      %v1233 = vadd.f32 0.0, %v1232
      %v1234 = vpop.f32.mrf.mxu0
      %v1235 = vpop.f32.mrf.mxu0
      %v1236 = vadd.f32 0.0, %v1235
      %v1237 = vpop.f32.mrf.mxu0
      %1238 = vmatprep.mubr.bf16.mxu0 0
      %1239 = vmatmul.mubr.bf16.gmra.mxu0 %v1083
      %v1240 = vpop.f32.mrf.mxu0
      %v1241 = vadd.f32 0.0, %v1240
      %v1242 = vpop.f32.mrf.mxu0
      %v1243 = vpop.f32.mrf.mxu0
      %v1244 = vadd.f32 0.0, %v1243
      %v1245 = vpop.f32.mrf.mxu0
      %1246 = vmatprep.mubr.bf16.mxu0 0
      %1247 = vmatmul.mubr.bf16.gmra.mxu0 %v1084
      %v1248 = vpop.f32.mrf.mxu0
      %v1249 = vadd.f32 0.0, %v1248
      %v1250 = vpop.f32.mrf.mxu0
      %v1251 = vpop.f32.mrf.mxu0
      %v1252 = vadd.f32 0.0, %v1251
      %v1253 = vpop.f32.mrf.mxu0
      %1254 = vmatprep.mubr.bf16.mxu0 0
      %1255 = vmatmul.mubr.bf16.gmra.mxu0 %v1085
      %v1256 = vpop.f32.mrf.mxu0
      %v1257 = vadd.f32 0.0, %v1256
      %v1258 = vpop.f32.mrf.mxu0
      %v1259 = vpop.f32.mrf.mxu0
      %v1260 = vadd.f32 0.0, %v1259
      %v1261 = vpop.f32.mrf.mxu0
      %1262 = vmatprep.mubr.bf16.mxu0 0
      %1263 = vmatmul.mubr.bf16.gmra.mxu0 %v1086
      %v1264 = vpop.f32.mrf.mxu0
      %v1265 = vadd.f32 0.0, %v1264
      %v1266 = vpop.f32.mrf.mxu0
      %v1267 = vpop.f32.mrf.mxu0
      %v1268 = vadd.f32 0.0, %v1267
      %v1269 = vpop.f32.mrf.mxu0
      %1270 = vmatprep.mubr.bf16.mxu0 0
      %1271 = vmatmul.mubr.bf16.gmra.mxu0 %v1087
      %v1272 = vpop.f32.mrf.mxu0
      %v1273 = vadd.f32 0.0, %v1272
      %v1274 = vpop.f32.mrf.mxu0
      %v1275 = vpop.f32.mrf.mxu0
      %v1276 = vadd.f32 0.0, %v1275
      %v1277 = vpop.f32.mrf.mxu0
      %1278 = vmatprep.mubr.bf16.mxu0 0
      %1279 = vmatmul.mubr.bf16.gmra.mxu0 %v1088
      %v1280 = vpop.f32.mrf.mxu0
      %v1281 = vadd.f32 0.0, %v1280
      %v1282 = vpop.f32.mrf.mxu0
      %v1283 = vpop.f32.mrf.mxu0
      %v1284 = vadd.f32 0.0, %v1283
      %v1285 = vpop.f32.mrf.mxu0
      %1286 = vmatprep.mubr.bf16.mxu0 0
      %1287 = vmatmul.mubr.bf16.gmra.mxu0 %v1089
      %v1288 = vpop.f32.mrf.mxu0
      %v1289 = vadd.f32 0.0, %v1288
      %v1290 = vpop.f32.mrf.mxu0
      %v1291 = vpop.f32.mrf.mxu0
      %v1292 = vadd.f32 0.0, %v1291
      %v1293 = vpop.f32.mrf.mxu0
      %1294 = vmatprep.mubr.bf16.mxu0 0
      %1295 = vmatmul.mubr.bf16.gmra.mxu0 %v1090
      %v1296 = vpop.f32.mrf.mxu0
      %v1297 = vadd.f32 0.0, %v1296
      %v1298 = vpop.f32.mrf.mxu0
      %v1299 = vpop.f32.mrf.mxu0
      %v1300 = vadd.f32 0.0, %v1299
      %v1301 = vpop.f32.mrf.mxu0
      %1302 = vmatprep.mubr.bf16.mxu0 0
      %1303 = vmatmul.mubr.bf16.gmra.mxu0 %v1091
      %v1304 = vpop.f32.mrf.mxu0
      %v1305 = vadd.f32 0.0, %v1304
      %v1306 = vpop.f32.mrf.mxu0
      %v1307 = vpop.f32.mrf.mxu0
      %v1308 = vadd.f32 0.0, %v1307
      %v1309 = vpop.f32.mrf.mxu0
      %1310 = vmatprep.mubr.bf16.mxu0 0
      %1311 = vmatmul.mubr.bf16.gmra.mxu0 %v1092
      %v1312 = vpop.f32.mrf.mxu0
      %v1313 = vadd.f32 0.0, %v1312
      %v1314 = vpop.f32.mrf.mxu0
      %v1315 = vpop.f32.mrf.mxu0
      %v1316 = vadd.f32 0.0, %v1315
      %v1317 = vpop.f32.mrf.mxu0
      %1318 = vdwg.mxu0
      %v1319 = vadd.f32 %v919, %v1193
      %v1320 = vadd.f32 %v922, %v1196
      %v1321 = vadd.f32 %v927, %v1201
      %v1322 = vadd.f32 %v930, %v1204
      %v1323 = vadd.f32 %v935, %v1209
      %v1324 = vadd.f32 %v938, %v1212
      %v1325 = vadd.f32 %v943, %v1217
      %v1326 = vadd.f32 %v946, %v1220
      %v1327 = vadd.f32 %v951, %v1225
      %v1328 = vadd.f32 %v954, %v1228
      %v1329 = vadd.f32 %v959, %v1233
      %v1330 = vadd.f32 %v962, %v1236
      %v1331 = vadd.f32 %v967, %v1241
      %v1332 = vadd.f32 %v970, %v1244
      %v1333 = vadd.f32 %v975, %v1249
      %v1334 = vadd.f32 %v978, %v1252
      %v1335 = vadd.f32 %v983, %v1257
      %v1336 = vadd.f32 %v986, %v1260
      %v1337 = vadd.f32 %v991, %v1265
      %v1338 = vadd.f32 %v994, %v1268
      %v1339 = vadd.f32 %v999, %v1273
      %v1340 = vadd.f32 %v1002, %v1276
      %v1341 = vadd.f32 %v1007, %v1281
      %v1342 = vadd.f32 %v1010, %v1284
      %v1343 = vadd.f32 %v1015, %v1289
      %v1344 = vadd.f32 %v1018, %v1292
      %v1345 = vadd.f32 %v1023, %v1297
      %v1346 = vadd.f32 %v1026, %v1300
      %v1347 = vadd.f32 %v1031, %v1305
      %v1348 = vadd.f32 %v1034, %v1308
      %v1349 = vadd.f32 %v1039, %v1313
      %v1350 = vadd.f32 %v1042, %v1316
      %v1351 = vld [vmem:[%s465] sm:$0xff]
      %v1352 = vld [vmem:[%s465 + $0x8] sm:$0xff]
      %v1353 = vld [vmem:[%s465 + $0x18] sm:$0xff]
      %v1354 = vld [vmem:[%s465 + $0x20] sm:$0xff]
      %v1355 = vld [vmem:[%s465 + $0x30] sm:$0xff]
      %v1356 = vld [vmem:[%s465 + $0x38] sm:$0xff]
      %v1357 = vld [vmem:[%s465 + $0x48] sm:$0xff]
      %v1358 = vld [vmem:[%s465 + $0x50] sm:$0xff]
      %v1359 = vld [vmem:[%s465 + $0x60] sm:$0xff]
      %v1360 = vld [vmem:[%s465 + $0x68] sm:$0xff]
      %v1361 = vld [vmem:[%s465 + $0x78] sm:$0xff]
      %v1362 = vld [vmem:[%s465 + $0x80] sm:$0xff]
      %v1363 = vld [vmem:[%s465 + $0x90] sm:$0xff]
      %v1364 = vld [vmem:[%s465 + $0x98] sm:$0xff]
      %v1365 = vld [vmem:[%s465 + $0xa8] sm:$0xff]
      %v1366 = vld [vmem:[%s465 + $0xb0] sm:$0xff]
      %v1367 = vld [vmem:[%s465 + $0xc0] sm:$0xff]
      %v1368 = vld [vmem:[%s465 + $0xc8] sm:$0xff]
      %v1369 = vld [vmem:[%s465 + $0xd8] sm:$0xff]
      %v1370 = vld [vmem:[%s465 + $0xe0] sm:$0xff]
      %v1371 = vld [vmem:[%s465 + $0xf0] sm:$0xff]
      %v1372 = vld [vmem:[%s465 + $0xf8] sm:$0xff]
      %v1373 = vld [vmem:[%s465 + $0x108] sm:$0xff]
      %v1374 = vld [vmem:[%s465 + $0x110] sm:$0xff]
      %v1375 = vld [vmem:[%s465 + $0x120] sm:$0xff]
      %v1376 = vld [vmem:[%s465 + $0x128] sm:$0xff]
      %v1377 = vld [vmem:[%s465 + $0x138] sm:$0xff]
      %v1378 = vld [vmem:[%s465 + $0x140] sm:$0xff]
      %v1379 = vld [vmem:[%s465 + $0x150] sm:$0xff]
      %v1380 = vld [vmem:[%s465 + $0x158] sm:$0xff]
      %v1381 = vld [vmem:[%s465 + $0x168] sm:$0xff]
      %v1382 = vld [vmem:[%s465 + $0x170] sm:$0xff]
      %v1383 = vpack.c.bf16 %v1352, %v1351
      %v1384 = vpack.c.bf16 %v1354, %v1353
      %v1385 = vpack.c.bf16 %v1356, %v1355
      %v1386 = vpack.c.bf16 %v1358, %v1357
      %v1387 = vpack.c.bf16 %v1360, %v1359
      %v1388 = vpack.c.bf16 %v1362, %v1361
      %v1389 = vpack.c.bf16 %v1364, %v1363
      %v1390 = vpack.c.bf16 %v1366, %v1365
      %v1391 = vpack.c.bf16 %v1368, %v1367
      %v1392 = vpack.c.bf16 %v1370, %v1369
      %v1393 = vpack.c.bf16 %v1372, %v1371
      %v1394 = vpack.c.bf16 %v1374, %v1373
      %v1395 = vpack.c.bf16 %v1376, %v1375
      %v1396 = vpack.c.bf16 %v1378, %v1377
      %v1397 = vpack.c.bf16 %v1380, %v1379
      %v1398 = vpack.c.bf16 %v1382, %v1381
      %s1399 = scalar_lea.vmem %s3, 192
      %v1400 = vld [vmem:[%s1399] sm:$0xf]
      %v1401 = vld [vmem:[%s1399 + $0x4] sm:$0xf]
      %v1402 = vld [vmem:[%s1399 + $0x8] sm:$0xf]
      %v1403 = vld [vmem:[%s1399 + $0xc] sm:$0xf]
      %v1404 = vld [vmem:[%s1399 + $0x10] sm:$0xf]
      %v1405 = vld [vmem:[%s1399 + $0x14] sm:$0xf]
      %v1406 = vld [vmem:[%s1399 + $0x18] sm:$0xf]
      %v1407 = vld [vmem:[%s1399 + $0x1c] sm:$0xf]
      %v1408 = vld [vmem:[%s1399 + $0x20] sm:$0xf]
      %v1409 = vld [vmem:[%s1399 + $0x24] sm:$0xf]
      %v1410 = vld [vmem:[%s1399 + $0x28] sm:$0xf]
      %v1411 = vld [vmem:[%s1399 + $0x2c] sm:$0xf]
      %v1412 = vld [vmem:[%s1399 + $0x30] sm:$0xf]
      %v1413 = vld [vmem:[%s1399 + $0x34] sm:$0xf]
      %v1414 = vld [vmem:[%s1399 + $0x38] sm:$0xf]
      %v1415 = vld [vmem:[%s1399 + $0x3c] sm:$0xf]
      %v1432 = vunpack.c.l.b16 %v1400
      %v1433 = vunpack.c.l.b16 %v1401
      %v1434 = vunpack.c.l.b16 %v1402
      %v1435 = vunpack.c.l.b16 %v1403
      %v1436 = vunpack.c.l.b16 %v1404
      %v1437 = vunpack.c.l.b16 %v1405
      %v1438 = vunpack.c.l.b16 %v1406
      %v1439 = vunpack.c.l.b16 %v1407
      %v1440 = vunpack.c.l.b16 %v1408
      %v1441 = vunpack.c.l.b16 %v1409
      %v1442 = vunpack.c.l.b16 %v1410
      %v1443 = vunpack.c.l.b16 %v1411
      %v1444 = vunpack.c.l.b16 %v1412
      %v1445 = vunpack.c.l.b16 %v1413
      %v1446 = vunpack.c.l.b16 %v1414
      %v1447 = vunpack.c.l.b16 %v1415
      %v1448 = vpack.c.b16 %v1433, %v1432
      %v1449 = vpack.c.b16 %v1435, %v1434
      %v1450 = vpack.c.b16 %v1437, %v1436
      %v1451 = vpack.c.b16 %v1439, %v1438
      %v1452 = vpack.c.b16 %v1441, %v1440
      %v1453 = vpack.c.b16 %v1443, %v1442
      %v1454 = vpack.c.b16 %v1445, %v1444
      %v1455 = vpack.c.b16 %v1447, %v1446
      %1464 = vmatprep.subr.bf16.mxu0 0
      %1465 = vmatpush1.bf16.msra.mxu0 %v1455
      %1466 = vmatprep.subr.bf16.mxu0 0
      %1467 = vmatpush1.bf16.msra.mxu0 %v1454
      %1468 = vmatprep.subr.bf16.mxu0 0
      %1469 = vmatpush1.bf16.msra.mxu0 %v1453
      %1470 = vmatprep.subr.bf16.mxu0 0
      %1471 = vmatpush1.bf16.msra.mxu0 %v1452
      %1472 = vmatprep.subr.bf16.mxu0 0
      %1473 = vmatpush1.bf16.msra.mxu0 %v1451
      %1474 = vmatprep.subr.bf16.mxu0 0
      %1475 = vmatpush1.bf16.msra.mxu0 %v1450
      %1476 = vmatprep.subr.bf16.mxu0 0
      %1477 = vmatpush1.bf16.msra.mxu0 %v1449
      %1478 = vmatprep.subr.bf16.mxu0 0
      %1479 = vmatpush1.bf16.msra.mxu0 %v1448
      %1480 = vmatprep.subr.bf16.mxu0 0
      %1481 = vmatpush2.bf16.msra.mxu0 0
      %1482 = vmatprep.subr.bf16.mxu0 0
      %1483 = vmatpush2.bf16.msra.mxu0 0
      %1484 = vmatprep.subr.bf16.mxu0 0
      %1485 = vmatpush2.bf16.msra.mxu0 0
      %1486 = vmatprep.subr.bf16.mxu0 0
      %1487 = vmatpush2.bf16.msra.mxu0 0
      %1488 = vmatprep.subr.bf16.mxu0 0
      %1489 = vmatpush2.bf16.msra.mxu0 0
      %1490 = vmatprep.subr.bf16.mxu0 0
      %1491 = vmatpush2.bf16.msra.mxu0 0
      %1492 = vmatprep.subr.bf16.mxu0 0
      %1493 = vmatpush2.bf16.msra.mxu0 0
      %1494 = vmatprep.subr.bf16.mxu0 0
      %1495 = vmatpush2.bf16.msra.mxu0 0
      %1496 = vmatprep.mubr.bf16.mxu0 0
      %1497 = vmatmul.mubr.bf16.gmra.mxu0 %v1383
      %v1498 = vpop.f32.mrf.mxu0
      %v1499 = vadd.f32 0.0, %v1498
      %v1500 = vpop.f32.mrf.mxu0
      %v1501 = vpop.f32.mrf.mxu0
      %v1502 = vadd.f32 0.0, %v1501
      %v1503 = vpop.f32.mrf.mxu0
      %1504 = vmatprep.mubr.bf16.mxu0 0
      %1505 = vmatmul.mubr.bf16.gmra.mxu0 %v1384
      %v1506 = vpop.f32.mrf.mxu0
      %v1507 = vadd.f32 0.0, %v1506
      %v1508 = vpop.f32.mrf.mxu0
      %v1509 = vpop.f32.mrf.mxu0
      %v1510 = vadd.f32 0.0, %v1509
      %v1511 = vpop.f32.mrf.mxu0
      %1512 = vmatprep.mubr.bf16.mxu0 0
      %1513 = vmatmul.mubr.bf16.gmra.mxu0 %v1385
      %v1514 = vpop.f32.mrf.mxu0
      %v1515 = vadd.f32 0.0, %v1514
      %v1516 = vpop.f32.mrf.mxu0
      %v1517 = vpop.f32.mrf.mxu0
      %v1518 = vadd.f32 0.0, %v1517
      %v1519 = vpop.f32.mrf.mxu0
      %1520 = vmatprep.mubr.bf16.mxu0 0
      %1521 = vmatmul.mubr.bf16.gmra.mxu0 %v1386
      %v1522 = vpop.f32.mrf.mxu0
      %v1523 = vadd.f32 0.0, %v1522
      %v1524 = vpop.f32.mrf.mxu0
      %v1525 = vpop.f32.mrf.mxu0
      %v1526 = vadd.f32 0.0, %v1525
      %v1527 = vpop.f32.mrf.mxu0
      %1528 = vmatprep.mubr.bf16.mxu0 0
      %1529 = vmatmul.mubr.bf16.gmra.mxu0 %v1387
      %v1530 = vpop.f32.mrf.mxu0
      %v1531 = vadd.f32 0.0, %v1530
      %v1532 = vpop.f32.mrf.mxu0
      %v1533 = vpop.f32.mrf.mxu0
      %v1534 = vadd.f32 0.0, %v1533
      %v1535 = vpop.f32.mrf.mxu0
      %1536 = vmatprep.mubr.bf16.mxu0 0
      %1537 = vmatmul.mubr.bf16.gmra.mxu0 %v1388
      %v1538 = vpop.f32.mrf.mxu0
      %v1539 = vadd.f32 0.0, %v1538
      %v1540 = vpop.f32.mrf.mxu0
      %v1541 = vpop.f32.mrf.mxu0
      %v1542 = vadd.f32 0.0, %v1541
      %v1543 = vpop.f32.mrf.mxu0
      %1544 = vmatprep.mubr.bf16.mxu0 0
      %1545 = vmatmul.mubr.bf16.gmra.mxu0 %v1389
      %v1546 = vpop.f32.mrf.mxu0
      %v1547 = vadd.f32 0.0, %v1546
      %v1548 = vpop.f32.mrf.mxu0
      %v1549 = vpop.f32.mrf.mxu0
      %v1550 = vadd.f32 0.0, %v1549
      %v1551 = vpop.f32.mrf.mxu0
      %1552 = vmatprep.mubr.bf16.mxu0 0
      %1553 = vmatmul.mubr.bf16.gmra.mxu0 %v1390
      %v1554 = vpop.f32.mrf.mxu0
      %v1555 = vadd.f32 0.0, %v1554
      %v1556 = vpop.f32.mrf.mxu0
      %v1557 = vpop.f32.mrf.mxu0
      %v1558 = vadd.f32 0.0, %v1557
      %v1559 = vpop.f32.mrf.mxu0
      %1560 = vmatprep.mubr.bf16.mxu0 0
      %1561 = vmatmul.mubr.bf16.gmra.mxu0 %v1391
      %v1562 = vpop.f32.mrf.mxu0
      %v1563 = vadd.f32 0.0, %v1562
      %v1564 = vpop.f32.mrf.mxu0
      %v1565 = vpop.f32.mrf.mxu0
      %v1566 = vadd.f32 0.0, %v1565
      %v1567 = vpop.f32.mrf.mxu0
      %1568 = vmatprep.mubr.bf16.mxu0 0
      %1569 = vmatmul.mubr.bf16.gmra.mxu0 %v1392
      %v1570 = vpop.f32.mrf.mxu0
      %v1571 = vadd.f32 0.0, %v1570
      %v1572 = vpop.f32.mrf.mxu0
      %v1573 = vpop.f32.mrf.mxu0
      %v1574 = vadd.f32 0.0, %v1573
      %v1575 = vpop.f32.mrf.mxu0
      %1576 = vmatprep.mubr.bf16.mxu0 0
      %1577 = vmatmul.mubr.bf16.gmra.mxu0 %v1393
      %v1578 = vpop.f32.mrf.mxu0
      %v1579 = vadd.f32 0.0, %v1578
      %v1580 = vpop.f32.mrf.mxu0
      %v1581 = vpop.f32.mrf.mxu0
      %v1582 = vadd.f32 0.0, %v1581
      %v1583 = vpop.f32.mrf.mxu0
      %1584 = vmatprep.mubr.bf16.mxu0 0
      %1585 = vmatmul.mubr.bf16.gmra.mxu0 %v1394
      %v1586 = vpop.f32.mrf.mxu0
      %v1587 = vadd.f32 0.0, %v1586
      %v1588 = vpop.f32.mrf.mxu0
      %v1589 = vpop.f32.mrf.mxu0
      %v1590 = vadd.f32 0.0, %v1589
      %v1591 = vpop.f32.mrf.mxu0
      %1592 = vmatprep.mubr.bf16.mxu0 0
      %1593 = vmatmul.mubr.bf16.gmra.mxu0 %v1395
      %v1594 = vpop.f32.mrf.mxu0
      %v1595 = vadd.f32 0.0, %v1594
      %v1596 = vpop.f32.mrf.mxu0
      %v1597 = vpop.f32.mrf.mxu0
      %v1598 = vadd.f32 0.0, %v1597
      %v1599 = vpop.f32.mrf.mxu0
      %1600 = vmatprep.mubr.bf16.mxu0 0
      %1601 = vmatmul.mubr.bf16.gmra.mxu0 %v1396
      %v1602 = vpop.f32.mrf.mxu0
      %v1603 = vadd.f32 0.0, %v1602
      %v1604 = vpop.f32.mrf.mxu0
      %v1605 = vpop.f32.mrf.mxu0
      %v1606 = vadd.f32 0.0, %v1605
      %v1607 = vpop.f32.mrf.mxu0
      %1608 = vmatprep.mubr.bf16.mxu0 0
      %1609 = vmatmul.mubr.bf16.gmra.mxu0 %v1397
      %v1610 = vpop.f32.mrf.mxu0
      %v1611 = vadd.f32 0.0, %v1610
      %v1612 = vpop.f32.mrf.mxu0
      %v1613 = vpop.f32.mrf.mxu0
      %v1614 = vadd.f32 0.0, %v1613
      %v1615 = vpop.f32.mrf.mxu0
      %1616 = vmatprep.mubr.bf16.mxu0 0
      %1617 = vmatmul.mubr.bf16.gmra.mxu0 %v1398
      %v1618 = vpop.f32.mrf.mxu0
      %v1619 = vadd.f32 0.0, %v1618
      %v1620 = vpop.f32.mrf.mxu0
      %v1621 = vpop.f32.mrf.mxu0
      %v1622 = vadd.f32 0.0, %v1621
      %v1623 = vpop.f32.mrf.mxu0
      %1624 = vdwg.mxu0
      %v1625 = vadd.f32 %v1319, %v1499
      %v1626 = vadd.f32 %v1320, %v1502
      %v1627 = vadd.f32 %v1321, %v1507
      %v1628 = vadd.f32 %v1322, %v1510
      %v1629 = vadd.f32 %v1323, %v1515
      %v1630 = vadd.f32 %v1324, %v1518
      %v1631 = vadd.f32 %v1325, %v1523
      %v1632 = vadd.f32 %v1326, %v1526
      %v1633 = vadd.f32 %v1327, %v1531
      %v1634 = vadd.f32 %v1328, %v1534
      %v1635 = vadd.f32 %v1329, %v1539
      %v1636 = vadd.f32 %v1330, %v1542
      %v1637 = vadd.f32 %v1331, %v1547
      %v1638 = vadd.f32 %v1332, %v1550
      %v1639 = vadd.f32 %v1333, %v1555
      %v1640 = vadd.f32 %v1334, %v1558
      %v1641 = vadd.f32 %v1335, %v1563
      %v1642 = vadd.f32 %v1336, %v1566
      %v1643 = vadd.f32 %v1337, %v1571
      %v1644 = vadd.f32 %v1338, %v1574
      %v1645 = vadd.f32 %v1339, %v1579
      %v1646 = vadd.f32 %v1340, %v1582
      %v1647 = vadd.f32 %v1341, %v1587
      %v1648 = vadd.f32 %v1342, %v1590
      %v1649 = vadd.f32 %v1343, %v1595
      %v1650 = vadd.f32 %v1344, %v1598
      %v1651 = vadd.f32 %v1345, %v1603
      %v1652 = vadd.f32 %v1346, %v1606
      %v1653 = vadd.f32 %v1347, %v1611
      %v1654 = vadd.f32 %v1348, %v1614
      %v1655 = vadd.f32 %v1349, %v1619
      %v1656 = vadd.f32 %v1350, %v1622
      %v1657 = vld [vmem:[%s465 + $0x1] sm:$0xff]
      %v1658 = vld [vmem:[%s465 + $0x9] sm:$0xff]
      %v1659 = vld [vmem:[%s465 + $0x19] sm:$0xff]
      %v1660 = vld [vmem:[%s465 + $0x21] sm:$0xff]
      %v1661 = vld [vmem:[%s465 + $0x31] sm:$0xff]
      %v1662 = vld [vmem:[%s465 + $0x39] sm:$0xff]
      %v1663 = vld [vmem:[%s465 + $0x49] sm:$0xff]
      %v1664 = vld [vmem:[%s465 + $0x51] sm:$0xff]
      %v1665 = vld [vmem:[%s465 + $0x61] sm:$0xff]
      %v1666 = vld [vmem:[%s465 + $0x69] sm:$0xff]
      %v1667 = vld [vmem:[%s465 + $0x79] sm:$0xff]
      %v1668 = vld [vmem:[%s465 + $0x81] sm:$0xff]
      %v1669 = vld [vmem:[%s465 + $0x91] sm:$0xff]
      %v1670 = vld [vmem:[%s465 + $0x99] sm:$0xff]
      %v1671 = vld [vmem:[%s465 + $0xa9] sm:$0xff]
      %v1672 = vld [vmem:[%s465 + $0xb1] sm:$0xff]
      %v1673 = vld [vmem:[%s465 + $0xc1] sm:$0xff]
      %v1674 = vld [vmem:[%s465 + $0xc9] sm:$0xff]
      %v1675 = vld [vmem:[%s465 + $0xd9] sm:$0xff]
      %v1676 = vld [vmem:[%s465 + $0xe1] sm:$0xff]
      %v1677 = vld [vmem:[%s465 + $0xf1] sm:$0xff]
      %v1678 = vld [vmem:[%s465 + $0xf9] sm:$0xff]
      %v1679 = vld [vmem:[%s465 + $0x109] sm:$0xff]
      %v1680 = vld [vmem:[%s465 + $0x111] sm:$0xff]
      %v1681 = vld [vmem:[%s465 + $0x121] sm:$0xff]
      %v1682 = vld [vmem:[%s465 + $0x129] sm:$0xff]
      %v1683 = vld [vmem:[%s465 + $0x139] sm:$0xff]
      %v1684 = vld [vmem:[%s465 + $0x141] sm:$0xff]
      %v1685 = vld [vmem:[%s465 + $0x151] sm:$0xff]
      %v1686 = vld [vmem:[%s465 + $0x159] sm:$0xff]
      %v1687 = vld [vmem:[%s465 + $0x169] sm:$0xff]
      %v1688 = vld [vmem:[%s465 + $0x171] sm:$0xff]
      %v1689 = vpack.c.bf16 %v1658, %v1657
      %v1690 = vpack.c.bf16 %v1660, %v1659
      %v1691 = vpack.c.bf16 %v1662, %v1661
      %v1692 = vpack.c.bf16 %v1664, %v1663
      %v1693 = vpack.c.bf16 %v1666, %v1665
      %v1694 = vpack.c.bf16 %v1668, %v1667
      %v1695 = vpack.c.bf16 %v1670, %v1669
      %v1696 = vpack.c.bf16 %v1672, %v1671
      %v1697 = vpack.c.bf16 %v1674, %v1673
      %v1698 = vpack.c.bf16 %v1676, %v1675
      %v1699 = vpack.c.bf16 %v1678, %v1677
      %v1700 = vpack.c.bf16 %v1680, %v1679
      %v1701 = vpack.c.bf16 %v1682, %v1681
      %v1702 = vpack.c.bf16 %v1684, %v1683
      %v1703 = vpack.c.bf16 %v1686, %v1685
      %v1704 = vpack.c.bf16 %v1688, %v1687
      %s1705 = scalar_lea.vmem %s3, 256
      %v1706 = vld [vmem:[%s1705] sm:$0xf]
      %v1707 = vld [vmem:[%s1705 + $0x4] sm:$0xf]
      %v1708 = vld [vmem:[%s1705 + $0x8] sm:$0xf]
      %v1709 = vld [vmem:[%s1705 + $0xc] sm:$0xf]
      %v1710 = vld [vmem:[%s1705 + $0x10] sm:$0xf]
      %v1711 = vld [vmem:[%s1705 + $0x14] sm:$0xf]
      %v1712 = vld [vmem:[%s1705 + $0x18] sm:$0xf]
      %v1713 = vld [vmem:[%s1705 + $0x1c] sm:$0xf]
      %v1714 = vld [vmem:[%s1705 + $0x20] sm:$0xf]
      %v1715 = vld [vmem:[%s1705 + $0x24] sm:$0xf]
      %v1716 = vld [vmem:[%s1705 + $0x28] sm:$0xf]
      %v1717 = vld [vmem:[%s1705 + $0x2c] sm:$0xf]
      %v1718 = vld [vmem:[%s1705 + $0x30] sm:$0xf]
      %v1719 = vld [vmem:[%s1705 + $0x34] sm:$0xf]
      %v1720 = vld [vmem:[%s1705 + $0x38] sm:$0xf]
      %v1721 = vld [vmem:[%s1705 + $0x3c] sm:$0xf]
      %v1738 = vunpack.c.l.b16 %v1706
      %v1739 = vunpack.c.l.b16 %v1707
      %v1740 = vunpack.c.l.b16 %v1708
      %v1741 = vunpack.c.l.b16 %v1709
      %v1742 = vunpack.c.l.b16 %v1710
      %v1743 = vunpack.c.l.b16 %v1711
      %v1744 = vunpack.c.l.b16 %v1712
      %v1745 = vunpack.c.l.b16 %v1713
      %v1746 = vunpack.c.l.b16 %v1714
      %v1747 = vunpack.c.l.b16 %v1715
      %v1748 = vunpack.c.l.b16 %v1716
      %v1749 = vunpack.c.l.b16 %v1717
      %v1750 = vunpack.c.l.b16 %v1718
      %v1751 = vunpack.c.l.b16 %v1719
      %v1752 = vunpack.c.l.b16 %v1720
      %v1753 = vunpack.c.l.b16 %v1721
      %v1754 = vpack.c.b16 %v1739, %v1738
      %v1755 = vpack.c.b16 %v1741, %v1740
      %v1756 = vpack.c.b16 %v1743, %v1742
      %v1757 = vpack.c.b16 %v1745, %v1744
      %v1758 = vpack.c.b16 %v1747, %v1746
      %v1759 = vpack.c.b16 %v1749, %v1748
      %v1760 = vpack.c.b16 %v1751, %v1750
      %v1761 = vpack.c.b16 %v1753, %v1752
      %1770 = vmatprep.subr.bf16.mxu0 0
      %1771 = vmatpush1.bf16.msra.mxu0 %v1761
      %1772 = vmatprep.subr.bf16.mxu0 0
      %1773 = vmatpush1.bf16.msra.mxu0 %v1760
      %1774 = vmatprep.subr.bf16.mxu0 0
      %1775 = vmatpush1.bf16.msra.mxu0 %v1759
      %1776 = vmatprep.subr.bf16.mxu0 0
      %1777 = vmatpush1.bf16.msra.mxu0 %v1758
      %1778 = vmatprep.subr.bf16.mxu0 0
      %1779 = vmatpush1.bf16.msra.mxu0 %v1757
      %1780 = vmatprep.subr.bf16.mxu0 0
      %1781 = vmatpush1.bf16.msra.mxu0 %v1756
      %1782 = vmatprep.subr.bf16.mxu0 0
      %1783 = vmatpush1.bf16.msra.mxu0 %v1755
      %1784 = vmatprep.subr.bf16.mxu0 0
      %1785 = vmatpush1.bf16.msra.mxu0 %v1754
      %1786 = vmatprep.subr.bf16.mxu0 0
      %1787 = vmatpush2.bf16.msra.mxu0 0
      %1788 = vmatprep.subr.bf16.mxu0 0
      %1789 = vmatpush2.bf16.msra.mxu0 0
      %1790 = vmatprep.subr.bf16.mxu0 0
      %1791 = vmatpush2.bf16.msra.mxu0 0
      %1792 = vmatprep.subr.bf16.mxu0 0
      %1793 = vmatpush2.bf16.msra.mxu0 0
      %1794 = vmatprep.subr.bf16.mxu0 0
      %1795 = vmatpush2.bf16.msra.mxu0 0
      %1796 = vmatprep.subr.bf16.mxu0 0
      %1797 = vmatpush2.bf16.msra.mxu0 0
      %1798 = vmatprep.subr.bf16.mxu0 0
      %1799 = vmatpush2.bf16.msra.mxu0 0
      %1800 = vmatprep.subr.bf16.mxu0 0
      %1801 = vmatpush2.bf16.msra.mxu0 0
      %1802 = vmatprep.mubr.bf16.mxu0 0
      %1803 = vmatmul.mubr.bf16.gmra.mxu0 %v1689
      %v1804 = vpop.f32.mrf.mxu0
      %v1805 = vadd.f32 0.0, %v1804
      %v1806 = vpop.f32.mrf.mxu0
      %v1807 = vpop.f32.mrf.mxu0
      %v1808 = vadd.f32 0.0, %v1807
      %v1809 = vpop.f32.mrf.mxu0
      %1810 = vmatprep.mubr.bf16.mxu0 0
      %1811 = vmatmul.mubr.bf16.gmra.mxu0 %v1690
      %v1812 = vpop.f32.mrf.mxu0
      %v1813 = vadd.f32 0.0, %v1812
      %v1814 = vpop.f32.mrf.mxu0
      %v1815 = vpop.f32.mrf.mxu0
      %v1816 = vadd.f32 0.0, %v1815
      %v1817 = vpop.f32.mrf.mxu0
      %1818 = vmatprep.mubr.bf16.mxu0 0
      %1819 = vmatmul.mubr.bf16.gmra.mxu0 %v1691
      %v1820 = vpop.f32.mrf.mxu0
      %v1821 = vadd.f32 0.0, %v1820
      %v1822 = vpop.f32.mrf.mxu0
      %v1823 = vpop.f32.mrf.mxu0
      %v1824 = vadd.f32 0.0, %v1823
      %v1825 = vpop.f32.mrf.mxu0
      %1826 = vmatprep.mubr.bf16.mxu0 0
      %1827 = vmatmul.mubr.bf16.gmra.mxu0 %v1692
      %v1828 = vpop.f32.mrf.mxu0
      %v1829 = vadd.f32 0.0, %v1828
      %v1830 = vpop.f32.mrf.mxu0
      %v1831 = vpop.f32.mrf.mxu0
      %v1832 = vadd.f32 0.0, %v1831
      %v1833 = vpop.f32.mrf.mxu0
      %1834 = vmatprep.mubr.bf16.mxu0 0
      %1835 = vmatmul.mubr.bf16.gmra.mxu0 %v1693
      %v1836 = vpop.f32.mrf.mxu0
      %v1837 = vadd.f32 0.0, %v1836
      %v1838 = vpop.f32.mrf.mxu0
      %v1839 = vpop.f32.mrf.mxu0
      %v1840 = vadd.f32 0.0, %v1839
      %v1841 = vpop.f32.mrf.mxu0
      %1842 = vmatprep.mubr.bf16.mxu0 0
      %1843 = vmatmul.mubr.bf16.gmra.mxu0 %v1694
      %v1844 = vpop.f32.mrf.mxu0
      %v1845 = vadd.f32 0.0, %v1844
      %v1846 = vpop.f32.mrf.mxu0
      %v1847 = vpop.f32.mrf.mxu0
      %v1848 = vadd.f32 0.0, %v1847
      %v1849 = vpop.f32.mrf.mxu0
      %1850 = vmatprep.mubr.bf16.mxu0 0
      %1851 = vmatmul.mubr.bf16.gmra.mxu0 %v1695
      %v1852 = vpop.f32.mrf.mxu0
      %v1853 = vadd.f32 0.0, %v1852
      %v1854 = vpop.f32.mrf.mxu0
      %v1855 = vpop.f32.mrf.mxu0
      %v1856 = vadd.f32 0.0, %v1855
      %v1857 = vpop.f32.mrf.mxu0
      %1858 = vmatprep.mubr.bf16.mxu0 0
      %1859 = vmatmul.mubr.bf16.gmra.mxu0 %v1696
      %v1860 = vpop.f32.mrf.mxu0
      %v1861 = vadd.f32 0.0, %v1860
      %v1862 = vpop.f32.mrf.mxu0
      %v1863 = vpop.f32.mrf.mxu0
      %v1864 = vadd.f32 0.0, %v1863
      %v1865 = vpop.f32.mrf.mxu0
      %1866 = vmatprep.mubr.bf16.mxu0 0
      %1867 = vmatmul.mubr.bf16.gmra.mxu0 %v1697
      %v1868 = vpop.f32.mrf.mxu0
      %v1869 = vadd.f32 0.0, %v1868
      %v1870 = vpop.f32.mrf.mxu0
      %v1871 = vpop.f32.mrf.mxu0
      %v1872 = vadd.f32 0.0, %v1871
      %v1873 = vpop.f32.mrf.mxu0
      %1874 = vmatprep.mubr.bf16.mxu0 0
      %1875 = vmatmul.mubr.bf16.gmra.mxu0 %v1698
      %v1876 = vpop.f32.mrf.mxu0
      %v1877 = vadd.f32 0.0, %v1876
      %v1878 = vpop.f32.mrf.mxu0
      %v1879 = vpop.f32.mrf.mxu0
      %v1880 = vadd.f32 0.0, %v1879
      %v1881 = vpop.f32.mrf.mxu0
      %1882 = vmatprep.mubr.bf16.mxu0 0
      %1883 = vmatmul.mubr.bf16.gmra.mxu0 %v1699
      %v1884 = vpop.f32.mrf.mxu0
      %v1885 = vadd.f32 0.0, %v1884
      %v1886 = vpop.f32.mrf.mxu0
      %v1887 = vpop.f32.mrf.mxu0
      %v1888 = vadd.f32 0.0, %v1887
      %v1889 = vpop.f32.mrf.mxu0
      %1890 = vmatprep.mubr.bf16.mxu0 0
      %1891 = vmatmul.mubr.bf16.gmra.mxu0 %v1700
      %v1892 = vpop.f32.mrf.mxu0
      %v1893 = vadd.f32 0.0, %v1892
      %v1894 = vpop.f32.mrf.mxu0
      %v1895 = vpop.f32.mrf.mxu0
      %v1896 = vadd.f32 0.0, %v1895
      %v1897 = vpop.f32.mrf.mxu0
      %1898 = vmatprep.mubr.bf16.mxu0 0
      %1899 = vmatmul.mubr.bf16.gmra.mxu0 %v1701
      %v1900 = vpop.f32.mrf.mxu0
      %v1901 = vadd.f32 0.0, %v1900
      %v1902 = vpop.f32.mrf.mxu0
      %v1903 = vpop.f32.mrf.mxu0
      %v1904 = vadd.f32 0.0, %v1903
      %v1905 = vpop.f32.mrf.mxu0
      %1906 = vmatprep.mubr.bf16.mxu0 0
      %1907 = vmatmul.mubr.bf16.gmra.mxu0 %v1702
      %v1908 = vpop.f32.mrf.mxu0
      %v1909 = vadd.f32 0.0, %v1908
      %v1910 = vpop.f32.mrf.mxu0
      %v1911 = vpop.f32.mrf.mxu0
      %v1912 = vadd.f32 0.0, %v1911
      %v1913 = vpop.f32.mrf.mxu0
      %1914 = vmatprep.mubr.bf16.mxu0 0
      %1915 = vmatmul.mubr.bf16.gmra.mxu0 %v1703
      %v1916 = vpop.f32.mrf.mxu0
      %v1917 = vadd.f32 0.0, %v1916
      %v1918 = vpop.f32.mrf.mxu0
      %v1919 = vpop.f32.mrf.mxu0
      %v1920 = vadd.f32 0.0, %v1919
      %v1921 = vpop.f32.mrf.mxu0
      %1922 = vmatprep.mubr.bf16.mxu0 0
      %1923 = vmatmul.mubr.bf16.gmra.mxu0 %v1704
      %v1924 = vpop.f32.mrf.mxu0
      %v1925 = vadd.f32 0.0, %v1924
      %v1926 = vpop.f32.mrf.mxu0
      %v1927 = vpop.f32.mrf.mxu0
      %v1928 = vadd.f32 0.0, %v1927
      %v1929 = vpop.f32.mrf.mxu0
      %1930 = vdwg.mxu0
      %v1931 = vadd.f32 %v1625, %v1805
      %v1932 = vadd.f32 %v1626, %v1808
      %v1933 = vadd.f32 %v1627, %v1813
      %v1934 = vadd.f32 %v1628, %v1816
      %v1935 = vadd.f32 %v1629, %v1821
      %v1936 = vadd.f32 %v1630, %v1824
      %v1937 = vadd.f32 %v1631, %v1829
      %v1938 = vadd.f32 %v1632, %v1832
      %v1939 = vadd.f32 %v1633, %v1837
      %v1940 = vadd.f32 %v1634, %v1840
      %v1941 = vadd.f32 %v1635, %v1845
      %v1942 = vadd.f32 %v1636, %v1848
      %v1943 = vadd.f32 %v1637, %v1853
      %v1944 = vadd.f32 %v1638, %v1856
      %v1945 = vadd.f32 %v1639, %v1861
      %v1946 = vadd.f32 %v1640, %v1864
      %v1947 = vadd.f32 %v1641, %v1869
      %v1948 = vadd.f32 %v1642, %v1872
      %v1949 = vadd.f32 %v1643, %v1877
      %v1950 = vadd.f32 %v1644, %v1880
      %v1951 = vadd.f32 %v1645, %v1885
      %v1952 = vadd.f32 %v1646, %v1888
      %v1953 = vadd.f32 %v1647, %v1893
      %v1954 = vadd.f32 %v1648, %v1896
      %v1955 = vadd.f32 %v1649, %v1901
      %v1956 = vadd.f32 %v1650, %v1904
      %v1957 = vadd.f32 %v1651, %v1909
      %v1958 = vadd.f32 %v1652, %v1912
      %v1959 = vadd.f32 %v1653, %v1917
      %v1960 = vadd.f32 %v1654, %v1920
      %v1961 = vadd.f32 %v1655, %v1925
      %v1962 = vadd.f32 %v1656, %v1928
      %v1963 = vld [vmem:[%s465 + $0x2] sm:$0xff]
      %v1964 = vld [vmem:[%s465 + $0xa] sm:$0xff]
      %v1965 = vld [vmem:[%s465 + $0x1a] sm:$0xff]
      %v1966 = vld [vmem:[%s465 + $0x22] sm:$0xff]
      %v1967 = vld [vmem:[%s465 + $0x32] sm:$0xff]
      %v1968 = vld [vmem:[%s465 + $0x3a] sm:$0xff]
      %v1969 = vld [vmem:[%s465 + $0x4a] sm:$0xff]
      %v1970 = vld [vmem:[%s465 + $0x52] sm:$0xff]
      %v1971 = vld [vmem:[%s465 + $0x62] sm:$0xff]
      %v1972 = vld [vmem:[%s465 + $0x6a] sm:$0xff]
      %v1973 = vld [vmem:[%s465 + $0x7a] sm:$0xff]
      %v1974 = vld [vmem:[%s465 + $0x82] sm:$0xff]
      %v1975 = vld [vmem:[%s465 + $0x92] sm:$0xff]
      %v1976 = vld [vmem:[%s465 + $0x9a] sm:$0xff]
      %v1977 = vld [vmem:[%s465 + $0xaa] sm:$0xff]
      %v1978 = vld [vmem:[%s465 + $0xb2] sm:$0xff]
      %v1979 = vld [vmem:[%s465 + $0xc2] sm:$0xff]
      %v1980 = vld [vmem:[%s465 + $0xca] sm:$0xff]
      %v1981 = vld [vmem:[%s465 + $0xda] sm:$0xff]
      %v1982 = vld [vmem:[%s465 + $0xe2] sm:$0xff]
      %v1983 = vld [vmem:[%s465 + $0xf2] sm:$0xff]
      %v1984 = vld [vmem:[%s465 + $0xfa] sm:$0xff]
      %v1985 = vld [vmem:[%s465 + $0x10a] sm:$0xff]
      %v1986 = vld [vmem:[%s465 + $0x112] sm:$0xff]
      %v1987 = vld [vmem:[%s465 + $0x122] sm:$0xff]
      %v1988 = vld [vmem:[%s465 + $0x12a] sm:$0xff]
      %v1989 = vld [vmem:[%s465 + $0x13a] sm:$0xff]
      %v1990 = vld [vmem:[%s465 + $0x142] sm:$0xff]
      %v1991 = vld [vmem:[%s465 + $0x152] sm:$0xff]
      %v1992 = vld [vmem:[%s465 + $0x15a] sm:$0xff]
      %v1993 = vld [vmem:[%s465 + $0x16a] sm:$0xff]
      %v1994 = vld [vmem:[%s465 + $0x172] sm:$0xff]
      %v1995 = vpack.c.bf16 %v1964, %v1963
      %v1996 = vpack.c.bf16 %v1966, %v1965
      %v1997 = vpack.c.bf16 %v1968, %v1967
      %v1998 = vpack.c.bf16 %v1970, %v1969
      %v1999 = vpack.c.bf16 %v1972, %v1971
      %v2000 = vpack.c.bf16 %v1974, %v1973
      %v2001 = vpack.c.bf16 %v1976, %v1975
      %v2002 = vpack.c.bf16 %v1978, %v1977
      %v2003 = vpack.c.bf16 %v1980, %v1979
      %v2004 = vpack.c.bf16 %v1982, %v1981
      %v2005 = vpack.c.bf16 %v1984, %v1983
      %v2006 = vpack.c.bf16 %v1986, %v1985
      %v2007 = vpack.c.bf16 %v1988, %v1987
      %v2008 = vpack.c.bf16 %v1990, %v1989
      %v2009 = vpack.c.bf16 %v1992, %v1991
      %v2010 = vpack.c.bf16 %v1994, %v1993
      %s2011 = scalar_lea.vmem %s3, 320
      %v2012 = vld [vmem:[%s2011] sm:$0xf]
      %v2013 = vld [vmem:[%s2011 + $0x4] sm:$0xf]
      %v2014 = vld [vmem:[%s2011 + $0x8] sm:$0xf]
      %v2015 = vld [vmem:[%s2011 + $0xc] sm:$0xf]
      %v2016 = vld [vmem:[%s2011 + $0x10] sm:$0xf]
      %v2017 = vld [vmem:[%s2011 + $0x14] sm:$0xf]
      %v2018 = vld [vmem:[%s2011 + $0x18] sm:$0xf]
      %v2019 = vld [vmem:[%s2011 + $0x1c] sm:$0xf]
      %v2020 = vld [vmem:[%s2011 + $0x20] sm:$0xf]
      %v2021 = vld [vmem:[%s2011 + $0x24] sm:$0xf]
      %v2022 = vld [vmem:[%s2011 + $0x28] sm:$0xf]
      %v2023 = vld [vmem:[%s2011 + $0x2c] sm:$0xf]
      %v2024 = vld [vmem:[%s2011 + $0x30] sm:$0xf]
      %v2025 = vld [vmem:[%s2011 + $0x34] sm:$0xf]
      %v2026 = vld [vmem:[%s2011 + $0x38] sm:$0xf]
      %v2027 = vld [vmem:[%s2011 + $0x3c] sm:$0xf]
      %v2044 = vunpack.c.l.b16 %v2012
      %v2045 = vunpack.c.l.b16 %v2013
      %v2046 = vunpack.c.l.b16 %v2014
      %v2047 = vunpack.c.l.b16 %v2015
      %v2048 = vunpack.c.l.b16 %v2016
      %v2049 = vunpack.c.l.b16 %v2017
      %v2050 = vunpack.c.l.b16 %v2018
      %v2051 = vunpack.c.l.b16 %v2019
      %v2052 = vunpack.c.l.b16 %v2020
      %v2053 = vunpack.c.l.b16 %v2021
      %v2054 = vunpack.c.l.b16 %v2022
      %v2055 = vunpack.c.l.b16 %v2023
      %v2056 = vunpack.c.l.b16 %v2024
      %v2057 = vunpack.c.l.b16 %v2025
      %v2058 = vunpack.c.l.b16 %v2026
      %v2059 = vunpack.c.l.b16 %v2027
      %v2060 = vpack.c.b16 %v2045, %v2044
      %v2061 = vpack.c.b16 %v2047, %v2046
      %v2062 = vpack.c.b16 %v2049, %v2048
      %v2063 = vpack.c.b16 %v2051, %v2050
      %v2064 = vpack.c.b16 %v2053, %v2052
      %v2065 = vpack.c.b16 %v2055, %v2054
      %v2066 = vpack.c.b16 %v2057, %v2056
      %v2067 = vpack.c.b16 %v2059, %v2058
      %2076 = vmatprep.subr.bf16.mxu0 0
      %2077 = vmatpush1.bf16.msra.mxu0 %v2067
      %2078 = vmatprep.subr.bf16.mxu0 0
      %2079 = vmatpush1.bf16.msra.mxu0 %v2066
      %2080 = vmatprep.subr.bf16.mxu0 0
      %2081 = vmatpush1.bf16.msra.mxu0 %v2065
      %2082 = vmatprep.subr.bf16.mxu0 0
      %2083 = vmatpush1.bf16.msra.mxu0 %v2064
      %2084 = vmatprep.subr.bf16.mxu0 0
      %2085 = vmatpush1.bf16.msra.mxu0 %v2063
      %2086 = vmatprep.subr.bf16.mxu0 0
      %2087 = vmatpush1.bf16.msra.mxu0 %v2062
      %2088 = vmatprep.subr.bf16.mxu0 0
      %2089 = vmatpush1.bf16.msra.mxu0 %v2061
      %2090 = vmatprep.subr.bf16.mxu0 0
      %2091 = vmatpush1.bf16.msra.mxu0 %v2060
      %2092 = vmatprep.subr.bf16.mxu0 0
      %2093 = vmatpush2.bf16.msra.mxu0 0
      %2094 = vmatprep.subr.bf16.mxu0 0
      %2095 = vmatpush2.bf16.msra.mxu0 0
      %2096 = vmatprep.subr.bf16.mxu0 0
      %2097 = vmatpush2.bf16.msra.mxu0 0
      %2098 = vmatprep.subr.bf16.mxu0 0
      %2099 = vmatpush2.bf16.msra.mxu0 0
      %2100 = vmatprep.subr.bf16.mxu0 0
      %2101 = vmatpush2.bf16.msra.mxu0 0
      %2102 = vmatprep.subr.bf16.mxu0 0
      %2103 = vmatpush2.bf16.msra.mxu0 0
      %2104 = vmatprep.subr.bf16.mxu0 0
      %2105 = vmatpush2.bf16.msra.mxu0 0
      %2106 = vmatprep.subr.bf16.mxu0 0
      %2107 = vmatpush2.bf16.msra.mxu0 0
      %2108 = vmatprep.mubr.bf16.mxu0 0
      %2109 = vmatmul.mubr.bf16.gmra.mxu0 %v1995
      %v2110 = vpop.f32.mrf.mxu0
      %v2111 = vadd.f32 0.0, %v2110
      %v2112 = vpop.f32.mrf.mxu0
      %v2113 = vpop.f32.mrf.mxu0
      %v2114 = vadd.f32 0.0, %v2113
      %v2115 = vpop.f32.mrf.mxu0
      %2116 = vmatprep.mubr.bf16.mxu0 0
      %2117 = vmatmul.mubr.bf16.gmra.mxu0 %v1996
      %v2118 = vpop.f32.mrf.mxu0
      %v2119 = vadd.f32 0.0, %v2118
      %v2120 = vpop.f32.mrf.mxu0
      %v2121 = vpop.f32.mrf.mxu0
      %v2122 = vadd.f32 0.0, %v2121
      %v2123 = vpop.f32.mrf.mxu0
      %2124 = vmatprep.mubr.bf16.mxu0 0
      %2125 = vmatmul.mubr.bf16.gmra.mxu0 %v1997
      %v2126 = vpop.f32.mrf.mxu0
      %v2127 = vadd.f32 0.0, %v2126
      %v2128 = vpop.f32.mrf.mxu0
      %v2129 = vpop.f32.mrf.mxu0
      %v2130 = vadd.f32 0.0, %v2129
      %v2131 = vpop.f32.mrf.mxu0
      %2132 = vmatprep.mubr.bf16.mxu0 0
      %2133 = vmatmul.mubr.bf16.gmra.mxu0 %v1998
      %v2134 = vpop.f32.mrf.mxu0
      %v2135 = vadd.f32 0.0, %v2134
      %v2136 = vpop.f32.mrf.mxu0
      %v2137 = vpop.f32.mrf.mxu0
      %v2138 = vadd.f32 0.0, %v2137
      %v2139 = vpop.f32.mrf.mxu0
      %2140 = vmatprep.mubr.bf16.mxu0 0
      %2141 = vmatmul.mubr.bf16.gmra.mxu0 %v1999
      %v2142 = vpop.f32.mrf.mxu0
      %v2143 = vadd.f32 0.0, %v2142
      %v2144 = vpop.f32.mrf.mxu0
      %v2145 = vpop.f32.mrf.mxu0
      %v2146 = vadd.f32 0.0, %v2145
      %v2147 = vpop.f32.mrf.mxu0
      %2148 = vmatprep.mubr.bf16.mxu0 0
      %2149 = vmatmul.mubr.bf16.gmra.mxu0 %v2000
      %v2150 = vpop.f32.mrf.mxu0
      %v2151 = vadd.f32 0.0, %v2150
      %v2152 = vpop.f32.mrf.mxu0
      %v2153 = vpop.f32.mrf.mxu0
      %v2154 = vadd.f32 0.0, %v2153
      %v2155 = vpop.f32.mrf.mxu0
      %2156 = vmatprep.mubr.bf16.mxu0 0
      %2157 = vmatmul.mubr.bf16.gmra.mxu0 %v2001
      %v2158 = vpop.f32.mrf.mxu0
      %v2159 = vadd.f32 0.0, %v2158
      %v2160 = vpop.f32.mrf.mxu0
      %v2161 = vpop.f32.mrf.mxu0
      %v2162 = vadd.f32 0.0, %v2161
      %v2163 = vpop.f32.mrf.mxu0
      %2164 = vmatprep.mubr.bf16.mxu0 0
      %2165 = vmatmul.mubr.bf16.gmra.mxu0 %v2002
      %v2166 = vpop.f32.mrf.mxu0
      %v2167 = vadd.f32 0.0, %v2166
      %v2168 = vpop.f32.mrf.mxu0
      %v2169 = vpop.f32.mrf.mxu0
      %v2170 = vadd.f32 0.0, %v2169
      %v2171 = vpop.f32.mrf.mxu0
      %2172 = vmatprep.mubr.bf16.mxu0 0
      %2173 = vmatmul.mubr.bf16.gmra.mxu0 %v2003
      %v2174 = vpop.f32.mrf.mxu0
      %v2175 = vadd.f32 0.0, %v2174
      %v2176 = vpop.f32.mrf.mxu0
      %v2177 = vpop.f32.mrf.mxu0
      %v2178 = vadd.f32 0.0, %v2177
      %v2179 = vpop.f32.mrf.mxu0
      %2180 = vmatprep.mubr.bf16.mxu0 0
      %2181 = vmatmul.mubr.bf16.gmra.mxu0 %v2004
      %v2182 = vpop.f32.mrf.mxu0
      %v2183 = vadd.f32 0.0, %v2182
      %v2184 = vpop.f32.mrf.mxu0
      %v2185 = vpop.f32.mrf.mxu0
      %v2186 = vadd.f32 0.0, %v2185
      %v2187 = vpop.f32.mrf.mxu0
      %2188 = vmatprep.mubr.bf16.mxu0 0
      %2189 = vmatmul.mubr.bf16.gmra.mxu0 %v2005
      %v2190 = vpop.f32.mrf.mxu0
      %v2191 = vadd.f32 0.0, %v2190
      %v2192 = vpop.f32.mrf.mxu0
      %v2193 = vpop.f32.mrf.mxu0
      %v2194 = vadd.f32 0.0, %v2193
      %v2195 = vpop.f32.mrf.mxu0
      %2196 = vmatprep.mubr.bf16.mxu0 0
      %2197 = vmatmul.mubr.bf16.gmra.mxu0 %v2006
      %v2198 = vpop.f32.mrf.mxu0
      %v2199 = vadd.f32 0.0, %v2198
      %v2200 = vpop.f32.mrf.mxu0
      %v2201 = vpop.f32.mrf.mxu0
      %v2202 = vadd.f32 0.0, %v2201
      %v2203 = vpop.f32.mrf.mxu0
      %2204 = vmatprep.mubr.bf16.mxu0 0
      %2205 = vmatmul.mubr.bf16.gmra.mxu0 %v2007
      %v2206 = vpop.f32.mrf.mxu0
      %v2207 = vadd.f32 0.0, %v2206
      %v2208 = vpop.f32.mrf.mxu0
      %v2209 = vpop.f32.mrf.mxu0
      %v2210 = vadd.f32 0.0, %v2209
      %v2211 = vpop.f32.mrf.mxu0
      %2212 = vmatprep.mubr.bf16.mxu0 0
      %2213 = vmatmul.mubr.bf16.gmra.mxu0 %v2008
      %v2214 = vpop.f32.mrf.mxu0
      %v2215 = vadd.f32 0.0, %v2214
      %v2216 = vpop.f32.mrf.mxu0
      %v2217 = vpop.f32.mrf.mxu0
      %v2218 = vadd.f32 0.0, %v2217
      %v2219 = vpop.f32.mrf.mxu0
      %2220 = vmatprep.mubr.bf16.mxu0 0
      %2221 = vmatmul.mubr.bf16.gmra.mxu0 %v2009
      %v2222 = vpop.f32.mrf.mxu0
      %v2223 = vadd.f32 0.0, %v2222
      %v2224 = vpop.f32.mrf.mxu0
      %v2225 = vpop.f32.mrf.mxu0
      %v2226 = vadd.f32 0.0, %v2225
      %v2227 = vpop.f32.mrf.mxu0
      %2228 = vmatprep.mubr.bf16.mxu0 0
      %2229 = vmatmul.mubr.bf16.gmra.mxu0 %v2010
      %v2230 = vpop.f32.mrf.mxu0
      %v2231 = vadd.f32 0.0, %v2230
      %v2232 = vpop.f32.mrf.mxu0
      %v2233 = vpop.f32.mrf.mxu0
      %v2234 = vadd.f32 0.0, %v2233
      %v2235 = vpop.f32.mrf.mxu0
      %2236 = vdwg.mxu0
      %v2237 = vadd.f32 %v1931, %v2111
      %v2238 = vadd.f32 %v1932, %v2114
      %v2239 = vadd.f32 %v1933, %v2119
      %v2240 = vadd.f32 %v1934, %v2122
      %v2241 = vadd.f32 %v1935, %v2127
      %v2242 = vadd.f32 %v1936, %v2130
      %v2243 = vadd.f32 %v1937, %v2135
      %v2244 = vadd.f32 %v1938, %v2138
      %v2245 = vadd.f32 %v1939, %v2143
      %v2246 = vadd.f32 %v1940, %v2146
      %v2247 = vadd.f32 %v1941, %v2151
      %v2248 = vadd.f32 %v1942, %v2154
      %v2249 = vadd.f32 %v1943, %v2159
      %v2250 = vadd.f32 %v1944, %v2162
      %v2251 = vadd.f32 %v1945, %v2167
      %v2252 = vadd.f32 %v1946, %v2170
      %v2253 = vadd.f32 %v1947, %v2175
      %v2254 = vadd.f32 %v1948, %v2178
      %v2255 = vadd.f32 %v1949, %v2183
      %v2256 = vadd.f32 %v1950, %v2186
      %v2257 = vadd.f32 %v1951, %v2191
      %v2258 = vadd.f32 %v1952, %v2194
      %v2259 = vadd.f32 %v1953, %v2199
      %v2260 = vadd.f32 %v1954, %v2202
      %v2261 = vadd.f32 %v1955, %v2207
      %v2262 = vadd.f32 %v1956, %v2210
      %v2263 = vadd.f32 %v1957, %v2215
      %v2264 = vadd.f32 %v1958, %v2218
      %v2265 = vadd.f32 %v1959, %v2223
      %v2266 = vadd.f32 %v1960, %v2226
      %v2267 = vadd.f32 %v1961, %v2231
      %v2268 = vadd.f32 %v1962, %v2234
      %s2269 = scalar_lea.vmem [#allocation2], 48
      %v2270 = vld [vmem:[%s2269] sm:$0xff]
      %v2271 = vld [vmem:[%s2269 + $0x8] sm:$0xff]
      %v2272 = vld [vmem:[%s2269 + $0x18] sm:$0xff]
      %v2273 = vld [vmem:[%s2269 + $0x20] sm:$0xff]
      %v2274 = vld [vmem:[%s2269 + $0x30] sm:$0xff]
      %v2275 = vld [vmem:[%s2269 + $0x38] sm:$0xff]
      %v2276 = vld [vmem:[%s2269 + $0x48] sm:$0xff]
      %v2277 = vld [vmem:[%s2269 + $0x50] sm:$0xff]
      %v2278 = vld [vmem:[%s2269 + $0x60] sm:$0xff]
      %v2279 = vld [vmem:[%s2269 + $0x68] sm:$0xff]
      %v2280 = vld [vmem:[%s2269 + $0x78] sm:$0xff]
      %v2281 = vld [vmem:[%s2269 + $0x80] sm:$0xff]
      %v2282 = vld [vmem:[%s2269 + $0x90] sm:$0xff]
      %v2283 = vld [vmem:[%s2269 + $0x98] sm:$0xff]
      %v2284 = vld [vmem:[%s2269 + $0xa8] sm:$0xff]
      %v2285 = vld [vmem:[%s2269 + $0xb0] sm:$0xff]
      %v2286 = vld [vmem:[%s2269 + $0xc0] sm:$0xff]
      %v2287 = vld [vmem:[%s2269 + $0xc8] sm:$0xff]
      %v2288 = vld [vmem:[%s2269 + $0xd8] sm:$0xff]
      %v2289 = vld [vmem:[%s2269 + $0xe0] sm:$0xff]
      %v2290 = vld [vmem:[%s2269 + $0xf0] sm:$0xff]
      %v2291 = vld [vmem:[%s2269 + $0xf8] sm:$0xff]
      %v2292 = vld [vmem:[%s2269 + $0x108] sm:$0xff]
      %v2293 = vld [vmem:[%s2269 + $0x110] sm:$0xff]
      %v2294 = vld [vmem:[%s2269 + $0x120] sm:$0xff]
      %v2295 = vld [vmem:[%s2269 + $0x128] sm:$0xff]
      %v2296 = vld [vmem:[%s2269 + $0x138] sm:$0xff]
      %v2297 = vld [vmem:[%s2269 + $0x140] sm:$0xff]
      %v2298 = vld [vmem:[%s2269 + $0x150] sm:$0xff]
      %v2299 = vld [vmem:[%s2269 + $0x158] sm:$0xff]
      %v2300 = vld [vmem:[%s2269 + $0x168] sm:$0xff]
      %v2301 = vld [vmem:[%s2269 + $0x170] sm:$0xff]
      %v2302 = vpack.c.bf16 %v2271, %v2270
      %v2303 = vpack.c.bf16 %v2273, %v2272
      %v2304 = vpack.c.bf16 %v2275, %v2274
      %v2305 = vpack.c.bf16 %v2277, %v2276
      %v2306 = vpack.c.bf16 %v2279, %v2278
      %v2307 = vpack.c.bf16 %v2281, %v2280
      %v2308 = vpack.c.bf16 %v2283, %v2282
      %v2309 = vpack.c.bf16 %v2285, %v2284
      %v2310 = vpack.c.bf16 %v2287, %v2286
      %v2311 = vpack.c.bf16 %v2289, %v2288
      %v2312 = vpack.c.bf16 %v2291, %v2290
      %v2313 = vpack.c.bf16 %v2293, %v2292
      %v2314 = vpack.c.bf16 %v2295, %v2294
      %v2315 = vpack.c.bf16 %v2297, %v2296
      %v2316 = vpack.c.bf16 %v2299, %v2298
      %v2317 = vpack.c.bf16 %v2301, %v2300
      %s2318 = scalar_lea.vmem %s3, 384
      %v2319 = vld [vmem:[%s2318] sm:$0xf]
      %v2320 = vld [vmem:[%s2318 + $0x4] sm:$0xf]
      %v2321 = vld [vmem:[%s2318 + $0x8] sm:$0xf]
      %v2322 = vld [vmem:[%s2318 + $0xc] sm:$0xf]
      %v2323 = vld [vmem:[%s2318 + $0x10] sm:$0xf]
      %v2324 = vld [vmem:[%s2318 + $0x14] sm:$0xf]
      %v2325 = vld [vmem:[%s2318 + $0x18] sm:$0xf]
      %v2326 = vld [vmem:[%s2318 + $0x1c] sm:$0xf]
      %v2327 = vld [vmem:[%s2318 + $0x20] sm:$0xf]
      %v2328 = vld [vmem:[%s2318 + $0x24] sm:$0xf]
      %v2329 = vld [vmem:[%s2318 + $0x28] sm:$0xf]
      %v2330 = vld [vmem:[%s2318 + $0x2c] sm:$0xf]
      %v2331 = vld [vmem:[%s2318 + $0x30] sm:$0xf]
      %v2332 = vld [vmem:[%s2318 + $0x34] sm:$0xf]
      %v2333 = vld [vmem:[%s2318 + $0x38] sm:$0xf]
      %v2334 = vld [vmem:[%s2318 + $0x3c] sm:$0xf]
      %v2351 = vunpack.c.l.b16 %v2319
      %v2352 = vunpack.c.l.b16 %v2320
      %v2353 = vunpack.c.l.b16 %v2321
      %v2354 = vunpack.c.l.b16 %v2322
      %v2355 = vunpack.c.l.b16 %v2323
      %v2356 = vunpack.c.l.b16 %v2324
      %v2357 = vunpack.c.l.b16 %v2325
      %v2358 = vunpack.c.l.b16 %v2326
      %v2359 = vunpack.c.l.b16 %v2327
      %v2360 = vunpack.c.l.b16 %v2328
      %v2361 = vunpack.c.l.b16 %v2329
      %v2362 = vunpack.c.l.b16 %v2330
      %v2363 = vunpack.c.l.b16 %v2331
      %v2364 = vunpack.c.l.b16 %v2332
      %v2365 = vunpack.c.l.b16 %v2333
      %v2366 = vunpack.c.l.b16 %v2334
      %v2367 = vpack.c.b16 %v2352, %v2351
      %v2368 = vpack.c.b16 %v2354, %v2353
      %v2369 = vpack.c.b16 %v2356, %v2355
      %v2370 = vpack.c.b16 %v2358, %v2357
      %v2371 = vpack.c.b16 %v2360, %v2359
      %v2372 = vpack.c.b16 %v2362, %v2361
      %v2373 = vpack.c.b16 %v2364, %v2363
      %v2374 = vpack.c.b16 %v2366, %v2365
      %2383 = vmatprep.subr.bf16.mxu0 0
      %2384 = vmatpush1.bf16.msra.mxu0 %v2374
      %2385 = vmatprep.subr.bf16.mxu0 0
      %2386 = vmatpush1.bf16.msra.mxu0 %v2373
      %2387 = vmatprep.subr.bf16.mxu0 0
      %2388 = vmatpush1.bf16.msra.mxu0 %v2372
      %2389 = vmatprep.subr.bf16.mxu0 0
      %2390 = vmatpush1.bf16.msra.mxu0 %v2371
      %2391 = vmatprep.subr.bf16.mxu0 0
      %2392 = vmatpush1.bf16.msra.mxu0 %v2370
      %2393 = vmatprep.subr.bf16.mxu0 0
      %2394 = vmatpush1.bf16.msra.mxu0 %v2369
      %2395 = vmatprep.subr.bf16.mxu0 0
      %2396 = vmatpush1.bf16.msra.mxu0 %v2368
      %2397 = vmatprep.subr.bf16.mxu0 0
      %2398 = vmatpush1.bf16.msra.mxu0 %v2367
      %2399 = vmatprep.subr.bf16.mxu0 0
      %2400 = vmatpush2.bf16.msra.mxu0 0
      %2401 = vmatprep.subr.bf16.mxu0 0
      %2402 = vmatpush2.bf16.msra.mxu0 0
      %2403 = vmatprep.subr.bf16.mxu0 0
      %2404 = vmatpush2.bf16.msra.mxu0 0
      %2405 = vmatprep.subr.bf16.mxu0 0
      %2406 = vmatpush2.bf16.msra.mxu0 0
      %2407 = vmatprep.subr.bf16.mxu0 0
      %2408 = vmatpush2.bf16.msra.mxu0 0
      %2409 = vmatprep.subr.bf16.mxu0 0
      %2410 = vmatpush2.bf16.msra.mxu0 0
      %2411 = vmatprep.subr.bf16.mxu0 0
      %2412 = vmatpush2.bf16.msra.mxu0 0
      %2413 = vmatprep.subr.bf16.mxu0 0
      %2414 = vmatpush2.bf16.msra.mxu0 0
      %2415 = vmatprep.mubr.bf16.mxu0 0
      %2416 = vmatmul.mubr.bf16.gmra.mxu0 %v2302
      %v2417 = vpop.f32.mrf.mxu0
      %v2418 = vadd.f32 0.0, %v2417
      %v2419 = vpop.f32.mrf.mxu0
      %v2420 = vpop.f32.mrf.mxu0
      %v2421 = vadd.f32 0.0, %v2420
      %v2422 = vpop.f32.mrf.mxu0
      %2423 = vmatprep.mubr.bf16.mxu0 0
      %2424 = vmatmul.mubr.bf16.gmra.mxu0 %v2303
      %v2425 = vpop.f32.mrf.mxu0
      %v2426 = vadd.f32 0.0, %v2425
      %v2427 = vpop.f32.mrf.mxu0
      %v2428 = vpop.f32.mrf.mxu0
      %v2429 = vadd.f32 0.0, %v2428
      %v2430 = vpop.f32.mrf.mxu0
      %2431 = vmatprep.mubr.bf16.mxu0 0
      %2432 = vmatmul.mubr.bf16.gmra.mxu0 %v2304
      %v2433 = vpop.f32.mrf.mxu0
      %v2434 = vadd.f32 0.0, %v2433
      %v2435 = vpop.f32.mrf.mxu0
      %v2436 = vpop.f32.mrf.mxu0
      %v2437 = vadd.f32 0.0, %v2436
      %v2438 = vpop.f32.mrf.mxu0
      %2439 = vmatprep.mubr.bf16.mxu0 0
      %2440 = vmatmul.mubr.bf16.gmra.mxu0 %v2305
      %v2441 = vpop.f32.mrf.mxu0
      %v2442 = vadd.f32 0.0, %v2441
      %v2443 = vpop.f32.mrf.mxu0
      %v2444 = vpop.f32.mrf.mxu0
      %v2445 = vadd.f32 0.0, %v2444
      %v2446 = vpop.f32.mrf.mxu0
      %2447 = vmatprep.mubr.bf16.mxu0 0
      %2448 = vmatmul.mubr.bf16.gmra.mxu0 %v2306
      %v2449 = vpop.f32.mrf.mxu0
      %v2450 = vadd.f32 0.0, %v2449
      %v2451 = vpop.f32.mrf.mxu0
      %v2452 = vpop.f32.mrf.mxu0
      %v2453 = vadd.f32 0.0, %v2452
      %v2454 = vpop.f32.mrf.mxu0
      %2455 = vmatprep.mubr.bf16.mxu0 0
      %2456 = vmatmul.mubr.bf16.gmra.mxu0 %v2307
      %v2457 = vpop.f32.mrf.mxu0
      %v2458 = vadd.f32 0.0, %v2457
      %v2459 = vpop.f32.mrf.mxu0
      %v2460 = vpop.f32.mrf.mxu0
      %v2461 = vadd.f32 0.0, %v2460
      %v2462 = vpop.f32.mrf.mxu0
      %2463 = vmatprep.mubr.bf16.mxu0 0
      %2464 = vmatmul.mubr.bf16.gmra.mxu0 %v2308
      %v2465 = vpop.f32.mrf.mxu0
      %v2466 = vadd.f32 0.0, %v2465
      %v2467 = vpop.f32.mrf.mxu0
      %v2468 = vpop.f32.mrf.mxu0
      %v2469 = vadd.f32 0.0, %v2468
      %v2470 = vpop.f32.mrf.mxu0
      %2471 = vmatprep.mubr.bf16.mxu0 0
      %2472 = vmatmul.mubr.bf16.gmra.mxu0 %v2309
      %v2473 = vpop.f32.mrf.mxu0
      %v2474 = vadd.f32 0.0, %v2473
      %v2475 = vpop.f32.mrf.mxu0
      %v2476 = vpop.f32.mrf.mxu0
      %v2477 = vadd.f32 0.0, %v2476
      %v2478 = vpop.f32.mrf.mxu0
      %2479 = vmatprep.mubr.bf16.mxu0 0
      %2480 = vmatmul.mubr.bf16.gmra.mxu0 %v2310
      %v2481 = vpop.f32.mrf.mxu0
      %v2482 = vadd.f32 0.0, %v2481
      %v2483 = vpop.f32.mrf.mxu0
      %v2484 = vpop.f32.mrf.mxu0
      %v2485 = vadd.f32 0.0, %v2484
      %v2486 = vpop.f32.mrf.mxu0
      %2487 = vmatprep.mubr.bf16.mxu0 0
      %2488 = vmatmul.mubr.bf16.gmra.mxu0 %v2311
      %v2489 = vpop.f32.mrf.mxu0
      %v2490 = vadd.f32 0.0, %v2489
      %v2491 = vpop.f32.mrf.mxu0
      %v2492 = vpop.f32.mrf.mxu0
      %v2493 = vadd.f32 0.0, %v2492
      %v2494 = vpop.f32.mrf.mxu0
      %2495 = vmatprep.mubr.bf16.mxu0 0
      %2496 = vmatmul.mubr.bf16.gmra.mxu0 %v2312
      %v2497 = vpop.f32.mrf.mxu0
      %v2498 = vadd.f32 0.0, %v2497
      %v2499 = vpop.f32.mrf.mxu0
      %v2500 = vpop.f32.mrf.mxu0
      %v2501 = vadd.f32 0.0, %v2500
      %v2502 = vpop.f32.mrf.mxu0
      %2503 = vmatprep.mubr.bf16.mxu0 0
      %2504 = vmatmul.mubr.bf16.gmra.mxu0 %v2313
      %v2505 = vpop.f32.mrf.mxu0
      %v2506 = vadd.f32 0.0, %v2505
      %v2507 = vpop.f32.mrf.mxu0
      %v2508 = vpop.f32.mrf.mxu0
      %v2509 = vadd.f32 0.0, %v2508
      %v2510 = vpop.f32.mrf.mxu0
      %2511 = vmatprep.mubr.bf16.mxu0 0
      %2512 = vmatmul.mubr.bf16.gmra.mxu0 %v2314
      %v2513 = vpop.f32.mrf.mxu0
      %v2514 = vadd.f32 0.0, %v2513
      %v2515 = vpop.f32.mrf.mxu0
      %v2516 = vpop.f32.mrf.mxu0
      %v2517 = vadd.f32 0.0, %v2516
      %v2518 = vpop.f32.mrf.mxu0
      %2519 = vmatprep.mubr.bf16.mxu0 0
      %2520 = vmatmul.mubr.bf16.gmra.mxu0 %v2315
      %v2521 = vpop.f32.mrf.mxu0
      %v2522 = vadd.f32 0.0, %v2521
      %v2523 = vpop.f32.mrf.mxu0
      %v2524 = vpop.f32.mrf.mxu0
      %v2525 = vadd.f32 0.0, %v2524
      %v2526 = vpop.f32.mrf.mxu0
      %2527 = vmatprep.mubr.bf16.mxu0 0
      %2528 = vmatmul.mubr.bf16.gmra.mxu0 %v2316
      %v2529 = vpop.f32.mrf.mxu0
      %v2530 = vadd.f32 0.0, %v2529
      %v2531 = vpop.f32.mrf.mxu0
      %v2532 = vpop.f32.mrf.mxu0
      %v2533 = vadd.f32 0.0, %v2532
      %v2534 = vpop.f32.mrf.mxu0
      %2535 = vmatprep.mubr.bf16.mxu0 0
      %2536 = vmatmul.mubr.bf16.gmra.mxu0 %v2317
      %v2537 = vpop.f32.mrf.mxu0
      %v2538 = vadd.f32 0.0, %v2537
      %v2539 = vpop.f32.mrf.mxu0
      %v2540 = vpop.f32.mrf.mxu0
      %v2541 = vadd.f32 0.0, %v2540
      %v2542 = vpop.f32.mrf.mxu0
      %2543 = vdwg.mxu0
      %v2544 = vadd.f32 %v2237, %v2418
      %v2545 = vadd.f32 %v2238, %v2421
      %v2546 = vadd.f32 %v2239, %v2426
      %v2547 = vadd.f32 %v2240, %v2429
      %v2548 = vadd.f32 %v2241, %v2434
      %v2549 = vadd.f32 %v2242, %v2437
      %v2550 = vadd.f32 %v2243, %v2442
      %v2551 = vadd.f32 %v2244, %v2445
      %v2552 = vadd.f32 %v2245, %v2450
      %v2553 = vadd.f32 %v2246, %v2453
      %v2554 = vadd.f32 %v2247, %v2458
      %v2555 = vadd.f32 %v2248, %v2461
      %v2556 = vadd.f32 %v2249, %v2466
      %v2557 = vadd.f32 %v2250, %v2469
      %v2558 = vadd.f32 %v2251, %v2474
      %v2559 = vadd.f32 %v2252, %v2477
      %v2560 = vadd.f32 %v2253, %v2482
      %v2561 = vadd.f32 %v2254, %v2485
      %v2562 = vadd.f32 %v2255, %v2490
      %v2563 = vadd.f32 %v2256, %v2493
      %v2564 = vadd.f32 %v2257, %v2498
      %v2565 = vadd.f32 %v2258, %v2501
      %v2566 = vadd.f32 %v2259, %v2506
      %v2567 = vadd.f32 %v2260, %v2509
      %v2568 = vadd.f32 %v2261, %v2514
      %v2569 = vadd.f32 %v2262, %v2517
      %v2570 = vadd.f32 %v2263, %v2522
      %v2571 = vadd.f32 %v2264, %v2525
      %v2572 = vadd.f32 %v2265, %v2530
      %v2573 = vadd.f32 %v2266, %v2533
      %v2574 = vadd.f32 %v2267, %v2538
      %v2575 = vadd.f32 %v2268, %v2541
      %v2576 = vld [vmem:[%s2269 + $0x1] sm:$0xff]
      %v2577 = vld [vmem:[%s2269 + $0x9] sm:$0xff]
      %v2578 = vld [vmem:[%s2269 + $0x19] sm:$0xff]
      %v2579 = vld [vmem:[%s2269 + $0x21] sm:$0xff]
      %v2580 = vld [vmem:[%s2269 + $0x31] sm:$0xff]
      %v2581 = vld [vmem:[%s2269 + $0x39] sm:$0xff]
      %v2582 = vld [vmem:[%s2269 + $0x49] sm:$0xff]
      %v2583 = vld [vmem:[%s2269 + $0x51] sm:$0xff]
      %v2584 = vld [vmem:[%s2269 + $0x61] sm:$0xff]
      %v2585 = vld [vmem:[%s2269 + $0x69] sm:$0xff]
      %v2586 = vld [vmem:[%s2269 + $0x79] sm:$0xff]
      %v2587 = vld [vmem:[%s2269 + $0x81] sm:$0xff]
      %v2588 = vld [vmem:[%s2269 + $0x91] sm:$0xff]
      %v2589 = vld [vmem:[%s2269 + $0x99] sm:$0xff]
      %v2590 = vld [vmem:[%s2269 + $0xa9] sm:$0xff]
      %v2591 = vld [vmem:[%s2269 + $0xb1] sm:$0xff]
      %v2592 = vld [vmem:[%s2269 + $0xc1] sm:$0xff]
      %v2593 = vld [vmem:[%s2269 + $0xc9] sm:$0xff]
      %v2594 = vld [vmem:[%s2269 + $0xd9] sm:$0xff]
      %v2595 = vld [vmem:[%s2269 + $0xe1] sm:$0xff]
      %v2596 = vld [vmem:[%s2269 + $0xf1] sm:$0xff]
      %v2597 = vld [vmem:[%s2269 + $0xf9] sm:$0xff]
      %v2598 = vld [vmem:[%s2269 + $0x109] sm:$0xff]
      %v2599 = vld [vmem:[%s2269 + $0x111] sm:$0xff]
      %v2600 = vld [vmem:[%s2269 + $0x121] sm:$0xff]
      %v2601 = vld [vmem:[%s2269 + $0x129] sm:$0xff]
      %v2602 = vld [vmem:[%s2269 + $0x139] sm:$0xff]
      %v2603 = vld [vmem:[%s2269 + $0x141] sm:$0xff]
      %v2604 = vld [vmem:[%s2269 + $0x151] sm:$0xff]
      %v2605 = vld [vmem:[%s2269 + $0x159] sm:$0xff]
      %v2606 = vld [vmem:[%s2269 + $0x169] sm:$0xff]
      %v2607 = vld [vmem:[%s2269 + $0x171] sm:$0xff]
      %v2608 = vpack.c.bf16 %v2577, %v2576
      %v2609 = vpack.c.bf16 %v2579, %v2578
      %v2610 = vpack.c.bf16 %v2581, %v2580
      %v2611 = vpack.c.bf16 %v2583, %v2582
      %v2612 = vpack.c.bf16 %v2585, %v2584
      %v2613 = vpack.c.bf16 %v2587, %v2586
      %v2614 = vpack.c.bf16 %v2589, %v2588
      %v2615 = vpack.c.bf16 %v2591, %v2590
      %v2616 = vpack.c.bf16 %v2593, %v2592
      %v2617 = vpack.c.bf16 %v2595, %v2594
      %v2618 = vpack.c.bf16 %v2597, %v2596
      %v2619 = vpack.c.bf16 %v2599, %v2598
      %v2620 = vpack.c.bf16 %v2601, %v2600
      %v2621 = vpack.c.bf16 %v2603, %v2602
      %v2622 = vpack.c.bf16 %v2605, %v2604
      %v2623 = vpack.c.bf16 %v2607, %v2606
      %s2624 = scalar_lea.vmem %s3, 448
      %v2625 = vld [vmem:[%s2624] sm:$0xf]
      %v2626 = vld [vmem:[%s2624 + $0x4] sm:$0xf]
      %v2627 = vld [vmem:[%s2624 + $0x8] sm:$0xf]
      %v2628 = vld [vmem:[%s2624 + $0xc] sm:$0xf]
      %v2629 = vld [vmem:[%s2624 + $0x10] sm:$0xf]
      %v2630 = vld [vmem:[%s2624 + $0x14] sm:$0xf]
      %v2631 = vld [vmem:[%s2624 + $0x18] sm:$0xf]
      %v2632 = vld [vmem:[%s2624 + $0x1c] sm:$0xf]
      %v2633 = vld [vmem:[%s2624 + $0x20] sm:$0xf]
      %v2634 = vld [vmem:[%s2624 + $0x24] sm:$0xf]
      %v2635 = vld [vmem:[%s2624 + $0x28] sm:$0xf]
      %v2636 = vld [vmem:[%s2624 + $0x2c] sm:$0xf]
      %v2637 = vld [vmem:[%s2624 + $0x30] sm:$0xf]
      %v2638 = vld [vmem:[%s2624 + $0x34] sm:$0xf]
      %v2639 = vld [vmem:[%s2624 + $0x38] sm:$0xf]
      %v2640 = vld [vmem:[%s2624 + $0x3c] sm:$0xf]
      %v2657 = vunpack.c.l.b16 %v2625
      %v2658 = vunpack.c.l.b16 %v2626
      %v2659 = vunpack.c.l.b16 %v2627
      %v2660 = vunpack.c.l.b16 %v2628
      %v2661 = vunpack.c.l.b16 %v2629
      %v2662 = vunpack.c.l.b16 %v2630
      %v2663 = vunpack.c.l.b16 %v2631
      %v2664 = vunpack.c.l.b16 %v2632
      %v2665 = vunpack.c.l.b16 %v2633
      %v2666 = vunpack.c.l.b16 %v2634
      %v2667 = vunpack.c.l.b16 %v2635
      %v2668 = vunpack.c.l.b16 %v2636
      %v2669 = vunpack.c.l.b16 %v2637
      %v2670 = vunpack.c.l.b16 %v2638
      %v2671 = vunpack.c.l.b16 %v2639
      %v2672 = vunpack.c.l.b16 %v2640
      %v2673 = vpack.c.b16 %v2658, %v2657
      %v2674 = vpack.c.b16 %v2660, %v2659
      %v2675 = vpack.c.b16 %v2662, %v2661
      %v2676 = vpack.c.b16 %v2664, %v2663
      %v2677 = vpack.c.b16 %v2666, %v2665
      %v2678 = vpack.c.b16 %v2668, %v2667
      %v2679 = vpack.c.b16 %v2670, %v2669
      %v2680 = vpack.c.b16 %v2672, %v2671
      %2689 = vmatprep.subr.bf16.mxu0 0
      %2690 = vmatpush1.bf16.msra.mxu0 %v2680
      %2691 = vmatprep.subr.bf16.mxu0 0
      %2692 = vmatpush1.bf16.msra.mxu0 %v2679
      %2693 = vmatprep.subr.bf16.mxu0 0
      %2694 = vmatpush1.bf16.msra.mxu0 %v2678
      %2695 = vmatprep.subr.bf16.mxu0 0
      %2696 = vmatpush1.bf16.msra.mxu0 %v2677
      %2697 = vmatprep.subr.bf16.mxu0 0
      %2698 = vmatpush1.bf16.msra.mxu0 %v2676
      %2699 = vmatprep.subr.bf16.mxu0 0
      %2700 = vmatpush1.bf16.msra.mxu0 %v2675
      %2701 = vmatprep.subr.bf16.mxu0 0
      %2702 = vmatpush1.bf16.msra.mxu0 %v2674
      %2703 = vmatprep.subr.bf16.mxu0 0
      %2704 = vmatpush1.bf16.msra.mxu0 %v2673
      %2705 = vmatprep.subr.bf16.mxu0 0
      %2706 = vmatpush2.bf16.msra.mxu0 0
      %2707 = vmatprep.subr.bf16.mxu0 0
      %2708 = vmatpush2.bf16.msra.mxu0 0
      %2709 = vmatprep.subr.bf16.mxu0 0
      %2710 = vmatpush2.bf16.msra.mxu0 0
      %2711 = vmatprep.subr.bf16.mxu0 0
      %2712 = vmatpush2.bf16.msra.mxu0 0
      %2713 = vmatprep.subr.bf16.mxu0 0
      %2714 = vmatpush2.bf16.msra.mxu0 0
      %2715 = vmatprep.subr.bf16.mxu0 0
      %2716 = vmatpush2.bf16.msra.mxu0 0
      %2717 = vmatprep.subr.bf16.mxu0 0
      %2718 = vmatpush2.bf16.msra.mxu0 0
      %2719 = vmatprep.subr.bf16.mxu0 0
      %2720 = vmatpush2.bf16.msra.mxu0 0
      %2721 = vmatprep.mubr.bf16.mxu0 0
      %2722 = vmatmul.mubr.bf16.gmra.mxu0 %v2608
      %v2723 = vpop.f32.mrf.mxu0
      %v2724 = vadd.f32 0.0, %v2723
      %v2725 = vpop.f32.mrf.mxu0
      %v2726 = vpop.f32.mrf.mxu0
      %v2727 = vadd.f32 0.0, %v2726
      %v2728 = vpop.f32.mrf.mxu0
      %2729 = vmatprep.mubr.bf16.mxu0 0
      %2730 = vmatmul.mubr.bf16.gmra.mxu0 %v2609
      %v2731 = vpop.f32.mrf.mxu0
      %v2732 = vadd.f32 0.0, %v2731
      %v2733 = vpop.f32.mrf.mxu0
      %v2734 = vpop.f32.mrf.mxu0
      %v2735 = vadd.f32 0.0, %v2734
      %v2736 = vpop.f32.mrf.mxu0
      %2737 = vmatprep.mubr.bf16.mxu0 0
      %2738 = vmatmul.mubr.bf16.gmra.mxu0 %v2610
      %v2739 = vpop.f32.mrf.mxu0
      %v2740 = vadd.f32 0.0, %v2739
      %v2741 = vpop.f32.mrf.mxu0
      %v2742 = vpop.f32.mrf.mxu0
      %v2743 = vadd.f32 0.0, %v2742
      %v2744 = vpop.f32.mrf.mxu0
      %2745 = vmatprep.mubr.bf16.mxu0 0
      %2746 = vmatmul.mubr.bf16.gmra.mxu0 %v2611
      %v2747 = vpop.f32.mrf.mxu0
      %v2748 = vadd.f32 0.0, %v2747
      %v2749 = vpop.f32.mrf.mxu0
      %v2750 = vpop.f32.mrf.mxu0
      %v2751 = vadd.f32 0.0, %v2750
      %v2752 = vpop.f32.mrf.mxu0
      %2753 = vmatprep.mubr.bf16.mxu0 0
      %2754 = vmatmul.mubr.bf16.gmra.mxu0 %v2612
      %v2755 = vpop.f32.mrf.mxu0
      %v2756 = vadd.f32 0.0, %v2755
      %v2757 = vpop.f32.mrf.mxu0
      %v2758 = vpop.f32.mrf.mxu0
      %v2759 = vadd.f32 0.0, %v2758
      %v2760 = vpop.f32.mrf.mxu0
      %2761 = vmatprep.mubr.bf16.mxu0 0
      %2762 = vmatmul.mubr.bf16.gmra.mxu0 %v2613
      %v2763 = vpop.f32.mrf.mxu0
      %v2764 = vadd.f32 0.0, %v2763
      %v2765 = vpop.f32.mrf.mxu0
      %v2766 = vpop.f32.mrf.mxu0
      %v2767 = vadd.f32 0.0, %v2766
      %v2768 = vpop.f32.mrf.mxu0
      %2769 = vmatprep.mubr.bf16.mxu0 0
      %2770 = vmatmul.mubr.bf16.gmra.mxu0 %v2614
      %v2771 = vpop.f32.mrf.mxu0
      %v2772 = vadd.f32 0.0, %v2771
      %v2773 = vpop.f32.mrf.mxu0
      %v2774 = vpop.f32.mrf.mxu0
      %v2775 = vadd.f32 0.0, %v2774
      %v2776 = vpop.f32.mrf.mxu0
      %2777 = vmatprep.mubr.bf16.mxu0 0
      %2778 = vmatmul.mubr.bf16.gmra.mxu0 %v2615
      %v2779 = vpop.f32.mrf.mxu0
      %v2780 = vadd.f32 0.0, %v2779
      %v2781 = vpop.f32.mrf.mxu0
      %v2782 = vpop.f32.mrf.mxu0
      %v2783 = vadd.f32 0.0, %v2782
      %v2784 = vpop.f32.mrf.mxu0
      %2785 = vmatprep.mubr.bf16.mxu0 0
      %2786 = vmatmul.mubr.bf16.gmra.mxu0 %v2616
      %v2787 = vpop.f32.mrf.mxu0
      %v2788 = vadd.f32 0.0, %v2787
      %v2789 = vpop.f32.mrf.mxu0
      %v2790 = vpop.f32.mrf.mxu0
      %v2791 = vadd.f32 0.0, %v2790
      %v2792 = vpop.f32.mrf.mxu0
      %2793 = vmatprep.mubr.bf16.mxu0 0
      %2794 = vmatmul.mubr.bf16.gmra.mxu0 %v2617
      %v2795 = vpop.f32.mrf.mxu0
      %v2796 = vadd.f32 0.0, %v2795
      %v2797 = vpop.f32.mrf.mxu0
      %v2798 = vpop.f32.mrf.mxu0
      %v2799 = vadd.f32 0.0, %v2798
      %v2800 = vpop.f32.mrf.mxu0
      %2801 = vmatprep.mubr.bf16.mxu0 0
      %2802 = vmatmul.mubr.bf16.gmra.mxu0 %v2618
      %v2803 = vpop.f32.mrf.mxu0
      %v2804 = vadd.f32 0.0, %v2803
      %v2805 = vpop.f32.mrf.mxu0
      %v2806 = vpop.f32.mrf.mxu0
      %v2807 = vadd.f32 0.0, %v2806
      %v2808 = vpop.f32.mrf.mxu0
      %2809 = vmatprep.mubr.bf16.mxu0 0
      %2810 = vmatmul.mubr.bf16.gmra.mxu0 %v2619
      %v2811 = vpop.f32.mrf.mxu0
      %v2812 = vadd.f32 0.0, %v2811
      %v2813 = vpop.f32.mrf.mxu0
      %v2814 = vpop.f32.mrf.mxu0
      %v2815 = vadd.f32 0.0, %v2814
      %v2816 = vpop.f32.mrf.mxu0
      %2817 = vmatprep.mubr.bf16.mxu0 0
      %2818 = vmatmul.mubr.bf16.gmra.mxu0 %v2620
      %v2819 = vpop.f32.mrf.mxu0
      %v2820 = vadd.f32 0.0, %v2819
      %v2821 = vpop.f32.mrf.mxu0
      %v2822 = vpop.f32.mrf.mxu0
      %v2823 = vadd.f32 0.0, %v2822
      %v2824 = vpop.f32.mrf.mxu0
      %2825 = vmatprep.mubr.bf16.mxu0 0
      %2826 = vmatmul.mubr.bf16.gmra.mxu0 %v2621
      %v2827 = vpop.f32.mrf.mxu0
      %v2828 = vadd.f32 0.0, %v2827
      %v2829 = vpop.f32.mrf.mxu0
      %v2830 = vpop.f32.mrf.mxu0
      %v2831 = vadd.f32 0.0, %v2830
      %v2832 = vpop.f32.mrf.mxu0
      %2833 = vmatprep.mubr.bf16.mxu0 0
      %2834 = vmatmul.mubr.bf16.gmra.mxu0 %v2622
      %v2835 = vpop.f32.mrf.mxu0
      %v2836 = vadd.f32 0.0, %v2835
      %v2837 = vpop.f32.mrf.mxu0
      %v2838 = vpop.f32.mrf.mxu0
      %v2839 = vadd.f32 0.0, %v2838
      %v2840 = vpop.f32.mrf.mxu0
      %2841 = vmatprep.mubr.bf16.mxu0 0
      %2842 = vmatmul.mubr.bf16.gmra.mxu0 %v2623
      %v2843 = vpop.f32.mrf.mxu0
      %v2844 = vadd.f32 0.0, %v2843
      %v2845 = vpop.f32.mrf.mxu0
      %v2846 = vpop.f32.mrf.mxu0
      %v2847 = vadd.f32 0.0, %v2846
      %v2848 = vpop.f32.mrf.mxu0
      %2849 = vdwg.mxu0
      %v2850 = vadd.f32 %v2544, %v2724
      %v2851 = vadd.f32 %v2545, %v2727
      %v2852 = vadd.f32 %v2546, %v2732
      %v2853 = vadd.f32 %v2547, %v2735
      %v2854 = vadd.f32 %v2548, %v2740
      %v2855 = vadd.f32 %v2549, %v2743
      %v2856 = vadd.f32 %v2550, %v2748
      %v2857 = vadd.f32 %v2551, %v2751
      %v2858 = vadd.f32 %v2552, %v2756
      %v2859 = vadd.f32 %v2553, %v2759
      %v2860 = vadd.f32 %v2554, %v2764
      %v2861 = vadd.f32 %v2555, %v2767
      %v2862 = vadd.f32 %v2556, %v2772
      %v2863 = vadd.f32 %v2557, %v2775
      %v2864 = vadd.f32 %v2558, %v2780
      %v2865 = vadd.f32 %v2559, %v2783
      %v2866 = vadd.f32 %v2560, %v2788
      %v2867 = vadd.f32 %v2561, %v2791
      %v2868 = vadd.f32 %v2562, %v2796
      %v2869 = vadd.f32 %v2563, %v2799
      %v2870 = vadd.f32 %v2564, %v2804
      %v2871 = vadd.f32 %v2565, %v2807
      %v2872 = vadd.f32 %v2566, %v2812
      %v2873 = vadd.f32 %v2567, %v2815
      %v2874 = vadd.f32 %v2568, %v2820
      %v2875 = vadd.f32 %v2569, %v2823
      %v2876 = vadd.f32 %v2570, %v2828
      %v2877 = vadd.f32 %v2571, %v2831
      %v2878 = vadd.f32 %v2572, %v2836
      %v2879 = vadd.f32 %v2573, %v2839
      %v2880 = vadd.f32 %v2574, %v2844
      %v2881 = vadd.f32 %v2575, %v2847
      %v2882 = vld [vmem:[%s2269 + $0x2] sm:$0xff]
      %v2883 = vld [vmem:[%s2269 + $0xa] sm:$0xff]
      %v2884 = vld [vmem:[%s2269 + $0x1a] sm:$0xff]
      %v2885 = vld [vmem:[%s2269 + $0x22] sm:$0xff]
      %v2886 = vld [vmem:[%s2269 + $0x32] sm:$0xff]
      %v2887 = vld [vmem:[%s2269 + $0x3a] sm:$0xff]
      %v2888 = vld [vmem:[%s2269 + $0x4a] sm:$0xff]
      %v2889 = vld [vmem:[%s2269 + $0x52] sm:$0xff]
      %v2890 = vld [vmem:[%s2269 + $0x62] sm:$0xff]
      %v2891 = vld [vmem:[%s2269 + $0x6a] sm:$0xff]
      %v2892 = vld [vmem:[%s2269 + $0x7a] sm:$0xff]
      %v2893 = vld [vmem:[%s2269 + $0x82] sm:$0xff]
      %v2894 = vld [vmem:[%s2269 + $0x92] sm:$0xff]
      %v2895 = vld [vmem:[%s2269 + $0x9a] sm:$0xff]
      %v2896 = vld [vmem:[%s2269 + $0xaa] sm:$0xff]
      %v2897 = vld [vmem:[%s2269 + $0xb2] sm:$0xff]
      %v2898 = vld [vmem:[%s2269 + $0xc2] sm:$0xff]
      %v2899 = vld [vmem:[%s2269 + $0xca] sm:$0xff]
      %v2900 = vld [vmem:[%s2269 + $0xda] sm:$0xff]
      %v2901 = vld [vmem:[%s2269 + $0xe2] sm:$0xff]
      %v2902 = vld [vmem:[%s2269 + $0xf2] sm:$0xff]
      %v2903 = vld [vmem:[%s2269 + $0xfa] sm:$0xff]
      %v2904 = vld [vmem:[%s2269 + $0x10a] sm:$0xff]
      %v2905 = vld [vmem:[%s2269 + $0x112] sm:$0xff]
      %v2906 = vld [vmem:[%s2269 + $0x122] sm:$0xff]
      %v2907 = vld [vmem:[%s2269 + $0x12a] sm:$0xff]
      %v2908 = vld [vmem:[%s2269 + $0x13a] sm:$0xff]
      %v2909 = vld [vmem:[%s2269 + $0x142] sm:$0xff]
      %v2910 = vld [vmem:[%s2269 + $0x152] sm:$0xff]
      %v2911 = vld [vmem:[%s2269 + $0x15a] sm:$0xff]
      %v2912 = vld [vmem:[%s2269 + $0x16a] sm:$0xff]
      %v2913 = vld [vmem:[%s2269 + $0x172] sm:$0xff]
      %v2914 = vpack.c.bf16 %v2883, %v2882
      %v2915 = vpack.c.bf16 %v2885, %v2884
      %v2916 = vpack.c.bf16 %v2887, %v2886
      %v2917 = vpack.c.bf16 %v2889, %v2888
      %v2918 = vpack.c.bf16 %v2891, %v2890
      %v2919 = vpack.c.bf16 %v2893, %v2892
      %v2920 = vpack.c.bf16 %v2895, %v2894
      %v2921 = vpack.c.bf16 %v2897, %v2896
      %v2922 = vpack.c.bf16 %v2899, %v2898
      %v2923 = vpack.c.bf16 %v2901, %v2900
      %v2924 = vpack.c.bf16 %v2903, %v2902
      %v2925 = vpack.c.bf16 %v2905, %v2904
      %v2926 = vpack.c.bf16 %v2907, %v2906
      %v2927 = vpack.c.bf16 %v2909, %v2908
      %v2928 = vpack.c.bf16 %v2911, %v2910
      %v2929 = vpack.c.bf16 %v2913, %v2912
      %s2930 = scalar_lea.vmem %s3, 512
      %v2931 = vld [vmem:[%s2930] sm:$0xf]
      %v2932 = vld [vmem:[%s2930 + $0x4] sm:$0xf]
      %v2933 = vld [vmem:[%s2930 + $0x8] sm:$0xf]
      %v2934 = vld [vmem:[%s2930 + $0xc] sm:$0xf]
      %v2935 = vld [vmem:[%s2930 + $0x10] sm:$0xf]
      %v2936 = vld [vmem:[%s2930 + $0x14] sm:$0xf]
      %v2937 = vld [vmem:[%s2930 + $0x18] sm:$0xf]
      %v2938 = vld [vmem:[%s2930 + $0x1c] sm:$0xf]
      %v2939 = vld [vmem:[%s2930 + $0x20] sm:$0xf]
      %v2940 = vld [vmem:[%s2930 + $0x24] sm:$0xf]
      %v2941 = vld [vmem:[%s2930 + $0x28] sm:$0xf]
      %v2942 = vld [vmem:[%s2930 + $0x2c] sm:$0xf]
      %v2943 = vld [vmem:[%s2930 + $0x30] sm:$0xf]
      %v2944 = vld [vmem:[%s2930 + $0x34] sm:$0xf]
      %v2945 = vld [vmem:[%s2930 + $0x38] sm:$0xf]
      %v2946 = vld [vmem:[%s2930 + $0x3c] sm:$0xf]
      %v2963 = vunpack.c.l.b16 %v2931
      %v2964 = vunpack.c.l.b16 %v2932
      %v2965 = vunpack.c.l.b16 %v2933
      %v2966 = vunpack.c.l.b16 %v2934
      %v2967 = vunpack.c.l.b16 %v2935
      %v2968 = vunpack.c.l.b16 %v2936
      %v2969 = vunpack.c.l.b16 %v2937
      %v2970 = vunpack.c.l.b16 %v2938
      %v2971 = vunpack.c.l.b16 %v2939
      %v2972 = vunpack.c.l.b16 %v2940
      %v2973 = vunpack.c.l.b16 %v2941
      %v2974 = vunpack.c.l.b16 %v2942
      %v2975 = vunpack.c.l.b16 %v2943
      %v2976 = vunpack.c.l.b16 %v2944
      %v2977 = vunpack.c.l.b16 %v2945
      %v2978 = vunpack.c.l.b16 %v2946
      %v2979 = vpack.c.b16 %v2964, %v2963
      %v2980 = vpack.c.b16 %v2966, %v2965
      %v2981 = vpack.c.b16 %v2968, %v2967
      %v2982 = vpack.c.b16 %v2970, %v2969
      %v2983 = vpack.c.b16 %v2972, %v2971
      %v2984 = vpack.c.b16 %v2974, %v2973
      %v2985 = vpack.c.b16 %v2976, %v2975
      %v2986 = vpack.c.b16 %v2978, %v2977
      %2995 = vmatprep.subr.bf16.mxu0 0
      %2996 = vmatpush1.bf16.msra.mxu0 %v2986
      %2997 = vmatprep.subr.bf16.mxu0 0
      %2998 = vmatpush1.bf16.msra.mxu0 %v2985
      %2999 = vmatprep.subr.bf16.mxu0 0
      %3000 = vmatpush1.bf16.msra.mxu0 %v2984
      %3001 = vmatprep.subr.bf16.mxu0 0
      %3002 = vmatpush1.bf16.msra.mxu0 %v2983
      %3003 = vmatprep.subr.bf16.mxu0 0
      %3004 = vmatpush1.bf16.msra.mxu0 %v2982
      %3005 = vmatprep.subr.bf16.mxu0 0
      %3006 = vmatpush1.bf16.msra.mxu0 %v2981
      %3007 = vmatprep.subr.bf16.mxu0 0
      %3008 = vmatpush1.bf16.msra.mxu0 %v2980
      %3009 = vmatprep.subr.bf16.mxu0 0
      %3010 = vmatpush1.bf16.msra.mxu0 %v2979
      %3011 = vmatprep.subr.bf16.mxu0 0
      %3012 = vmatpush2.bf16.msra.mxu0 0
      %3013 = vmatprep.subr.bf16.mxu0 0
      %3014 = vmatpush2.bf16.msra.mxu0 0
      %3015 = vmatprep.subr.bf16.mxu0 0
      %3016 = vmatpush2.bf16.msra.mxu0 0
      %3017 = vmatprep.subr.bf16.mxu0 0
      %3018 = vmatpush2.bf16.msra.mxu0 0
      %3019 = vmatprep.subr.bf16.mxu0 0
      %3020 = vmatpush2.bf16.msra.mxu0 0
      %3021 = vmatprep.subr.bf16.mxu0 0
      %3022 = vmatpush2.bf16.msra.mxu0 0
      %3023 = vmatprep.subr.bf16.mxu0 0
      %3024 = vmatpush2.bf16.msra.mxu0 0
      %3025 = vmatprep.subr.bf16.mxu0 0
      %3026 = vmatpush2.bf16.msra.mxu0 0
      %3027 = vmatprep.mubr.bf16.mxu0 0
      %3028 = vmatmul.mubr.bf16.gmra.mxu0 %v2914
      %v3029 = vpop.f32.mrf.mxu0
      %v3030 = vadd.f32 0.0, %v3029
      %v3031 = vpop.f32.mrf.mxu0
      %v3032 = vpop.f32.mrf.mxu0
      %v3033 = vadd.f32 0.0, %v3032
      %v3034 = vpop.f32.mrf.mxu0
      %3035 = vmatprep.mubr.bf16.mxu0 0
      %3036 = vmatmul.mubr.bf16.gmra.mxu0 %v2915
      %v3037 = vpop.f32.mrf.mxu0
      %v3038 = vadd.f32 0.0, %v3037
      %v3039 = vpop.f32.mrf.mxu0
      %v3040 = vpop.f32.mrf.mxu0
      %v3041 = vadd.f32 0.0, %v3040
      %v3042 = vpop.f32.mrf.mxu0
      %3043 = vmatprep.mubr.bf16.mxu0 0
      %3044 = vmatmul.mubr.bf16.gmra.mxu0 %v2916
      %v3045 = vpop.f32.mrf.mxu0
      %v3046 = vadd.f32 0.0, %v3045
      %v3047 = vpop.f32.mrf.mxu0
      %v3048 = vpop.f32.mrf.mxu0
      %v3049 = vadd.f32 0.0, %v3048
      %v3050 = vpop.f32.mrf.mxu0
      %3051 = vmatprep.mubr.bf16.mxu0 0
      %3052 = vmatmul.mubr.bf16.gmra.mxu0 %v2917
      %v3053 = vpop.f32.mrf.mxu0
      %v3054 = vadd.f32 0.0, %v3053
      %v3055 = vpop.f32.mrf.mxu0
      %v3056 = vpop.f32.mrf.mxu0
      %v3057 = vadd.f32 0.0, %v3056
      %v3058 = vpop.f32.mrf.mxu0
      %3059 = vmatprep.mubr.bf16.mxu0 0
      %3060 = vmatmul.mubr.bf16.gmra.mxu0 %v2918
      %v3061 = vpop.f32.mrf.mxu0
      %v3062 = vadd.f32 0.0, %v3061
      %v3063 = vpop.f32.mrf.mxu0
      %v3064 = vpop.f32.mrf.mxu0
      %v3065 = vadd.f32 0.0, %v3064
      %v3066 = vpop.f32.mrf.mxu0
      %3067 = vmatprep.mubr.bf16.mxu0 0
      %3068 = vmatmul.mubr.bf16.gmra.mxu0 %v2919
      %v3069 = vpop.f32.mrf.mxu0
      %v3070 = vadd.f32 0.0, %v3069
      %v3071 = vpop.f32.mrf.mxu0
      %v3072 = vpop.f32.mrf.mxu0
      %v3073 = vadd.f32 0.0, %v3072
      %v3074 = vpop.f32.mrf.mxu0
      %3075 = vmatprep.mubr.bf16.mxu0 0
      %3076 = vmatmul.mubr.bf16.gmra.mxu0 %v2920
      %v3077 = vpop.f32.mrf.mxu0
      %v3078 = vadd.f32 0.0, %v3077
      %v3079 = vpop.f32.mrf.mxu0
      %v3080 = vpop.f32.mrf.mxu0
      %v3081 = vadd.f32 0.0, %v3080
      %v3082 = vpop.f32.mrf.mxu0
      %3083 = vmatprep.mubr.bf16.mxu0 0
      %3084 = vmatmul.mubr.bf16.gmra.mxu0 %v2921
      %v3085 = vpop.f32.mrf.mxu0
      %v3086 = vadd.f32 0.0, %v3085
      %v3087 = vpop.f32.mrf.mxu0
      %v3088 = vpop.f32.mrf.mxu0
      %v3089 = vadd.f32 0.0, %v3088
      %v3090 = vpop.f32.mrf.mxu0
      %3091 = vmatprep.mubr.bf16.mxu0 0
      %3092 = vmatmul.mubr.bf16.gmra.mxu0 %v2922
      %v3093 = vpop.f32.mrf.mxu0
      %v3094 = vadd.f32 0.0, %v3093
      %v3095 = vpop.f32.mrf.mxu0
      %v3096 = vpop.f32.mrf.mxu0
      %v3097 = vadd.f32 0.0, %v3096
      %v3098 = vpop.f32.mrf.mxu0
      %3099 = vmatprep.mubr.bf16.mxu0 0
      %3100 = vmatmul.mubr.bf16.gmra.mxu0 %v2923
      %v3101 = vpop.f32.mrf.mxu0
      %v3102 = vadd.f32 0.0, %v3101
      %v3103 = vpop.f32.mrf.mxu0
      %v3104 = vpop.f32.mrf.mxu0
      %v3105 = vadd.f32 0.0, %v3104
      %v3106 = vpop.f32.mrf.mxu0
      %3107 = vmatprep.mubr.bf16.mxu0 0
      %3108 = vmatmul.mubr.bf16.gmra.mxu0 %v2924
      %v3109 = vpop.f32.mrf.mxu0
      %v3110 = vadd.f32 0.0, %v3109
      %v3111 = vpop.f32.mrf.mxu0
      %v3112 = vpop.f32.mrf.mxu0
      %v3113 = vadd.f32 0.0, %v3112
      %v3114 = vpop.f32.mrf.mxu0
      %3115 = vmatprep.mubr.bf16.mxu0 0
      %3116 = vmatmul.mubr.bf16.gmra.mxu0 %v2925
      %v3117 = vpop.f32.mrf.mxu0
      %v3118 = vadd.f32 0.0, %v3117
      %v3119 = vpop.f32.mrf.mxu0
      %v3120 = vpop.f32.mrf.mxu0
      %v3121 = vadd.f32 0.0, %v3120
      %v3122 = vpop.f32.mrf.mxu0
      %3123 = vmatprep.mubr.bf16.mxu0 0
      %3124 = vmatmul.mubr.bf16.gmra.mxu0 %v2926
      %v3125 = vpop.f32.mrf.mxu0
      %v3126 = vadd.f32 0.0, %v3125
      %v3127 = vpop.f32.mrf.mxu0
      %v3128 = vpop.f32.mrf.mxu0
      %v3129 = vadd.f32 0.0, %v3128
      %v3130 = vpop.f32.mrf.mxu0
      %3131 = vmatprep.mubr.bf16.mxu0 0
      %3132 = vmatmul.mubr.bf16.gmra.mxu0 %v2927
      %v3133 = vpop.f32.mrf.mxu0
      %v3134 = vadd.f32 0.0, %v3133
      %v3135 = vpop.f32.mrf.mxu0
      %v3136 = vpop.f32.mrf.mxu0
      %v3137 = vadd.f32 0.0, %v3136
      %v3138 = vpop.f32.mrf.mxu0
      %3139 = vmatprep.mubr.bf16.mxu0 0
      %3140 = vmatmul.mubr.bf16.gmra.mxu0 %v2928
      %v3141 = vpop.f32.mrf.mxu0
      %v3142 = vadd.f32 0.0, %v3141
      %v3143 = vpop.f32.mrf.mxu0
      %v3144 = vpop.f32.mrf.mxu0
      %v3145 = vadd.f32 0.0, %v3144
      %v3146 = vpop.f32.mrf.mxu0
      %3147 = vmatprep.mubr.bf16.mxu0 0
      %3148 = vmatmul.mubr.bf16.gmra.mxu0 %v2929
      %v3149 = vpop.f32.mrf.mxu0
      %v3150 = vadd.f32 0.0, %v3149
      %v3151 = vpop.f32.mrf.mxu0
      %v3152 = vpop.f32.mrf.mxu0
      %v3153 = vadd.f32 0.0, %v3152
      %v3154 = vpop.f32.mrf.mxu0
      %3155 = vdwg.mxu0
      %v3156 = vadd.f32 %v2850, %v3030
      %v3157 = vadd.f32 %v2851, %v3033
      %v3158 = vadd.f32 %v2852, %v3038
      %v3159 = vadd.f32 %v2853, %v3041
      %v3160 = vadd.f32 %v2854, %v3046
      %v3161 = vadd.f32 %v2855, %v3049
      %v3162 = vadd.f32 %v2856, %v3054
      %v3163 = vadd.f32 %v2857, %v3057
      %v3164 = vadd.f32 %v2858, %v3062
      %v3165 = vadd.f32 %v2859, %v3065
      %v3166 = vadd.f32 %v2860, %v3070
      %v3167 = vadd.f32 %v2861, %v3073
      %v3168 = vadd.f32 %v2862, %v3078
      %v3169 = vadd.f32 %v2863, %v3081
      %v3170 = vadd.f32 %v2864, %v3086
      %v3171 = vadd.f32 %v2865, %v3089
      %v3172 = vadd.f32 %v2866, %v3094
      %v3173 = vadd.f32 %v2867, %v3097
      %v3174 = vadd.f32 %v2868, %v3102
      %v3175 = vadd.f32 %v2869, %v3105
      %v3176 = vadd.f32 %v2870, %v3110
      %v3177 = vadd.f32 %v2871, %v3113
      %v3178 = vadd.f32 %v2872, %v3118
      %v3179 = vadd.f32 %v2873, %v3121
      %v3180 = vadd.f32 %v2874, %v3126
      %v3181 = vadd.f32 %v2875, %v3129
      %v3182 = vadd.f32 %v2876, %v3134
      %v3183 = vadd.f32 %v2877, %v3137
      %v3184 = vadd.f32 %v2878, %v3142
      %v3185 = vadd.f32 %v2879, %v3145
      %v3186 = vadd.f32 %v2880, %v3150
      %v3187 = vadd.f32 %v2881, %v3153
      %v3188 = vpack.c.bf16 %v3157, %v3156
      %v3189 = vpack.c.bf16 %v3159, %v3158
      %v3190 = vpack.c.bf16 %v3161, %v3160
      %v3191 = vpack.c.bf16 %v3163, %v3162
      %v3192 = vpack.c.bf16 %v3165, %v3164
      %v3193 = vpack.c.bf16 %v3167, %v3166
      %v3194 = vpack.c.bf16 %v3169, %v3168
      %v3195 = vpack.c.bf16 %v3171, %v3170
      %v3196 = vpack.c.bf16 %v3173, %v3172
      %v3197 = vpack.c.bf16 %v3175, %v3174
      %v3198 = vpack.c.bf16 %v3177, %v3176
      %v3199 = vpack.c.bf16 %v3179, %v3178
      %v3200 = vpack.c.bf16 %v3181, %v3180
      %v3201 = vpack.c.bf16 %v3183, %v3182
      %v3202 = vpack.c.bf16 %v3185, %v3184
      %v3203 = vpack.c.bf16 %v3187, %v3186
      %v3220 = vunpack.c.l.b16 %v3188
      %v3221 = vunpack.c.h.b16 %v3188
      %v3222 = vunpack.c.l.b16 %v3189
      %v3223 = vunpack.c.h.b16 %v3189
      %v3224 = vunpack.c.l.b16 %v3190
      %v3225 = vunpack.c.h.b16 %v3190
      %v3226 = vunpack.c.l.b16 %v3191
      %v3227 = vunpack.c.h.b16 %v3191
      %v3228 = vunpack.c.l.b16 %v3192
      %v3229 = vunpack.c.h.b16 %v3192
      %v3230 = vunpack.c.l.b16 %v3193
      %v3231 = vunpack.c.h.b16 %v3193
      %v3232 = vunpack.c.l.b16 %v3194
      %v3233 = vunpack.c.h.b16 %v3194
      %v3234 = vunpack.c.l.b16 %v3195
      %v3235 = vunpack.c.h.b16 %v3195
      %v3236 = vunpack.c.l.b16 %v3196
      %v3237 = vunpack.c.h.b16 %v3196
      %v3238 = vunpack.c.l.b16 %v3197
      %v3239 = vunpack.c.h.b16 %v3197
      %v3240 = vunpack.c.l.b16 %v3198
      %v3241 = vunpack.c.h.b16 %v3198
      %v3242 = vunpack.c.l.b16 %v3199
      %v3243 = vunpack.c.h.b16 %v3199
      %v3244 = vunpack.c.l.b16 %v3200
      %v3245 = vunpack.c.h.b16 %v3200
      %v3246 = vunpack.c.l.b16 %v3201
      %v3247 = vunpack.c.h.b16 %v3201
      %v3248 = vunpack.c.l.b16 %v3202
      %v3249 = vunpack.c.h.b16 %v3202
      %v3250 = vunpack.c.l.b16 %v3203
      %v3251 = vunpack.c.h.b16 %v3203
      %v3252 = vpack.c.b16 %v3220, %v3220
      %v3253 = vpack.c.b16 %v3221, %v3221
      %v3254 = vpack.c.b16 %v3222, %v3222
      %v3255 = vpack.c.b16 %v3223, %v3223
      %v3256 = vpack.c.b16 %v3224, %v3224
      %v3257 = vpack.c.b16 %v3225, %v3225
      %v3258 = vpack.c.b16 %v3226, %v3226
      %v3259 = vpack.c.b16 %v3227, %v3227
      %v3260 = vpack.c.b16 %v3228, %v3228
      %v3261 = vpack.c.b16 %v3229, %v3229
      %v3262 = vpack.c.b16 %v3230, %v3230
      %v3263 = vpack.c.b16 %v3231, %v3231
      %v3264 = vpack.c.b16 %v3232, %v3232
      %v3265 = vpack.c.b16 %v3233, %v3233
      %v3266 = vpack.c.b16 %v3234, %v3234
      %v3267 = vpack.c.b16 %v3235, %v3235
      %v3268 = vpack.c.b16 %v3236, %v3236
      %v3269 = vpack.c.b16 %v3237, %v3237
      %v3270 = vpack.c.b16 %v3238, %v3238
      %v3271 = vpack.c.b16 %v3239, %v3239
      %v3272 = vpack.c.b16 %v3240, %v3240
      %v3273 = vpack.c.b16 %v3241, %v3241
      %v3274 = vpack.c.b16 %v3242, %v3242
      %v3275 = vpack.c.b16 %v3243, %v3243
      %v3276 = vpack.c.b16 %v3244, %v3244
      %v3277 = vpack.c.b16 %v3245, %v3245
      %v3278 = vpack.c.b16 %v3246, %v3246
      %v3279 = vpack.c.b16 %v3247, %v3247
      %v3280 = vpack.c.b16 %v3248, %v3248
      %v3281 = vpack.c.b16 %v3249, %v3249
      %v3282 = vpack.c.b16 %v3250, %v3250
      %v3283 = vpack.c.b16 %v3251, %v3251
      %3316 = vst [vmem:[%s231] sm:$0xf] %v3252
      %3317 = vst [vmem:[%s231 + $0x4] sm:$0xf] %v3253
      %3318 = vst [vmem:[%s231 + $0x8] sm:$0xf] %v3254
      %3319 = vst [vmem:[%s231 + $0xc] sm:$0xf] %v3255
      %3320 = vst [vmem:[%s231 + $0x10] sm:$0xf] %v3256
      %3321 = vst [vmem:[%s231 + $0x14] sm:$0xf] %v3257
      %3322 = vst [vmem:[%s231 + $0x18] sm:$0xf] %v3258
      %3323 = vst [vmem:[%s231 + $0x1c] sm:$0xf] %v3259
      %3324 = vst [vmem:[%s231 + $0x20] sm:$0xf] %v3260
      %3325 = vst [vmem:[%s231 + $0x24] sm:$0xf] %v3261
      %3326 = vst [vmem:[%s231 + $0x28] sm:$0xf] %v3262
      %3327 = vst [vmem:[%s231 + $0x2c] sm:$0xf] %v3263
      %3328 = vst [vmem:[%s231 + $0x30] sm:$0xf] %v3264
      %3329 = vst [vmem:[%s231 + $0x34] sm:$0xf] %v3265
      %3330 = vst [vmem:[%s231 + $0x38] sm:$0xf] %v3266
      %3331 = vst [vmem:[%s231 + $0x3c] sm:$0xf] %v3267
      %3332 = vst [vmem:[%s231 + $0x40] sm:$0xf] %v3268
      %3333 = vst [vmem:[%s231 + $0x44] sm:$0xf] %v3269
      %3334 = vst [vmem:[%s231 + $0x48] sm:$0xf] %v3270
      %3335 = vst [vmem:[%s231 + $0x4c] sm:$0xf] %v3271
      %3336 = vst [vmem:[%s231 + $0x50] sm:$0xf] %v3272
      %3337 = vst [vmem:[%s231 + $0x54] sm:$0xf] %v3273
      %3338 = vst [vmem:[%s231 + $0x58] sm:$0xf] %v3274
      %3339 = vst [vmem:[%s231 + $0x5c] sm:$0xf] %v3275
      %3340 = vst [vmem:[%s231 + $0x60] sm:$0xf] %v3276
      %3341 = vst [vmem:[%s231 + $0x64] sm:$0xf] %v3277
      %3342 = vst [vmem:[%s231 + $0x68] sm:$0xf] %v3278
      %3343 = vst [vmem:[%s231 + $0x6c] sm:$0xf] %v3279
      %3344 = vst [vmem:[%s231 + $0x70] sm:$0xf] %v3280
      %3345 = vst [vmem:[%s231 + $0x74] sm:$0xf] %v3281
      %3346 = vst [vmem:[%s231 + $0x78] sm:$0xf] %v3282
      %3347 = vst [vmem:[%s231 + $0x7c] sm:$0xf] %v3283
      %v3348 = vadd.f32 %v3156, %v3157
      %v3349 = vadd.f32 %v3348, %v3158
      %v3350 = vadd.f32 %v3349, %v3159
      %v3351 = vadd.f32 %v3350, %v3160
      %v3352 = vadd.f32 %v3351, %v3161
      %v3353 = vadd.f32 %v3352, %v3162
      %v3354 = vadd.f32 %v3353, %v3163
      %v3355 = vadd.f32 %v3354, %v3164
      %v3356 = vadd.f32 %v3355, %v3165
      %v3357 = vadd.f32 %v3356, %v3166
      %v3358 = vadd.f32 %v3357, %v3167
      %v3359 = vadd.f32 %v3358, %v3168
      %v3360 = vadd.f32 %v3359, %v3169
      %v3361 = vadd.f32 %v3360, %v3170
      %v3362 = vadd.f32 %v3361, %v3171
      %v3363 = vadd.f32 %v3362, %v3172
      %v3364 = vadd.f32 %v3363, %v3173
      %v3365 = vadd.f32 %v3364, %v3174
      %v3366 = vadd.f32 %v3365, %v3175
      %v3367 = vadd.f32 %v3366, %v3176
      %v3368 = vadd.f32 %v3367, %v3177
      %v3369 = vadd.f32 %v3368, %v3178
      %v3370 = vadd.f32 %v3369, %v3179
      %v3371 = vadd.f32 %v3370, %v3180
      %v3372 = vadd.f32 %v3371, %v3181
      %v3373 = vadd.f32 %v3372, %v3182
      %v3374 = vadd.f32 %v3373, %v3183
      %v3375 = vadd.f32 %v3374, %v3184
      %v3376 = vadd.f32 %v3375, %v3185
      %v3377 = vadd.f32 %v3376, %v3186
      %v3378 = vadd.f32 %v3377, %v3187
      %v3379 = vrot.slane %v3378, 4
      %v3380 = vadd.f32 %v3378, %v3379
      %v3381 = vrot.slane %v3380, 2
      %v3382 = vadd.f32 %v3380, %v3381
      %v3383 = vrot.slane %v3382, 1
      %v3384 = vadd.f32 %v3382, %v3383
      %3385 = vst [vmem:[%s235] sm:$0x1] %v3384
      %v3386 = vmul.f32 %v3156, %v3156
      %v3387 = vmul.f32 %v3157, %v3157
      %v3388 = vmul.f32 %v3158, %v3158
      %v3389 = vmul.f32 %v3159, %v3159
      %v3390 = vmul.f32 %v3160, %v3160
      %v3391 = vmul.f32 %v3161, %v3161
      %v3392 = vmul.f32 %v3162, %v3162
      %v3393 = vmul.f32 %v3163, %v3163
      %v3394 = vmul.f32 %v3164, %v3164
      %v3395 = vmul.f32 %v3165, %v3165
      %v3396 = vmul.f32 %v3166, %v3166
      %v3397 = vmul.f32 %v3167, %v3167
      %v3398 = vmul.f32 %v3168, %v3168
      %v3399 = vmul.f32 %v3169, %v3169
      %v3400 = vmul.f32 %v3170, %v3170
      %v3401 = vmul.f32 %v3171, %v3171
      %v3402 = vmul.f32 %v3172, %v3172
      %v3403 = vmul.f32 %v3173, %v3173
      %v3404 = vmul.f32 %v3174, %v3174
      %v3405 = vmul.f32 %v3175, %v3175
      %v3406 = vmul.f32 %v3176, %v3176
      %v3407 = vmul.f32 %v3177, %v3177
      %v3408 = vmul.f32 %v3178, %v3178
      %v3409 = vmul.f32 %v3179, %v3179
      %v3410 = vmul.f32 %v3180, %v3180
      %v3411 = vmul.f32 %v3181, %v3181
      %v3412 = vmul.f32 %v3182, %v3182
      %v3413 = vmul.f32 %v3183, %v3183
      %v3414 = vmul.f32 %v3184, %v3184
      %v3415 = vmul.f32 %v3185, %v3185
      %v3416 = vmul.f32 %v3186, %v3186
      %v3417 = vmul.f32 %v3187, %v3187
      %v3418 = vadd.f32 %v3386, %v3387
      %v3419 = vadd.f32 %v3418, %v3388
      %v3420 = vadd.f32 %v3419, %v3389
      %v3421 = vadd.f32 %v3420, %v3390
      %v3422 = vadd.f32 %v3421, %v3391
      %v3423 = vadd.f32 %v3422, %v3392
      %v3424 = vadd.f32 %v3423, %v3393
      %v3425 = vadd.f32 %v3424, %v3394
      %v3426 = vadd.f32 %v3425, %v3395
      %v3427 = vadd.f32 %v3426, %v3396
      %v3428 = vadd.f32 %v3427, %v3397
      %v3429 = vadd.f32 %v3428, %v3398
      %v3430 = vadd.f32 %v3429, %v3399
      %v3431 = vadd.f32 %v3430, %v3400
      %v3432 = vadd.f32 %v3431, %v3401
      %v3433 = vadd.f32 %v3432, %v3402
      %v3434 = vadd.f32 %v3433, %v3403
      %v3435 = vadd.f32 %v3434, %v3404
      %v3436 = vadd.f32 %v3435, %v3405
      %v3437 = vadd.f32 %v3436, %v3406
      %v3438 = vadd.f32 %v3437, %v3407
      %v3439 = vadd.f32 %v3438, %v3408
      %v3440 = vadd.f32 %v3439, %v3409
      %v3441 = vadd.f32 %v3440, %v3410
      %v3442 = vadd.f32 %v3441, %v3411
      %v3443 = vadd.f32 %v3442, %v3412
      %v3444 = vadd.f32 %v3443, %v3413
      %v3445 = vadd.f32 %v3444, %v3414
      %v3446 = vadd.f32 %v3445, %v3415
      %v3447 = vadd.f32 %v3446, %v3416
      %v3448 = vadd.f32 %v3447, %v3417
      %v3449 = vrot.slane %v3448, 4
      %v3450 = vadd.f32 %v3448, %v3449
      %v3451 = vrot.slane %v3450, 2
      %v3452 = vadd.f32 %v3450, %v3451
      %v3453 = vrot.slane %v3452, 1
      %v3454 = vadd.f32 %v3452, %v3453
      %3455 = vst [vmem:[%s235 + $0x1] sm:$0x1] %v3454
      %p3456 = scmp.lt.s32.totalorder %s17, 1
      %s3457 = scalar_select %p3456, %s17, 1
      %s3458 = smul.addr %s3457, 32
      %s3459 = smul.addr %s3458, 4
      %s3460 = scalar_lea.vmem %s4, %s3459
      %p3461 = scmp.lt.s32.totalorder %s17, 1
      %s3462 = scalar_select %p3461, %s17, 1
      %s3463 = smul.addr %s3462, 2
      %s3464 = scalar_lea.vmem %s5, %s3463
      // Predicated region
      $region37: #{forward.14} parent=35 // pred_check
        %p3465 = pneg %p124
      $region38: #{forward.14} parent=35 // pred_check_branch
        %3467 = sbr.rel (%p3465) target = $region40
      $region39: #{forward.14} parent=35 // pred_region
        _
      $region40: #{forward.14} parent=35 // pred_fallthru
        _
      // Predicated region
      $region41: #{forward.14} parent=35 // pred_check
        %p3468 = pneg %p150
      $region42: #{forward.14} parent=35 // pred_check_branch
        %3470 = sbr.rel (%p3468) target = $region44
      $region43: #{forward.14} parent=35 // pred_region
        _
      $region44: #{forward.14} parent=35 // pred_fallthru
        _
    $region36: #{forward.14} parent=5 // pred_fallthru
      _
    %p3471 = scmp.le.s32.totalorder 2, %s12
    // Predicated region
    $region45: #{forward.14} parent=5 // pred_check
      %p3472 = pneg %p3471
    $region46: #{forward.14} parent=5 // pred_check_branch
      %3474 = sbr.rel (%p3472) target = $region48
    $region47: #{forward.14} parent=5 // pred_region
      %s3475 = ssub.s32 %s12, 2
      // Predicated region
      $region49: #{forward.14} parent=47 // pred_check
        %p3476 = pneg %p130
      $region50: #{forward.14} parent=47 // pred_check_branch
        %3478 = sbr.rel (%p3476) target = $region52
      $region51: #{forward.14} parent=47 // pred_region
        %p3479 = scmp.lt.s32.totalorder %s18, 1
        %s3480 = scalar_select %p3479, %s18, 1
        %s3481 = smul.addr %s3480, 32
        %s3482 = smul.addr %s3481, 4
        %s3483 = scalar_lea.vmem %s4, %s3482
      $region52: #{forward.14} parent=47 // pred_fallthru
        _
      // Predicated region
      $region53: #{forward.14} parent=47 // pred_check
        %p3484 = pneg %p156
      $region54: #{forward.14} parent=47 // pred_check_branch
        %3486 = sbr.rel (%p3484) target = $region56
      $region55: #{forward.14} parent=47 // pred_region
        %p3487 = scmp.lt.s32.totalorder %s18, 1
        %s3488 = scalar_select %p3487, %s18, 1
        %s3489 = smul.addr %s3488, 2
        %s3490 = scalar_lea.vmem %s5, %s3489
      $region56: #{forward.14} parent=47 // pred_fallthru
        _
    $region48: #{forward.14} parent=5 // pred_fallthru
      _
  $region6: #{forward.14} parent=0 // loop_footer
    %s16 = sadd.s32 1, %s12
  $region7: #{forward.14} parent=0 // loop_footer_branch
    %11 = sbr.rel target = $region3
  $region8: #{forward.14} parent=0 // loop_exit
    _

// kernel: forward.21
$region0: #{forward.21}
  #allocation0 [shape = 'u32[]', space=smem, size = 0x4, offset = 0x4, fixed_abs, tag = 'smem constant byte address 0x4 - core index']
  #allocation1 [shape = 'u32[144,128]{1,0:T(1,128)}', space=vmem, size = 0x12000, scoped, tag = 'internal scratch']
  %s0 = inlined_call_operand.vmem [shape: bf16[2,256,128], index: 0, kind: input, shape index: {}]
  %s1 = inlined_call_operand.vmem [shape: f32[1,128], index: 1, kind: input, shape index: {}]
  %s2 = inlined_call_operand.vmem [shape: f32[1,128], index: 2, kind: input, shape index: {}]
  %s3 = inlined_call_operand.vmem [shape: f32[2,18,18,128], index: 3, kind: input, shape index: {}]
  %s4 = inlined_call_operand.vmem [shape: bf16[128,128], index: 4, kind: input, shape index: {}]
  %s5 = inlined_call_operand.vmem [shape: f32[128,128], index: 5, kind: input, shape index: {}]
  %s6 = inlined_call_operand.vmem [shape: f32[1,128], index: 6, kind: input, shape index: {}]
  %s7 = inlined_call_operand.hbm [shape: f32[2,1,128], index: 7, kind: output, shape index: {}]
  %s8 = sld [smem:[#allocation0]]
  $region61: #{forward.21} parent=0
    _
  %s10 = ssub.s32 1, %s8
  %s11 = scalar_select 0, %s10, %s8
  $region1: #{forward.21} parent=0
    #allocation2 [shape = 'u8[1024]{0}', space=vmem, size = 0x400, scoped, tag = 'output window, operand 0']
    #allocation3 [shape = 's32[2]{0}', space=sflag, size = 0x8, scoped, tag = 'scoped memory for forward.21']
    %12 = vsyncpa [#allocation3], 0
    %s13 = scalar_lea.sflag [#allocation3], 1
    %14 = vsyncpa %s13, 0
    loop: start=0, step=1, limit=4
    $region2: #{forward.21} parent=1 // loop_pre_header
      _
    $region3: #{forward.21} parent=1 // loop_header
      %s16 = sphi 0, %s20
      %p17 = scmp.ge.s32.totalorder %s16, 4
      %s26 = sphi 0, %s28
      %s29 = sphi 0, %s26
      %s30 = sphi 0, %s29
      %s46 = sphi 0, %s30
      %s50 = sphi 0, %s50
      %s52 = sphi 0, %s50
      %s53 = sphi 0, %s52
      %s67 = sphi 0, %s53
      %s71 = sphi 0, %s71
      %s73 = sphi 0, %s71
      %s74 = sphi 0, %s73
      %s88 = sphi 0, %s74
      %s94 = sphi 0, %s96
      %s97 = sphi 0, %s94
      %s98 = sphi 0, %s97
      %s114 = sphi 0, %s98
      %s118 = sphi 0, %s118
      %s120 = sphi 0, %s118
      %s121 = sphi 0, %s120
      %s135 = sphi 0, %s121
      %s139 = sphi 0, %s139
      %s141 = sphi 0, %s139
      %s142 = sphi 0, %s141
      %s156 = sphi 0, %s142
      %s160 = sphi 0, %s160
      %s162 = sphi 0, %s160
      %s163 = sphi 0, %s162
      %s177 = sphi 0, %s163
      %s183 = sphi 0, %s185
      %s186 = sphi 0, %s183
      %s187 = sphi 0, %s186
      %s203 = sphi 0, %s187
    $region4: #{forward.21} parent=1 // loop_header_branch
      %19 = sbr.rel (%p17) target = $region8
    $region5: #{forward.21} parent=1 // loop_body
      %s21 = ssub.s32 %s16, 1
      %s22 = ssub.s32 %s16, 2
      %s23 = sadd.s32 %s16, 1
      %s24 = ssub.s32 %s16, %s23
      %p25 = scmp.eq.s32.totalorder %s24, 0
      %s27 = sadd.s32 %s26, 1
      %s28 = scalar_select %p25, %s26, %s27
      %p31 = pneg %p25
      %p32 = scmp.eq.s32.totalorder %s16, 1
      %p33 = por %p31, %p32
      %p34 = scmp.ne.s32.totalorder %s26, %s29
      %p35 = scmp.eq.s32.totalorder %s16, 0
      %p36 = por %p34, %p35
      %p37 = scmp.ne.s32.totalorder %s26, %s29
      %p38 = scmp.eq.s32.totalorder %s21, 1
      %p39 = por %p37, %p38
      %p40 = scmp.ne.s32.totalorder %s29, %s30
      %p41 = scmp.eq.s32.totalorder %s21, 0
      %p42 = por %p40, %p41
      %p43 = scmp.ne.s32.totalorder %s29, %s30
      %p44 = scmp.eq.s32.totalorder %s22, 1
      %p45 = por %p43, %p44
      %p47 = scmp.ne.s32.totalorder %s30, %s46
      %p48 = scmp.eq.s32.totalorder %s22, 0
      %p49 = por %p47, %p48
      %s51 = sadd.s32 %s50, 1
      %p54 = scmp.eq.s32.totalorder %s16, 1
      %p55 = scmp.ne.s32.totalorder %s50, %s52
      %p56 = scmp.eq.s32.totalorder %s16, 0
      %p57 = por %p55, %p56
      %p58 = scmp.ne.s32.totalorder %s50, %s52
      %p59 = scmp.eq.s32.totalorder %s21, 1
      %p60 = por %p58, %p59
      %p61 = scmp.ne.s32.totalorder %s52, %s53
      %p62 = scmp.eq.s32.totalorder %s21, 0
      %p63 = por %p61, %p62
      %p64 = scmp.ne.s32.totalorder %s52, %s53
      %p65 = scmp.eq.s32.totalorder %s22, 1
      %p66 = por %p64, %p65
      %p68 = scmp.ne.s32.totalorder %s53, %s67
      %p69 = scmp.eq.s32.totalorder %s22, 0
      %p70 = por %p68, %p69
      %s72 = sadd.s32 %s71, 1
      %p75 = scmp.eq.s32.totalorder %s16, 1
      %p76 = scmp.ne.s32.totalorder %s71, %s73
      %p77 = scmp.eq.s32.totalorder %s16, 0
      %p78 = por %p76, %p77
      %p79 = scmp.ne.s32.totalorder %s71, %s73
      %p80 = scmp.eq.s32.totalorder %s21, 1
      %p81 = por %p79, %p80
      %p82 = scmp.ne.s32.totalorder %s73, %s74
      %p83 = scmp.eq.s32.totalorder %s21, 0
      %p84 = por %p82, %p83
      %p85 = scmp.ne.s32.totalorder %s73, %s74
      %p86 = scmp.eq.s32.totalorder %s22, 1
      %p87 = por %p85, %p86
      %p89 = scmp.ne.s32.totalorder %s74, %s88
      %p90 = scmp.eq.s32.totalorder %s22, 0
      %p91 = por %p89, %p90
      %s92 = ssub.s32 %s16, %s23
      %p93 = scmp.eq.s32.totalorder %s92, 0
      %s95 = sadd.s32 %s94, 1
      %s96 = scalar_select %p93, %s94, %s95
      %p99 = pneg %p93
      %p100 = scmp.eq.s32.totalorder %s16, 1
      %p101 = por %p99, %p100
      %p102 = scmp.ne.s32.totalorder %s94, %s97
      %p103 = scmp.eq.s32.totalorder %s16, 0
      %p104 = por %p102, %p103
      %p105 = scmp.ne.s32.totalorder %s94, %s97
      %p106 = scmp.eq.s32.totalorder %s21, 1
      %p107 = por %p105, %p106
      %p108 = scmp.ne.s32.totalorder %s97, %s98
      %p109 = scmp.eq.s32.totalorder %s21, 0
      %p110 = por %p108, %p109
      %p111 = scmp.ne.s32.totalorder %s97, %s98
      %p112 = scmp.eq.s32.totalorder %s22, 1
      %p113 = por %p111, %p112
      %p115 = scmp.ne.s32.totalorder %s98, %s114
      %p116 = scmp.eq.s32.totalorder %s22, 0
      %p117 = por %p115, %p116
      %s119 = sadd.s32 %s118, 1
      %p122 = scmp.eq.s32.totalorder %s16, 1
      %p123 = scmp.ne.s32.totalorder %s118, %s120
      %p124 = scmp.eq.s32.totalorder %s16, 0
      %p125 = por %p123, %p124
      %p126 = scmp.ne.s32.totalorder %s118, %s120
      %p127 = scmp.eq.s32.totalorder %s21, 1
      %p128 = por %p126, %p127
      %p129 = scmp.ne.s32.totalorder %s120, %s121
      %p130 = scmp.eq.s32.totalorder %s21, 0
      %p131 = por %p129, %p130
      %p132 = scmp.ne.s32.totalorder %s120, %s121
      %p133 = scmp.eq.s32.totalorder %s22, 1
      %p134 = por %p132, %p133
      %p136 = scmp.ne.s32.totalorder %s121, %s135
      %p137 = scmp.eq.s32.totalorder %s22, 0
      %p138 = por %p136, %p137
      %s140 = sadd.s32 %s139, 1
      %p143 = scmp.eq.s32.totalorder %s16, 1
      %p144 = scmp.ne.s32.totalorder %s139, %s141
      %p145 = scmp.eq.s32.totalorder %s16, 0
      %p146 = por %p144, %p145
      %p147 = scmp.ne.s32.totalorder %s139, %s141
      %p148 = scmp.eq.s32.totalorder %s21, 1
      %p149 = por %p147, %p148
      %p150 = scmp.ne.s32.totalorder %s141, %s142
      %p151 = scmp.eq.s32.totalorder %s21, 0
      %p152 = por %p150, %p151
      %p153 = scmp.ne.s32.totalorder %s141, %s142
      %p154 = scmp.eq.s32.totalorder %s22, 1
      %p155 = por %p153, %p154
      %p157 = scmp.ne.s32.totalorder %s142, %s156
      %p158 = scmp.eq.s32.totalorder %s22, 0
      %p159 = por %p157, %p158
      %s161 = sadd.s32 %s160, 1
      %p164 = scmp.eq.s32.totalorder %s16, 1
      %p165 = scmp.ne.s32.totalorder %s160, %s162
      %p166 = scmp.eq.s32.totalorder %s16, 0
      %p167 = por %p165, %p166
      %p168 = scmp.ne.s32.totalorder %s160, %s162
      %p169 = scmp.eq.s32.totalorder %s21, 1
      %p170 = por %p168, %p169
      %p171 = scmp.ne.s32.totalorder %s162, %s163
      %p172 = scmp.eq.s32.totalorder %s21, 0
      %p173 = por %p171, %p172
      %p174 = scmp.ne.s32.totalorder %s162, %s163
      %p175 = scmp.eq.s32.totalorder %s22, 1
      %p176 = por %p174, %p175
      %p178 = scmp.ne.s32.totalorder %s163, %s177
      %p179 = scmp.eq.s32.totalorder %s22, 0
      %p180 = por %p178, %p179
      %s181 = ssub.s32 %s16, %s23
      %p182 = scmp.eq.s32.totalorder %s181, 0
      %s184 = sadd.s32 %s183, 1
      %s185 = scalar_select %p182, %s183, %s184
      %p188 = pneg %p182
      %p189 = scmp.eq.s32.totalorder %s16, 1
      %p190 = por %p188, %p189
      %p191 = scmp.ne.s32.totalorder %s183, %s186
      %p192 = scmp.eq.s32.totalorder %s16, 0
      %p193 = por %p191, %p192
      %p194 = scmp.ne.s32.totalorder %s183, %s186
      %p195 = scmp.eq.s32.totalorder %s21, 1
      %p196 = por %p194, %p195
      %p197 = scmp.ne.s32.totalorder %s186, %s187
      %p198 = scmp.eq.s32.totalorder %s21, 0
      %p199 = por %p197, %p198
      %p200 = scmp.ne.s32.totalorder %s186, %s187
      %p201 = scmp.eq.s32.totalorder %s22, 1
      %p202 = por %p200, %p201
      %p204 = scmp.ne.s32.totalorder %s187, %s203
      %p205 = scmp.eq.s32.totalorder %s22, 0
      %p206 = por %p204, %p205
      %p207 = scmp.le.s32.totalorder 1, %s16
      %p208 = scmp.lt.s32.totalorder %s16, 3
      %p209 = pnand %p207, %p208
      %p210 = pneg %p209
      // Predicated region
      $region9: #{forward.21} parent=5 // pred_check
        _
      $region10: #{forward.21} parent=5 // pred_check_branch
        %212 = sbr.rel (%p209) target = $region12
      $region11: #{forward.21} parent=5 // pred_region
        %s213 = ssub.s32 %s16, 1
        // Predicated region
        $region13: #{forward.21} parent=11 // pred_check
          %p214 = pneg %p63
        $region14: #{forward.21} parent=11 // pred_check_branch
          %216 = sbr.rel (%p214) target = $region16
        $region15: #{forward.21} parent=11 // pred_region
          _
        $region16: #{forward.21} parent=11 // pred_fallthru
          _
        // Predicated region
        $region17: #{forward.21} parent=11 // pred_check
          %p217 = pneg %p84
        $region18: #{forward.21} parent=11 // pred_check_branch
          %219 = sbr.rel (%p217) target = $region20
        $region19: #{forward.21} parent=11 // pred_region
          _
        $region20: #{forward.21} parent=11 // pred_fallthru
          _
        // Predicated region
        $region21: #{forward.21} parent=11 // pred_check
          %p220 = pneg %p131
        $region22: #{forward.21} parent=11 // pred_check_branch
          %222 = sbr.rel (%p220) target = $region24
        $region23: #{forward.21} parent=11 // pred_region
          _
        $region24: #{forward.21} parent=11 // pred_fallthru
          _
        // Predicated region
        $region25: #{forward.21} parent=11 // pred_check
          %p223 = pneg %p152
        $region26: #{forward.21} parent=11 // pred_check_branch
          %225 = sbr.rel (%p223) target = $region28
        $region27: #{forward.21} parent=11 // pred_region
          _
        $region28: #{forward.21} parent=11 // pred_fallthru
          _
        // Predicated region
        $region29: #{forward.21} parent=11 // pred_check
          %p226 = pneg %p173
        $region30: #{forward.21} parent=11 // pred_check_branch
          %228 = sbr.rel (%p226) target = $region32
        $region31: #{forward.21} parent=11 // pred_region
          _
        $region32: #{forward.21} parent=11 // pred_fallthru
          _
      $region12: #{forward.21} parent=5 // pred_fallthru
        _
      %p229 = scmp.lt.s32.totalorder %s16, 2
      // Predicated region
      $region33: #{forward.21} parent=5 // pred_check
        %p230 = pneg %p229
      $region34: #{forward.21} parent=5 // pred_check_branch
        %232 = sbr.rel (%p230) target = $region36
      $region35: #{forward.21} parent=5 // pred_region
        // Predicated region
        $region37: #{forward.21} parent=35 // pred_check
          %p233 = pneg %p36
        $region38: #{forward.21} parent=35 // pred_check_branch
          %235 = sbr.rel (%p233) target = $region40
        $region39: #{forward.21} parent=35 // pred_region
          %p236 = scmp.lt.s32.totalorder %s16, 1
          %s237 = scalar_select %p236, %s16, 1
          %s238 = smul.addr %s237, 32
          %s239 = smul.addr %s238, 4
          %s240 = scalar_lea.vmem %s0, %s239
        $region40: #{forward.21} parent=35 // pred_fallthru
          _
        // Predicated region
        $region41: #{forward.21} parent=35 // pred_check
          %p241 = pneg %p104
        $region42: #{forward.21} parent=35 // pred_check_branch
          %243 = sbr.rel (%p241) target = $region44
        $region43: #{forward.21} parent=35 // pred_region
          %p244 = scmp.lt.s32.totalorder %s16, 1
          %s245 = scalar_select %p244, %s16, 1
          %s246 = smul.addr %s245, 54
          %s247 = smul.addr %s246, 8
          %s248 = scalar_lea.vmem %s3, %s247
        $region44: #{forward.21} parent=35 // pred_fallthru
          _
      $region36: #{forward.21} parent=5 // pred_fallthru
        _
      %p249 = scmp.le.s32.totalorder 1, %s16
      %p250 = scmp.lt.s32.totalorder %s16, 3
      %p251 = pnand %p249, %p250
      %p252 = pneg %p251
      // Predicated region
      $region45: #{forward.21} parent=5 // pred_check
        _
      $region46: #{forward.21} parent=5 // pred_check_branch
        %254 = sbr.rel (%p251) target = $region48
      $region47: #{forward.21} parent=5 // pred_region
        %s255 = ssub.s32 %s16, 1
        %p256 = scmp.lt.s32.totalorder %s21, 1
        %s257 = scalar_select %p256, %s21, 1
        %s258 = smul.addr %s257, 32
        %s259 = smul.addr %s258, 4
        %s260 = scalar_lea.vmem %s0, %s259
        %p261 = pneg %p42
        %p262 = pneg %p39
        %p263 = pneg %p63
        %p264 = pneg %p60
        %p265 = pneg %p84
        %p266 = pneg %p81
        %p267 = scmp.lt.s32.totalorder %s21, 1
        %s268 = scalar_select %p267, %s21, 1
        %s269 = smul.addr %s268, 54
        %s270 = smul.addr %s269, 8
        %s271 = scalar_lea.vmem %s3, %s270
        %p272 = pneg %p110
        %p273 = pneg %p107
        %p274 = pneg %p131
        %p275 = pneg %p128
        %p276 = pneg %p152
        %p277 = pneg %p149
        %p278 = pneg %p173
        %p279 = pneg %p170
        %p280 = pneg %p199
        %p281 = pneg %p196
        %s282 = sand.u32 %s186, 1
        %s283 = scalar_lea.sflag [#allocation3], %s282
        %s284 = sand.u32 %s186, 1
        %s285 = scalar_lea.vmem [#allocation2], %s284
        %p286 = scmp.lt.s32.totalorder %s21, 1
        %s287 = scalar_select %p286, %s21, 1
        %s288 = smul.addr %s287, 32
        %s289 = smul.addr %s288, 4
        %s290 = scalar_lea.vmem %s0, %s289
        %p291 = scmp.lt.s32.totalorder %s21, 1
        %s292 = scalar_select %p291, %s21, 1
        %s293 = smul.addr %s292, 54
        %s294 = smul.addr %s293, 8
        %s295 = scalar_lea.vmem %s3, %s294
        %v297 = vld [vmem:[%s290] sm:$0xf]
        %v298 = vld [vmem:[%s290 + $0x4] sm:$0xf]
        %v299 = vld [vmem:[%s290 + $0x8] sm:$0xf]
        %v300 = vld [vmem:[%s290 + $0xc] sm:$0xf]
        %v301 = vld [vmem:[%s290 + $0x10] sm:$0xf]
        %v302 = vld [vmem:[%s290 + $0x14] sm:$0xf]
        %v303 = vld [vmem:[%s290 + $0x18] sm:$0xf]
        %v304 = vld [vmem:[%s290 + $0x1c] sm:$0xf]
        %v305 = vld [vmem:[%s290 + $0x20] sm:$0xf]
        %v306 = vld [vmem:[%s290 + $0x24] sm:$0xf]
        %v307 = vld [vmem:[%s290 + $0x28] sm:$0xf]
        %v308 = vld [vmem:[%s290 + $0x2c] sm:$0xf]
        %v309 = vld [vmem:[%s290 + $0x30] sm:$0xf]
        %v310 = vld [vmem:[%s290 + $0x34] sm:$0xf]
        %v311 = vld [vmem:[%s290 + $0x38] sm:$0xf]
        %v312 = vld [vmem:[%s290 + $0x3c] sm:$0xf]
        %v313 = vld [vmem:[%s290 + $0x40] sm:$0xf]
        %v314 = vld [vmem:[%s290 + $0x44] sm:$0xf]
        %v315 = vld [vmem:[%s290 + $0x48] sm:$0xf]
        %v316 = vld [vmem:[%s290 + $0x4c] sm:$0xf]
        %v317 = vld [vmem:[%s290 + $0x50] sm:$0xf]
        %v318 = vld [vmem:[%s290 + $0x54] sm:$0xf]
        %v319 = vld [vmem:[%s290 + $0x58] sm:$0xf]
        %v320 = vld [vmem:[%s290 + $0x5c] sm:$0xf]
        %v321 = vld [vmem:[%s290 + $0x60] sm:$0xf]
        %v322 = vld [vmem:[%s290 + $0x64] sm:$0xf]
        %v323 = vld [vmem:[%s290 + $0x68] sm:$0xf]
        %v324 = vld [vmem:[%s290 + $0x6c] sm:$0xf]
        %v325 = vld [vmem:[%s290 + $0x70] sm:$0xf]
        %v326 = vld [vmem:[%s290 + $0x74] sm:$0xf]
        %v327 = vld [vmem:[%s290 + $0x78] sm:$0xf]
        %v328 = vld [vmem:[%s290 + $0x7c] sm:$0xf]
        %v329 = vld [vmem:[%s1] sm:$0x1]
        %v330 = vunpack.c.l.bf16 %v297
        %v331 = vunpack.c.l.bf16 %v298
        %v332 = vunpack.c.l.bf16 %v299
        %v333 = vunpack.c.l.bf16 %v300
        %v334 = vunpack.c.l.bf16 %v301
        %v335 = vunpack.c.l.bf16 %v302
        %v336 = vunpack.c.l.bf16 %v303
        %v337 = vunpack.c.l.bf16 %v304
        %v338 = vunpack.c.l.bf16 %v305
        %v339 = vunpack.c.l.bf16 %v306
        %v340 = vunpack.c.l.bf16 %v307
        %v341 = vunpack.c.l.bf16 %v308
        %v342 = vunpack.c.l.bf16 %v309
        %v343 = vunpack.c.l.bf16 %v310
        %v344 = vunpack.c.l.bf16 %v311
        %v345 = vunpack.c.l.bf16 %v312
        %v346 = vunpack.c.l.bf16 %v313
        %v347 = vunpack.c.l.bf16 %v314
        %v348 = vunpack.c.l.bf16 %v315
        %v349 = vunpack.c.l.bf16 %v316
        %v350 = vunpack.c.l.bf16 %v317
        %v351 = vunpack.c.l.bf16 %v318
        %v352 = vunpack.c.l.bf16 %v319
        %v353 = vunpack.c.l.bf16 %v320
        %v354 = vunpack.c.l.bf16 %v321
        %v355 = vunpack.c.l.bf16 %v322
        %v356 = vunpack.c.l.bf16 %v323
        %v357 = vunpack.c.l.bf16 %v324
        %v358 = vunpack.c.l.bf16 %v325
        %v359 = vunpack.c.l.bf16 %v326
        %v360 = vunpack.c.l.bf16 %v327
        %v361 = vunpack.c.l.bf16 %v328
        %v363 = vlaneseq
        %v364 = vshrl.u32 %v363, 7
        %v365 = vsub.s32 0, %v364
        %v366 = vrot.slane %v329, %v365
        %v368 = vmul.f32 %v330, %v366
        %v369 = vmul.f32 %v331, %v366
        %v370 = vmul.f32 %v332, %v366
        %v371 = vmul.f32 %v333, %v366
        %v372 = vmul.f32 %v334, %v366
        %v373 = vmul.f32 %v335, %v366
        %v374 = vmul.f32 %v336, %v366
        %v375 = vmul.f32 %v337, %v366
        %v376 = vmul.f32 %v338, %v366
        %v377 = vmul.f32 %v339, %v366
        %v378 = vmul.f32 %v340, %v366
        %v379 = vmul.f32 %v341, %v366
        %v380 = vmul.f32 %v342, %v366
        %v381 = vmul.f32 %v343, %v366
        %v382 = vmul.f32 %v344, %v366
        %v383 = vmul.f32 %v345, %v366
        %v384 = vmul.f32 %v346, %v366
        %v385 = vmul.f32 %v347, %v366
        %v386 = vmul.f32 %v348, %v366
        %v387 = vmul.f32 %v349, %v366
        %v388 = vmul.f32 %v350, %v366
        %v389 = vmul.f32 %v351, %v366
        %v390 = vmul.f32 %v352, %v366
        %v391 = vmul.f32 %v353, %v366
        %v392 = vmul.f32 %v354, %v366
        %v393 = vmul.f32 %v355, %v366
        %v394 = vmul.f32 %v356, %v366
        %v395 = vmul.f32 %v357, %v366
        %v396 = vmul.f32 %v358, %v366
        %v397 = vmul.f32 %v359, %v366
        %v398 = vmul.f32 %v360, %v366
        %v399 = vmul.f32 %v361, %v366
        %v400 = vld [vmem:[%s2] sm:$0x1]
        %v402 = vlaneseq
        %v403 = vshrl.u32 %v402, 7
        %v404 = vsub.s32 0, %v403
        %v405 = vrot.slane %v400, %v404
        %v407 = vadd.f32 %v368, %v405
        %v408 = vadd.f32 %v369, %v405
        %v409 = vadd.f32 %v370, %v405
        %v410 = vadd.f32 %v371, %v405
        %v411 = vadd.f32 %v372, %v405
        %v412 = vadd.f32 %v373, %v405
        %v413 = vadd.f32 %v374, %v405
        %v414 = vadd.f32 %v375, %v405
        %v415 = vadd.f32 %v376, %v405
        %v416 = vadd.f32 %v377, %v405
        %v417 = vadd.f32 %v378, %v405
        %v418 = vadd.f32 %v379, %v405
        %v419 = vadd.f32 %v380, %v405
        %v420 = vadd.f32 %v381, %v405
        %v421 = vadd.f32 %v382, %v405
        %v422 = vadd.f32 %v383, %v405
        %v423 = vadd.f32 %v384, %v405
        %v424 = vadd.f32 %v385, %v405
        %v425 = vadd.f32 %v386, %v405
        %v426 = vadd.f32 %v387, %v405
        %v427 = vadd.f32 %v388, %v405
        %v428 = vadd.f32 %v389, %v405
        %v429 = vadd.f32 %v390, %v405
        %v430 = vadd.f32 %v391, %v405
        %v431 = vadd.f32 %v392, %v405
        %v432 = vadd.f32 %v393, %v405
        %v433 = vadd.f32 %v394, %v405
        %v434 = vadd.f32 %v395, %v405
        %v435 = vadd.f32 %v396, %v405
        %v436 = vadd.f32 %v397, %v405
        %v437 = vadd.f32 %v398, %v405
        %v438 = vadd.f32 %v399, %v405
        %s439 = scalar_lea.vmem %s295, 24
        %v440 = vld [vmem:[%s439 + $0x1] sm:$0xff]
        %v441 = vld [vmem:[%s439 + $0x9] sm:$0xff]
        %v442 = vld [vmem:[%s439 + $0x19] sm:$0xff]
        %v443 = vld [vmem:[%s439 + $0x21] sm:$0xff]
        %v444 = vld [vmem:[%s439 + $0x31] sm:$0xff]
        %v445 = vld [vmem:[%s439 + $0x39] sm:$0xff]
        %v446 = vld [vmem:[%s439 + $0x49] sm:$0xff]
        %v447 = vld [vmem:[%s439 + $0x51] sm:$0xff]
        %v448 = vld [vmem:[%s439 + $0x61] sm:$0xff]
        %v449 = vld [vmem:[%s439 + $0x69] sm:$0xff]
        %v450 = vld [vmem:[%s439 + $0x79] sm:$0xff]
        %v451 = vld [vmem:[%s439 + $0x81] sm:$0xff]
        %v452 = vld [vmem:[%s439 + $0x91] sm:$0xff]
        %v453 = vld [vmem:[%s439 + $0x99] sm:$0xff]
        %v454 = vld [vmem:[%s439 + $0xa9] sm:$0xff]
        %v455 = vld [vmem:[%s439 + $0xb1] sm:$0xff]
        %v456 = vld [vmem:[%s439 + $0xc1] sm:$0xff]
        %v457 = vld [vmem:[%s439 + $0xc9] sm:$0xff]
        %v458 = vld [vmem:[%s439 + $0xd9] sm:$0xff]
        %v459 = vld [vmem:[%s439 + $0xe1] sm:$0xff]
        %v460 = vld [vmem:[%s439 + $0xf1] sm:$0xff]
        %v461 = vld [vmem:[%s439 + $0xf9] sm:$0xff]
        %v462 = vld [vmem:[%s439 + $0x109] sm:$0xff]
        %v463 = vld [vmem:[%s439 + $0x111] sm:$0xff]
        %v464 = vld [vmem:[%s439 + $0x121] sm:$0xff]
        %v465 = vld [vmem:[%s439 + $0x129] sm:$0xff]
        %v466 = vld [vmem:[%s439 + $0x139] sm:$0xff]
        %v467 = vld [vmem:[%s439 + $0x141] sm:$0xff]
        %v468 = vld [vmem:[%s439 + $0x151] sm:$0xff]
        %v469 = vld [vmem:[%s439 + $0x159] sm:$0xff]
        %v470 = vld [vmem:[%s439 + $0x169] sm:$0xff]
        %v471 = vld [vmem:[%s439 + $0x171] sm:$0xff]
        %v472 = vpack.c.bf16 %v441, %v440
        %v473 = vpack.c.bf16 %v443, %v442
        %v474 = vpack.c.bf16 %v445, %v444
        %v475 = vpack.c.bf16 %v447, %v446
        %v476 = vpack.c.bf16 %v449, %v448
        %v477 = vpack.c.bf16 %v451, %v450
        %v478 = vpack.c.bf16 %v453, %v452
        %v479 = vpack.c.bf16 %v455, %v454
        %v480 = vpack.c.bf16 %v457, %v456
        %v481 = vpack.c.bf16 %v459, %v458
        %v482 = vpack.c.bf16 %v461, %v460
        %v483 = vpack.c.bf16 %v463, %v462
        %v484 = vpack.c.bf16 %v465, %v464
        %v485 = vpack.c.bf16 %v467, %v466
        %v486 = vpack.c.bf16 %v469, %v468
        %v487 = vpack.c.bf16 %v471, %v470
        %v488 = vld [vmem:[%s4] sm:$0xf]
        %v489 = vld [vmem:[%s4 + $0x4] sm:$0xf]
        %v490 = vld [vmem:[%s4 + $0x8] sm:$0xf]
        %v491 = vld [vmem:[%s4 + $0xc] sm:$0xf]
        %v492 = vld [vmem:[%s4 + $0x10] sm:$0xf]
        %v493 = vld [vmem:[%s4 + $0x14] sm:$0xf]
        %v494 = vld [vmem:[%s4 + $0x18] sm:$0xf]
        %v495 = vld [vmem:[%s4 + $0x1c] sm:$0xf]
        %v496 = vld [vmem:[%s4 + $0x20] sm:$0xf]
        %v497 = vld [vmem:[%s4 + $0x24] sm:$0xf]
        %v498 = vld [vmem:[%s4 + $0x28] sm:$0xf]
        %v499 = vld [vmem:[%s4 + $0x2c] sm:$0xf]
        %v500 = vld [vmem:[%s4 + $0x30] sm:$0xf]
        %v501 = vld [vmem:[%s4 + $0x34] sm:$0xf]
        %v502 = vld [vmem:[%s4 + $0x38] sm:$0xf]
        %v503 = vld [vmem:[%s4 + $0x3c] sm:$0xf]
        %v520 = vunpack.c.l.b16 %v488
        %v521 = vunpack.c.l.b16 %v489
        %v522 = vunpack.c.l.b16 %v490
        %v523 = vunpack.c.l.b16 %v491
        %v524 = vunpack.c.l.b16 %v492
        %v525 = vunpack.c.l.b16 %v493
        %v526 = vunpack.c.l.b16 %v494
        %v527 = vunpack.c.l.b16 %v495
        %v528 = vunpack.c.l.b16 %v496
        %v529 = vunpack.c.l.b16 %v497
        %v530 = vunpack.c.l.b16 %v498
        %v531 = vunpack.c.l.b16 %v499
        %v532 = vunpack.c.l.b16 %v500
        %v533 = vunpack.c.l.b16 %v501
        %v534 = vunpack.c.l.b16 %v502
        %v535 = vunpack.c.l.b16 %v503
        %v536 = vpack.c.b16 %v521, %v520
        %v537 = vpack.c.b16 %v523, %v522
        %v538 = vpack.c.b16 %v525, %v524
        %v539 = vpack.c.b16 %v527, %v526
        %v540 = vpack.c.b16 %v529, %v528
        %v541 = vpack.c.b16 %v531, %v530
        %v542 = vpack.c.b16 %v533, %v532
        %v543 = vpack.c.b16 %v535, %v534
        %552 = vmatprep.subr.bf16.mxu0 0
        %553 = vmatpush1.bf16.msra.mxu0 %v543
        %554 = vmatprep.subr.bf16.mxu0 0
        %555 = vmatpush1.bf16.msra.mxu0 %v542
        %556 = vmatprep.subr.bf16.mxu0 0
        %557 = vmatpush1.bf16.msra.mxu0 %v541
        %558 = vmatprep.subr.bf16.mxu0 0
        %559 = vmatpush1.bf16.msra.mxu0 %v540
        %560 = vmatprep.subr.bf16.mxu0 0
        %561 = vmatpush1.bf16.msra.mxu0 %v539
        %562 = vmatprep.subr.bf16.mxu0 0
        %563 = vmatpush1.bf16.msra.mxu0 %v538
        %564 = vmatprep.subr.bf16.mxu0 0
        %565 = vmatpush1.bf16.msra.mxu0 %v537
        %566 = vmatprep.subr.bf16.mxu0 0
        %567 = vmatpush1.bf16.msra.mxu0 %v536
        %568 = vmatprep.subr.bf16.mxu0 0
        %569 = vmatpush2.bf16.msra.mxu0 0
        %570 = vmatprep.subr.bf16.mxu0 0
        %571 = vmatpush2.bf16.msra.mxu0 0
        %572 = vmatprep.subr.bf16.mxu0 0
        %573 = vmatpush2.bf16.msra.mxu0 0
        %574 = vmatprep.subr.bf16.mxu0 0
        %575 = vmatpush2.bf16.msra.mxu0 0
        %576 = vmatprep.subr.bf16.mxu0 0
        %577 = vmatpush2.bf16.msra.mxu0 0
        %578 = vmatprep.subr.bf16.mxu0 0
        %579 = vmatpush2.bf16.msra.mxu0 0
        %580 = vmatprep.subr.bf16.mxu0 0
        %581 = vmatpush2.bf16.msra.mxu0 0
        %582 = vmatprep.subr.bf16.mxu0 0
        %583 = vmatpush2.bf16.msra.mxu0 0
        %584 = vmatprep.mubr.bf16.mxu0 0
        %585 = vmatmul.mubr.bf16.gmra.mxu0 %v472
        %v586 = vpop.f32.mrf.mxu0
        %v587 = vadd.f32 0.0, %v586
        %v588 = vpop.f32.mrf.mxu0
        %v589 = vpop.f32.mrf.mxu0
        %v590 = vadd.f32 0.0, %v589
        %v591 = vpop.f32.mrf.mxu0
        %592 = vmatprep.mubr.bf16.mxu0 0
        %593 = vmatmul.mubr.bf16.gmra.mxu0 %v473
        %v594 = vpop.f32.mrf.mxu0
        %v595 = vadd.f32 0.0, %v594
        %v596 = vpop.f32.mrf.mxu0
        %v597 = vpop.f32.mrf.mxu0
        %v598 = vadd.f32 0.0, %v597
        %v599 = vpop.f32.mrf.mxu0
        %600 = vmatprep.mubr.bf16.mxu0 0
        %601 = vmatmul.mubr.bf16.gmra.mxu0 %v474
        %v602 = vpop.f32.mrf.mxu0
        %v603 = vadd.f32 0.0, %v602
        %v604 = vpop.f32.mrf.mxu0
        %v605 = vpop.f32.mrf.mxu0
        %v606 = vadd.f32 0.0, %v605
        %v607 = vpop.f32.mrf.mxu0
        %608 = vmatprep.mubr.bf16.mxu0 0
        %609 = vmatmul.mubr.bf16.gmra.mxu0 %v475
        %v610 = vpop.f32.mrf.mxu0
        %v611 = vadd.f32 0.0, %v610
        %v612 = vpop.f32.mrf.mxu0
        %v613 = vpop.f32.mrf.mxu0
        %v614 = vadd.f32 0.0, %v613
        %v615 = vpop.f32.mrf.mxu0
        %616 = vmatprep.mubr.bf16.mxu0 0
        %617 = vmatmul.mubr.bf16.gmra.mxu0 %v476
        %v618 = vpop.f32.mrf.mxu0
        %v619 = vadd.f32 0.0, %v618
        %v620 = vpop.f32.mrf.mxu0
        %v621 = vpop.f32.mrf.mxu0
        %v622 = vadd.f32 0.0, %v621
        %v623 = vpop.f32.mrf.mxu0
        %624 = vmatprep.mubr.bf16.mxu0 0
        %625 = vmatmul.mubr.bf16.gmra.mxu0 %v477
        %v626 = vpop.f32.mrf.mxu0
        %v627 = vadd.f32 0.0, %v626
        %v628 = vpop.f32.mrf.mxu0
        %v629 = vpop.f32.mrf.mxu0
        %v630 = vadd.f32 0.0, %v629
        %v631 = vpop.f32.mrf.mxu0
        %632 = vmatprep.mubr.bf16.mxu0 0
        %633 = vmatmul.mubr.bf16.gmra.mxu0 %v478
        %v634 = vpop.f32.mrf.mxu0
        %v635 = vadd.f32 0.0, %v634
        %v636 = vpop.f32.mrf.mxu0
        %v637 = vpop.f32.mrf.mxu0
        %v638 = vadd.f32 0.0, %v637
        %v639 = vpop.f32.mrf.mxu0
        %640 = vmatprep.mubr.bf16.mxu0 0
        %641 = vmatmul.mubr.bf16.gmra.mxu0 %v479
        %v642 = vpop.f32.mrf.mxu0
        %v643 = vadd.f32 0.0, %v642
        %v644 = vpop.f32.mrf.mxu0
        %v645 = vpop.f32.mrf.mxu0
        %v646 = vadd.f32 0.0, %v645
        %v647 = vpop.f32.mrf.mxu0
        %648 = vmatprep.mubr.bf16.mxu0 0
        %649 = vmatmul.mubr.bf16.gmra.mxu0 %v480
        %v650 = vpop.f32.mrf.mxu0
        %v651 = vadd.f32 0.0, %v650
        %v652 = vpop.f32.mrf.mxu0
        %v653 = vpop.f32.mrf.mxu0
        %v654 = vadd.f32 0.0, %v653
        %v655 = vpop.f32.mrf.mxu0
        %656 = vmatprep.mubr.bf16.mxu0 0
        %657 = vmatmul.mubr.bf16.gmra.mxu0 %v481
        %v658 = vpop.f32.mrf.mxu0
        %v659 = vadd.f32 0.0, %v658
        %v660 = vpop.f32.mrf.mxu0
        %v661 = vpop.f32.mrf.mxu0
        %v662 = vadd.f32 0.0, %v661
        %v663 = vpop.f32.mrf.mxu0
        %664 = vmatprep.mubr.bf16.mxu0 0
        %665 = vmatmul.mubr.bf16.gmra.mxu0 %v482
        %v666 = vpop.f32.mrf.mxu0
        %v667 = vadd.f32 0.0, %v666
        %v668 = vpop.f32.mrf.mxu0
        %v669 = vpop.f32.mrf.mxu0
        %v670 = vadd.f32 0.0, %v669
        %v671 = vpop.f32.mrf.mxu0
        %672 = vmatprep.mubr.bf16.mxu0 0
        %673 = vmatmul.mubr.bf16.gmra.mxu0 %v483
        %v674 = vpop.f32.mrf.mxu0
        %v675 = vadd.f32 0.0, %v674
        %v676 = vpop.f32.mrf.mxu0
        %v677 = vpop.f32.mrf.mxu0
        %v678 = vadd.f32 0.0, %v677
        %v679 = vpop.f32.mrf.mxu0
        %680 = vmatprep.mubr.bf16.mxu0 0
        %681 = vmatmul.mubr.bf16.gmra.mxu0 %v484
        %v682 = vpop.f32.mrf.mxu0
        %v683 = vadd.f32 0.0, %v682
        %v684 = vpop.f32.mrf.mxu0
        %v685 = vpop.f32.mrf.mxu0
        %v686 = vadd.f32 0.0, %v685
        %v687 = vpop.f32.mrf.mxu0
        %688 = vmatprep.mubr.bf16.mxu0 0
        %689 = vmatmul.mubr.bf16.gmra.mxu0 %v485
        %v690 = vpop.f32.mrf.mxu0
        %v691 = vadd.f32 0.0, %v690
        %v692 = vpop.f32.mrf.mxu0
        %v693 = vpop.f32.mrf.mxu0
        %v694 = vadd.f32 0.0, %v693
        %v695 = vpop.f32.mrf.mxu0
        %696 = vmatprep.mubr.bf16.mxu0 0
        %697 = vmatmul.mubr.bf16.gmra.mxu0 %v486
        %v698 = vpop.f32.mrf.mxu0
        %v699 = vadd.f32 0.0, %v698
        %v700 = vpop.f32.mrf.mxu0
        %v701 = vpop.f32.mrf.mxu0
        %v702 = vadd.f32 0.0, %v701
        %v703 = vpop.f32.mrf.mxu0
        %704 = vmatprep.mubr.bf16.mxu0 0
        %705 = vmatmul.mubr.bf16.gmra.mxu0 %v487
        %v706 = vpop.f32.mrf.mxu0
        %v707 = vadd.f32 0.0, %v706
        %v708 = vpop.f32.mrf.mxu0
        %v709 = vpop.f32.mrf.mxu0
        %v710 = vadd.f32 0.0, %v709
        %v711 = vpop.f32.mrf.mxu0
        %712 = vdwg.mxu0
        %v713 = vadd.f32 %v407, %v587
        %v714 = vadd.f32 %v408, %v590
        %v715 = vadd.f32 %v409, %v595
        %v716 = vadd.f32 %v410, %v598
        %v717 = vadd.f32 %v411, %v603
        %v718 = vadd.f32 %v412, %v606
        %v719 = vadd.f32 %v413, %v611
        %v720 = vadd.f32 %v414, %v614
        %v721 = vadd.f32 %v415, %v619
        %v722 = vadd.f32 %v416, %v622
        %v723 = vadd.f32 %v417, %v627
        %v724 = vadd.f32 %v418, %v630
        %v725 = vadd.f32 %v419, %v635
        %v726 = vadd.f32 %v420, %v638
        %v727 = vadd.f32 %v421, %v643
        %v728 = vadd.f32 %v422, %v646
        %v729 = vadd.f32 %v423, %v651
        %v730 = vadd.f32 %v424, %v654
        %v731 = vadd.f32 %v425, %v659
        %v732 = vadd.f32 %v426, %v662
        %v733 = vadd.f32 %v427, %v667
        %v734 = vadd.f32 %v428, %v670
        %v735 = vadd.f32 %v429, %v675
        %v736 = vadd.f32 %v430, %v678
        %v737 = vadd.f32 %v431, %v683
        %v738 = vadd.f32 %v432, %v686
        %v739 = vadd.f32 %v433, %v691
        %v740 = vadd.f32 %v434, %v694
        %v741 = vadd.f32 %v435, %v699
        %v742 = vadd.f32 %v436, %v702
        %v743 = vadd.f32 %v437, %v707
        %v744 = vadd.f32 %v438, %v710
        %v745 = vmax.f32 %v713, 0.0
        %v746 = vmax.f32 %v714, 0.0
        %v747 = vmax.f32 %v715, 0.0
        %v748 = vmax.f32 %v716, 0.0
        %v749 = vmax.f32 %v717, 0.0
        %v750 = vmax.f32 %v718, 0.0
        %v751 = vmax.f32 %v719, 0.0
        %v752 = vmax.f32 %v720, 0.0
        %v753 = vmax.f32 %v721, 0.0
        %v754 = vmax.f32 %v722, 0.0
        %v755 = vmax.f32 %v723, 0.0
        %v756 = vmax.f32 %v724, 0.0
        %v757 = vmax.f32 %v725, 0.0
        %v758 = vmax.f32 %v726, 0.0
        %v759 = vmax.f32 %v727, 0.0
        %v760 = vmax.f32 %v728, 0.0
        %v761 = vmax.f32 %v729, 0.0
        %v762 = vmax.f32 %v730, 0.0
        %v763 = vmax.f32 %v731, 0.0
        %v764 = vmax.f32 %v732, 0.0
        %v765 = vmax.f32 %v733, 0.0
        %v766 = vmax.f32 %v734, 0.0
        %v767 = vmax.f32 %v735, 0.0
        %v768 = vmax.f32 %v736, 0.0
        %v769 = vmax.f32 %v737, 0.0
        %v770 = vmax.f32 %v738, 0.0
        %v771 = vmax.f32 %v739, 0.0
        %v772 = vmax.f32 %v740, 0.0
        %v773 = vmax.f32 %v741, 0.0
        %v774 = vmax.f32 %v742, 0.0
        %v775 = vmax.f32 %v743, 0.0
        %v776 = vmax.f32 %v744, 0.0
        %v777 = vadd.f32 %v745, %v746
        %v778 = vadd.f32 %v777, %v747
        %v779 = vadd.f32 %v778, %v748
        %v780 = vadd.f32 %v779, %v749
        %v781 = vadd.f32 %v780, %v750
        %v782 = vadd.f32 %v781, %v751
        %v783 = vadd.f32 %v782, %v752
        %v784 = vadd.f32 %v783, %v753
        %v785 = vadd.f32 %v784, %v754
        %v786 = vadd.f32 %v785, %v755
        %v787 = vadd.f32 %v786, %v756
        %v788 = vadd.f32 %v787, %v757
        %v789 = vadd.f32 %v788, %v758
        %v790 = vadd.f32 %v789, %v759
        %v791 = vadd.f32 %v790, %v760
        %v792 = vadd.f32 %v791, %v761
        %v793 = vadd.f32 %v792, %v762
        %v794 = vadd.f32 %v793, %v763
        %v795 = vadd.f32 %v794, %v764
        %v796 = vadd.f32 %v795, %v765
        %v797 = vadd.f32 %v796, %v766
        %v798 = vadd.f32 %v797, %v767
        %v799 = vadd.f32 %v798, %v768
        %v800 = vadd.f32 %v799, %v769
        %v801 = vadd.f32 %v800, %v770
        %v802 = vadd.f32 %v801, %v771
        %v803 = vadd.f32 %v802, %v772
        %v804 = vadd.f32 %v803, %v773
        %v805 = vadd.f32 %v804, %v774
        %v806 = vadd.f32 %v805, %v775
        %v807 = vadd.f32 %v806, %v776
        %v808 = vrot.slane %v807, 4
        %v809 = vadd.f32 %v807, %v808
        %v810 = vrot.slane %v809, 2
        %v811 = vadd.f32 %v809, %v810
        %v812 = vrot.slane %v811, 1
        %v813 = vadd.f32 %v811, %v812
        %v814 = vrcp.pop 256.0
        %v815 = vmul.f32 %v813, %v814
        %v816 = vld [vmem:[%s5] sm:$0xff]
        %v817 = vld [vmem:[%s5 + $0x8] sm:$0xff]
        %v818 = vld [vmem:[%s5 + $0x10] sm:$0xff]
        %v819 = vld [vmem:[%s5 + $0x18] sm:$0xff]
        %v820 = vld [vmem:[%s5 + $0x20] sm:$0xff]
        %v821 = vld [vmem:[%s5 + $0x28] sm:$0xff]
        %v822 = vld [vmem:[%s5 + $0x30] sm:$0xff]
        %v823 = vld [vmem:[%s5 + $0x38] sm:$0xff]
        %v824 = vld [vmem:[%s5 + $0x40] sm:$0xff]
        %v825 = vld [vmem:[%s5 + $0x48] sm:$0xff]
        %v826 = vld [vmem:[%s5 + $0x50] sm:$0xff]
        %v827 = vld [vmem:[%s5 + $0x58] sm:$0xff]
        %v828 = vld [vmem:[%s5 + $0x60] sm:$0xff]
        %v829 = vld [vmem:[%s5 + $0x68] sm:$0xff]
        %v830 = vld [vmem:[%s5 + $0x70] sm:$0xff]
        %v831 = vld [vmem:[%s5 + $0x78] sm:$0xff]
        %v832 = vld [vmem:[%s6] sm:$0x1]
        %833 = vmatprep.subr.mxu0 0.0
        %834 = vmatpush1.msra.mxu0 %v831
        %835 = vmatprep.subr.mxu0 0.0
        %836 = vmatpush1.msra.mxu0 %v830
        %837 = vmatprep.subr.mxu0 0.0
        %838 = vmatpush1.msra.mxu0 %v829
        %839 = vmatprep.subr.mxu0 0.0
        %840 = vmatpush1.msra.mxu0 %v828
        %841 = vmatprep.subr.mxu0 0.0
        %842 = vmatpush1.msra.mxu0 %v827
        %843 = vmatprep.subr.mxu0 0.0
        %844 = vmatpush1.msra.mxu0 %v826
        %845 = vmatprep.subr.mxu0 0.0
        %846 = vmatpush1.msra.mxu0 %v825
        %847 = vmatprep.subr.mxu0 0.0
        %848 = vmatpush1.msra.mxu0 %v824
        %849 = vmatprep.subr.mxu0 0.0
        %850 = vmatpush1.msra.mxu0 %v823
        %851 = vmatprep.subr.mxu0 0.0
        %852 = vmatpush1.msra.mxu0 %v822
        %853 = vmatprep.subr.mxu0 0.0
        %854 = vmatpush1.msra.mxu0 %v821
        %855 = vmatprep.subr.mxu0 0.0
        %856 = vmatpush1.msra.mxu0 %v820
        %857 = vmatprep.subr.mxu0 0.0
        %858 = vmatpush1.msra.mxu0 %v819
        %859 = vmatprep.subr.mxu0 0.0
        %860 = vmatpush1.msra.mxu0 %v818
        %861 = vmatprep.subr.mxu0 0.0
        %862 = vmatpush1.msra.mxu0 %v817
        %863 = vmatprep.subr.mxu0 0.0
        %864 = vmatpush1.msra.mxu0 %v816
        %865 = vmatprep.subr.mxu0 0.0
        %866 = vmatpush2.msra.mxu0 0.0
        %867 = vmatprep.subr.mxu0 0.0
        %868 = vmatpush2.msra.mxu0 0.0
        %869 = vmatprep.subr.mxu0 0.0
        %870 = vmatpush2.msra.mxu0 0.0
        %871 = vmatprep.subr.mxu0 0.0
        %872 = vmatpush2.msra.mxu0 0.0
        %873 = vmatprep.subr.mxu0 0.0
        %874 = vmatpush2.msra.mxu0 0.0
        %875 = vmatprep.subr.mxu0 0.0
        %876 = vmatpush2.msra.mxu0 0.0
        %877 = vmatprep.subr.mxu0 0.0
        %878 = vmatpush2.msra.mxu0 0.0
        %879 = vmatprep.subr.mxu0 0.0
        %880 = vmatpush2.msra.mxu0 0.0
        %881 = vmatprep.subr.mxu0 0.0
        %882 = vmatpush2.msra.mxu0 0.0
        %883 = vmatprep.subr.mxu0 0.0
        %884 = vmatpush2.msra.mxu0 0.0
        %885 = vmatprep.subr.mxu0 0.0
        %886 = vmatpush2.msra.mxu0 0.0
        %887 = vmatprep.subr.mxu0 0.0
        %888 = vmatpush2.msra.mxu0 0.0
        %889 = vmatprep.subr.mxu0 0.0
        %890 = vmatpush2.msra.mxu0 0.0
        %891 = vmatprep.subr.mxu0 0.0
        %892 = vmatpush2.msra.mxu0 0.0
        %893 = vmatprep.subr.mxu0 0.0
        %894 = vmatpush2.msra.mxu0 0.0
        %895 = vmatprep.subr.mxu0 0.0
        %896 = vmatpush2.msra.mxu0 0.0
        %897 = vmatprep.mubr.f32.mxu0 0.0
        %898 = vmatmul.mubr.f32.gmra.mxu0 %v815
        %v899 = vpop.f32.mrf.mxu0
        %v900 = vadd.f32 %v832, %v899
        %v901 = vpop.f32.mrf.mxu0
        %902 = vdwg.mxu0
        %903 = vst [vmem:[%s285] sm:$0x1] %v900
        %s904 = sand.u32 %s186, 1
        %s905 = scalar_lea.sflag [#allocation3], %s904
        %s906 = sand.u32 %s186, 1
        %s907 = scalar_lea.vmem [#allocation2], %s906
        // Predicated region
        $region49: #{forward.21} parent=47 // pred_check
          %p908 = pneg %p196
        $region50: #{forward.21} parent=47 // pred_check_branch
          %910 = sbr.rel (%p908) target = $region52
        $region51: #{forward.21} parent=47 // pred_region
          %s912 = ssub.s32 16, 16
          %913 = vsyncadd %s905, %s912
          %s914 = smul.addr %s21, 16
          %s915 = scalar_lea.hbm %s7, %s914
          %s917 = sshll.u32 %s907, 4
          %s918 = int_to_ptr.vmem [resolvable:$true] %s917
          %920 = dma.vmem_to_hbm [thread:$0]  %s918, 16, %s915, %s905
        $region52: #{forward.21} parent=47 // pred_fallthru
          _
      $region48: #{forward.21} parent=5 // pred_fallthru
        _
      %p921 = scmp.le.s32.totalorder 2, %s16
      // Predicated region
      $region53: #{forward.21} parent=5 // pred_check
        %p922 = pneg %p921
      $region54: #{forward.21} parent=5 // pred_check_branch
        %924 = sbr.rel (%p922) target = $region56
      $region55: #{forward.21} parent=5 // pred_region
        %s925 = ssub.s32 %s16, 2
        // Predicated region
        $region57: #{forward.21} parent=55 // pred_check
          %p926 = pneg %p202
        $region58: #{forward.21} parent=55 // pred_check_branch
          %928 = sbr.rel (%p926) target = $region60
        $region59: #{forward.21} parent=55 // pred_region
          %s929 = sand.u32 %s187, 1
          %s930 = scalar_lea.sflag [#allocation3], %s929
          %s931 = sand.u32 %s187, 1
          %s932 = scalar_lea.vmem [#allocation2], %s931
          %933 = dma.done %s930, 16
        $region60: #{forward.21} parent=55 // pred_fallthru
          _
      $region56: #{forward.21} parent=5 // pred_fallthru
        _
    $region6: #{forward.21} parent=1 // loop_footer
      %s20 = sadd.s32 1, %s16
    $region7: #{forward.21} parent=1 // loop_footer_branch
      %15 = sbr.rel target = $region3
    $region8: #{forward.21} parent=1 // loop_exit
      _
    %934 = vsyncpa [#allocation3], 1
    %s935 = scalar_lea.sflag [#allocation3], 1
    %936 = vsyncpa %s935, 1

</llo_original>
